<compile_context>
chip_gen: v7x
topology: tpu7x:2x2x1
jax: 0.10.0
libtpu: 0.0.40
codegen_flags: <defaults>
</compile_context>

<pallas_src>
import functools

import jax
import jax.numpy as jnp
from jax.experimental import pallas as pl
from jax.experimental.pallas import tpu as pltpu

_VMEM_LIMIT = 32 * 1024 * 1024  # explicit scoped-VMEM cap, safe on v5e/v6e/v7x


def _round_up(x, m):
    return (x + m - 1) // m * m


# --------------------------------------------------------------------------
# Gridded matmul + bias (+ ReLU) kernel — bf16 MXU inputs, f32 accumulation
# --------------------------------------------------------------------------
def _matmul_bias_kernel(x_ref, w_ref, b_ref, o_ref, *, apply_relu):
    acc = jnp.dot(x_ref[...], w_ref[...], preferred_element_type=jnp.float32)
    acc = acc + b_ref[...]
    if apply_relu:
        acc = jnp.maximum(acc, 0.0)
    o_ref[...] = acc.astype(o_ref.dtype)


def matmul_bias(x, w, b, *, apply_relu, out_dtype=jnp.bfloat16, tm=512):
    M, K = x.shape
    K2, N = w.shape
    assert K == K2
    TM = min(tm, _round_up(M, 8))
    Mp = _round_up(M, TM)

    xb = x.astype(jnp.bfloat16)
    if Mp != M:
        xb = jnp.pad(xb, ((0, Mp - M), (0, 0)))
    wb = w.astype(jnp.bfloat16)
    b2 = b.reshape(1, N).astype(jnp.float32)

    out_itemsize = jnp.dtype(out_dtype).itemsize
    cost = pl.CostEstimate(
        flops=2 * Mp * K * N,
        transcendentals=0,
        bytes_accessed=Mp * K * 2 + K * N * 2 + N * 4 + Mp * N * out_itemsize,
    )

    out = pl.pallas_call(
        functools.partial(_matmul_bias_kernel, apply_relu=apply_relu),
        grid=(Mp // TM,),
        out_shape=jax.ShapeDtypeStruct((Mp, N), out_dtype),
        in_specs=[
            pl.BlockSpec((TM, K), lambda i: (i, 0)),   # activations: tiled over M
            pl.BlockSpec((K, N), lambda i: (0, 0)),    # weights: resident
            pl.BlockSpec((1, N), lambda i: (0, 0)),    # bias: resident
        ],
        out_specs=pl.BlockSpec((TM, N), lambda i: (i, 0)),
        compiler_params=pltpu.CompilerParams(
            dimension_semantics=("parallel",),
            vmem_limit_bytes=_VMEM_LIMIT,
        ),
        cost_estimate=cost,
    )(xb, wb, b2)
    return out[:M] if Mp != M else out


# --------------------------------------------------------------------------
# 2x2 max-pool: elementwise max of 4 lane-aligned views (pure VPU kernel)
# --------------------------------------------------------------------------
def _max4_kernel(a_ref, b_ref, c_ref, d_ref, o_ref):
    o_ref[...] = jnp.maximum(jnp.maximum(a_ref[...], b_ref[...]),
                             jnp.maximum(c_ref[...], d_ref[...]))


def maxpool2x2(x_nhwc, *, tm=1024):
    B, H, W, C = x_nhwc.shape
    Ho, Wo = H // 2, W // 2
    M = B * Ho * Wo
    views = [x_nhwc[:, dh::2, dw::2, :].reshape(M, C)
             for dh in (0, 1) for dw in (0, 1)]
    TM = min(tm, _round_up(M, 8))
    Mp = _round_up(M, TM)
    if Mp != M:
        views = [jnp.pad(v, ((0, Mp - M), (0, 0))) for v in views]

    out = pl.pallas_call(
        _max4_kernel,
        grid=(Mp // TM,),
        out_shape=jax.ShapeDtypeStruct((Mp, C), x_nhwc.dtype),
        in_specs=[pl.BlockSpec((TM, C), lambda i: (i, 0)) for _ in range(4)],
        out_specs=pl.BlockSpec((TM, C), lambda i: (i, 0)),
        compiler_params=pltpu.CompilerParams(
            dimension_semantics=("parallel",),
            vmem_limit_bytes=_VMEM_LIMIT,
        ),
    )(*views)
    if Mp != M:
        out = out[:M]
    return out.reshape(B, Ho, Wo, C)


# --------------------------------------------------------------------------
# Conv = im2col (no activation transpose) + Pallas matmul
# --------------------------------------------------------------------------
def im2col_3x3(x_nhwc):
    # Patch elements ordered (kh, kw, cin) along the last axis; the weight is
    # reordered to match (cheap — weight is tiny), so no activation transpose.
    B, H, W, C = x_nhwc.shape
    xp = jnp.pad(x_nhwc, ((0, 0), (1, 1), (1, 1), (0, 0)))
    taps = [xp[:, kh:kh + H, kw:kw + W, :]
            for kh in range(3) for kw in range(3)]
    p = jnp.concatenate(taps, axis=-1)          # (B, H, W, 9*C)
    return p.reshape(B * H * W, 9 * C)
    # TODO(synk): gather the 9 taps from a halo'd VMEM tile inside the matmul
    # kernel instead of materializing the im2col matrix in HBM.


def conv3x3_relu(x_nhwc, w_oihw, b):
    B, H, W, Cin = x_nhwc.shape
    Cout = w_oihw.shape[0]
    patches = im2col_3x3(x_nhwc)                                  # (B*H*W, 9*Cin)
    w_flat = jnp.transpose(w_oihw, (2, 3, 1, 0)).reshape(9 * Cin, Cout)
    y = matmul_bias(patches, w_flat, b, apply_relu=True, out_dtype=jnp.bfloat16)
    return y.reshape(B, H, W, Cout)


# --------------------------------------------------------------------------
# Fused fc1+fc2+fc3 head in a single Pallas kernel (weights VMEM-resident)
# --------------------------------------------------------------------------
def _fc_fused_kernel(x_ref, w1_ref, b1_ref, w2_ref, b2_ref, w3_ref, b3_ref,
                     o_ref):
    h = jnp.dot(x_ref[...], w1_ref[...], preferred_element_type=jnp.float32)
    h = jnp.maximum(h + b1_ref[...], 0.0).astype(jnp.bfloat16)
    h = jnp.dot(h, w2_ref[...], preferred_element_type=jnp.float32)
    h = jnp.maximum(h + b2_ref[...], 0.0).astype(jnp.bfloat16)
    o_ref[...] = (jnp.dot(h, w3_ref[...], preferred_element_type=jnp.float32)
                  + b3_ref[...])


def fc_head(x_flat, w1, b1, w2, b2, w3p, b3p, *, n_logits, tm=256):
    M, K1 = x_flat.shape
    N1 = w1.shape[1]
    N2 = w2.shape[1]
    N3p = w3p.shape[1]
    TM = min(tm, _round_up(M, 8))   # keep M a multiple of the 8-row sublane granule
    Mp = _round_up(M, TM)
    xb = x_flat.astype(jnp.bfloat16)
    if Mp != M:
        xb = jnp.pad(xb, ((0, Mp - M), (0, 0)))

    out = pl.pallas_call(
        _fc_fused_kernel,
        grid=(Mp // TM,),
        out_shape=jax.ShapeDtypeStruct((Mp, N3p), jnp.float32),
        in_specs=[
            pl.BlockSpec((TM, K1), lambda i: (i, 0)),
            pl.BlockSpec((K1, N1), lambda i: (0, 0)),
            pl.BlockSpec((1, N1), lambda i: (0, 0)),
            pl.BlockSpec((N1, N2), lambda i: (0, 0)),
            pl.BlockSpec((1, N2), lambda i: (0, 0)),
            pl.BlockSpec((N2, N3p), lambda i: (0, 0)),
            pl.BlockSpec((1, N3p), lambda i: (0, 0)),
        ],
        out_specs=pl.BlockSpec((TM, N3p), lambda i: (i, 0)),
        compiler_params=pltpu.CompilerParams(
            dimension_semantics=("parallel",),
            vmem_limit_bytes=_VMEM_LIMIT,
        ),
    )(xb,
      w1.astype(jnp.bfloat16), b1.reshape(1, N1).astype(jnp.float32),
      w2.astype(jnp.bfloat16), b2.reshape(1, N2).astype(jnp.float32),
      w3p.astype(jnp.bfloat16), b3p.reshape(1, N3p).astype(jnp.float32))
    return out[:M, :n_logits]


# --------------------------------------------------------------------------
# Parameters (deterministic, PyTorch shapes: conv OIHW, linear (out, in))
# --------------------------------------------------------------------------
def init_params(key):
    def uniform(key, shape, fan_in):
        bound = 1.0 / jnp.sqrt(jnp.float32(fan_in))
        return jax.random.uniform(key, shape, jnp.float32, -bound, bound)

    keys = jax.random.split(key, 14)
    p = {}
    conv_dims = [(32, 3), (64, 32), (128, 64), (256, 128)]
    for i, (co, ci) in enumerate(conv_dims, start=1):
        fan_in = ci * 9
        p[f"conv{i}_w"] = uniform(keys[2 * (i - 1)], (co, ci, 3, 3), fan_in)
        p[f"conv{i}_b"] = uniform(keys[2 * (i - 1) + 1], (co,), fan_in)
    fc_dims = [(256, 256 * 2 * 2), (64, 256), (10, 64)]
    for j, (o, i_) in enumerate(fc_dims, start=1):
        p[f"fc{j}_w"] = uniform(keys[8 + 2 * (j - 1)], (o, i_), i_)
        p[f"fc{j}_b"] = uniform(keys[8 + 2 * (j - 1) + 1], (o,), i_)
    return p


# --------------------------------------------------------------------------
# Forward pass (mirrors Net.forward)
# --------------------------------------------------------------------------
def net_forward(params, x_nchw):
    x = jnp.transpose(x_nchw, (0, 2, 3, 1)).astype(jnp.bfloat16)  # NCHW -> NHWC

    x = maxpool2x2(conv3x3_relu(x, params["conv1_w"], params["conv1_b"]))  # 16x16x32
    x = maxpool2x2(conv3x3_relu(x, params["conv2_w"], params["conv2_b"]))  # 8x8x64
    x = maxpool2x2(conv3x3_relu(x, params["conv3_w"], params["conv3_b"]))  # 4x4x128
    x = maxpool2x2(conv3x3_relu(x, params["conv4_w"], params["conv4_b"]))  # 2x2x256

    # Flatten directly in NHWC order (free reshape); compensate by permuting
    # fc1's input columns from PyTorch's (c, h, w) flatten order.
    B = x.shape[0]
    x_flat = x.reshape(B, 2 * 2 * 256)

    f = jnp.arange(2 * 2 * 256)
    h = f // (2 * 256)
    w = (f // 256) % 2
    c = f % 256
    perm = c * 4 + h * 2 + w                      # NHWC index -> PyTorch column
    w1 = params["fc1_w"][:, perm].T               # (1024, 256)
    w2 = params["fc2_w"].T                        # (256, 64)
    # Pad fc3's 10 outputs to a lane-dense 128-wide store; slice logits after.
    w3p = jnp.pad(params["fc3_w"].T, ((0, 0), (0, 128 - 10)))    # (64, 128)
    b3p = jnp.pad(params["fc3_b"], (0, 128 - 10))                # (128,)

    logits = fc_head(x_flat, w1, params["fc1_b"], w2, params["fc2_b"],
                     w3p, b3p, n_logits=10)
    return logits  # (B, 10), float32


if __name__ == "__main__":
    key = jax.random.PRNGKey(0)
    k_param, k_x = jax.random.split(key)
    params = init_params(k_param)
    # Input must be 32x32 so that four 2x2 pools produce 2x2x256 = 1024 feats.
    x = jax.random.normal(k_x, (2, 3, 32, 32), dtype=jnp.float32)

    out = jax.jit(net_forward)(params, x)
    out = jax.block_until_ready(out)
    assert out.shape == (2, 10) and out.dtype == jnp.float32
    print("KERNEL_OK")
</pallas_src>

<mosaic_0001>
module attributes {stable_mosaic.version = 11 : i64} {
  func.func @_matmul_bias_kernel(%arg0: i32, %arg1: memref<512x27xbf16, #tpu.memory_space<vmem>>, %arg2: memref<27x32xbf16, #tpu.memory_space<vmem>>, %arg3: memref<1x32xf32, #tpu.memory_space<vmem>>, %arg4: memref<512x32xbf16, #tpu.memory_space<vmem>>) attributes {dimension_semantics = [#tpu.dimension_semantics<parallel>], iteration_bounds = array<i64: 4>, scalar_prefetch = 0 : i64, scratch_operands = 0 : i64, tpu.core_type = #tpu.core_type<tc>, window_params = [{transform_indices = @transform_0, window_bounds = array<i64: 512, 27>}, {pipeline_mode = #tpu.pipeline_mode<synchronous>, transform_indices = @transform_1, window_bounds = array<i64: 27, 32>}, {pipeline_mode = #tpu.pipeline_mode<synchronous>, transform_indices = @transform_2, window_bounds = array<i64: 1, 32>}, {transform_indices = @transform_3, window_bounds = array<i64: 512, 32>}]} {
    %c0 = arith.constant 0 : index
    %c0_0 = arith.constant 0 : index
    %0 = vector.load %arg1[%c0, %c0_0] : memref<512x27xbf16, #tpu.memory_space<vmem>>, vector<512x27xbf16>
    %c0_1 = arith.constant 0 : index
    %c0_2 = arith.constant 0 : index
    %1 = vector.load %arg2[%c0_1, %c0_2] : memref<27x32xbf16, #tpu.memory_space<vmem>>, vector<27x32xbf16>
    %cst = arith.constant dense<0.000000e+00> : vector<512x32xf32>
    %2 = tpu.matmul %0, %1, %cst {dimension_numbers = #tpu.dot_dimension_numbers<[1], [0], [0], [1], [0, 0, 1, 1], [], []>} : vector<512x27xbf16>, vector<27x32xbf16>, vector<512x32xf32> -> vector<512x32xf32>
    %c0_3 = arith.constant 0 : index
    %c0_4 = arith.constant 0 : index
    %3 = vector.load %arg3[%c0_3, %c0_4] : memref<1x32xf32, #tpu.memory_space<vmem>>, vector<1x32xf32>
    %4 = vector.broadcast %3 : vector<1x32xf32> to vector<512x32xf32>
    %5 = arith.addf %2, %4 : vector<512x32xf32>
    %cst_5 = arith.constant 0.000000e+00 : f32
    %6 = vector.broadcast %cst_5 : f32 to vector<512x32xf32>
    %7 = arith.maximumf %5, %6 : vector<512x32xf32>
    %8 = arith.truncf %7 : vector<512x32xf32> to vector<512x32xbf16>
    %c0_6 = arith.constant 0 : index
    %c0_7 = arith.constant 0 : index
    %9 = vector.load %arg4[%c0_6, %c0_7] : memref<512x32xbf16, #tpu.memory_space<vmem>>, vector<512x32xbf16>
    tpu.vector_store %arg4[%c0_6, %c0_7], %8 {strides = array<i32>} : memref<512x32xbf16, #tpu.memory_space<vmem>>, vector<512x32xbf16>,
    return
  }
  func.func @transform_0(%arg0: i32) -> (i32, i32) {
    %c0_i32 = arith.constant 0 : i32
    %c0_i32_0 = arith.constant 0 : i32
    return %arg0, %c0_i32 : i32, i32
  }
  func.func @transform_1(%arg0: i32) -> (i32, i32) {
    %c0_i32 = arith.constant 0 : i32
    %c0_i32_0 = arith.constant 0 : i32
    %c0_i32_1 = arith.constant 0 : i32
    return %c0_i32, %c0_i32_0 : i32, i32
  }
  func.func @transform_2(%arg0: i32) -> (i32, i32) {
    %c0_i32 = arith.constant 0 : i32
    %c0_i32_0 = arith.constant 0 : i32
    %c0_i32_1 = arith.constant 0 : i32
    return %c0_i32, %c0_i32_0 : i32, i32
  }
  func.func @transform_3(%arg0: i32) -> (i32, i32) {
    %c0_i32 = arith.constant 0 : i32
    %c0_i32_0 = arith.constant 0 : i32
    return %arg0, %c0_i32 : i32, i32
  }
}

module attributes {stable_mosaic.version = 11 : i64} {
  func.func @_max4_kernel(%arg0: i32, %arg1: memref<512x32xbf16, #tpu.memory_space<vmem>>, %arg2: memref<512x32xbf16, #tpu.memory_space<vmem>>, %arg3: memref<512x32xbf16, #tpu.memory_space<vmem>>, %arg4: memref<512x32xbf16, #tpu.memory_space<vmem>>, %arg5: memref<512x32xbf16, #tpu.memory_space<vmem>>) attributes {dimension_semantics = [#tpu.dimension_semantics<parallel>], iteration_bounds = array<i64: 1>, scalar_prefetch = 0 : i64, scratch_operands = 0 : i64, tpu.core_type = #tpu.core_type<tc>, window_params = [{transform_indices = @transform_0, window_bounds = array<i64: 512, 32>}, {transform_indices = @transform_1, window_bounds = array<i64: 512, 32>}, {transform_indices = @transform_2, window_bounds = array<i64: 512, 32>}, {transform_indices = @transform_3, window_bounds = array<i64: 512, 32>}, {transform_indices = @transform_4, window_bounds = array<i64: 512, 32>}]} {
    %c0 = arith.constant 0 : index
    %c0_0 = arith.constant 0 : index
    %0 = vector.load %arg1[%c0, %c0_0] : memref<512x32xbf16, #tpu.memory_space<vmem>>, vector<512x32xbf16>
    %c0_1 = arith.constant 0 : index
    %c0_2 = arith.constant 0 : index
    %1 = vector.load %arg2[%c0_1, %c0_2] : memref<512x32xbf16, #tpu.memory_space<vmem>>, vector<512x32xbf16>
    %2 = arith.maximumf %0, %1 : vector<512x32xbf16>
    %c0_3 = arith.constant 0 : index
    %c0_4 = arith.constant 0 : index
    %3 = vector.load %arg3[%c0_3, %c0_4] : memref<512x32xbf16, #tpu.memory_space<vmem>>, vector<512x32xbf16>
    %c0_5 = arith.constant 0 : index
    %c0_6 = arith.constant 0 : index
    %4 = vector.load %arg4[%c0_5, %c0_6] : memref<512x32xbf16, #tpu.memory_space<vmem>>, vector<512x32xbf16>
    %5 = arith.maximumf %3, %4 : vector<512x32xbf16>
    %6 = arith.maximumf %2, %5 : vector<512x32xbf16>
    %c0_7 = arith.constant 0 : index
    %c0_8 = arith.constant 0 : index
    %7 = vector.load %arg5[%c0_7, %c0_8] : memref<512x32xbf16, #tpu.memory_space<vmem>>, vector<512x32xbf16>
    tpu.vector_store %arg5[%c0_7, %c0_8], %6 {strides = array<i32>} : memref<512x32xbf16, #tpu.memory_space<vmem>>, vector<512x32xbf16>,
    return
  }
  func.func @transform_0(%arg0: i32) -> (i32, i32) {
    %c0_i32 = arith.constant 0 : i32
    %c0_i32_0 = arith.constant 0 : i32
    return %arg0, %c0_i32 : i32, i32
  }
  func.func @transform_1(%arg0: i32) -> (i32, i32) {
    %c0_i32 = arith.constant 0 : i32
    %c0_i32_0 = arith.constant 0 : i32
    return %arg0, %c0_i32 : i32, i32
  }
  func.func @transform_2(%arg0: i32) -> (i32, i32) {
    %c0_i32 = arith.constant 0 : i32
    %c0_i32_0 = arith.constant 0 : i32
    return %arg0, %c0_i32 : i32, i32
  }
  func.func @transform_3(%arg0: i32) -> (i32, i32) {
    %c0_i32 = arith.constant 0 : i32
    %c0_i32_0 = arith.constant 0 : i32
    return %arg0, %c0_i32 : i32, i32
  }
  func.func @transform_4(%arg0: i32) -> (i32, i32) {
    %c0_i32 = arith.constant 0 : i32
    %c0_i32_0 = arith.constant 0 : i32
    return %arg0, %c0_i32 : i32, i32
  }
}

module attributes {stable_mosaic.version = 11 : i64} {
  func.func @_matmul_bias_kernel(%arg0: i32, %arg1: memref<512x288xbf16, #tpu.memory_space<vmem>>, %arg2: memref<288x64xbf16, #tpu.memory_space<vmem>>, %arg3: memref<1x64xf32, #tpu.memory_space<vmem>>, %arg4: memref<512x64xbf16, #tpu.memory_space<vmem>>) attributes {dimension_semantics = [#tpu.dimension_semantics<parallel>], iteration_bounds = array<i64: 1>, scalar_prefetch = 0 : i64, scratch_operands = 0 : i64, tpu.core_type = #tpu.core_type<tc>, window_params = [{transform_indices = @transform_0, window_bounds = array<i64: 512, 288>}, {pipeline_mode = #tpu.pipeline_mode<synchronous>, transform_indices = @transform_1, window_bounds = array<i64: 288, 64>}, {pipeline_mode = #tpu.pipeline_mode<synchronous>, transform_indices = @transform_2, window_bounds = array<i64: 1, 64>}, {transform_indices = @transform_3, window_bounds = array<i64: 512, 64>}]} {
    %c0 = arith.constant 0 : index
    %c0_0 = arith.constant 0 : index
    %0 = vector.load %arg1[%c0, %c0_0] : memref<512x288xbf16, #tpu.memory_space<vmem>>, vector<512x288xbf16>
    %c0_1 = arith.constant 0 : index
    %c0_2 = arith.constant 0 : index
    %1 = vector.load %arg2[%c0_1, %c0_2] : memref<288x64xbf16, #tpu.memory_space<vmem>>, vector<288x64xbf16>
    %cst = arith.constant dense<0.000000e+00> : vector<512x64xf32>
    %2 = tpu.matmul %0, %1, %cst {dimension_numbers = #tpu.dot_dimension_numbers<[1], [0], [0], [1], [0, 0, 1, 1], [], []>} : vector<512x288xbf16>, vector<288x64xbf16>, vector<512x64xf32> -> vector<512x64xf32>
    %c0_3 = arith.constant 0 : index
    %c0_4 = arith.constant 0 : index
    %3 = vector.load %arg3[%c0_3, %c0_4] : memref<1x64xf32, #tpu.memory_space<vmem>>, vector<1x64xf32>
    %4 = vector.broadcast %3 : vector<1x64xf32> to vector<512x64xf32>
    %5 = arith.addf %2, %4 : vector<512x64xf32>
    %cst_5 = arith.constant 0.000000e+00 : f32
    %6 = vector.broadcast %cst_5 : f32 to vector<512x64xf32>
    %7 = arith.maximumf %5, %6 : vector<512x64xf32>
    %8 = arith.truncf %7 : vector<512x64xf32> to vector<512x64xbf16>
    %c0_6 = arith.constant 0 : index
    %c0_7 = arith.constant 0 : index
    %9 = vector.load %arg4[%c0_6, %c0_7] : memref<512x64xbf16, #tpu.memory_space<vmem>>, vector<512x64xbf16>
    tpu.vector_store %arg4[%c0_6, %c0_7], %8 {strides = array<i32>} : memref<512x64xbf16, #tpu.memory_space<vmem>>, vector<512x64xbf16>,
    return
  }
  func.func @transform_0(%arg0: i32) -> (i32, i32) {
    %c0_i32 = arith.constant 0 : i32
    %c0_i32_0 = arith.constant 0 : i32
    return %arg0, %c0_i32 : i32, i32
  }
  func.func @transform_1(%arg0: i32) -> (i32, i32) {
    %c0_i32 = arith.constant 0 : i32
    %c0_i32_0 = arith.constant 0 : i32
    %c0_i32_1 = arith.constant 0 : i32
    return %c0_i32, %c0_i32_0 : i32, i32
  }
  func.func @transform_2(%arg0: i32) -> (i32, i32) {
    %c0_i32 = arith.constant 0 : i32
    %c0_i32_0 = arith.constant 0 : i32
    %c0_i32_1 = arith.constant 0 : i32
    return %c0_i32, %c0_i32_0 : i32, i32
  }
  func.func @transform_3(%arg0: i32) -> (i32, i32) {
    %c0_i32 = arith.constant 0 : i32
    %c0_i32_0 = arith.constant 0 : i32
    return %arg0, %c0_i32 : i32, i32
  }
}

module attributes {stable_mosaic.version = 11 : i64} {
  func.func @_max4_kernel(%arg0: i32, %arg1: memref<128x64xbf16, #tpu.memory_space<vmem>>, %arg2: memref<128x64xbf16, #tpu.memory_space<vmem>>, %arg3: memref<128x64xbf16, #tpu.memory_space<vmem>>, %arg4: memref<128x64xbf16, #tpu.memory_space<vmem>>, %arg5: memref<128x64xbf16, #tpu.memory_space<vmem>>) attributes {dimension_semantics = [#tpu.dimension_semantics<parallel>], iteration_bounds = array<i64: 1>, scalar_prefetch = 0 : i64, scratch_operands = 0 : i64, tpu.core_type = #tpu.core_type<tc>, window_params = [{transform_indices = @transform_0, window_bounds = array<i64: 128, 64>}, {transform_indices = @transform_1, window_bounds = array<i64: 128, 64>}, {transform_indices = @transform_2, window_bounds = array<i64: 128, 64>}, {transform_indices = @transform_3, window_bounds = array<i64: 128, 64>}, {transform_indices = @transform_4, window_bounds = array<i64: 128, 64>}]} {
    %c0 = arith.constant 0 : index
    %c0_0 = arith.constant 0 : index
    %0 = vector.load %arg1[%c0, %c0_0] : memref<128x64xbf16, #tpu.memory_space<vmem>>, vector<128x64xbf16>
    %c0_1 = arith.constant 0 : index
    %c0_2 = arith.constant 0 : index
    %1 = vector.load %arg2[%c0_1, %c0_2] : memref<128x64xbf16, #tpu.memory_space<vmem>>, vector<128x64xbf16>
    %2 = arith.maximumf %0, %1 : vector<128x64xbf16>
    %c0_3 = arith.constant 0 : index
    %c0_4 = arith.constant 0 : index
    %3 = vector.load %arg3[%c0_3, %c0_4] : memref<128x64xbf16, #tpu.memory_space<vmem>>, vector<128x64xbf16>
    %c0_5 = arith.constant 0 : index
    %c0_6 = arith.constant 0 : index
    %4 = vector.load %arg4[%c0_5, %c0_6] : memref<128x64xbf16, #tpu.memory_space<vmem>>, vector<128x64xbf16>
    %5 = arith.maximumf %3, %4 : vector<128x64xbf16>
    %6 = arith.maximumf %2, %5 : vector<128x64xbf16>
    %c0_7 = arith.constant 0 : index
    %c0_8 = arith.constant 0 : index
    %7 = vector.load %arg5[%c0_7, %c0_8] : memref<128x64xbf16, #tpu.memory_space<vmem>>, vector<128x64xbf16>
    tpu.vector_store %arg5[%c0_7, %c0_8], %6 {strides = array<i32>} : memref<128x64xbf16, #tpu.memory_space<vmem>>, vector<128x64xbf16>,
    return
  }
  func.func @transform_0(%arg0: i32) -> (i32, i32) {
    %c0_i32 = arith.constant 0 : i32
    %c0_i32_0 = arith.constant 0 : i32
    return %arg0, %c0_i32 : i32, i32
  }
  func.func @transform_1(%arg0: i32) -> (i32, i32) {
    %c0_i32 = arith.constant 0 : i32
    %c0_i32_0 = arith.constant 0 : i32
    return %arg0, %c0_i32 : i32, i32
  }
  func.func @transform_2(%arg0: i32) -> (i32, i32) {
    %c0_i32 = arith.constant 0 : i32
    %c0_i32_0 = arith.constant 0 : i32
    return %arg0, %c0_i32 : i32, i32
  }
  func.func @transform_3(%arg0: i32) -> (i32, i32) {
    %c0_i32 = arith.constant 0 : i32
    %c0_i32_0 = arith.constant 0 : i32
    return %arg0, %c0_i32 : i32, i32
  }
  func.func @transform_4(%arg0: i32) -> (i32, i32) {
    %c0_i32 = arith.constant 0 : i32
    %c0_i32_0 = arith.constant 0 : i32
    return %arg0, %c0_i32 : i32, i32
  }
}

module attributes {stable_mosaic.version = 11 : i64} {
  func.func @_matmul_bias_kernel(%arg0: i32, %arg1: memref<128x576xbf16, #tpu.memory_space<vmem>>, %arg2: memref<576x128xbf16, #tpu.memory_space<vmem>>, %arg3: memref<1x128xf32, #tpu.memory_space<vmem>>, %arg4: memref<128x128xbf16, #tpu.memory_space<vmem>>) attributes {dimension_semantics = [#tpu.dimension_semantics<parallel>], iteration_bounds = array<i64: 1>, scalar_prefetch = 0 : i64, scratch_operands = 0 : i64, tpu.core_type = #tpu.core_type<tc>, window_params = [{transform_indices = @transform_0, window_bounds = array<i64: 128, 576>}, {pipeline_mode = #tpu.pipeline_mode<synchronous>, transform_indices = @transform_1, window_bounds = array<i64: 576, 128>}, {pipeline_mode = #tpu.pipeline_mode<synchronous>, transform_indices = @transform_2, window_bounds = array<i64: 1, 128>}, {transform_indices = @transform_3, window_bounds = array<i64: 128, 128>}]} {
    %c0 = arith.constant 0 : index
    %c0_0 = arith.constant 0 : index
    %0 = vector.load %arg1[%c0, %c0_0] : memref<128x576xbf16, #tpu.memory_space<vmem>>, vector<128x576xbf16>
    %c0_1 = arith.constant 0 : index
    %c0_2 = arith.constant 0 : index
    %1 = vector.load %arg2[%c0_1, %c0_2] : memref<576x128xbf16, #tpu.memory_space<vmem>>, vector<576x128xbf16>
    %cst = arith.constant dense<0.000000e+00> : vector<128x128xf32>
    %2 = tpu.matmul %0, %1, %cst {dimension_numbers = #tpu.dot_dimension_numbers<[1], [0], [0], [1], [0, 0, 1, 1], [], []>} : vector<128x576xbf16>, vector<576x128xbf16>, vector<128x128xf32> -> vector<128x128xf32>
    %c0_3 = arith.constant 0 : index
    %c0_4 = arith.constant 0 : index
    %3 = vector.load %arg3[%c0_3, %c0_4] : memref<1x128xf32, #tpu.memory_space<vmem>>, vector<1x128xf32>
    %4 = vector.broadcast %3 : vector<1x128xf32> to vector<128x128xf32>
    %5 = arith.addf %2, %4 : vector<128x128xf32>
    %cst_5 = arith.constant 0.000000e+00 : f32
    %6 = vector.broadcast %cst_5 : f32 to vector<128x128xf32>
    %7 = arith.maximumf %5, %6 : vector<128x128xf32>
    %8 = arith.truncf %7 : vector<128x128xf32> to vector<128x128xbf16>
    %c0_6 = arith.constant 0 : index
    %c0_7 = arith.constant 0 : index
    %9 = vector.load %arg4[%c0_6, %c0_7] : memref<128x128xbf16, #tpu.memory_space<vmem>>, vector<128x128xbf16>
    tpu.vector_store %arg4[%c0_6, %c0_7], %8 {strides = array<i32>} : memref<128x128xbf16, #tpu.memory_space<vmem>>, vector<128x128xbf16>,
    return
  }
  func.func @transform_0(%arg0: i32) -> (i32, i32) {
    %c0_i32 = arith.constant 0 : i32
    %c0_i32_0 = arith.constant 0 : i32
    return %arg0, %c0_i32 : i32, i32
  }
  func.func @transform_1(%arg0: i32) -> (i32, i32) {
    %c0_i32 = arith.constant 0 : i32
    %c0_i32_0 = arith.constant 0 : i32
    %c0_i32_1 = arith.constant 0 : i32
    return %c0_i32, %c0_i32_0 : i32, i32
  }
  func.func @transform_2(%arg0: i32) -> (i32, i32) {
    %c0_i32 = arith.constant 0 : i32
    %c0_i32_0 = arith.constant 0 : i32
    %c0_i32_1 = arith.constant 0 : i32
    return %c0_i32, %c0_i32_0 : i32, i32
  }
  func.func @transform_3(%arg0: i32) -> (i32, i32) {
    %c0_i32 = arith.constant 0 : i32
    %c0_i32_0 = arith.constant 0 : i32
    return %arg0, %c0_i32 : i32, i32
  }
}

module attributes {stable_mosaic.version = 11 : i64} {
  func.func @_max4_kernel(%arg0: i32, %arg1: memref<32x128xbf16, #tpu.memory_space<vmem>>, %arg2: memref<32x128xbf16, #tpu.memory_space<vmem>>, %arg3: memref<32x128xbf16, #tpu.memory_space<vmem>>, %arg4: memref<32x128xbf16, #tpu.memory_space<vmem>>, %arg5: memref<32x128xbf16, #tpu.memory_space<vmem>>) attributes {dimension_semantics = [#tpu.dimension_semantics<parallel>], iteration_bounds = array<i64: 1>, scalar_prefetch = 0 : i64, scratch_operands = 0 : i64, tpu.core_type = #tpu.core_type<tc>, window_params = [{transform_indices = @transform_0, window_bounds = array<i64: 32, 128>}, {transform_indices = @transform_1, window_bounds = array<i64: 32, 128>}, {transform_indices = @transform_2, window_bounds = array<i64: 32, 128>}, {transform_indices = @transform_3, window_bounds = array<i64: 32, 128>}, {transform_indices = @transform_4, window_bounds = array<i64: 32, 128>}]} {
    %c0 = arith.constant 0 : index
    %c0_0 = arith.constant 0 : index
    %0 = vector.load %arg1[%c0, %c0_0] : memref<32x128xbf16, #tpu.memory_space<vmem>>, vector<32x128xbf16>
    %c0_1 = arith.constant 0 : index
    %c0_2 = arith.constant 0 : index
    %1 = vector.load %arg2[%c0_1, %c0_2] : memref<32x128xbf16, #tpu.memory_space<vmem>>, vector<32x128xbf16>
    %2 = arith.maximumf %0, %1 : vector<32x128xbf16>
    %c0_3 = arith.constant 0 : index
    %c0_4 = arith.constant 0 : index
    %3 = vector.load %arg3[%c0_3, %c0_4] : memref<32x128xbf16, #tpu.memory_space<vmem>>, vector<32x128xbf16>
    %c0_5 = arith.constant 0 : index
    %c0_6 = arith.constant 0 : index
    %4 = vector.load %arg4[%c0_5, %c0_6] : memref<32x128xbf16, #tpu.memory_space<vmem>>, vector<32x128xbf16>
    %5 = arith.maximumf %3, %4 : vector<32x128xbf16>
    %6 = arith.maximumf %2, %5 : vector<32x128xbf16>
    %c0_7 = arith.constant 0 : index
    %c0_8 = arith.constant 0 : index
    %7 = vector.load %arg5[%c0_7, %c0_8] : memref<32x128xbf16, #tpu.memory_space<vmem>>, vector<32x128xbf16>
    tpu.vector_store %arg5[%c0_7, %c0_8], %6 {strides = array<i32>} : memref<32x128xbf16, #tpu.memory_space<vmem>>, vector<32x128xbf16>,
    return
  }
  func.func @transform_0(%arg0: i32) -> (i32, i32) {
    %c0_i32 = arith.constant 0 : i32
    %c0_i32_0 = arith.constant 0 : i32
    return %arg0, %c0_i32 : i32, i32
  }
  func.func @transform_1(%arg0: i32) -> (i32, i32) {
    %c0_i32 = arith.constant 0 : i32
    %c0_i32_0 = arith.constant 0 : i32
    return %arg0, %c0_i32 : i32, i32
  }
  func.func @transform_2(%arg0: i32) -> (i32, i32) {
    %c0_i32 = arith.constant 0 : i32
    %c0_i32_0 = arith.constant 0 : i32
    return %arg0, %c0_i32 : i32, i32
  }
  func.func @transform_3(%arg0: i32) -> (i32, i32) {
    %c0_i32 = arith.constant 0 : i32
    %c0_i32_0 = arith.constant 0 : i32
    return %arg0, %c0_i32 : i32, i32
  }
  func.func @transform_4(%arg0: i32) -> (i32, i32) {
    %c0_i32 = arith.constant 0 : i32
    %c0_i32_0 = arith.constant 0 : i32
    return %arg0, %c0_i32 : i32, i32
  }
}

module attributes {stable_mosaic.version = 11 : i64} {
  func.func @_matmul_bias_kernel(%arg0: i32, %arg1: memref<32x1152xbf16, #tpu.memory_space<vmem>>, %arg2: memref<1152x256xbf16, #tpu.memory_space<vmem>>, %arg3: memref<1x256xf32, #tpu.memory_space<vmem>>, %arg4: memref<32x256xbf16, #tpu.memory_space<vmem>>) attributes {dimension_semantics = [#tpu.dimension_semantics<parallel>], iteration_bounds = array<i64: 1>, scalar_prefetch = 0 : i64, scratch_operands = 0 : i64, tpu.core_type = #tpu.core_type<tc>, window_params = [{transform_indices = @transform_0, window_bounds = array<i64: 32, 1152>}, {pipeline_mode = #tpu.pipeline_mode<synchronous>, transform_indices = @transform_1, window_bounds = array<i64: 1152, 256>}, {pipeline_mode = #tpu.pipeline_mode<synchronous>, transform_indices = @transform_2, window_bounds = array<i64: 1, 256>}, {transform_indices = @transform_3, window_bounds = array<i64: 32, 256>}]} {
    %c0 = arith.constant 0 : index
    %c0_0 = arith.constant 0 : index
    %0 = vector.load %arg1[%c0, %c0_0] : memref<32x1152xbf16, #tpu.memory_space<vmem>>, vector<32x1152xbf16>
    %c0_1 = arith.constant 0 : index
    %c0_2 = arith.constant 0 : index
    %1 = vector.load %arg2[%c0_1, %c0_2] : memref<1152x256xbf16, #tpu.memory_space<vmem>>, vector<1152x256xbf16>
    %cst = arith.constant dense<0.000000e+00> : vector<32x256xf32>
    %2 = tpu.matmul %0, %1, %cst {dimension_numbers = #tpu.dot_dimension_numbers<[1], [0], [0], [1], [0, 0, 1, 1], [], []>} : vector<32x1152xbf16>, vector<1152x256xbf16>, vector<32x256xf32> -> vector<32x256xf32>
    %c0_3 = arith.constant 0 : index
    %c0_4 = arith.constant 0 : index
    %3 = vector.load %arg3[%c0_3, %c0_4] : memref<1x256xf32, #tpu.memory_space<vmem>>, vector<1x256xf32>
    %4 = vector.broadcast %3 : vector<1x256xf32> to vector<32x256xf32>
    %5 = arith.addf %2, %4 : vector<32x256xf32>
    %cst_5 = arith.constant 0.000000e+00 : f32
    %6 = vector.broadcast %cst_5 : f32 to vector<32x256xf32>
    %7 = arith.maximumf %5, %6 : vector<32x256xf32>
    %8 = arith.truncf %7 : vector<32x256xf32> to vector<32x256xbf16>
    %c0_6 = arith.constant 0 : index
    %c0_7 = arith.constant 0 : index
    %9 = vector.load %arg4[%c0_6, %c0_7] : memref<32x256xbf16, #tpu.memory_space<vmem>>, vector<32x256xbf16>
    tpu.vector_store %arg4[%c0_6, %c0_7], %8 {strides = array<i32>} : memref<32x256xbf16, #tpu.memory_space<vmem>>, vector<32x256xbf16>,
    return
  }
  func.func @transform_0(%arg0: i32) -> (i32, i32) {
    %c0_i32 = arith.constant 0 : i32
    %c0_i32_0 = arith.constant 0 : i32
    return %arg0, %c0_i32 : i32, i32
  }
  func.func @transform_1(%arg0: i32) -> (i32, i32) {
    %c0_i32 = arith.constant 0 : i32
    %c0_i32_0 = arith.constant 0 : i32
    %c0_i32_1 = arith.constant 0 : i32
    return %c0_i32, %c0_i32_0 : i32, i32
  }
  func.func @transform_2(%arg0: i32) -> (i32, i32) {
    %c0_i32 = arith.constant 0 : i32
    %c0_i32_0 = arith.constant 0 : i32
    %c0_i32_1 = arith.constant 0 : i32
    return %c0_i32, %c0_i32_0 : i32, i32
  }
  func.func @transform_3(%arg0: i32) -> (i32, i32) {
    %c0_i32 = arith.constant 0 : i32
    %c0_i32_0 = arith.constant 0 : i32
    return %arg0, %c0_i32 : i32, i32
  }
}

module attributes {stable_mosaic.version = 11 : i64} {
  func.func @_max4_kernel(%arg0: i32, %arg1: memref<8x256xbf16, #tpu.memory_space<vmem>>, %arg2: memref<8x256xbf16, #tpu.memory_space<vmem>>, %arg3: memref<8x256xbf16, #tpu.memory_space<vmem>>, %arg4: memref<8x256xbf16, #tpu.memory_space<vmem>>, %arg5: memref<8x256xbf16, #tpu.memory_space<vmem>>) attributes {dimension_semantics = [#tpu.dimension_semantics<parallel>], iteration_bounds = array<i64: 1>, scalar_prefetch = 0 : i64, scratch_operands = 0 : i64, tpu.core_type = #tpu.core_type<tc>, window_params = [{transform_indices = @transform_0, window_bounds = array<i64: 8, 256>}, {transform_indices = @transform_1, window_bounds = array<i64: 8, 256>}, {transform_indices = @transform_2, window_bounds = array<i64: 8, 256>}, {transform_indices = @transform_3, window_bounds = array<i64: 8, 256>}, {transform_indices = @transform_4, window_bounds = array<i64: 8, 256>}]} {
    %c0 = arith.constant 0 : index
    %c0_0 = arith.constant 0 : index
    %0 = vector.load %arg1[%c0, %c0_0] : memref<8x256xbf16, #tpu.memory_space<vmem>>, vector<8x256xbf16>
    %c0_1 = arith.constant 0 : index
    %c0_2 = arith.constant 0 : index
    %1 = vector.load %arg2[%c0_1, %c0_2] : memref<8x256xbf16, #tpu.memory_space<vmem>>, vector<8x256xbf16>
    %2 = arith.maximumf %0, %1 : vector<8x256xbf16>
    %c0_3 = arith.constant 0 : index
    %c0_4 = arith.constant 0 : index
    %3 = vector.load %arg3[%c0_3, %c0_4] : memref<8x256xbf16, #tpu.memory_space<vmem>>, vector<8x256xbf16>
    %c0_5 = arith.constant 0 : index
    %c0_6 = arith.constant 0 : index
    %4 = vector.load %arg4[%c0_5, %c0_6] : memref<8x256xbf16, #tpu.memory_space<vmem>>, vector<8x256xbf16>
    %5 = arith.maximumf %3, %4 : vector<8x256xbf16>
    %6 = arith.maximumf %2, %5 : vector<8x256xbf16>
    %c0_7 = arith.constant 0 : index
    %c0_8 = arith.constant 0 : index
    %7 = vector.load %arg5[%c0_7, %c0_8] : memref<8x256xbf16, #tpu.memory_space<vmem>>, vector<8x256xbf16>
    tpu.vector_store %arg5[%c0_7, %c0_8], %6 {strides = array<i32>} : memref<8x256xbf16, #tpu.memory_space<vmem>>, vector<8x256xbf16>,
    return
  }
  func.func @transform_0(%arg0: i32) -> (i32, i32) {
    %c0_i32 = arith.constant 0 : i32
    %c0_i32_0 = arith.constant 0 : i32
    return %arg0, %c0_i32 : i32, i32
  }
  func.func @transform_1(%arg0: i32) -> (i32, i32) {
    %c0_i32 = arith.constant 0 : i32
    %c0_i32_0 = arith.constant 0 : i32
    return %arg0, %c0_i32 : i32, i32
  }
  func.func @transform_2(%arg0: i32) -> (i32, i32) {
    %c0_i32 = arith.constant 0 : i32
    %c0_i32_0 = arith.constant 0 : i32
    return %arg0, %c0_i32 : i32, i32
  }
  func.func @transform_3(%arg0: i32) -> (i32, i32) {
    %c0_i32 = arith.constant 0 : i32
    %c0_i32_0 = arith.constant 0 : i32
    return %arg0, %c0_i32 : i32, i32
  }
  func.func @transform_4(%arg0: i32) -> (i32, i32) {
    %c0_i32 = arith.constant 0 : i32
    %c0_i32_0 = arith.constant 0 : i32
    return %arg0, %c0_i32 : i32, i32
  }
}

module attributes {stable_mosaic.version = 11 : i64} {
  func.func @_fc_fused_kernel(%arg0: i32, %arg1: memref<8x1024xbf16, #tpu.memory_space<vmem>>, %arg2: memref<1024x256xbf16, #tpu.memory_space<vmem>>, %arg3: memref<1x256xf32, #tpu.memory_space<vmem>>, %arg4: memref<256x64xbf16, #tpu.memory_space<vmem>>, %arg5: memref<1x64xf32, #tpu.memory_space<vmem>>, %arg6: memref<64x128xbf16, #tpu.memory_space<vmem>>, %arg7: memref<1x128xf32, #tpu.memory_space<vmem>>, %arg8: memref<8x128xf32, #tpu.memory_space<vmem>>) attributes {dimension_semantics = [#tpu.dimension_semantics<parallel>], iteration_bounds = array<i64: 1>, scalar_prefetch = 0 : i64, scratch_operands = 0 : i64, tpu.core_type = #tpu.core_type<tc>, window_params = [{transform_indices = @transform_0, window_bounds = array<i64: 8, 1024>}, {pipeline_mode = #tpu.pipeline_mode<synchronous>, transform_indices = @transform_1, window_bounds = array<i64: 1024, 256>}, {pipeline_mode = #tpu.pipeline_mode<synchronous>, transform_indices = @transform_2, window_bounds = array<i64: 1, 256>}, {pipeline_mode = #tpu.pipeline_mode<synchronous>, transform_indices = @transform_3, window_bounds = array<i64: 256, 64>}, {pipeline_mode = #tpu.pipeline_mode<synchronous>, transform_indices = @transform_4, window_bounds = array<i64: 1, 64>}, {pipeline_mode = #tpu.pipeline_mode<synchronous>, transform_indices = @transform_5, window_bounds = array<i64: 64, 128>}, {pipeline_mode = #tpu.pipeline_mode<synchronous>, transform_indices = @transform_6, window_bounds = array<i64: 1, 128>}, {transform_indices = @transform_7, window_bounds = array<i64: 8, 128>}]} {
    %c0 = arith.constant 0 : index
    %c0_0 = arith.constant 0 : index
    %0 = vector.load %arg1[%c0, %c0_0] : memref<8x1024xbf16, #tpu.memory_space<vmem>>, vector<8x1024xbf16>
    %c0_1 = arith.constant 0 : index
    %c0_2 = arith.constant 0 : index
    %1 = vector.load %arg2[%c0_1, %c0_2] : memref<1024x256xbf16, #tpu.memory_space<vmem>>, vector<1024x256xbf16>
    %cst = arith.constant dense<0.000000e+00> : vector<8x256xf32>
    %2 = tpu.matmul %0, %1, %cst {dimension_numbers = #tpu.dot_dimension_numbers<[1], [0], [0], [1], [0, 0, 1, 1], [], []>} : vector<8x1024xbf16>, vector<1024x256xbf16>, vector<8x256xf32> -> vector<8x256xf32>
    %c0_3 = arith.constant 0 : index
    %c0_4 = arith.constant 0 : index
    %3 = vector.load %arg3[%c0_3, %c0_4] : memref<1x256xf32, #tpu.memory_space<vmem>>, vector<1x256xf32>
    %4 = vector.broadcast %3 : vector<1x256xf32> to vector<8x256xf32>
    %5 = arith.addf %2, %4 : vector<8x256xf32>
    %cst_5 = arith.constant 0.000000e+00 : f32
    %6 = vector.broadcast %cst_5 : f32 to vector<8x256xf32>
    %7 = arith.maximumf %5, %6 : vector<8x256xf32>
    %8 = arith.truncf %7 : vector<8x256xf32> to vector<8x256xbf16>
    %c0_6 = arith.constant 0 : index
    %c0_7 = arith.constant 0 : index
    %9 = vector.load %arg4[%c0_6, %c0_7] : memref<256x64xbf16, #tpu.memory_space<vmem>>, vector<256x64xbf16>
    %cst_8 = arith.constant dense<0.000000e+00> : vector<8x64xf32>
    %10 = tpu.matmul %8, %9, %cst_8 {dimension_numbers = #tpu.dot_dimension_numbers<[1], [0], [0], [1], [0, 0, 1, 1], [], []>} : vector<8x256xbf16>, vector<256x64xbf16>, vector<8x64xf32> -> vector<8x64xf32>
    %c0_9 = arith.constant 0 : index
    %c0_10 = arith.constant 0 : index
    %11 = vector.load %arg5[%c0_9, %c0_10] : memref<1x64xf32, #tpu.memory_space<vmem>>, vector<1x64xf32>
    %12 = vector.broadcast %11 : vector<1x64xf32> to vector<8x64xf32>
    %13 = arith.addf %10, %12 : vector<8x64xf32>
    %cst_11 = arith.constant 0.000000e+00 : f32
    %14 = vector.broadcast %cst_11 : f32 to vector<8x64xf32>
    %15 = arith.maximumf %13, %14 : vector<8x64xf32>
    %16 = arith.truncf %15 : vector<8x64xf32> to vector<8x64xbf16>
    %c0_12 = arith.constant 0 : index
    %c0_13 = arith.constant 0 : index
    %17 = vector.load %arg6[%c0_12, %c0_13] : memref<64x128xbf16, #tpu.memory_space<vmem>>, vector<64x128xbf16>
    %cst_14 = arith.constant dense<0.000000e+00> : vector<8x128xf32>
    %18 = tpu.matmul %16, %17, %cst_14 {dimension_numbers = #tpu.dot_dimension_numbers<[1], [0], [0], [1], [0, 0, 1, 1], [], []>} : vector<8x64xbf16>, vector<64x128xbf16>, vector<8x128xf32> -> vector<8x128xf32>
    %c0_15 = arith.constant 0 : index
    %c0_16 = arith.constant 0 : index
    %19 = vector.load %arg7[%c0_15, %c0_16] : memref<1x128xf32, #tpu.memory_space<vmem>>, vector<1x128xf32>
    %20 = vector.broadcast %19 : vector<1x128xf32> to vector<8x128xf32>
    %21 = arith.addf %18, %20 : vector<8x128xf32>
    %c0_17 = arith.constant 0 : index
    %c0_18 = arith.constant 0 : index
    %22 = vector.load %arg8[%c0_17, %c0_18] : memref<8x128xf32, #tpu.memory_space<vmem>>, vector<8x128xf32>
    tpu.vector_store %arg8[%c0_17, %c0_18], %21 {strides = array<i32>} : memref<8x128xf32, #tpu.memory_space<vmem>>, vector<8x128xf32>,
    return
  }
  func.func @transform_0(%arg0: i32) -> (i32, i32) {
    %c0_i32 = arith.constant 0 : i32
    %c0_i32_0 = arith.constant 0 : i32
    return %arg0, %c0_i32 : i32, i32
  }
  func.func @transform_1(%arg0: i32) -> (i32, i32) {
    %c0_i32 = arith.constant 0 : i32
    %c0_i32_0 = arith.constant 0 : i32
    %c0_i32_1 = arith.constant 0 : i32
    return %c0_i32, %c0_i32_0 : i32, i32
  }
  func.func @transform_2(%arg0: i32) -> (i32, i32) {
    %c0_i32 = arith.constant 0 : i32
    %c0_i32_0 = arith.constant 0 : i32
    %c0_i32_1 = arith.constant 0 : i32
    return %c0_i32, %c0_i32_0 : i32, i32
  }
  func.func @transform_3(%arg0: i32) -> (i32, i32) {
    %c0_i32 = arith.constant 0 : i32
    %c0_i32_0 = arith.constant 0 : i32
    %c0_i32_1 = arith.constant 0 : i32
    return %c0_i32, %c0_i32_0 : i32, i32
  }
  func.func @transform_4(%arg0: i32) -> (i32, i32) {
    %c0_i32 = arith.constant 0 : i32
    %c0_i32_0 = arith.constant 0 : i32
    %c0_i32_1 = arith.constant 0 : i32
    return %c0_i32, %c0_i32_0 : i32, i32
  }
  func.func @transform_5(%arg0: i32) -> (i32, i32) {
    %c0_i32 = arith.constant 0 : i32
    %c0_i32_0 = arith.constant 0 : i32
    %c0_i32_1 = arith.constant 0 : i32
    return %c0_i32, %c0_i32_0 : i32, i32
  }
  func.func @transform_6(%arg0: i32) -> (i32, i32) {
    %c0_i32 = arith.constant 0 : i32
    %c0_i32_0 = arith.constant 0 : i32
    %c0_i32_1 = arith.constant 0 : i32
    return %c0_i32, %c0_i32_0 : i32, i32
  }
  func.func @transform_7(%arg0: i32) -> (i32, i32) {
    %c0_i32 = arith.constant 0 : i32
    %c0_i32_0 = arith.constant 0 : i32
    return %arg0, %c0_i32 : i32, i32
  }
}

</mosaic_0001>

<llo_original>
// kernel: net_forward.9
$region0: #{net_forward.9}
  #allocation0 [shape = 'u32[]', space=smem, size = 0x4, offset = 0x4, fixed_abs, tag = 'smem constant byte address 0x4 - core index']
  #allocation1 [shape = 'u32[144,128]{1,0:T(1,128)}', space=vmem, size = 0x12000, scoped, tag = 'internal scratch']
  %s0 = inlined_call_operand.vmem [shape: bf16[2048,27], index: 0, kind: input, shape index: {}]
  %s1 = inlined_call_operand.vmem [shape: bf16[27,32], index: 1, kind: input, shape index: {}]
  %s2 = inlined_call_operand.vmem [shape: f32[1,32], index: 2, kind: input, shape index: {}]
  %s3 = inlined_call_operand.vmem [shape: bf16[2048,32], index: 3, kind: output, shape index: {}]
  %s4 = sld [smem:[#allocation0]]
  $region45: #{net_forward.9} parent=0
    _
  %s6 = ssub.s32 1, %s4
  %s7 = scalar_select 0, %s6, %s4
  loop: start=0, step=1, limit=6
  $region2: #{net_forward.9} parent=0 // loop_pre_header
    _
  $region3: #{net_forward.9} parent=0 // loop_header
    %s9 = sphi 0, %s13
    %p10 = scmp.ge.s32.totalorder %s9, 6
    %s19 = sphi 0, %s21
    %s22 = sphi 0, %s19
    %s23 = sphi 0, %s22
    %s39 = sphi 0, %s23
    %s43 = sphi 0, %s43
    %s45 = sphi 0, %s43
    %s46 = sphi 0, %s45
    %s60 = sphi 0, %s46
    %s64 = sphi 0, %s64
    %s66 = sphi 0, %s64
    %s67 = sphi 0, %s66
    %s81 = sphi 0, %s67
    %s87 = sphi 0, %s89
    %s90 = sphi 0, %s87
    %s91 = sphi 0, %s90
    %s107 = sphi 0, %s91
  $region4: #{net_forward.9} parent=0 // loop_header_branch
    %12 = sbr.rel (%p10) target = $region8
  $region5: #{net_forward.9} parent=0 // loop_body
    %s14 = ssub.s32 %s9, 1
    %s15 = ssub.s32 %s9, 2
    %s16 = sadd.s32 %s9, 1
    %s17 = ssub.s32 %s9, %s16
    %p18 = scmp.eq.s32.totalorder %s17, 0
    %s20 = sadd.s32 %s19, 1
    %s21 = scalar_select %p18, %s19, %s20
    %p24 = pneg %p18
    %p25 = scmp.eq.s32.totalorder %s9, 3
    %p26 = por %p24, %p25
    %p27 = scmp.ne.s32.totalorder %s19, %s22
    %p28 = scmp.eq.s32.totalorder %s9, 0
    %p29 = por %p27, %p28
    %p30 = scmp.ne.s32.totalorder %s19, %s22
    %p31 = scmp.eq.s32.totalorder %s14, 3
    %p32 = por %p30, %p31
    %p33 = scmp.ne.s32.totalorder %s22, %s23
    %p34 = scmp.eq.s32.totalorder %s14, 0
    %p35 = por %p33, %p34
    %p36 = scmp.ne.s32.totalorder %s22, %s23
    %p37 = scmp.eq.s32.totalorder %s15, 3
    %p38 = por %p36, %p37
    %p40 = scmp.ne.s32.totalorder %s23, %s39
    %p41 = scmp.eq.s32.totalorder %s15, 0
    %p42 = por %p40, %p41
    %s44 = sadd.s32 %s43, 1
    %p47 = scmp.eq.s32.totalorder %s9, 3
    %p48 = scmp.ne.s32.totalorder %s43, %s45
    %p49 = scmp.eq.s32.totalorder %s9, 0
    %p50 = por %p48, %p49
    %p51 = scmp.ne.s32.totalorder %s43, %s45
    %p52 = scmp.eq.s32.totalorder %s14, 3
    %p53 = por %p51, %p52
    %p54 = scmp.ne.s32.totalorder %s45, %s46
    %p55 = scmp.eq.s32.totalorder %s14, 0
    %p56 = por %p54, %p55
    %p57 = scmp.ne.s32.totalorder %s45, %s46
    %p58 = scmp.eq.s32.totalorder %s15, 3
    %p59 = por %p57, %p58
    %p61 = scmp.ne.s32.totalorder %s46, %s60
    %p62 = scmp.eq.s32.totalorder %s15, 0
    %p63 = por %p61, %p62
    %s65 = sadd.s32 %s64, 1
    %p68 = scmp.eq.s32.totalorder %s9, 3
    %p69 = scmp.ne.s32.totalorder %s64, %s66
    %p70 = scmp.eq.s32.totalorder %s9, 0
    %p71 = por %p69, %p70
    %p72 = scmp.ne.s32.totalorder %s64, %s66
    %p73 = scmp.eq.s32.totalorder %s14, 3
    %p74 = por %p72, %p73
    %p75 = scmp.ne.s32.totalorder %s66, %s67
    %p76 = scmp.eq.s32.totalorder %s14, 0
    %p77 = por %p75, %p76
    %p78 = scmp.ne.s32.totalorder %s66, %s67
    %p79 = scmp.eq.s32.totalorder %s15, 3
    %p80 = por %p78, %p79
    %p82 = scmp.ne.s32.totalorder %s67, %s81
    %p83 = scmp.eq.s32.totalorder %s15, 0
    %p84 = por %p82, %p83
    %s85 = ssub.s32 %s9, %s16
    %p86 = scmp.eq.s32.totalorder %s85, 0
    %s88 = sadd.s32 %s87, 1
    %s89 = scalar_select %p86, %s87, %s88
    %p92 = pneg %p86
    %p93 = scmp.eq.s32.totalorder %s9, 3
    %p94 = por %p92, %p93
    %p95 = scmp.ne.s32.totalorder %s87, %s90
    %p96 = scmp.eq.s32.totalorder %s9, 0
    %p97 = por %p95, %p96
    %p98 = scmp.ne.s32.totalorder %s87, %s90
    %p99 = scmp.eq.s32.totalorder %s14, 3
    %p100 = por %p98, %p99
    %p101 = scmp.ne.s32.totalorder %s90, %s91
    %p102 = scmp.eq.s32.totalorder %s14, 0
    %p103 = por %p101, %p102
    %p104 = scmp.ne.s32.totalorder %s90, %s91
    %p105 = scmp.eq.s32.totalorder %s15, 3
    %p106 = por %p104, %p105
    %p108 = scmp.ne.s32.totalorder %s91, %s107
    %p109 = scmp.eq.s32.totalorder %s15, 0
    %p110 = por %p108, %p109
    %p111 = scmp.le.s32.totalorder 1, %s9
    %p112 = scmp.lt.s32.totalorder %s9, 5
    %p113 = pnand %p111, %p112
    %p114 = pneg %p113
    // Predicated region
    $region9: #{net_forward.9} parent=5 // pred_check
      _
    $region10: #{net_forward.9} parent=5 // pred_check_branch
      %116 = sbr.rel (%p113) target = $region12
    $region11: #{net_forward.9} parent=5 // pred_region
      %s117 = ssub.s32 %s9, 1
      // Predicated region
      $region13: #{net_forward.9} parent=11 // pred_check
        %p118 = pneg %p56
      $region14: #{net_forward.9} parent=11 // pred_check_branch
        %120 = sbr.rel (%p118) target = $region16
      $region15: #{net_forward.9} parent=11 // pred_region
        _
      $region16: #{net_forward.9} parent=11 // pred_fallthru
        _
      // Predicated region
      $region17: #{net_forward.9} parent=11 // pred_check
        %p121 = pneg %p77
      $region18: #{net_forward.9} parent=11 // pred_check_branch
        %123 = sbr.rel (%p121) target = $region20
      $region19: #{net_forward.9} parent=11 // pred_region
        _
      $region20: #{net_forward.9} parent=11 // pred_fallthru
        _
    $region12: #{net_forward.9} parent=5 // pred_fallthru
      _
    %p124 = scmp.lt.s32.totalorder %s9, 4
    // Predicated region
    $region21: #{net_forward.9} parent=5 // pred_check
      %p125 = pneg %p124
    $region22: #{net_forward.9} parent=5 // pred_check_branch
      %127 = sbr.rel (%p125) target = $region24
    $region23: #{net_forward.9} parent=5 // pred_region
      // Predicated region
      $region25: #{net_forward.9} parent=23 // pred_check
        %p128 = pneg %p29
      $region26: #{net_forward.9} parent=23 // pred_check_branch
        %130 = sbr.rel (%p128) target = $region28
      $region27: #{net_forward.9} parent=23 // pred_region
        %s131 = smul.u32 64, %s9
        %p132 = scmp.lt.s32.totalorder %s131, 255
        %s133 = scalar_select %p132, %s131, 255
        %s134 = smul.addr %s133, 4
        %s135 = scalar_lea.vmem %s0, %s134
        %s136 = smul.u32 64, %s9
      $region28: #{net_forward.9} parent=23 // pred_fallthru
        _
    $region24: #{net_forward.9} parent=5 // pred_fallthru
      _
    %p137 = scmp.le.s32.totalorder 1, %s9
    %p138 = scmp.lt.s32.totalorder %s9, 5
    %p139 = pnand %p137, %p138
    %p140 = pneg %p139
    // Predicated region
    $region29: #{net_forward.9} parent=5 // pred_check
      _
    $region30: #{net_forward.9} parent=5 // pred_check_branch
      %142 = sbr.rel (%p139) target = $region32
    $region31: #{net_forward.9} parent=5 // pred_region
      %s143 = ssub.s32 %s9, 1
      %s144 = smul.u32 64, %s14
      %p145 = scmp.lt.s32.totalorder %s144, 255
      %s146 = scalar_select %p145, %s144, 255
      %s147 = smul.addr %s146, 4
      %s148 = scalar_lea.vmem %s0, %s147
      %p149 = pneg %p35
      %p150 = pneg %p32
      %p151 = pneg %p56
      %p152 = pneg %p53
      %p153 = pneg %p77
      %p154 = pneg %p74
      %p155 = pneg %p103
      %p156 = pneg %p100
      %s157 = smul.u32 64, %s14
      %p158 = scmp.lt.s32.totalorder %s157, 255
      %s159 = scalar_select %p158, %s157, 255
      %s160 = smul.addr %s159, 4
      %s161 = scalar_lea.vmem %s3, %s160
      %s162 = smul.u32 64, %s14
      %p163 = scmp.lt.s32.totalorder %s162, 255
      %s164 = scalar_select %p163, %s162, 255
      %s165 = smul.addr %s164, 4
      %s166 = scalar_lea.vmem %s0, %s165
      %s167 = smul.u32 64, %s14
      %s168 = smul.u32 64, %s14
      %p169 = scmp.lt.s32.totalorder %s168, 255
      %s170 = scalar_select %p169, %s168, 255
      %s171 = smul.addr %s170, 4
      %s172 = scalar_lea.vmem %s3, %s171
      %s173 = smul.u32 64, %s14
      %v175 = vld [vmem:[%s166] sm:$0xf]
      %v176 = vld [vmem:[%s166 + $0x4] sm:$0xf]
      %v177 = vld [vmem:[%s166 + $0x8] sm:$0xf]
      %v178 = vld [vmem:[%s166 + $0xc] sm:$0xf]
      %v179 = vld [vmem:[%s166 + $0x10] sm:$0xf]
      %v180 = vld [vmem:[%s166 + $0x14] sm:$0xf]
      %v181 = vld [vmem:[%s166 + $0x18] sm:$0xf]
      %v182 = vld [vmem:[%s166 + $0x1c] sm:$0xf]
      %v183 = vld [vmem:[%s166 + $0x20] sm:$0xf]
      %v184 = vld [vmem:[%s166 + $0x24] sm:$0xf]
      %v185 = vld [vmem:[%s166 + $0x28] sm:$0xf]
      %v186 = vld [vmem:[%s166 + $0x2c] sm:$0xf]
      %v187 = vld [vmem:[%s166 + $0x30] sm:$0xf]
      %v188 = vld [vmem:[%s166 + $0x34] sm:$0xf]
      %v189 = vld [vmem:[%s166 + $0x38] sm:$0xf]
      %v190 = vld [vmem:[%s166 + $0x3c] sm:$0xf]
      %v191 = vld [vmem:[%s166 + $0x40] sm:$0xf]
      %v192 = vld [vmem:[%s166 + $0x44] sm:$0xf]
      %v193 = vld [vmem:[%s166 + $0x48] sm:$0xf]
      %v194 = vld [vmem:[%s166 + $0x4c] sm:$0xf]
      %v195 = vld [vmem:[%s166 + $0x50] sm:$0xf]
      %v196 = vld [vmem:[%s166 + $0x54] sm:$0xf]
      %v197 = vld [vmem:[%s166 + $0x58] sm:$0xf]
      %v198 = vld [vmem:[%s166 + $0x5c] sm:$0xf]
      %v199 = vld [vmem:[%s166 + $0x60] sm:$0xf]
      %v200 = vld [vmem:[%s166 + $0x64] sm:$0xf]
      %v201 = vld [vmem:[%s166 + $0x68] sm:$0xf]
      %v202 = vld [vmem:[%s166 + $0x6c] sm:$0xf]
      %v203 = vld [vmem:[%s166 + $0x70] sm:$0xf]
      %v204 = vld [vmem:[%s166 + $0x74] sm:$0xf]
      %v205 = vld [vmem:[%s166 + $0x78] sm:$0xf]
      %v206 = vld [vmem:[%s166 + $0x7c] sm:$0xf]
      %v207 = vld [vmem:[%s166 + $0x80] sm:$0xf]
      %v208 = vld [vmem:[%s166 + $0x84] sm:$0xf]
      %v209 = vld [vmem:[%s166 + $0x88] sm:$0xf]
      %v210 = vld [vmem:[%s166 + $0x8c] sm:$0xf]
      %v211 = vld [vmem:[%s166 + $0x90] sm:$0xf]
      %v212 = vld [vmem:[%s166 + $0x94] sm:$0xf]
      %v213 = vld [vmem:[%s166 + $0x98] sm:$0xf]
      %v214 = vld [vmem:[%s166 + $0x9c] sm:$0xf]
      %v215 = vld [vmem:[%s166 + $0xa0] sm:$0xf]
      %v216 = vld [vmem:[%s166 + $0xa4] sm:$0xf]
      %v217 = vld [vmem:[%s166 + $0xa8] sm:$0xf]
      %v218 = vld [vmem:[%s166 + $0xac] sm:$0xf]
      %v219 = vld [vmem:[%s166 + $0xb0] sm:$0xf]
      %v220 = vld [vmem:[%s166 + $0xb4] sm:$0xf]
      %v221 = vld [vmem:[%s166 + $0xb8] sm:$0xf]
      %v222 = vld [vmem:[%s166 + $0xbc] sm:$0xf]
      %v223 = vld [vmem:[%s166 + $0xc0] sm:$0xf]
      %v224 = vld [vmem:[%s166 + $0xc4] sm:$0xf]
      %v225 = vld [vmem:[%s166 + $0xc8] sm:$0xf]
      %v226 = vld [vmem:[%s166 + $0xcc] sm:$0xf]
      %v227 = vld [vmem:[%s166 + $0xd0] sm:$0xf]
      %v228 = vld [vmem:[%s166 + $0xd4] sm:$0xf]
      %v229 = vld [vmem:[%s166 + $0xd8] sm:$0xf]
      %v230 = vld [vmem:[%s166 + $0xdc] sm:$0xf]
      %v231 = vld [vmem:[%s166 + $0xe0] sm:$0xf]
      %v232 = vld [vmem:[%s166 + $0xe4] sm:$0xf]
      %v233 = vld [vmem:[%s166 + $0xe8] sm:$0xf]
      %v234 = vld [vmem:[%s166 + $0xec] sm:$0xf]
      %v235 = vld [vmem:[%s166 + $0xf0] sm:$0xf]
      %v236 = vld [vmem:[%s166 + $0xf4] sm:$0xf]
      %v237 = vld [vmem:[%s166 + $0xf8] sm:$0xf]
      %v238 = vld [vmem:[%s166 + $0xfc] sm:$0xf]
      %v239 = vld [vmem:[%s1] sm:$0xf]
      %v240 = vld [vmem:[%s1 + $0x4] sm:$0xf]
      %v241 = vld [vmem:[%s1 + $0x8] sm:$0xf]
      %v242 = vld [vmem:[%s1 + $0xc] sm:$0x3]
      %v243 = vld [vmem:[%s2] sm:$0x1]
      %v245 = vlaneseq
      %v246 = vshrl.u32 %v245, 7
      %v247 = vsub.s32 0, %v246
      %v248 = vrot.slane %v243, %v247
      %v314 = vunpack.c.l.b16 %v175
      %v315 = vunpack.c.l.b16 %v176
      %v316 = vunpack.c.l.b16 %v177
      %v317 = vunpack.c.l.b16 %v178
      %v318 = vunpack.c.l.b16 %v179
      %v319 = vunpack.c.l.b16 %v180
      %v320 = vunpack.c.l.b16 %v181
      %v321 = vunpack.c.l.b16 %v182
      %v322 = vunpack.c.l.b16 %v183
      %v323 = vunpack.c.l.b16 %v184
      %v324 = vunpack.c.l.b16 %v185
      %v325 = vunpack.c.l.b16 %v186
      %v326 = vunpack.c.l.b16 %v187
      %v327 = vunpack.c.l.b16 %v188
      %v328 = vunpack.c.l.b16 %v189
      %v329 = vunpack.c.l.b16 %v190
      %v330 = vunpack.c.l.b16 %v191
      %v331 = vunpack.c.l.b16 %v192
      %v332 = vunpack.c.l.b16 %v193
      %v333 = vunpack.c.l.b16 %v194
      %v334 = vunpack.c.l.b16 %v195
      %v335 = vunpack.c.l.b16 %v196
      %v336 = vunpack.c.l.b16 %v197
      %v337 = vunpack.c.l.b16 %v198
      %v338 = vunpack.c.l.b16 %v199
      %v339 = vunpack.c.l.b16 %v200
      %v340 = vunpack.c.l.b16 %v201
      %v341 = vunpack.c.l.b16 %v202
      %v342 = vunpack.c.l.b16 %v203
      %v343 = vunpack.c.l.b16 %v204
      %v344 = vunpack.c.l.b16 %v205
      %v345 = vunpack.c.l.b16 %v206
      %v346 = vunpack.c.l.b16 %v207
      %v347 = vunpack.c.l.b16 %v208
      %v348 = vunpack.c.l.b16 %v209
      %v349 = vunpack.c.l.b16 %v210
      %v350 = vunpack.c.l.b16 %v211
      %v351 = vunpack.c.l.b16 %v212
      %v352 = vunpack.c.l.b16 %v213
      %v353 = vunpack.c.l.b16 %v214
      %v354 = vunpack.c.l.b16 %v215
      %v355 = vunpack.c.l.b16 %v216
      %v356 = vunpack.c.l.b16 %v217
      %v357 = vunpack.c.l.b16 %v218
      %v358 = vunpack.c.l.b16 %v219
      %v359 = vunpack.c.l.b16 %v220
      %v360 = vunpack.c.l.b16 %v221
      %v361 = vunpack.c.l.b16 %v222
      %v362 = vunpack.c.l.b16 %v223
      %v363 = vunpack.c.l.b16 %v224
      %v364 = vunpack.c.l.b16 %v225
      %v365 = vunpack.c.l.b16 %v226
      %v366 = vunpack.c.l.b16 %v227
      %v367 = vunpack.c.l.b16 %v228
      %v368 = vunpack.c.l.b16 %v229
      %v369 = vunpack.c.l.b16 %v230
      %v370 = vunpack.c.l.b16 %v231
      %v371 = vunpack.c.l.b16 %v232
      %v372 = vunpack.c.l.b16 %v233
      %v373 = vunpack.c.l.b16 %v234
      %v374 = vunpack.c.l.b16 %v235
      %v375 = vunpack.c.l.b16 %v236
      %v376 = vunpack.c.l.b16 %v237
      %v377 = vunpack.c.l.b16 %v238
      %v378 = vpack.c.b16 %v315, %v314
      %v379 = vpack.c.b16 %v317, %v316
      %v380 = vpack.c.b16 %v319, %v318
      %v381 = vpack.c.b16 %v321, %v320
      %v382 = vpack.c.b16 %v323, %v322
      %v383 = vpack.c.b16 %v325, %v324
      %v384 = vpack.c.b16 %v327, %v326
      %v385 = vpack.c.b16 %v329, %v328
      %v386 = vpack.c.b16 %v331, %v330
      %v387 = vpack.c.b16 %v333, %v332
      %v388 = vpack.c.b16 %v335, %v334
      %v389 = vpack.c.b16 %v337, %v336
      %v390 = vpack.c.b16 %v339, %v338
      %v391 = vpack.c.b16 %v341, %v340
      %v392 = vpack.c.b16 %v343, %v342
      %v393 = vpack.c.b16 %v345, %v344
      %v394 = vpack.c.b16 %v347, %v346
      %v395 = vpack.c.b16 %v349, %v348
      %v396 = vpack.c.b16 %v351, %v350
      %v397 = vpack.c.b16 %v353, %v352
      %v398 = vpack.c.b16 %v355, %v354
      %v399 = vpack.c.b16 %v357, %v356
      %v400 = vpack.c.b16 %v359, %v358
      %v401 = vpack.c.b16 %v361, %v360
      %v402 = vpack.c.b16 %v363, %v362
      %v403 = vpack.c.b16 %v365, %v364
      %v404 = vpack.c.b16 %v367, %v366
      %v405 = vpack.c.b16 %v369, %v368
      %v406 = vpack.c.b16 %v371, %v370
      %v407 = vpack.c.b16 %v373, %v372
      %v408 = vpack.c.b16 %v375, %v374
      %v409 = vpack.c.b16 %v377, %v376
      %v414 = vunpack.c.l.b16 %v239
      %v415 = vunpack.c.l.b16 %v240
      %v416 = vunpack.c.l.b16 %v241
      %v417 = vunpack.c.l.b16 %v242
      %v418 = vpack.c.b16 %v415, %v414
      %v419 = vpack.c.b16 %v417, %v416
      %vm421 = vcmask 220160
      %v423 = vsel %vm421, %v378, 0
      %v426 = vsel %vm421, %v379, 0
      %v429 = vsel %vm421, %v380, 0
      %v432 = vsel %vm421, %v381, 0
      %v435 = vsel %vm421, %v382, 0
      %v438 = vsel %vm421, %v383, 0
      %v441 = vsel %vm421, %v384, 0
      %v444 = vsel %vm421, %v385, 0
      %v447 = vsel %vm421, %v386, 0
      %v450 = vsel %vm421, %v387, 0
      %v453 = vsel %vm421, %v388, 0
      %v456 = vsel %vm421, %v389, 0
      %v459 = vsel %vm421, %v390, 0
      %v462 = vsel %vm421, %v391, 0
      %v465 = vsel %vm421, %v392, 0
      %v468 = vsel %vm421, %v393, 0
      %v471 = vsel %vm421, %v394, 0
      %v474 = vsel %vm421, %v395, 0
      %v477 = vsel %vm421, %v396, 0
      %v480 = vsel %vm421, %v397, 0
      %v483 = vsel %vm421, %v398, 0
      %v486 = vsel %vm421, %v399, 0
      %v489 = vsel %vm421, %v400, 0
      %v492 = vsel %vm421, %v401, 0
      %v495 = vsel %vm421, %v402, 0
      %v498 = vsel %vm421, %v403, 0
      %v501 = vsel %vm421, %v404, 0
      %v504 = vsel %vm421, %v405, 0
      %v507 = vsel %vm421, %v406, 0
      %v510 = vsel %vm421, %v407, 0
      %v513 = vsel %vm421, %v408, 0
      %v516 = vsel %vm421, %v409, 0
      %vm518 = vcmask 1044480
      %vm519 = vcmask 1045504
      %v520 = vsel %vm518, 4294967295, 65535
      %v521 = vsel %vm519, %v520, 0
      %v523 = vand.u32 %v419, %v521
      %525 = vmatprep.subr.bf16.mxu0 0
      %526 = vmatpush1.bf16.msra.mxu0 %v418
      %527 = vmatprep.subr.bf16.mxu0 0
      %528 = vmatpush1.bf16.msra.mxu0 %v523
      %529 = vmatprep.subr.bf16.mxu0 0
      %530 = vmatpush1.bf16.msra.mxu0 0
      %531 = vmatprep.subr.bf16.mxu0 0
      %532 = vmatpush1.bf16.msra.mxu0 0
      %533 = vmatprep.subr.bf16.mxu0 0
      %534 = vmatpush1.bf16.msra.mxu0 0
      %535 = vmatprep.subr.bf16.mxu0 0
      %536 = vmatpush1.bf16.msra.mxu0 0
      %537 = vmatprep.subr.bf16.mxu0 0
      %538 = vmatpush1.bf16.msra.mxu0 0
      %539 = vmatprep.subr.bf16.mxu0 0
      %540 = vmatpush1.bf16.msra.mxu0 0
      %541 = vmatprep.subr.bf16.mxu0 0
      %542 = vmatpush1.bf16.msra.mxu0 0
      %543 = vmatprep.subr.bf16.mxu0 0
      %544 = vmatpush1.bf16.msra.mxu0 0
      %545 = vmatprep.subr.bf16.mxu0 0
      %546 = vmatpush1.bf16.msra.mxu0 0
      %547 = vmatprep.subr.bf16.mxu0 0
      %548 = vmatpush1.bf16.msra.mxu0 0
      %549 = vmatprep.subr.bf16.mxu0 0
      %550 = vmatpush1.bf16.msra.mxu0 0
      %551 = vmatprep.subr.bf16.mxu0 0
      %552 = vmatpush1.bf16.msra.mxu0 0
      %553 = vmatprep.subr.bf16.mxu0 0
      %554 = vmatpush1.bf16.msra.mxu0 0
      %555 = vmatprep.subr.bf16.mxu0 0
      %556 = vmatpush1.bf16.msra.mxu0 0
      %557 = vmatprep.mubr.bf16.mxu0 0
      %558 = vmatmul.mubr.bf16.gmra.mrb[0].mxu0 %v423
      %v559 = vpop.f32.mrb[0].mxu0
      %v560 = vadd.f32 %v248, %v559
      %v561 = vpop.f32.mrb[0].mxu0
      %v562 = vpop.f32.mrb[0].mxu0
      %v563 = vadd.f32 %v248, %v562
      %v564 = vpop.f32.mrb[0].mxu0
      %565 = vmatprep.mubr.bf16.mxu0 0
      %566 = vmatmul.mubr.bf16.gmra.mrb[0].mxu0 %v426
      %v567 = vpop.f32.mrb[0].mxu0
      %v568 = vadd.f32 %v248, %v567
      %v569 = vpop.f32.mrb[0].mxu0
      %v570 = vpop.f32.mrb[0].mxu0
      %v571 = vadd.f32 %v248, %v570
      %v572 = vpop.f32.mrb[0].mxu0
      %573 = vmatprep.mubr.bf16.mxu0 0
      %574 = vmatmul.mubr.bf16.gmra.mrb[0].mxu0 %v429
      %v575 = vpop.f32.mrb[0].mxu0
      %v576 = vadd.f32 %v248, %v575
      %v577 = vpop.f32.mrb[0].mxu0
      %v578 = vpop.f32.mrb[0].mxu0
      %v579 = vadd.f32 %v248, %v578
      %v580 = vpop.f32.mrb[0].mxu0
      %581 = vmatprep.mubr.bf16.mxu0 0
      %582 = vmatmul.mubr.bf16.gmra.mrb[0].mxu0 %v432
      %v583 = vpop.f32.mrb[0].mxu0
      %v584 = vadd.f32 %v248, %v583
      %v585 = vpop.f32.mrb[0].mxu0
      %v586 = vpop.f32.mrb[0].mxu0
      %v587 = vadd.f32 %v248, %v586
      %v588 = vpop.f32.mrb[0].mxu0
      %589 = vmatprep.mubr.bf16.mxu0 0
      %590 = vmatmul.mubr.bf16.gmra.mrb[0].mxu0 %v435
      %v591 = vpop.f32.mrb[0].mxu0
      %v592 = vadd.f32 %v248, %v591
      %v593 = vpop.f32.mrb[0].mxu0
      %v594 = vpop.f32.mrb[0].mxu0
      %v595 = vadd.f32 %v248, %v594
      %v596 = vpop.f32.mrb[0].mxu0
      %597 = vmatprep.mubr.bf16.mxu0 0
      %598 = vmatmul.mubr.bf16.gmra.mrb[0].mxu0 %v438
      %v599 = vpop.f32.mrb[0].mxu0
      %v600 = vadd.f32 %v248, %v599
      %v601 = vpop.f32.mrb[0].mxu0
      %v602 = vpop.f32.mrb[0].mxu0
      %v603 = vadd.f32 %v248, %v602
      %v604 = vpop.f32.mrb[0].mxu0
      %605 = vmatprep.mubr.bf16.mxu0 0
      %606 = vmatmul.mubr.bf16.gmra.mrb[0].mxu0 %v441
      %v607 = vpop.f32.mrb[0].mxu0
      %v608 = vadd.f32 %v248, %v607
      %v609 = vpop.f32.mrb[0].mxu0
      %v610 = vpop.f32.mrb[0].mxu0
      %v611 = vadd.f32 %v248, %v610
      %v612 = vpop.f32.mrb[0].mxu0
      %613 = vmatprep.mubr.bf16.mxu0 0
      %614 = vmatmul.mubr.bf16.gmra.mrb[0].mxu0 %v444
      %v615 = vpop.f32.mrb[0].mxu0
      %v616 = vadd.f32 %v248, %v615
      %v617 = vpop.f32.mrb[0].mxu0
      %v618 = vpop.f32.mrb[0].mxu0
      %v619 = vadd.f32 %v248, %v618
      %v620 = vpop.f32.mrb[0].mxu0
      %621 = vmatprep.mubr.bf16.mxu0 0
      %622 = vmatmul.mubr.bf16.gmra.mrb[0].mxu0 %v447
      %v623 = vpop.f32.mrb[0].mxu0
      %v624 = vadd.f32 %v248, %v623
      %v625 = vpop.f32.mrb[0].mxu0
      %v626 = vpop.f32.mrb[0].mxu0
      %v627 = vadd.f32 %v248, %v626
      %v628 = vpop.f32.mrb[0].mxu0
      %629 = vmatprep.mubr.bf16.mxu0 0
      %630 = vmatmul.mubr.bf16.gmra.mrb[0].mxu0 %v450
      %v631 = vpop.f32.mrb[0].mxu0
      %v632 = vadd.f32 %v248, %v631
      %v633 = vpop.f32.mrb[0].mxu0
      %v634 = vpop.f32.mrb[0].mxu0
      %v635 = vadd.f32 %v248, %v634
      %v636 = vpop.f32.mrb[0].mxu0
      %637 = vmatprep.mubr.bf16.mxu0 0
      %638 = vmatmul.mubr.bf16.gmra.mrb[0].mxu0 %v453
      %v639 = vpop.f32.mrb[0].mxu0
      %v640 = vadd.f32 %v248, %v639
      %v641 = vpop.f32.mrb[0].mxu0
      %v642 = vpop.f32.mrb[0].mxu0
      %v643 = vadd.f32 %v248, %v642
      %v644 = vpop.f32.mrb[0].mxu0
      %645 = vmatprep.mubr.bf16.mxu0 0
      %646 = vmatmul.mubr.bf16.gmra.mrb[0].mxu0 %v456
      %v647 = vpop.f32.mrb[0].mxu0
      %v648 = vadd.f32 %v248, %v647
      %v649 = vpop.f32.mrb[0].mxu0
      %v650 = vpop.f32.mrb[0].mxu0
      %v651 = vadd.f32 %v248, %v650
      %v652 = vpop.f32.mrb[0].mxu0
      %653 = vmatprep.mubr.bf16.mxu0 0
      %654 = vmatmul.mubr.bf16.gmra.mrb[0].mxu0 %v459
      %v655 = vpop.f32.mrb[0].mxu0
      %v656 = vadd.f32 %v248, %v655
      %v657 = vpop.f32.mrb[0].mxu0
      %v658 = vpop.f32.mrb[0].mxu0
      %v659 = vadd.f32 %v248, %v658
      %v660 = vpop.f32.mrb[0].mxu0
      %661 = vmatprep.mubr.bf16.mxu0 0
      %662 = vmatmul.mubr.bf16.gmra.mrb[0].mxu0 %v462
      %v663 = vpop.f32.mrb[0].mxu0
      %v664 = vadd.f32 %v248, %v663
      %v665 = vpop.f32.mrb[0].mxu0
      %v666 = vpop.f32.mrb[0].mxu0
      %v667 = vadd.f32 %v248, %v666
      %v668 = vpop.f32.mrb[0].mxu0
      %669 = vmatprep.mubr.bf16.mxu0 0
      %670 = vmatmul.mubr.bf16.gmra.mrb[0].mxu0 %v465
      %v671 = vpop.f32.mrb[0].mxu0
      %v672 = vadd.f32 %v248, %v671
      %v673 = vpop.f32.mrb[0].mxu0
      %v674 = vpop.f32.mrb[0].mxu0
      %v675 = vadd.f32 %v248, %v674
      %v676 = vpop.f32.mrb[0].mxu0
      %677 = vmatprep.mubr.bf16.mxu0 0
      %678 = vmatmul.mubr.bf16.gmra.mrb[0].mxu0 %v468
      %v679 = vpop.f32.mrb[0].mxu0
      %v680 = vadd.f32 %v248, %v679
      %v681 = vpop.f32.mrb[0].mxu0
      %v682 = vpop.f32.mrb[0].mxu0
      %v683 = vadd.f32 %v248, %v682
      %v684 = vpop.f32.mrb[0].mxu0
      %685 = vmatprep.mubr.bf16.mxu0 0
      %686 = vmatmul.mubr.bf16.gmra.mrb[0].mxu0 %v471
      %v687 = vpop.f32.mrb[0].mxu0
      %v688 = vadd.f32 %v248, %v687
      %v689 = vpop.f32.mrb[0].mxu0
      %v690 = vpop.f32.mrb[0].mxu0
      %v691 = vadd.f32 %v248, %v690
      %v692 = vpop.f32.mrb[0].mxu0
      %693 = vmatprep.mubr.bf16.mxu0 0
      %694 = vmatmul.mubr.bf16.gmra.mrb[0].mxu0 %v474
      %v695 = vpop.f32.mrb[0].mxu0
      %v696 = vadd.f32 %v248, %v695
      %v697 = vpop.f32.mrb[0].mxu0
      %v698 = vpop.f32.mrb[0].mxu0
      %v699 = vadd.f32 %v248, %v698
      %v700 = vpop.f32.mrb[0].mxu0
      %701 = vmatprep.mubr.bf16.mxu0 0
      %702 = vmatmul.mubr.bf16.gmra.mrb[0].mxu0 %v477
      %v703 = vpop.f32.mrb[0].mxu0
      %v704 = vadd.f32 %v248, %v703
      %v705 = vpop.f32.mrb[0].mxu0
      %v706 = vpop.f32.mrb[0].mxu0
      %v707 = vadd.f32 %v248, %v706
      %v708 = vpop.f32.mrb[0].mxu0
      %709 = vmatprep.mubr.bf16.mxu0 0
      %710 = vmatmul.mubr.bf16.gmra.mrb[0].mxu0 %v480
      %v711 = vpop.f32.mrb[0].mxu0
      %v712 = vadd.f32 %v248, %v711
      %v713 = vpop.f32.mrb[0].mxu0
      %v714 = vpop.f32.mrb[0].mxu0
      %v715 = vadd.f32 %v248, %v714
      %v716 = vpop.f32.mrb[0].mxu0
      %717 = vmatprep.mubr.bf16.mxu0 0
      %718 = vmatmul.mubr.bf16.gmra.mrb[0].mxu0 %v483
      %v719 = vpop.f32.mrb[0].mxu0
      %v720 = vadd.f32 %v248, %v719
      %v721 = vpop.f32.mrb[0].mxu0
      %v722 = vpop.f32.mrb[0].mxu0
      %v723 = vadd.f32 %v248, %v722
      %v724 = vpop.f32.mrb[0].mxu0
      %725 = vmatprep.mubr.bf16.mxu0 0
      %726 = vmatmul.mubr.bf16.gmra.mrb[0].mxu0 %v486
      %v727 = vpop.f32.mrb[0].mxu0
      %v728 = vadd.f32 %v248, %v727
      %v729 = vpop.f32.mrb[0].mxu0
      %v730 = vpop.f32.mrb[0].mxu0
      %v731 = vadd.f32 %v248, %v730
      %v732 = vpop.f32.mrb[0].mxu0
      %733 = vmatprep.mubr.bf16.mxu0 0
      %734 = vmatmul.mubr.bf16.gmra.mrb[0].mxu0 %v489
      %v735 = vpop.f32.mrb[0].mxu0
      %v736 = vadd.f32 %v248, %v735
      %v737 = vpop.f32.mrb[0].mxu0
      %v738 = vpop.f32.mrb[0].mxu0
      %v739 = vadd.f32 %v248, %v738
      %v740 = vpop.f32.mrb[0].mxu0
      %741 = vmatprep.mubr.bf16.mxu0 0
      %742 = vmatmul.mubr.bf16.gmra.mrb[0].mxu0 %v492
      %v743 = vpop.f32.mrb[0].mxu0
      %v744 = vadd.f32 %v248, %v743
      %v745 = vpop.f32.mrb[0].mxu0
      %v746 = vpop.f32.mrb[0].mxu0
      %v747 = vadd.f32 %v248, %v746
      %v748 = vpop.f32.mrb[0].mxu0
      %749 = vmatprep.mubr.bf16.mxu0 0
      %750 = vmatmul.mubr.bf16.gmra.mrb[0].mxu0 %v495
      %v751 = vpop.f32.mrb[0].mxu0
      %v752 = vadd.f32 %v248, %v751
      %v753 = vpop.f32.mrb[0].mxu0
      %v754 = vpop.f32.mrb[0].mxu0
      %v755 = vadd.f32 %v248, %v754
      %v756 = vpop.f32.mrb[0].mxu0
      %757 = vmatprep.mubr.bf16.mxu0 0
      %758 = vmatmul.mubr.bf16.gmra.mrb[0].mxu0 %v498
      %v759 = vpop.f32.mrb[0].mxu0
      %v760 = vadd.f32 %v248, %v759
      %v761 = vpop.f32.mrb[0].mxu0
      %v762 = vpop.f32.mrb[0].mxu0
      %v763 = vadd.f32 %v248, %v762
      %v764 = vpop.f32.mrb[0].mxu0
      %765 = vmatprep.mubr.bf16.mxu0 0
      %766 = vmatmul.mubr.bf16.gmra.mrb[0].mxu0 %v501
      %v767 = vpop.f32.mrb[0].mxu0
      %v768 = vadd.f32 %v248, %v767
      %v769 = vpop.f32.mrb[0].mxu0
      %v770 = vpop.f32.mrb[0].mxu0
      %v771 = vadd.f32 %v248, %v770
      %v772 = vpop.f32.mrb[0].mxu0
      %773 = vmatprep.mubr.bf16.mxu0 0
      %774 = vmatmul.mubr.bf16.gmra.mrb[0].mxu0 %v504
      %v775 = vpop.f32.mrb[0].mxu0
      %v776 = vadd.f32 %v248, %v775
      %v777 = vpop.f32.mrb[0].mxu0
      %v778 = vpop.f32.mrb[0].mxu0
      %v779 = vadd.f32 %v248, %v778
      %v780 = vpop.f32.mrb[0].mxu0
      %781 = vmatprep.mubr.bf16.mxu0 0
      %782 = vmatmul.mubr.bf16.gmra.mrb[0].mxu0 %v507
      %v783 = vpop.f32.mrb[0].mxu0
      %v784 = vadd.f32 %v248, %v783
      %v785 = vpop.f32.mrb[0].mxu0
      %v786 = vpop.f32.mrb[0].mxu0
      %v787 = vadd.f32 %v248, %v786
      %v788 = vpop.f32.mrb[0].mxu0
      %789 = vmatprep.mubr.bf16.mxu0 0
      %790 = vmatmul.mubr.bf16.gmra.mrb[0].mxu0 %v510
      %v791 = vpop.f32.mrb[0].mxu0
      %v792 = vadd.f32 %v248, %v791
      %v793 = vpop.f32.mrb[0].mxu0
      %v794 = vpop.f32.mrb[0].mxu0
      %v795 = vadd.f32 %v248, %v794
      %v796 = vpop.f32.mrb[0].mxu0
      %797 = vmatprep.mubr.bf16.mxu0 0
      %798 = vmatmul.mubr.bf16.gmra.mrb[0].mxu0 %v513
      %v799 = vpop.f32.mrb[0].mxu0
      %v800 = vadd.f32 %v248, %v799
      %v801 = vpop.f32.mrb[0].mxu0
      %v802 = vpop.f32.mrb[0].mxu0
      %v803 = vadd.f32 %v248, %v802
      %v804 = vpop.f32.mrb[0].mxu0
      %805 = vmatprep.mubr.bf16.mxu0 0
      %806 = vmatmul.mubr.bf16.gmra.mrb[0].mxu0 %v516
      %v807 = vpop.f32.mrb[0].mxu0
      %v808 = vadd.f32 %v248, %v807
      %v809 = vpop.f32.mrb[0].mxu0
      %v810 = vpop.f32.mrb[0].mxu0
      %v811 = vadd.f32 %v248, %v810
      %v812 = vpop.f32.mrb[0].mxu0
      %813 = vdwg.mxu0
      %v814 = vmax.f32 %v560, 0.0
      %v815 = vmax.f32 %v563, 0.0
      %v816 = vmax.f32 %v568, 0.0
      %v817 = vmax.f32 %v571, 0.0
      %v818 = vmax.f32 %v576, 0.0
      %v819 = vmax.f32 %v579, 0.0
      %v820 = vmax.f32 %v584, 0.0
      %v821 = vmax.f32 %v587, 0.0
      %v822 = vmax.f32 %v592, 0.0
      %v823 = vmax.f32 %v595, 0.0
      %v824 = vmax.f32 %v600, 0.0
      %v825 = vmax.f32 %v603, 0.0
      %v826 = vmax.f32 %v608, 0.0
      %v827 = vmax.f32 %v611, 0.0
      %v828 = vmax.f32 %v616, 0.0
      %v829 = vmax.f32 %v619, 0.0
      %v830 = vmax.f32 %v624, 0.0
      %v831 = vmax.f32 %v627, 0.0
      %v832 = vmax.f32 %v632, 0.0
      %v833 = vmax.f32 %v635, 0.0
      %v834 = vmax.f32 %v640, 0.0
      %v835 = vmax.f32 %v643, 0.0
      %v836 = vmax.f32 %v648, 0.0
      %v837 = vmax.f32 %v651, 0.0
      %v838 = vmax.f32 %v656, 0.0
      %v839 = vmax.f32 %v659, 0.0
      %v840 = vmax.f32 %v664, 0.0
      %v841 = vmax.f32 %v667, 0.0
      %v842 = vmax.f32 %v672, 0.0
      %v843 = vmax.f32 %v675, 0.0
      %v844 = vmax.f32 %v680, 0.0
      %v845 = vmax.f32 %v683, 0.0
      %v846 = vmax.f32 %v688, 0.0
      %v847 = vmax.f32 %v691, 0.0
      %v848 = vmax.f32 %v696, 0.0
      %v849 = vmax.f32 %v699, 0.0
      %v850 = vmax.f32 %v704, 0.0
      %v851 = vmax.f32 %v707, 0.0
      %v852 = vmax.f32 %v712, 0.0
      %v853 = vmax.f32 %v715, 0.0
      %v854 = vmax.f32 %v720, 0.0
      %v855 = vmax.f32 %v723, 0.0
      %v856 = vmax.f32 %v728, 0.0
      %v857 = vmax.f32 %v731, 0.0
      %v858 = vmax.f32 %v736, 0.0
      %v859 = vmax.f32 %v739, 0.0
      %v860 = vmax.f32 %v744, 0.0
      %v861 = vmax.f32 %v747, 0.0
      %v862 = vmax.f32 %v752, 0.0
      %v863 = vmax.f32 %v755, 0.0
      %v864 = vmax.f32 %v760, 0.0
      %v865 = vmax.f32 %v763, 0.0
      %v866 = vmax.f32 %v768, 0.0
      %v867 = vmax.f32 %v771, 0.0
      %v868 = vmax.f32 %v776, 0.0
      %v869 = vmax.f32 %v779, 0.0
      %v870 = vmax.f32 %v784, 0.0
      %v871 = vmax.f32 %v787, 0.0
      %v872 = vmax.f32 %v792, 0.0
      %v873 = vmax.f32 %v795, 0.0
      %v874 = vmax.f32 %v800, 0.0
      %v875 = vmax.f32 %v803, 0.0
      %v876 = vmax.f32 %v808, 0.0
      %v877 = vmax.f32 %v811, 0.0
      %v878 = vpack.c.bf16 %v815, %v814
      %v879 = vpack.c.bf16 %v817, %v816
      %v880 = vpack.c.bf16 %v819, %v818
      %v881 = vpack.c.bf16 %v821, %v820
      %v882 = vpack.c.bf16 %v823, %v822
      %v883 = vpack.c.bf16 %v825, %v824
      %v884 = vpack.c.bf16 %v827, %v826
      %v885 = vpack.c.bf16 %v829, %v828
      %v886 = vpack.c.bf16 %v831, %v830
      %v887 = vpack.c.bf16 %v833, %v832
      %v888 = vpack.c.bf16 %v835, %v834
      %v889 = vpack.c.bf16 %v837, %v836
      %v890 = vpack.c.bf16 %v839, %v838
      %v891 = vpack.c.bf16 %v841, %v840
      %v892 = vpack.c.bf16 %v843, %v842
      %v893 = vpack.c.bf16 %v845, %v844
      %v894 = vpack.c.bf16 %v847, %v846
      %v895 = vpack.c.bf16 %v849, %v848
      %v896 = vpack.c.bf16 %v851, %v850
      %v897 = vpack.c.bf16 %v853, %v852
      %v898 = vpack.c.bf16 %v855, %v854
      %v899 = vpack.c.bf16 %v857, %v856
      %v900 = vpack.c.bf16 %v859, %v858
      %v901 = vpack.c.bf16 %v861, %v860
      %v902 = vpack.c.bf16 %v863, %v862
      %v903 = vpack.c.bf16 %v865, %v864
      %v904 = vpack.c.bf16 %v867, %v866
      %v905 = vpack.c.bf16 %v869, %v868
      %v906 = vpack.c.bf16 %v871, %v870
      %v907 = vpack.c.bf16 %v873, %v872
      %v908 = vpack.c.bf16 %v875, %v874
      %v909 = vpack.c.bf16 %v877, %v876
      %v942 = vunpack.c.l.b16 %v878
      %v943 = vunpack.c.h.b16 %v878
      %v944 = vunpack.c.l.b16 %v879
      %v945 = vunpack.c.h.b16 %v879
      %v946 = vunpack.c.l.b16 %v880
      %v947 = vunpack.c.h.b16 %v880
      %v948 = vunpack.c.l.b16 %v881
      %v949 = vunpack.c.h.b16 %v881
      %v950 = vunpack.c.l.b16 %v882
      %v951 = vunpack.c.h.b16 %v882
      %v952 = vunpack.c.l.b16 %v883
      %v953 = vunpack.c.h.b16 %v883
      %v954 = vunpack.c.l.b16 %v884
      %v955 = vunpack.c.h.b16 %v884
      %v956 = vunpack.c.l.b16 %v885
      %v957 = vunpack.c.h.b16 %v885
      %v958 = vunpack.c.l.b16 %v886
      %v959 = vunpack.c.h.b16 %v886
      %v960 = vunpack.c.l.b16 %v887
      %v961 = vunpack.c.h.b16 %v887
      %v962 = vunpack.c.l.b16 %v888
      %v963 = vunpack.c.h.b16 %v888
      %v964 = vunpack.c.l.b16 %v889
      %v965 = vunpack.c.h.b16 %v889
      %v966 = vunpack.c.l.b16 %v890
      %v967 = vunpack.c.h.b16 %v890
      %v968 = vunpack.c.l.b16 %v891
      %v969 = vunpack.c.h.b16 %v891
      %v970 = vunpack.c.l.b16 %v892
      %v971 = vunpack.c.h.b16 %v892
      %v972 = vunpack.c.l.b16 %v893
      %v973 = vunpack.c.h.b16 %v893
      %v974 = vunpack.c.l.b16 %v894
      %v975 = vunpack.c.h.b16 %v894
      %v976 = vunpack.c.l.b16 %v895
      %v977 = vunpack.c.h.b16 %v895
      %v978 = vunpack.c.l.b16 %v896
      %v979 = vunpack.c.h.b16 %v896
      %v980 = vunpack.c.l.b16 %v897
      %v981 = vunpack.c.h.b16 %v897
      %v982 = vunpack.c.l.b16 %v898
      %v983 = vunpack.c.h.b16 %v898
      %v984 = vunpack.c.l.b16 %v899
      %v985 = vunpack.c.h.b16 %v899
      %v986 = vunpack.c.l.b16 %v900
      %v987 = vunpack.c.h.b16 %v900
      %v988 = vunpack.c.l.b16 %v901
      %v989 = vunpack.c.h.b16 %v901
      %v990 = vunpack.c.l.b16 %v902
      %v991 = vunpack.c.h.b16 %v902
      %v992 = vunpack.c.l.b16 %v903
      %v993 = vunpack.c.h.b16 %v903
      %v994 = vunpack.c.l.b16 %v904
      %v995 = vunpack.c.h.b16 %v904
      %v996 = vunpack.c.l.b16 %v905
      %v997 = vunpack.c.h.b16 %v905
      %v998 = vunpack.c.l.b16 %v906
      %v999 = vunpack.c.h.b16 %v906
      %v1000 = vunpack.c.l.b16 %v907
      %v1001 = vunpack.c.h.b16 %v907
      %v1002 = vunpack.c.l.b16 %v908
      %v1003 = vunpack.c.h.b16 %v908
      %v1004 = vunpack.c.l.b16 %v909
      %v1005 = vunpack.c.h.b16 %v909
      %v1006 = vpack.c.b16 %v942, %v942
      %v1007 = vpack.c.b16 %v943, %v943
      %v1008 = vpack.c.b16 %v944, %v944
      %v1009 = vpack.c.b16 %v945, %v945
      %v1010 = vpack.c.b16 %v946, %v946
      %v1011 = vpack.c.b16 %v947, %v947
      %v1012 = vpack.c.b16 %v948, %v948
      %v1013 = vpack.c.b16 %v949, %v949
      %v1014 = vpack.c.b16 %v950, %v950
      %v1015 = vpack.c.b16 %v951, %v951
      %v1016 = vpack.c.b16 %v952, %v952
      %v1017 = vpack.c.b16 %v953, %v953
      %v1018 = vpack.c.b16 %v954, %v954
      %v1019 = vpack.c.b16 %v955, %v955
      %v1020 = vpack.c.b16 %v956, %v956
      %v1021 = vpack.c.b16 %v957, %v957
      %v1022 = vpack.c.b16 %v958, %v958
      %v1023 = vpack.c.b16 %v959, %v959
      %v1024 = vpack.c.b16 %v960, %v960
      %v1025 = vpack.c.b16 %v961, %v961
      %v1026 = vpack.c.b16 %v962, %v962
      %v1027 = vpack.c.b16 %v963, %v963
      %v1028 = vpack.c.b16 %v964, %v964
      %v1029 = vpack.c.b16 %v965, %v965
      %v1030 = vpack.c.b16 %v966, %v966
      %v1031 = vpack.c.b16 %v967, %v967
      %v1032 = vpack.c.b16 %v968, %v968
      %v1033 = vpack.c.b16 %v969, %v969
      %v1034 = vpack.c.b16 %v970, %v970
      %v1035 = vpack.c.b16 %v971, %v971
      %v1036 = vpack.c.b16 %v972, %v972
      %v1037 = vpack.c.b16 %v973, %v973
      %v1038 = vpack.c.b16 %v974, %v974
      %v1039 = vpack.c.b16 %v975, %v975
      %v1040 = vpack.c.b16 %v976, %v976
      %v1041 = vpack.c.b16 %v977, %v977
      %v1042 = vpack.c.b16 %v978, %v978
      %v1043 = vpack.c.b16 %v979, %v979
      %v1044 = vpack.c.b16 %v980, %v980
      %v1045 = vpack.c.b16 %v981, %v981
      %v1046 = vpack.c.b16 %v982, %v982
      %v1047 = vpack.c.b16 %v983, %v983
      %v1048 = vpack.c.b16 %v984, %v984
      %v1049 = vpack.c.b16 %v985, %v985
      %v1050 = vpack.c.b16 %v986, %v986
      %v1051 = vpack.c.b16 %v987, %v987
      %v1052 = vpack.c.b16 %v988, %v988
      %v1053 = vpack.c.b16 %v989, %v989
      %v1054 = vpack.c.b16 %v990, %v990
      %v1055 = vpack.c.b16 %v991, %v991
      %v1056 = vpack.c.b16 %v992, %v992
      %v1057 = vpack.c.b16 %v993, %v993
      %v1058 = vpack.c.b16 %v994, %v994
      %v1059 = vpack.c.b16 %v995, %v995
      %v1060 = vpack.c.b16 %v996, %v996
      %v1061 = vpack.c.b16 %v997, %v997
      %v1062 = vpack.c.b16 %v998, %v998
      %v1063 = vpack.c.b16 %v999, %v999
      %v1064 = vpack.c.b16 %v1000, %v1000
      %v1065 = vpack.c.b16 %v1001, %v1001
      %v1066 = vpack.c.b16 %v1002, %v1002
      %v1067 = vpack.c.b16 %v1003, %v1003
      %v1068 = vpack.c.b16 %v1004, %v1004
      %v1069 = vpack.c.b16 %v1005, %v1005
      %vm1134 = vcmask 257024
      %1135 = vst.msk [vmem:[%s172] sm:$0xf] %vm1134, %v1006
      %1136 = vst.msk [vmem:[%s172 + $0x4] sm:$0xf] %vm1134, %v1007
      %1137 = vst.msk [vmem:[%s172 + $0x8] sm:$0xf] %vm1134, %v1008
      %1138 = vst.msk [vmem:[%s172 + $0xc] sm:$0xf] %vm1134, %v1009
      %1139 = vst.msk [vmem:[%s172 + $0x10] sm:$0xf] %vm1134, %v1010
      %1140 = vst.msk [vmem:[%s172 + $0x14] sm:$0xf] %vm1134, %v1011
      %1141 = vst.msk [vmem:[%s172 + $0x18] sm:$0xf] %vm1134, %v1012
      %1142 = vst.msk [vmem:[%s172 + $0x1c] sm:$0xf] %vm1134, %v1013
      %1143 = vst.msk [vmem:[%s172 + $0x20] sm:$0xf] %vm1134, %v1014
      %1144 = vst.msk [vmem:[%s172 + $0x24] sm:$0xf] %vm1134, %v1015
      %1145 = vst.msk [vmem:[%s172 + $0x28] sm:$0xf] %vm1134, %v1016
      %1146 = vst.msk [vmem:[%s172 + $0x2c] sm:$0xf] %vm1134, %v1017
      %1147 = vst.msk [vmem:[%s172 + $0x30] sm:$0xf] %vm1134, %v1018
      %1148 = vst.msk [vmem:[%s172 + $0x34] sm:$0xf] %vm1134, %v1019
      %1149 = vst.msk [vmem:[%s172 + $0x38] sm:$0xf] %vm1134, %v1020
      %1150 = vst.msk [vmem:[%s172 + $0x3c] sm:$0xf] %vm1134, %v1021
      %1151 = vst.msk [vmem:[%s172 + $0x40] sm:$0xf] %vm1134, %v1022
      %1152 = vst.msk [vmem:[%s172 + $0x44] sm:$0xf] %vm1134, %v1023
      %1153 = vst.msk [vmem:[%s172 + $0x48] sm:$0xf] %vm1134, %v1024
      %1154 = vst.msk [vmem:[%s172 + $0x4c] sm:$0xf] %vm1134, %v1025
      %1155 = vst.msk [vmem:[%s172 + $0x50] sm:$0xf] %vm1134, %v1026
      %1156 = vst.msk [vmem:[%s172 + $0x54] sm:$0xf] %vm1134, %v1027
      %1157 = vst.msk [vmem:[%s172 + $0x58] sm:$0xf] %vm1134, %v1028
      %1158 = vst.msk [vmem:[%s172 + $0x5c] sm:$0xf] %vm1134, %v1029
      %1159 = vst.msk [vmem:[%s172 + $0x60] sm:$0xf] %vm1134, %v1030
      %1160 = vst.msk [vmem:[%s172 + $0x64] sm:$0xf] %vm1134, %v1031
      %1161 = vst.msk [vmem:[%s172 + $0x68] sm:$0xf] %vm1134, %v1032
      %1162 = vst.msk [vmem:[%s172 + $0x6c] sm:$0xf] %vm1134, %v1033
      %1163 = vst.msk [vmem:[%s172 + $0x70] sm:$0xf] %vm1134, %v1034
      %1164 = vst.msk [vmem:[%s172 + $0x74] sm:$0xf] %vm1134, %v1035
      %1165 = vst.msk [vmem:[%s172 + $0x78] sm:$0xf] %vm1134, %v1036
      %1166 = vst.msk [vmem:[%s172 + $0x7c] sm:$0xf] %vm1134, %v1037
      %1167 = vst.msk [vmem:[%s172 + $0x80] sm:$0xf] %vm1134, %v1038
      %1168 = vst.msk [vmem:[%s172 + $0x84] sm:$0xf] %vm1134, %v1039
      %1169 = vst.msk [vmem:[%s172 + $0x88] sm:$0xf] %vm1134, %v1040
      %1170 = vst.msk [vmem:[%s172 + $0x8c] sm:$0xf] %vm1134, %v1041
      %1171 = vst.msk [vmem:[%s172 + $0x90] sm:$0xf] %vm1134, %v1042
      %1172 = vst.msk [vmem:[%s172 + $0x94] sm:$0xf] %vm1134, %v1043
      %1173 = vst.msk [vmem:[%s172 + $0x98] sm:$0xf] %vm1134, %v1044
      %1174 = vst.msk [vmem:[%s172 + $0x9c] sm:$0xf] %vm1134, %v1045
      %1175 = vst.msk [vmem:[%s172 + $0xa0] sm:$0xf] %vm1134, %v1046
      %1176 = vst.msk [vmem:[%s172 + $0xa4] sm:$0xf] %vm1134, %v1047
      %1177 = vst.msk [vmem:[%s172 + $0xa8] sm:$0xf] %vm1134, %v1048
      %1178 = vst.msk [vmem:[%s172 + $0xac] sm:$0xf] %vm1134, %v1049
      %1179 = vst.msk [vmem:[%s172 + $0xb0] sm:$0xf] %vm1134, %v1050
      %1180 = vst.msk [vmem:[%s172 + $0xb4] sm:$0xf] %vm1134, %v1051
      %1181 = vst.msk [vmem:[%s172 + $0xb8] sm:$0xf] %vm1134, %v1052
      %1182 = vst.msk [vmem:[%s172 + $0xbc] sm:$0xf] %vm1134, %v1053
      %1183 = vst.msk [vmem:[%s172 + $0xc0] sm:$0xf] %vm1134, %v1054
      %1184 = vst.msk [vmem:[%s172 + $0xc4] sm:$0xf] %vm1134, %v1055
      %1185 = vst.msk [vmem:[%s172 + $0xc8] sm:$0xf] %vm1134, %v1056
      %1186 = vst.msk [vmem:[%s172 + $0xcc] sm:$0xf] %vm1134, %v1057
      %1187 = vst.msk [vmem:[%s172 + $0xd0] sm:$0xf] %vm1134, %v1058
      %1188 = vst.msk [vmem:[%s172 + $0xd4] sm:$0xf] %vm1134, %v1059
      %1189 = vst.msk [vmem:[%s172 + $0xd8] sm:$0xf] %vm1134, %v1060
      %1190 = vst.msk [vmem:[%s172 + $0xdc] sm:$0xf] %vm1134, %v1061
      %1191 = vst.msk [vmem:[%s172 + $0xe0] sm:$0xf] %vm1134, %v1062
      %1192 = vst.msk [vmem:[%s172 + $0xe4] sm:$0xf] %vm1134, %v1063
      %1193 = vst.msk [vmem:[%s172 + $0xe8] sm:$0xf] %vm1134, %v1064
      %1194 = vst.msk [vmem:[%s172 + $0xec] sm:$0xf] %vm1134, %v1065
      %1195 = vst.msk [vmem:[%s172 + $0xf0] sm:$0xf] %vm1134, %v1066
      %1196 = vst.msk [vmem:[%s172 + $0xf4] sm:$0xf] %vm1134, %v1067
      %1197 = vst.msk [vmem:[%s172 + $0xf8] sm:$0xf] %vm1134, %v1068
      %1198 = vst.msk [vmem:[%s172 + $0xfc] sm:$0xf] %vm1134, %v1069
      %s1199 = smul.u32 64, %s14
      %p1200 = scmp.lt.s32.totalorder %s1199, 255
      %s1201 = scalar_select %p1200, %s1199, 255
      %s1202 = smul.addr %s1201, 4
      %s1203 = scalar_lea.vmem %s3, %s1202
      // Predicated region
      $region33: #{net_forward.9} parent=31 // pred_check
        %p1204 = pneg %p100
      $region34: #{net_forward.9} parent=31 // pred_check_branch
        %1206 = sbr.rel (%p1204) target = $region36
      $region35: #{net_forward.9} parent=31 // pred_region
        %s1207 = smul.u32 64, %s14
      $region36: #{net_forward.9} parent=31 // pred_fallthru
        _
    $region32: #{net_forward.9} parent=5 // pred_fallthru
      _
    %p1208 = scmp.le.s32.totalorder 2, %s9
    // Predicated region
    $region37: #{net_forward.9} parent=5 // pred_check
      %p1209 = pneg %p1208
    $region38: #{net_forward.9} parent=5 // pred_check_branch
      %1211 = sbr.rel (%p1209) target = $region40
    $region39: #{net_forward.9} parent=5 // pred_region
      %s1212 = ssub.s32 %s9, 2
      // Predicated region
      $region41: #{net_forward.9} parent=39 // pred_check
        %p1213 = pneg %p106
      $region42: #{net_forward.9} parent=39 // pred_check_branch
        %1215 = sbr.rel (%p1213) target = $region44
      $region43: #{net_forward.9} parent=39 // pred_region
        %s1216 = smul.u32 64, %s15
        %p1217 = scmp.lt.s32.totalorder %s1216, 255
        %s1218 = scalar_select %p1217, %s1216, 255
        %s1219 = smul.addr %s1218, 4
        %s1220 = scalar_lea.vmem %s3, %s1219
      $region44: #{net_forward.9} parent=39 // pred_fallthru
        _
    $region40: #{net_forward.9} parent=5 // pred_fallthru
      _
  $region6: #{net_forward.9} parent=0 // loop_footer
    %s13 = sadd.s32 1, %s9
  $region7: #{net_forward.9} parent=0 // loop_footer_branch
    %8 = sbr.rel target = $region3
  $region8: #{net_forward.9} parent=0 // loop_exit
    _

// kernel: net_forward.10
$region0: #{net_forward.10}
  #allocation0 [shape = 'u32[]', space=smem, size = 0x4, offset = 0x4, fixed_abs, tag = 'smem constant byte address 0x4 - core index']
  #allocation1 [shape = 'u32[144,128]{1,0:T(1,128)}', space=vmem, size = 0x12000, scoped, tag = 'internal scratch']
  %s0 = inlined_call_operand.vmem [shape: bf16[512,32], index: 0, kind: input, shape index: {}]
  %s1 = inlined_call_operand.vmem [shape: bf16[512,32], index: 1, kind: input, shape index: {}]
  %s2 = inlined_call_operand.vmem [shape: bf16[512,32], index: 2, kind: input, shape index: {}]
  %s3 = inlined_call_operand.vmem [shape: bf16[512,32], index: 3, kind: input, shape index: {}]
  %s4 = inlined_call_operand.vmem [shape: bf16[512,32], index: 4, kind: output, shape index: {}]
  %s5 = sld [smem:[#allocation0]]
  $region26: #{net_forward.10} parent=0
    _
  %s7 = ssub.s32 1, %s5
  %s8 = scalar_select 0, %s7, %s5
  // Predicated region
  $region2: #{net_forward.10} parent=0 // pred_check
    _
  $region3: #{net_forward.10} parent=0 // pred_check_branch
    %10 = sbr.rel (0) target = $region5
  $region4: #{net_forward.10} parent=0 // pred_region
    _
  $region5: #{net_forward.10} parent=0 // pred_fallthru
    _
  // Predicated region
  $region6: #{net_forward.10} parent=0 // pred_check
    _
  $region7: #{net_forward.10} parent=0 // pred_check_branch
    %12 = sbr.rel (0) target = $region9
  $region8: #{net_forward.10} parent=0 // pred_region
    _
  $region9: #{net_forward.10} parent=0 // pred_fallthru
    _
  // Predicated region
  $region10: #{net_forward.10} parent=0 // pred_check
    _
  $region11: #{net_forward.10} parent=0 // pred_check_branch
    %14 = sbr.rel (0) target = $region13
  $region12: #{net_forward.10} parent=0 // pred_region
    _
  $region13: #{net_forward.10} parent=0 // pred_fallthru
    _
  // Predicated region
  $region14: #{net_forward.10} parent=0 // pred_check
    _
  $region15: #{net_forward.10} parent=0 // pred_check_branch
    %16 = sbr.rel (0) target = $region17
  $region16: #{net_forward.10} parent=0 // pred_region
    _
  $region17: #{net_forward.10} parent=0 // pred_fallthru
    _
  %v17 = vld [vmem:[%s0] sm:$0xf]
  %v18 = vld [vmem:[%s0 + $0x4] sm:$0xf]
  %v19 = vld [vmem:[%s0 + $0x8] sm:$0xf]
  %v20 = vld [vmem:[%s0 + $0xc] sm:$0xf]
  %v21 = vld [vmem:[%s0 + $0x10] sm:$0xf]
  %v22 = vld [vmem:[%s0 + $0x14] sm:$0xf]
  %v23 = vld [vmem:[%s0 + $0x18] sm:$0xf]
  %v24 = vld [vmem:[%s0 + $0x1c] sm:$0xf]
  %v25 = vld [vmem:[%s0 + $0x20] sm:$0xf]
  %v26 = vld [vmem:[%s0 + $0x24] sm:$0xf]
  %v27 = vld [vmem:[%s0 + $0x28] sm:$0xf]
  %v28 = vld [vmem:[%s0 + $0x2c] sm:$0xf]
  %v29 = vld [vmem:[%s0 + $0x30] sm:$0xf]
  %v30 = vld [vmem:[%s0 + $0x34] sm:$0xf]
  %v31 = vld [vmem:[%s0 + $0x38] sm:$0xf]
  %v32 = vld [vmem:[%s0 + $0x3c] sm:$0xf]
  %v33 = vld [vmem:[%s0 + $0x40] sm:$0xf]
  %v34 = vld [vmem:[%s0 + $0x44] sm:$0xf]
  %v35 = vld [vmem:[%s0 + $0x48] sm:$0xf]
  %v36 = vld [vmem:[%s0 + $0x4c] sm:$0xf]
  %v37 = vld [vmem:[%s0 + $0x50] sm:$0xf]
  %v38 = vld [vmem:[%s0 + $0x54] sm:$0xf]
  %v39 = vld [vmem:[%s0 + $0x58] sm:$0xf]
  %v40 = vld [vmem:[%s0 + $0x5c] sm:$0xf]
  %v41 = vld [vmem:[%s0 + $0x60] sm:$0xf]
  %v42 = vld [vmem:[%s0 + $0x64] sm:$0xf]
  %v43 = vld [vmem:[%s0 + $0x68] sm:$0xf]
  %v44 = vld [vmem:[%s0 + $0x6c] sm:$0xf]
  %v45 = vld [vmem:[%s0 + $0x70] sm:$0xf]
  %v46 = vld [vmem:[%s0 + $0x74] sm:$0xf]
  %v47 = vld [vmem:[%s0 + $0x78] sm:$0xf]
  %v48 = vld [vmem:[%s0 + $0x7c] sm:$0xf]
  %v49 = vld [vmem:[%s0 + $0x80] sm:$0xf]
  %v50 = vld [vmem:[%s0 + $0x84] sm:$0xf]
  %v51 = vld [vmem:[%s0 + $0x88] sm:$0xf]
  %v52 = vld [vmem:[%s0 + $0x8c] sm:$0xf]
  %v53 = vld [vmem:[%s0 + $0x90] sm:$0xf]
  %v54 = vld [vmem:[%s0 + $0x94] sm:$0xf]
  %v55 = vld [vmem:[%s0 + $0x98] sm:$0xf]
  %v56 = vld [vmem:[%s0 + $0x9c] sm:$0xf]
  %v57 = vld [vmem:[%s0 + $0xa0] sm:$0xf]
  %v58 = vld [vmem:[%s0 + $0xa4] sm:$0xf]
  %v59 = vld [vmem:[%s0 + $0xa8] sm:$0xf]
  %v60 = vld [vmem:[%s0 + $0xac] sm:$0xf]
  %v61 = vld [vmem:[%s0 + $0xb0] sm:$0xf]
  %v62 = vld [vmem:[%s0 + $0xb4] sm:$0xf]
  %v63 = vld [vmem:[%s0 + $0xb8] sm:$0xf]
  %v64 = vld [vmem:[%s0 + $0xbc] sm:$0xf]
  %v65 = vld [vmem:[%s0 + $0xc0] sm:$0xf]
  %v66 = vld [vmem:[%s0 + $0xc4] sm:$0xf]
  %v67 = vld [vmem:[%s0 + $0xc8] sm:$0xf]
  %v68 = vld [vmem:[%s0 + $0xcc] sm:$0xf]
  %v69 = vld [vmem:[%s0 + $0xd0] sm:$0xf]
  %v70 = vld [vmem:[%s0 + $0xd4] sm:$0xf]
  %v71 = vld [vmem:[%s0 + $0xd8] sm:$0xf]
  %v72 = vld [vmem:[%s0 + $0xdc] sm:$0xf]
  %v73 = vld [vmem:[%s0 + $0xe0] sm:$0xf]
  %v74 = vld [vmem:[%s0 + $0xe4] sm:$0xf]
  %v75 = vld [vmem:[%s0 + $0xe8] sm:$0xf]
  %v76 = vld [vmem:[%s0 + $0xec] sm:$0xf]
  %v77 = vld [vmem:[%s0 + $0xf0] sm:$0xf]
  %v78 = vld [vmem:[%s0 + $0xf4] sm:$0xf]
  %v79 = vld [vmem:[%s0 + $0xf8] sm:$0xf]
  %v80 = vld [vmem:[%s0 + $0xfc] sm:$0xf]
  %v81 = vld [vmem:[%s1] sm:$0xf]
  %v82 = vld [vmem:[%s1 + $0x4] sm:$0xf]
  %v83 = vld [vmem:[%s1 + $0x8] sm:$0xf]
  %v84 = vld [vmem:[%s1 + $0xc] sm:$0xf]
  %v85 = vld [vmem:[%s1 + $0x10] sm:$0xf]
  %v86 = vld [vmem:[%s1 + $0x14] sm:$0xf]
  %v87 = vld [vmem:[%s1 + $0x18] sm:$0xf]
  %v88 = vld [vmem:[%s1 + $0x1c] sm:$0xf]
  %v89 = vld [vmem:[%s1 + $0x20] sm:$0xf]
  %v90 = vld [vmem:[%s1 + $0x24] sm:$0xf]
  %v91 = vld [vmem:[%s1 + $0x28] sm:$0xf]
  %v92 = vld [vmem:[%s1 + $0x2c] sm:$0xf]
  %v93 = vld [vmem:[%s1 + $0x30] sm:$0xf]
  %v94 = vld [vmem:[%s1 + $0x34] sm:$0xf]
  %v95 = vld [vmem:[%s1 + $0x38] sm:$0xf]
  %v96 = vld [vmem:[%s1 + $0x3c] sm:$0xf]
  %v97 = vld [vmem:[%s1 + $0x40] sm:$0xf]
  %v98 = vld [vmem:[%s1 + $0x44] sm:$0xf]
  %v99 = vld [vmem:[%s1 + $0x48] sm:$0xf]
  %v100 = vld [vmem:[%s1 + $0x4c] sm:$0xf]
  %v101 = vld [vmem:[%s1 + $0x50] sm:$0xf]
  %v102 = vld [vmem:[%s1 + $0x54] sm:$0xf]
  %v103 = vld [vmem:[%s1 + $0x58] sm:$0xf]
  %v104 = vld [vmem:[%s1 + $0x5c] sm:$0xf]
  %v105 = vld [vmem:[%s1 + $0x60] sm:$0xf]
  %v106 = vld [vmem:[%s1 + $0x64] sm:$0xf]
  %v107 = vld [vmem:[%s1 + $0x68] sm:$0xf]
  %v108 = vld [vmem:[%s1 + $0x6c] sm:$0xf]
  %v109 = vld [vmem:[%s1 + $0x70] sm:$0xf]
  %v110 = vld [vmem:[%s1 + $0x74] sm:$0xf]
  %v111 = vld [vmem:[%s1 + $0x78] sm:$0xf]
  %v112 = vld [vmem:[%s1 + $0x7c] sm:$0xf]
  %v113 = vld [vmem:[%s1 + $0x80] sm:$0xf]
  %v114 = vld [vmem:[%s1 + $0x84] sm:$0xf]
  %v115 = vld [vmem:[%s1 + $0x88] sm:$0xf]
  %v116 = vld [vmem:[%s1 + $0x8c] sm:$0xf]
  %v117 = vld [vmem:[%s1 + $0x90] sm:$0xf]
  %v118 = vld [vmem:[%s1 + $0x94] sm:$0xf]
  %v119 = vld [vmem:[%s1 + $0x98] sm:$0xf]
  %v120 = vld [vmem:[%s1 + $0x9c] sm:$0xf]
  %v121 = vld [vmem:[%s1 + $0xa0] sm:$0xf]
  %v122 = vld [vmem:[%s1 + $0xa4] sm:$0xf]
  %v123 = vld [vmem:[%s1 + $0xa8] sm:$0xf]
  %v124 = vld [vmem:[%s1 + $0xac] sm:$0xf]
  %v125 = vld [vmem:[%s1 + $0xb0] sm:$0xf]
  %v126 = vld [vmem:[%s1 + $0xb4] sm:$0xf]
  %v127 = vld [vmem:[%s1 + $0xb8] sm:$0xf]
  %v128 = vld [vmem:[%s1 + $0xbc] sm:$0xf]
  %v129 = vld [vmem:[%s1 + $0xc0] sm:$0xf]
  %v130 = vld [vmem:[%s1 + $0xc4] sm:$0xf]
  %v131 = vld [vmem:[%s1 + $0xc8] sm:$0xf]
  %v132 = vld [vmem:[%s1 + $0xcc] sm:$0xf]
  %v133 = vld [vmem:[%s1 + $0xd0] sm:$0xf]
  %v134 = vld [vmem:[%s1 + $0xd4] sm:$0xf]
  %v135 = vld [vmem:[%s1 + $0xd8] sm:$0xf]
  %v136 = vld [vmem:[%s1 + $0xdc] sm:$0xf]
  %v137 = vld [vmem:[%s1 + $0xe0] sm:$0xf]
  %v138 = vld [vmem:[%s1 + $0xe4] sm:$0xf]
  %v139 = vld [vmem:[%s1 + $0xe8] sm:$0xf]
  %v140 = vld [vmem:[%s1 + $0xec] sm:$0xf]
  %v141 = vld [vmem:[%s1 + $0xf0] sm:$0xf]
  %v142 = vld [vmem:[%s1 + $0xf4] sm:$0xf]
  %v143 = vld [vmem:[%s1 + $0xf8] sm:$0xf]
  %v144 = vld [vmem:[%s1 + $0xfc] sm:$0xf]
  %v145 = vmax.bf16 %v17, %v81
  %v146 = vmax.bf16 %v18, %v82
  %v147 = vmax.bf16 %v19, %v83
  %v148 = vmax.bf16 %v20, %v84
  %v149 = vmax.bf16 %v21, %v85
  %v150 = vmax.bf16 %v22, %v86
  %v151 = vmax.bf16 %v23, %v87
  %v152 = vmax.bf16 %v24, %v88
  %v153 = vmax.bf16 %v25, %v89
  %v154 = vmax.bf16 %v26, %v90
  %v155 = vmax.bf16 %v27, %v91
  %v156 = vmax.bf16 %v28, %v92
  %v157 = vmax.bf16 %v29, %v93
  %v158 = vmax.bf16 %v30, %v94
  %v159 = vmax.bf16 %v31, %v95
  %v160 = vmax.bf16 %v32, %v96
  %v161 = vmax.bf16 %v33, %v97
  %v162 = vmax.bf16 %v34, %v98
  %v163 = vmax.bf16 %v35, %v99
  %v164 = vmax.bf16 %v36, %v100
  %v165 = vmax.bf16 %v37, %v101
  %v166 = vmax.bf16 %v38, %v102
  %v167 = vmax.bf16 %v39, %v103
  %v168 = vmax.bf16 %v40, %v104
  %v169 = vmax.bf16 %v41, %v105
  %v170 = vmax.bf16 %v42, %v106
  %v171 = vmax.bf16 %v43, %v107
  %v172 = vmax.bf16 %v44, %v108
  %v173 = vmax.bf16 %v45, %v109
  %v174 = vmax.bf16 %v46, %v110
  %v175 = vmax.bf16 %v47, %v111
  %v176 = vmax.bf16 %v48, %v112
  %v177 = vmax.bf16 %v49, %v113
  %v178 = vmax.bf16 %v50, %v114
  %v179 = vmax.bf16 %v51, %v115
  %v180 = vmax.bf16 %v52, %v116
  %v181 = vmax.bf16 %v53, %v117
  %v182 = vmax.bf16 %v54, %v118
  %v183 = vmax.bf16 %v55, %v119
  %v184 = vmax.bf16 %v56, %v120
  %v185 = vmax.bf16 %v57, %v121
  %v186 = vmax.bf16 %v58, %v122
  %v187 = vmax.bf16 %v59, %v123
  %v188 = vmax.bf16 %v60, %v124
  %v189 = vmax.bf16 %v61, %v125
  %v190 = vmax.bf16 %v62, %v126
  %v191 = vmax.bf16 %v63, %v127
  %v192 = vmax.bf16 %v64, %v128
  %v193 = vmax.bf16 %v65, %v129
  %v194 = vmax.bf16 %v66, %v130
  %v195 = vmax.bf16 %v67, %v131
  %v196 = vmax.bf16 %v68, %v132
  %v197 = vmax.bf16 %v69, %v133
  %v198 = vmax.bf16 %v70, %v134
  %v199 = vmax.bf16 %v71, %v135
  %v200 = vmax.bf16 %v72, %v136
  %v201 = vmax.bf16 %v73, %v137
  %v202 = vmax.bf16 %v74, %v138
  %v203 = vmax.bf16 %v75, %v139
  %v204 = vmax.bf16 %v76, %v140
  %v205 = vmax.bf16 %v77, %v141
  %v206 = vmax.bf16 %v78, %v142
  %v207 = vmax.bf16 %v79, %v143
  %v208 = vmax.bf16 %v80, %v144
  %v209 = vld [vmem:[%s2] sm:$0xf]
  %v210 = vld [vmem:[%s2 + $0x4] sm:$0xf]
  %v211 = vld [vmem:[%s2 + $0x8] sm:$0xf]
  %v212 = vld [vmem:[%s2 + $0xc] sm:$0xf]
  %v213 = vld [vmem:[%s2 + $0x10] sm:$0xf]
  %v214 = vld [vmem:[%s2 + $0x14] sm:$0xf]
  %v215 = vld [vmem:[%s2 + $0x18] sm:$0xf]
  %v216 = vld [vmem:[%s2 + $0x1c] sm:$0xf]
  %v217 = vld [vmem:[%s2 + $0x20] sm:$0xf]
  %v218 = vld [vmem:[%s2 + $0x24] sm:$0xf]
  %v219 = vld [vmem:[%s2 + $0x28] sm:$0xf]
  %v220 = vld [vmem:[%s2 + $0x2c] sm:$0xf]
  %v221 = vld [vmem:[%s2 + $0x30] sm:$0xf]
  %v222 = vld [vmem:[%s2 + $0x34] sm:$0xf]
  %v223 = vld [vmem:[%s2 + $0x38] sm:$0xf]
  %v224 = vld [vmem:[%s2 + $0x3c] sm:$0xf]
  %v225 = vld [vmem:[%s2 + $0x40] sm:$0xf]
  %v226 = vld [vmem:[%s2 + $0x44] sm:$0xf]
  %v227 = vld [vmem:[%s2 + $0x48] sm:$0xf]
  %v228 = vld [vmem:[%s2 + $0x4c] sm:$0xf]
  %v229 = vld [vmem:[%s2 + $0x50] sm:$0xf]
  %v230 = vld [vmem:[%s2 + $0x54] sm:$0xf]
  %v231 = vld [vmem:[%s2 + $0x58] sm:$0xf]
  %v232 = vld [vmem:[%s2 + $0x5c] sm:$0xf]
  %v233 = vld [vmem:[%s2 + $0x60] sm:$0xf]
  %v234 = vld [vmem:[%s2 + $0x64] sm:$0xf]
  %v235 = vld [vmem:[%s2 + $0x68] sm:$0xf]
  %v236 = vld [vmem:[%s2 + $0x6c] sm:$0xf]
  %v237 = vld [vmem:[%s2 + $0x70] sm:$0xf]
  %v238 = vld [vmem:[%s2 + $0x74] sm:$0xf]
  %v239 = vld [vmem:[%s2 + $0x78] sm:$0xf]
  %v240 = vld [vmem:[%s2 + $0x7c] sm:$0xf]
  %v241 = vld [vmem:[%s2 + $0x80] sm:$0xf]
  %v242 = vld [vmem:[%s2 + $0x84] sm:$0xf]
  %v243 = vld [vmem:[%s2 + $0x88] sm:$0xf]
  %v244 = vld [vmem:[%s2 + $0x8c] sm:$0xf]
  %v245 = vld [vmem:[%s2 + $0x90] sm:$0xf]
  %v246 = vld [vmem:[%s2 + $0x94] sm:$0xf]
  %v247 = vld [vmem:[%s2 + $0x98] sm:$0xf]
  %v248 = vld [vmem:[%s2 + $0x9c] sm:$0xf]
  %v249 = vld [vmem:[%s2 + $0xa0] sm:$0xf]
  %v250 = vld [vmem:[%s2 + $0xa4] sm:$0xf]
  %v251 = vld [vmem:[%s2 + $0xa8] sm:$0xf]
  %v252 = vld [vmem:[%s2 + $0xac] sm:$0xf]
  %v253 = vld [vmem:[%s2 + $0xb0] sm:$0xf]
  %v254 = vld [vmem:[%s2 + $0xb4] sm:$0xf]
  %v255 = vld [vmem:[%s2 + $0xb8] sm:$0xf]
  %v256 = vld [vmem:[%s2 + $0xbc] sm:$0xf]
  %v257 = vld [vmem:[%s2 + $0xc0] sm:$0xf]
  %v258 = vld [vmem:[%s2 + $0xc4] sm:$0xf]
  %v259 = vld [vmem:[%s2 + $0xc8] sm:$0xf]
  %v260 = vld [vmem:[%s2 + $0xcc] sm:$0xf]
  %v261 = vld [vmem:[%s2 + $0xd0] sm:$0xf]
  %v262 = vld [vmem:[%s2 + $0xd4] sm:$0xf]
  %v263 = vld [vmem:[%s2 + $0xd8] sm:$0xf]
  %v264 = vld [vmem:[%s2 + $0xdc] sm:$0xf]
  %v265 = vld [vmem:[%s2 + $0xe0] sm:$0xf]
  %v266 = vld [vmem:[%s2 + $0xe4] sm:$0xf]
  %v267 = vld [vmem:[%s2 + $0xe8] sm:$0xf]
  %v268 = vld [vmem:[%s2 + $0xec] sm:$0xf]
  %v269 = vld [vmem:[%s2 + $0xf0] sm:$0xf]
  %v270 = vld [vmem:[%s2 + $0xf4] sm:$0xf]
  %v271 = vld [vmem:[%s2 + $0xf8] sm:$0xf]
  %v272 = vld [vmem:[%s2 + $0xfc] sm:$0xf]
  %v273 = vld [vmem:[%s3] sm:$0xf]
  %v274 = vld [vmem:[%s3 + $0x4] sm:$0xf]
  %v275 = vld [vmem:[%s3 + $0x8] sm:$0xf]
  %v276 = vld [vmem:[%s3 + $0xc] sm:$0xf]
  %v277 = vld [vmem:[%s3 + $0x10] sm:$0xf]
  %v278 = vld [vmem:[%s3 + $0x14] sm:$0xf]
  %v279 = vld [vmem:[%s3 + $0x18] sm:$0xf]
  %v280 = vld [vmem:[%s3 + $0x1c] sm:$0xf]
  %v281 = vld [vmem:[%s3 + $0x20] sm:$0xf]
  %v282 = vld [vmem:[%s3 + $0x24] sm:$0xf]
  %v283 = vld [vmem:[%s3 + $0x28] sm:$0xf]
  %v284 = vld [vmem:[%s3 + $0x2c] sm:$0xf]
  %v285 = vld [vmem:[%s3 + $0x30] sm:$0xf]
  %v286 = vld [vmem:[%s3 + $0x34] sm:$0xf]
  %v287 = vld [vmem:[%s3 + $0x38] sm:$0xf]
  %v288 = vld [vmem:[%s3 + $0x3c] sm:$0xf]
  %v289 = vld [vmem:[%s3 + $0x40] sm:$0xf]
  %v290 = vld [vmem:[%s3 + $0x44] sm:$0xf]
  %v291 = vld [vmem:[%s3 + $0x48] sm:$0xf]
  %v292 = vld [vmem:[%s3 + $0x4c] sm:$0xf]
  %v293 = vld [vmem:[%s3 + $0x50] sm:$0xf]
  %v294 = vld [vmem:[%s3 + $0x54] sm:$0xf]
  %v295 = vld [vmem:[%s3 + $0x58] sm:$0xf]
  %v296 = vld [vmem:[%s3 + $0x5c] sm:$0xf]
  %v297 = vld [vmem:[%s3 + $0x60] sm:$0xf]
  %v298 = vld [vmem:[%s3 + $0x64] sm:$0xf]
  %v299 = vld [vmem:[%s3 + $0x68] sm:$0xf]
  %v300 = vld [vmem:[%s3 + $0x6c] sm:$0xf]
  %v301 = vld [vmem:[%s3 + $0x70] sm:$0xf]
  %v302 = vld [vmem:[%s3 + $0x74] sm:$0xf]
  %v303 = vld [vmem:[%s3 + $0x78] sm:$0xf]
  %v304 = vld [vmem:[%s3 + $0x7c] sm:$0xf]
  %v305 = vld [vmem:[%s3 + $0x80] sm:$0xf]
  %v306 = vld [vmem:[%s3 + $0x84] sm:$0xf]
  %v307 = vld [vmem:[%s3 + $0x88] sm:$0xf]
  %v308 = vld [vmem:[%s3 + $0x8c] sm:$0xf]
  %v309 = vld [vmem:[%s3 + $0x90] sm:$0xf]
  %v310 = vld [vmem:[%s3 + $0x94] sm:$0xf]
  %v311 = vld [vmem:[%s3 + $0x98] sm:$0xf]
  %v312 = vld [vmem:[%s3 + $0x9c] sm:$0xf]
  %v313 = vld [vmem:[%s3 + $0xa0] sm:$0xf]
  %v314 = vld [vmem:[%s3 + $0xa4] sm:$0xf]
  %v315 = vld [vmem:[%s3 + $0xa8] sm:$0xf]
  %v316 = vld [vmem:[%s3 + $0xac] sm:$0xf]
  %v317 = vld [vmem:[%s3 + $0xb0] sm:$0xf]
  %v318 = vld [vmem:[%s3 + $0xb4] sm:$0xf]
  %v319 = vld [vmem:[%s3 + $0xb8] sm:$0xf]
  %v320 = vld [vmem:[%s3 + $0xbc] sm:$0xf]
  %v321 = vld [vmem:[%s3 + $0xc0] sm:$0xf]
  %v322 = vld [vmem:[%s3 + $0xc4] sm:$0xf]
  %v323 = vld [vmem:[%s3 + $0xc8] sm:$0xf]
  %v324 = vld [vmem:[%s3 + $0xcc] sm:$0xf]
  %v325 = vld [vmem:[%s3 + $0xd0] sm:$0xf]
  %v326 = vld [vmem:[%s3 + $0xd4] sm:$0xf]
  %v327 = vld [vmem:[%s3 + $0xd8] sm:$0xf]
  %v328 = vld [vmem:[%s3 + $0xdc] sm:$0xf]
  %v329 = vld [vmem:[%s3 + $0xe0] sm:$0xf]
  %v330 = vld [vmem:[%s3 + $0xe4] sm:$0xf]
  %v331 = vld [vmem:[%s3 + $0xe8] sm:$0xf]
  %v332 = vld [vmem:[%s3 + $0xec] sm:$0xf]
  %v333 = vld [vmem:[%s3 + $0xf0] sm:$0xf]
  %v334 = vld [vmem:[%s3 + $0xf4] sm:$0xf]
  %v335 = vld [vmem:[%s3 + $0xf8] sm:$0xf]
  %v336 = vld [vmem:[%s3 + $0xfc] sm:$0xf]
  %v337 = vmax.bf16 %v209, %v273
  %v338 = vmax.bf16 %v210, %v274
  %v339 = vmax.bf16 %v211, %v275
  %v340 = vmax.bf16 %v212, %v276
  %v341 = vmax.bf16 %v213, %v277
  %v342 = vmax.bf16 %v214, %v278
  %v343 = vmax.bf16 %v215, %v279
  %v344 = vmax.bf16 %v216, %v280
  %v345 = vmax.bf16 %v217, %v281
  %v346 = vmax.bf16 %v218, %v282
  %v347 = vmax.bf16 %v219, %v283
  %v348 = vmax.bf16 %v220, %v284
  %v349 = vmax.bf16 %v221, %v285
  %v350 = vmax.bf16 %v222, %v286
  %v351 = vmax.bf16 %v223, %v287
  %v352 = vmax.bf16 %v224, %v288
  %v353 = vmax.bf16 %v225, %v289
  %v354 = vmax.bf16 %v226, %v290
  %v355 = vmax.bf16 %v227, %v291
  %v356 = vmax.bf16 %v228, %v292
  %v357 = vmax.bf16 %v229, %v293
  %v358 = vmax.bf16 %v230, %v294
  %v359 = vmax.bf16 %v231, %v295
  %v360 = vmax.bf16 %v232, %v296
  %v361 = vmax.bf16 %v233, %v297
  %v362 = vmax.bf16 %v234, %v298
  %v363 = vmax.bf16 %v235, %v299
  %v364 = vmax.bf16 %v236, %v300
  %v365 = vmax.bf16 %v237, %v301
  %v366 = vmax.bf16 %v238, %v302
  %v367 = vmax.bf16 %v239, %v303
  %v368 = vmax.bf16 %v240, %v304
  %v369 = vmax.bf16 %v241, %v305
  %v370 = vmax.bf16 %v242, %v306
  %v371 = vmax.bf16 %v243, %v307
  %v372 = vmax.bf16 %v244, %v308
  %v373 = vmax.bf16 %v245, %v309
  %v374 = vmax.bf16 %v246, %v310
  %v375 = vmax.bf16 %v247, %v311
  %v376 = vmax.bf16 %v248, %v312
  %v377 = vmax.bf16 %v249, %v313
  %v378 = vmax.bf16 %v250, %v314
  %v379 = vmax.bf16 %v251, %v315
  %v380 = vmax.bf16 %v252, %v316
  %v381 = vmax.bf16 %v253, %v317
  %v382 = vmax.bf16 %v254, %v318
  %v383 = vmax.bf16 %v255, %v319
  %v384 = vmax.bf16 %v256, %v320
  %v385 = vmax.bf16 %v257, %v321
  %v386 = vmax.bf16 %v258, %v322
  %v387 = vmax.bf16 %v259, %v323
  %v388 = vmax.bf16 %v260, %v324
  %v389 = vmax.bf16 %v261, %v325
  %v390 = vmax.bf16 %v262, %v326
  %v391 = vmax.bf16 %v263, %v327
  %v392 = vmax.bf16 %v264, %v328
  %v393 = vmax.bf16 %v265, %v329
  %v394 = vmax.bf16 %v266, %v330
  %v395 = vmax.bf16 %v267, %v331
  %v396 = vmax.bf16 %v268, %v332
  %v397 = vmax.bf16 %v269, %v333
  %v398 = vmax.bf16 %v270, %v334
  %v399 = vmax.bf16 %v271, %v335
  %v400 = vmax.bf16 %v272, %v336
  %v401 = vmax.bf16 %v145, %v337
  %v402 = vmax.bf16 %v146, %v338
  %v403 = vmax.bf16 %v147, %v339
  %v404 = vmax.bf16 %v148, %v340
  %v405 = vmax.bf16 %v149, %v341
  %v406 = vmax.bf16 %v150, %v342
  %v407 = vmax.bf16 %v151, %v343
  %v408 = vmax.bf16 %v152, %v344
  %v409 = vmax.bf16 %v153, %v345
  %v410 = vmax.bf16 %v154, %v346
  %v411 = vmax.bf16 %v155, %v347
  %v412 = vmax.bf16 %v156, %v348
  %v413 = vmax.bf16 %v157, %v349
  %v414 = vmax.bf16 %v158, %v350
  %v415 = vmax.bf16 %v159, %v351
  %v416 = vmax.bf16 %v160, %v352
  %v417 = vmax.bf16 %v161, %v353
  %v418 = vmax.bf16 %v162, %v354
  %v419 = vmax.bf16 %v163, %v355
  %v420 = vmax.bf16 %v164, %v356
  %v421 = vmax.bf16 %v165, %v357
  %v422 = vmax.bf16 %v166, %v358
  %v423 = vmax.bf16 %v167, %v359
  %v424 = vmax.bf16 %v168, %v360
  %v425 = vmax.bf16 %v169, %v361
  %v426 = vmax.bf16 %v170, %v362
  %v427 = vmax.bf16 %v171, %v363
  %v428 = vmax.bf16 %v172, %v364
  %v429 = vmax.bf16 %v173, %v365
  %v430 = vmax.bf16 %v174, %v366
  %v431 = vmax.bf16 %v175, %v367
  %v432 = vmax.bf16 %v176, %v368
  %v433 = vmax.bf16 %v177, %v369
  %v434 = vmax.bf16 %v178, %v370
  %v435 = vmax.bf16 %v179, %v371
  %v436 = vmax.bf16 %v180, %v372
  %v437 = vmax.bf16 %v181, %v373
  %v438 = vmax.bf16 %v182, %v374
  %v439 = vmax.bf16 %v183, %v375
  %v440 = vmax.bf16 %v184, %v376
  %v441 = vmax.bf16 %v185, %v377
  %v442 = vmax.bf16 %v186, %v378
  %v443 = vmax.bf16 %v187, %v379
  %v444 = vmax.bf16 %v188, %v380
  %v445 = vmax.bf16 %v189, %v381
  %v446 = vmax.bf16 %v190, %v382
  %v447 = vmax.bf16 %v191, %v383
  %v448 = vmax.bf16 %v192, %v384
  %v449 = vmax.bf16 %v193, %v385
  %v450 = vmax.bf16 %v194, %v386
  %v451 = vmax.bf16 %v195, %v387
  %v452 = vmax.bf16 %v196, %v388
  %v453 = vmax.bf16 %v197, %v389
  %v454 = vmax.bf16 %v198, %v390
  %v455 = vmax.bf16 %v199, %v391
  %v456 = vmax.bf16 %v200, %v392
  %v457 = vmax.bf16 %v201, %v393
  %v458 = vmax.bf16 %v202, %v394
  %v459 = vmax.bf16 %v203, %v395
  %v460 = vmax.bf16 %v204, %v396
  %v461 = vmax.bf16 %v205, %v397
  %v462 = vmax.bf16 %v206, %v398
  %v463 = vmax.bf16 %v207, %v399
  %v464 = vmax.bf16 %v208, %v400
  %vm465 = vcmask 257024
  %466 = vst.msk [vmem:[%s4] sm:$0xf] %vm465, %v401
  %467 = vst.msk [vmem:[%s4 + $0x4] sm:$0xf] %vm465, %v402
  %468 = vst.msk [vmem:[%s4 + $0x8] sm:$0xf] %vm465, %v403
  %469 = vst.msk [vmem:[%s4 + $0xc] sm:$0xf] %vm465, %v404
  %470 = vst.msk [vmem:[%s4 + $0x10] sm:$0xf] %vm465, %v405
  %471 = vst.msk [vmem:[%s4 + $0x14] sm:$0xf] %vm465, %v406
  %472 = vst.msk [vmem:[%s4 + $0x18] sm:$0xf] %vm465, %v407
  %473 = vst.msk [vmem:[%s4 + $0x1c] sm:$0xf] %vm465, %v408
  %474 = vst.msk [vmem:[%s4 + $0x20] sm:$0xf] %vm465, %v409
  %475 = vst.msk [vmem:[%s4 + $0x24] sm:$0xf] %vm465, %v410
  %476 = vst.msk [vmem:[%s4 + $0x28] sm:$0xf] %vm465, %v411
  %477 = vst.msk [vmem:[%s4 + $0x2c] sm:$0xf] %vm465, %v412
  %478 = vst.msk [vmem:[%s4 + $0x30] sm:$0xf] %vm465, %v413
  %479 = vst.msk [vmem:[%s4 + $0x34] sm:$0xf] %vm465, %v414
  %480 = vst.msk [vmem:[%s4 + $0x38] sm:$0xf] %vm465, %v415
  %481 = vst.msk [vmem:[%s4 + $0x3c] sm:$0xf] %vm465, %v416
  %482 = vst.msk [vmem:[%s4 + $0x40] sm:$0xf] %vm465, %v417
  %483 = vst.msk [vmem:[%s4 + $0x44] sm:$0xf] %vm465, %v418
  %484 = vst.msk [vmem:[%s4 + $0x48] sm:$0xf] %vm465, %v419
  %485 = vst.msk [vmem:[%s4 + $0x4c] sm:$0xf] %vm465, %v420
  %486 = vst.msk [vmem:[%s4 + $0x50] sm:$0xf] %vm465, %v421
  %487 = vst.msk [vmem:[%s4 + $0x54] sm:$0xf] %vm465, %v422
  %488 = vst.msk [vmem:[%s4 + $0x58] sm:$0xf] %vm465, %v423
  %489 = vst.msk [vmem:[%s4 + $0x5c] sm:$0xf] %vm465, %v424
  %490 = vst.msk [vmem:[%s4 + $0x60] sm:$0xf] %vm465, %v425
  %491 = vst.msk [vmem:[%s4 + $0x64] sm:$0xf] %vm465, %v426
  %492 = vst.msk [vmem:[%s4 + $0x68] sm:$0xf] %vm465, %v427
  %493 = vst.msk [vmem:[%s4 + $0x6c] sm:$0xf] %vm465, %v428
  %494 = vst.msk [vmem:[%s4 + $0x70] sm:$0xf] %vm465, %v429
  %495 = vst.msk [vmem:[%s4 + $0x74] sm:$0xf] %vm465, %v430
  %496 = vst.msk [vmem:[%s4 + $0x78] sm:$0xf] %vm465, %v431
  %497 = vst.msk [vmem:[%s4 + $0x7c] sm:$0xf] %vm465, %v432
  %498 = vst.msk [vmem:[%s4 + $0x80] sm:$0xf] %vm465, %v433
  %499 = vst.msk [vmem:[%s4 + $0x84] sm:$0xf] %vm465, %v434
  %500 = vst.msk [vmem:[%s4 + $0x88] sm:$0xf] %vm465, %v435
  %501 = vst.msk [vmem:[%s4 + $0x8c] sm:$0xf] %vm465, %v436
  %502 = vst.msk [vmem:[%s4 + $0x90] sm:$0xf] %vm465, %v437
  %503 = vst.msk [vmem:[%s4 + $0x94] sm:$0xf] %vm465, %v438
  %504 = vst.msk [vmem:[%s4 + $0x98] sm:$0xf] %vm465, %v439
  %505 = vst.msk [vmem:[%s4 + $0x9c] sm:$0xf] %vm465, %v440
  %506 = vst.msk [vmem:[%s4 + $0xa0] sm:$0xf] %vm465, %v441
  %507 = vst.msk [vmem:[%s4 + $0xa4] sm:$0xf] %vm465, %v442
  %508 = vst.msk [vmem:[%s4 + $0xa8] sm:$0xf] %vm465, %v443
  %509 = vst.msk [vmem:[%s4 + $0xac] sm:$0xf] %vm465, %v444
  %510 = vst.msk [vmem:[%s4 + $0xb0] sm:$0xf] %vm465, %v445
  %511 = vst.msk [vmem:[%s4 + $0xb4] sm:$0xf] %vm465, %v446
  %512 = vst.msk [vmem:[%s4 + $0xb8] sm:$0xf] %vm465, %v447
  %513 = vst.msk [vmem:[%s4 + $0xbc] sm:$0xf] %vm465, %v448
  %514 = vst.msk [vmem:[%s4 + $0xc0] sm:$0xf] %vm465, %v449
  %515 = vst.msk [vmem:[%s4 + $0xc4] sm:$0xf] %vm465, %v450
  %516 = vst.msk [vmem:[%s4 + $0xc8] sm:$0xf] %vm465, %v451
  %517 = vst.msk [vmem:[%s4 + $0xcc] sm:$0xf] %vm465, %v452
  %518 = vst.msk [vmem:[%s4 + $0xd0] sm:$0xf] %vm465, %v453
  %519 = vst.msk [vmem:[%s4 + $0xd4] sm:$0xf] %vm465, %v454
  %520 = vst.msk [vmem:[%s4 + $0xd8] sm:$0xf] %vm465, %v455
  %521 = vst.msk [vmem:[%s4 + $0xdc] sm:$0xf] %vm465, %v456
  %522 = vst.msk [vmem:[%s4 + $0xe0] sm:$0xf] %vm465, %v457
  %523 = vst.msk [vmem:[%s4 + $0xe4] sm:$0xf] %vm465, %v458
  %524 = vst.msk [vmem:[%s4 + $0xe8] sm:$0xf] %vm465, %v459
  %525 = vst.msk [vmem:[%s4 + $0xec] sm:$0xf] %vm465, %v460
  %526 = vst.msk [vmem:[%s4 + $0xf0] sm:$0xf] %vm465, %v461
  %527 = vst.msk [vmem:[%s4 + $0xf4] sm:$0xf] %vm465, %v462
  %528 = vst.msk [vmem:[%s4 + $0xf8] sm:$0xf] %vm465, %v463
  %529 = vst.msk [vmem:[%s4 + $0xfc] sm:$0xf] %vm465, %v464
  // Predicated region
  $region18: #{net_forward.10} parent=0 // pred_check
    _
  $region19: #{net_forward.10} parent=0 // pred_check_branch
    %531 = sbr.rel (0) target = $region21
  $region20: #{net_forward.10} parent=0 // pred_region
    _
  $region21: #{net_forward.10} parent=0 // pred_fallthru
    _
  // Predicated region
  $region22: #{net_forward.10} parent=0 // pred_check
    _
  $region23: #{net_forward.10} parent=0 // pred_check_branch
    %533 = sbr.rel (0) target = $region25
  $region24: #{net_forward.10} parent=0 // pred_region
    _
  $region25: #{net_forward.10} parent=0 // pred_fallthru
    _

// kernel: net_forward.11
$region0: #{net_forward.11}
  #allocation0 [shape = 'u32[]', space=smem, size = 0x4, offset = 0x4, fixed_abs, tag = 'smem constant byte address 0x4 - core index']
  #allocation1 [shape = 'u32[144,128]{1,0:T(1,128)}', space=vmem, size = 0x12000, scoped, tag = 'internal scratch']
  %s0 = inlined_call_operand.vmem [shape: bf16[512,288], index: 0, kind: input, shape index: {}]
  %s1 = inlined_call_operand.vmem [shape: bf16[288,64], index: 1, kind: input, shape index: {}]
  %s2 = inlined_call_operand.vmem [shape: f32[1,64], index: 2, kind: input, shape index: {}]
  %s3 = inlined_call_operand.vmem [shape: bf16[512,64], index: 3, kind: output, shape index: {}]
  %s4 = sld [smem:[#allocation0]]
  $region22: #{net_forward.11} parent=0
    _
  %s6 = ssub.s32 1, %s4
  %s7 = scalar_select 0, %s6, %s4
  // Predicated region
  $region2: #{net_forward.11} parent=0 // pred_check
    _
  $region3: #{net_forward.11} parent=0 // pred_check_branch
    %9 = sbr.rel (0) target = $region5
  $region4: #{net_forward.11} parent=0 // pred_region
    _
  $region5: #{net_forward.11} parent=0 // pred_fallthru
    _
  // Predicated region
  $region6: #{net_forward.11} parent=0 // pred_check
    _
  $region7: #{net_forward.11} parent=0 // pred_check_branch
    %11 = sbr.rel (0) target = $region9
  $region8: #{net_forward.11} parent=0 // pred_region
    _
  $region9: #{net_forward.11} parent=0 // pred_fallthru
    _
  // Predicated region
  $region10: #{net_forward.11} parent=0 // pred_check
    _
  $region11: #{net_forward.11} parent=0 // pred_check_branch
    %13 = sbr.rel (0) target = $region13
  $region12: #{net_forward.11} parent=0 // pred_region
    _
  $region13: #{net_forward.11} parent=0 // pred_fallthru
    _
  %v15 = vld [vmem:[%s0] sm:$0xff]
  %v16 = vld [vmem:[%s0 + $0x8] sm:$0xf]
  %v17 = vld [vmem:[%s0 + $0xc] sm:$0xff]
  %v18 = vld [vmem:[%s0 + $0x14] sm:$0xf]
  %v19 = vld [vmem:[%s0 + $0x18] sm:$0xff]
  %v20 = vld [vmem:[%s0 + $0x20] sm:$0xf]
  %v21 = vld [vmem:[%s0 + $0x24] sm:$0xff]
  %v22 = vld [vmem:[%s0 + $0x2c] sm:$0xf]
  %v23 = vld [vmem:[%s0 + $0x30] sm:$0xff]
  %v24 = vld [vmem:[%s0 + $0x38] sm:$0xf]
  %v25 = vld [vmem:[%s0 + $0x3c] sm:$0xff]
  %v26 = vld [vmem:[%s0 + $0x44] sm:$0xf]
  %v27 = vld [vmem:[%s0 + $0x48] sm:$0xff]
  %v28 = vld [vmem:[%s0 + $0x50] sm:$0xf]
  %v29 = vld [vmem:[%s0 + $0x54] sm:$0xff]
  %v30 = vld [vmem:[%s0 + $0x5c] sm:$0xf]
  %v31 = vld [vmem:[%s0 + $0x60] sm:$0xff]
  %v32 = vld [vmem:[%s0 + $0x68] sm:$0xf]
  %v33 = vld [vmem:[%s0 + $0x6c] sm:$0xff]
  %v34 = vld [vmem:[%s0 + $0x74] sm:$0xf]
  %v35 = vld [vmem:[%s0 + $0x78] sm:$0xff]
  %v36 = vld [vmem:[%s0 + $0x80] sm:$0xf]
  %v37 = vld [vmem:[%s0 + $0x84] sm:$0xff]
  %v38 = vld [vmem:[%s0 + $0x8c] sm:$0xf]
  %v39 = vld [vmem:[%s0 + $0x90] sm:$0xff]
  %v40 = vld [vmem:[%s0 + $0x98] sm:$0xf]
  %v41 = vld [vmem:[%s0 + $0x9c] sm:$0xff]
  %v42 = vld [vmem:[%s0 + $0xa4] sm:$0xf]
  %v43 = vld [vmem:[%s0 + $0xa8] sm:$0xff]
  %v44 = vld [vmem:[%s0 + $0xb0] sm:$0xf]
  %v45 = vld [vmem:[%s0 + $0xb4] sm:$0xff]
  %v46 = vld [vmem:[%s0 + $0xbc] sm:$0xf]
  %v47 = vld [vmem:[%s0 + $0xc0] sm:$0xff]
  %v48 = vld [vmem:[%s0 + $0xc8] sm:$0xf]
  %v49 = vld [vmem:[%s0 + $0xcc] sm:$0xff]
  %v50 = vld [vmem:[%s0 + $0xd4] sm:$0xf]
  %v51 = vld [vmem:[%s0 + $0xd8] sm:$0xff]
  %v52 = vld [vmem:[%s0 + $0xe0] sm:$0xf]
  %v53 = vld [vmem:[%s0 + $0xe4] sm:$0xff]
  %v54 = vld [vmem:[%s0 + $0xec] sm:$0xf]
  %v55 = vld [vmem:[%s0 + $0xf0] sm:$0xff]
  %v56 = vld [vmem:[%s0 + $0xf8] sm:$0xf]
  %v57 = vld [vmem:[%s0 + $0xfc] sm:$0xff]
  %v58 = vld [vmem:[%s0 + $0x104] sm:$0xf]
  %v59 = vld [vmem:[%s0 + $0x108] sm:$0xff]
  %v60 = vld [vmem:[%s0 + $0x110] sm:$0xf]
  %v61 = vld [vmem:[%s0 + $0x114] sm:$0xff]
  %v62 = vld [vmem:[%s0 + $0x11c] sm:$0xf]
  %v63 = vld [vmem:[%s0 + $0x120] sm:$0xff]
  %v64 = vld [vmem:[%s0 + $0x128] sm:$0xf]
  %v65 = vld [vmem:[%s0 + $0x12c] sm:$0xff]
  %v66 = vld [vmem:[%s0 + $0x134] sm:$0xf]
  %v67 = vld [vmem:[%s0 + $0x138] sm:$0xff]
  %v68 = vld [vmem:[%s0 + $0x140] sm:$0xf]
  %v69 = vld [vmem:[%s0 + $0x144] sm:$0xff]
  %v70 = vld [vmem:[%s0 + $0x14c] sm:$0xf]
  %v71 = vld [vmem:[%s0 + $0x150] sm:$0xff]
  %v72 = vld [vmem:[%s0 + $0x158] sm:$0xf]
  %v73 = vld [vmem:[%s0 + $0x15c] sm:$0xff]
  %v74 = vld [vmem:[%s0 + $0x164] sm:$0xf]
  %v75 = vld [vmem:[%s0 + $0x168] sm:$0xff]
  %v76 = vld [vmem:[%s0 + $0x170] sm:$0xf]
  %v77 = vld [vmem:[%s0 + $0x174] sm:$0xff]
  %v78 = vld [vmem:[%s0 + $0x17c] sm:$0xf]
  %v79 = vld [vmem:[%s0 + $0x180] sm:$0xff]
  %v80 = vld [vmem:[%s0 + $0x188] sm:$0xf]
  %v81 = vld [vmem:[%s0 + $0x18c] sm:$0xff]
  %v82 = vld [vmem:[%s0 + $0x194] sm:$0xf]
  %v83 = vld [vmem:[%s0 + $0x198] sm:$0xff]
  %v84 = vld [vmem:[%s0 + $0x1a0] sm:$0xf]
  %v85 = vld [vmem:[%s0 + $0x1a4] sm:$0xff]
  %v86 = vld [vmem:[%s0 + $0x1ac] sm:$0xf]
  %v87 = vld [vmem:[%s0 + $0x1b0] sm:$0xff]
  %v88 = vld [vmem:[%s0 + $0x1b8] sm:$0xf]
  %v89 = vld [vmem:[%s0 + $0x1bc] sm:$0xff]
  %v90 = vld [vmem:[%s0 + $0x1c4] sm:$0xf]
  %v91 = vld [vmem:[%s0 + $0x1c8] sm:$0xff]
  %v92 = vld [vmem:[%s0 + $0x1d0] sm:$0xf]
  %v93 = vld [vmem:[%s0 + $0x1d4] sm:$0xff]
  %v94 = vld [vmem:[%s0 + $0x1dc] sm:$0xf]
  %v95 = vld [vmem:[%s0 + $0x1e0] sm:$0xff]
  %v96 = vld [vmem:[%s0 + $0x1e8] sm:$0xf]
  %v97 = vld [vmem:[%s0 + $0x1ec] sm:$0xff]
  %v98 = vld [vmem:[%s0 + $0x1f4] sm:$0xf]
  %v99 = vld [vmem:[%s0 + $0x1f8] sm:$0xff]
  %v100 = vld [vmem:[%s0 + $0x200] sm:$0xf]
  %v101 = vld [vmem:[%s0 + $0x204] sm:$0xff]
  %v102 = vld [vmem:[%s0 + $0x20c] sm:$0xf]
  %v103 = vld [vmem:[%s0 + $0x210] sm:$0xff]
  %v104 = vld [vmem:[%s0 + $0x218] sm:$0xf]
  %v105 = vld [vmem:[%s0 + $0x21c] sm:$0xff]
  %v106 = vld [vmem:[%s0 + $0x224] sm:$0xf]
  %v107 = vld [vmem:[%s0 + $0x228] sm:$0xff]
  %v108 = vld [vmem:[%s0 + $0x230] sm:$0xf]
  %v109 = vld [vmem:[%s0 + $0x234] sm:$0xff]
  %v110 = vld [vmem:[%s0 + $0x23c] sm:$0xf]
  %v111 = vld [vmem:[%s0 + $0x240] sm:$0xff]
  %v112 = vld [vmem:[%s0 + $0x248] sm:$0xf]
  %v113 = vld [vmem:[%s0 + $0x24c] sm:$0xff]
  %v114 = vld [vmem:[%s0 + $0x254] sm:$0xf]
  %v115 = vld [vmem:[%s0 + $0x258] sm:$0xff]
  %v116 = vld [vmem:[%s0 + $0x260] sm:$0xf]
  %v117 = vld [vmem:[%s0 + $0x264] sm:$0xff]
  %v118 = vld [vmem:[%s0 + $0x26c] sm:$0xf]
  %v119 = vld [vmem:[%s0 + $0x270] sm:$0xff]
  %v120 = vld [vmem:[%s0 + $0x278] sm:$0xf]
  %v121 = vld [vmem:[%s0 + $0x27c] sm:$0xff]
  %v122 = vld [vmem:[%s0 + $0x284] sm:$0xf]
  %v123 = vld [vmem:[%s0 + $0x288] sm:$0xff]
  %v124 = vld [vmem:[%s0 + $0x290] sm:$0xf]
  %v125 = vld [vmem:[%s0 + $0x294] sm:$0xff]
  %v126 = vld [vmem:[%s0 + $0x29c] sm:$0xf]
  %v127 = vld [vmem:[%s0 + $0x2a0] sm:$0xff]
  %v128 = vld [vmem:[%s0 + $0x2a8] sm:$0xf]
  %v129 = vld [vmem:[%s0 + $0x2ac] sm:$0xff]
  %v130 = vld [vmem:[%s0 + $0x2b4] sm:$0xf]
  %v131 = vld [vmem:[%s0 + $0x2b8] sm:$0xff]
  %v132 = vld [vmem:[%s0 + $0x2c0] sm:$0xf]
  %v133 = vld [vmem:[%s0 + $0x2c4] sm:$0xff]
  %v134 = vld [vmem:[%s0 + $0x2cc] sm:$0xf]
  %v135 = vld [vmem:[%s0 + $0x2d0] sm:$0xff]
  %v136 = vld [vmem:[%s0 + $0x2d8] sm:$0xf]
  %v137 = vld [vmem:[%s0 + $0x2dc] sm:$0xff]
  %v138 = vld [vmem:[%s0 + $0x2e4] sm:$0xf]
  %v139 = vld [vmem:[%s0 + $0x2e8] sm:$0xff]
  %v140 = vld [vmem:[%s0 + $0x2f0] sm:$0xf]
  %v141 = vld [vmem:[%s0 + $0x2f4] sm:$0xff]
  %v142 = vld [vmem:[%s0 + $0x2fc] sm:$0xf]
  %v143 = vld [vmem:[%s1] sm:$0xf]
  %v144 = vld [vmem:[%s1 + $0x4] sm:$0xf]
  %v145 = vld [vmem:[%s1 + $0x8] sm:$0xf]
  %v146 = vld [vmem:[%s1 + $0xc] sm:$0xf]
  %v147 = vld [vmem:[%s1 + $0x10] sm:$0xf]
  %v148 = vld [vmem:[%s1 + $0x14] sm:$0xf]
  %v149 = vld [vmem:[%s1 + $0x18] sm:$0xf]
  %v150 = vld [vmem:[%s1 + $0x1c] sm:$0xf]
  %v151 = vld [vmem:[%s1 + $0x20] sm:$0xf]
  %v152 = vld [vmem:[%s1 + $0x24] sm:$0xf]
  %v153 = vld [vmem:[%s1 + $0x28] sm:$0xf]
  %v154 = vld [vmem:[%s1 + $0x2c] sm:$0xf]
  %v155 = vld [vmem:[%s1 + $0x30] sm:$0xf]
  %v156 = vld [vmem:[%s1 + $0x34] sm:$0xf]
  %v157 = vld [vmem:[%s1 + $0x38] sm:$0xf]
  %v158 = vld [vmem:[%s1 + $0x3c] sm:$0xf]
  %v159 = vld [vmem:[%s1 + $0x40] sm:$0xf]
  %v160 = vld [vmem:[%s1 + $0x44] sm:$0xf]
  %v161 = vld [vmem:[%s1 + $0x48] sm:$0xf]
  %v162 = vld [vmem:[%s1 + $0x4c] sm:$0xf]
  %v163 = vld [vmem:[%s1 + $0x50] sm:$0xf]
  %v164 = vld [vmem:[%s1 + $0x54] sm:$0xf]
  %v165 = vld [vmem:[%s1 + $0x58] sm:$0xf]
  %v166 = vld [vmem:[%s1 + $0x5c] sm:$0xf]
  %v167 = vld [vmem:[%s1 + $0x60] sm:$0xf]
  %v168 = vld [vmem:[%s1 + $0x64] sm:$0xf]
  %v169 = vld [vmem:[%s1 + $0x68] sm:$0xf]
  %v170 = vld [vmem:[%s1 + $0x6c] sm:$0xf]
  %v171 = vld [vmem:[%s1 + $0x70] sm:$0xf]
  %v172 = vld [vmem:[%s1 + $0x74] sm:$0xf]
  %v173 = vld [vmem:[%s1 + $0x78] sm:$0xf]
  %v174 = vld [vmem:[%s1 + $0x7c] sm:$0xf]
  %v175 = vld [vmem:[%s1 + $0x80] sm:$0xf]
  %v176 = vld [vmem:[%s1 + $0x84] sm:$0xf]
  %v177 = vld [vmem:[%s1 + $0x88] sm:$0xf]
  %v178 = vld [vmem:[%s1 + $0x8c] sm:$0xf]
  %v179 = vld [vmem:[%s2] sm:$0x1]
  %v181 = vlaneseq
  %v182 = vshrl.u32 %v181, 7
  %v183 = vsub.s32 0, %v182
  %v184 = vrot.slane %v179, %v183
  %v314 = vunpack.c.l.b16 %v15
  %v315 = vunpack.c.h.b16 %v15
  %v316 = vunpack.c.l.b16 %v16
  %v317 = vunpack.c.l.b16 %v17
  %v318 = vunpack.c.h.b16 %v17
  %v319 = vunpack.c.l.b16 %v18
  %v320 = vunpack.c.l.b16 %v19
  %v321 = vunpack.c.h.b16 %v19
  %v322 = vunpack.c.l.b16 %v20
  %v323 = vunpack.c.l.b16 %v21
  %v324 = vunpack.c.h.b16 %v21
  %v325 = vunpack.c.l.b16 %v22
  %v326 = vunpack.c.l.b16 %v23
  %v327 = vunpack.c.h.b16 %v23
  %v328 = vunpack.c.l.b16 %v24
  %v329 = vunpack.c.l.b16 %v25
  %v330 = vunpack.c.h.b16 %v25
  %v331 = vunpack.c.l.b16 %v26
  %v332 = vunpack.c.l.b16 %v27
  %v333 = vunpack.c.h.b16 %v27
  %v334 = vunpack.c.l.b16 %v28
  %v335 = vunpack.c.l.b16 %v29
  %v336 = vunpack.c.h.b16 %v29
  %v337 = vunpack.c.l.b16 %v30
  %v338 = vunpack.c.l.b16 %v31
  %v339 = vunpack.c.h.b16 %v31
  %v340 = vunpack.c.l.b16 %v32
  %v341 = vunpack.c.l.b16 %v33
  %v342 = vunpack.c.h.b16 %v33
  %v343 = vunpack.c.l.b16 %v34
  %v344 = vunpack.c.l.b16 %v35
  %v345 = vunpack.c.h.b16 %v35
  %v346 = vunpack.c.l.b16 %v36
  %v347 = vunpack.c.l.b16 %v37
  %v348 = vunpack.c.h.b16 %v37
  %v349 = vunpack.c.l.b16 %v38
  %v350 = vunpack.c.l.b16 %v39
  %v351 = vunpack.c.h.b16 %v39
  %v352 = vunpack.c.l.b16 %v40
  %v353 = vunpack.c.l.b16 %v41
  %v354 = vunpack.c.h.b16 %v41
  %v355 = vunpack.c.l.b16 %v42
  %v356 = vunpack.c.l.b16 %v43
  %v357 = vunpack.c.h.b16 %v43
  %v358 = vunpack.c.l.b16 %v44
  %v359 = vunpack.c.l.b16 %v45
  %v360 = vunpack.c.h.b16 %v45
  %v361 = vunpack.c.l.b16 %v46
  %v362 = vunpack.c.l.b16 %v47
  %v363 = vunpack.c.h.b16 %v47
  %v364 = vunpack.c.l.b16 %v48
  %v365 = vunpack.c.l.b16 %v49
  %v366 = vunpack.c.h.b16 %v49
  %v367 = vunpack.c.l.b16 %v50
  %v368 = vunpack.c.l.b16 %v51
  %v369 = vunpack.c.h.b16 %v51
  %v370 = vunpack.c.l.b16 %v52
  %v371 = vunpack.c.l.b16 %v53
  %v372 = vunpack.c.h.b16 %v53
  %v373 = vunpack.c.l.b16 %v54
  %v374 = vunpack.c.l.b16 %v55
  %v375 = vunpack.c.h.b16 %v55
  %v376 = vunpack.c.l.b16 %v56
  %v377 = vunpack.c.l.b16 %v57
  %v378 = vunpack.c.h.b16 %v57
  %v379 = vunpack.c.l.b16 %v58
  %v380 = vunpack.c.l.b16 %v59
  %v381 = vunpack.c.h.b16 %v59
  %v382 = vunpack.c.l.b16 %v60
  %v383 = vunpack.c.l.b16 %v61
  %v384 = vunpack.c.h.b16 %v61
  %v385 = vunpack.c.l.b16 %v62
  %v386 = vunpack.c.l.b16 %v63
  %v387 = vunpack.c.h.b16 %v63
  %v388 = vunpack.c.l.b16 %v64
  %v389 = vunpack.c.l.b16 %v65
  %v390 = vunpack.c.h.b16 %v65
  %v391 = vunpack.c.l.b16 %v66
  %v392 = vunpack.c.l.b16 %v67
  %v393 = vunpack.c.h.b16 %v67
  %v394 = vunpack.c.l.b16 %v68
  %v395 = vunpack.c.l.b16 %v69
  %v396 = vunpack.c.h.b16 %v69
  %v397 = vunpack.c.l.b16 %v70
  %v398 = vunpack.c.l.b16 %v71
  %v399 = vunpack.c.h.b16 %v71
  %v400 = vunpack.c.l.b16 %v72
  %v401 = vunpack.c.l.b16 %v73
  %v402 = vunpack.c.h.b16 %v73
  %v403 = vunpack.c.l.b16 %v74
  %v404 = vunpack.c.l.b16 %v75
  %v405 = vunpack.c.h.b16 %v75
  %v406 = vunpack.c.l.b16 %v76
  %v407 = vunpack.c.l.b16 %v77
  %v408 = vunpack.c.h.b16 %v77
  %v409 = vunpack.c.l.b16 %v78
  %v410 = vunpack.c.l.b16 %v79
  %v411 = vunpack.c.h.b16 %v79
  %v412 = vunpack.c.l.b16 %v80
  %v413 = vunpack.c.l.b16 %v81
  %v414 = vunpack.c.h.b16 %v81
  %v415 = vunpack.c.l.b16 %v82
  %v416 = vunpack.c.l.b16 %v83
  %v417 = vunpack.c.h.b16 %v83
  %v418 = vunpack.c.l.b16 %v84
  %v419 = vunpack.c.l.b16 %v85
  %v420 = vunpack.c.h.b16 %v85
  %v421 = vunpack.c.l.b16 %v86
  %v422 = vunpack.c.l.b16 %v87
  %v423 = vunpack.c.h.b16 %v87
  %v424 = vunpack.c.l.b16 %v88
  %v425 = vunpack.c.l.b16 %v89
  %v426 = vunpack.c.h.b16 %v89
  %v427 = vunpack.c.l.b16 %v90
  %v428 = vunpack.c.l.b16 %v91
  %v429 = vunpack.c.h.b16 %v91
  %v430 = vunpack.c.l.b16 %v92
  %v431 = vunpack.c.l.b16 %v93
  %v432 = vunpack.c.h.b16 %v93
  %v433 = vunpack.c.l.b16 %v94
  %v434 = vunpack.c.l.b16 %v95
  %v435 = vunpack.c.h.b16 %v95
  %v436 = vunpack.c.l.b16 %v96
  %v437 = vunpack.c.l.b16 %v97
  %v438 = vunpack.c.h.b16 %v97
  %v439 = vunpack.c.l.b16 %v98
  %v440 = vunpack.c.l.b16 %v99
  %v441 = vunpack.c.h.b16 %v99
  %v442 = vunpack.c.l.b16 %v100
  %v443 = vunpack.c.l.b16 %v101
  %v444 = vunpack.c.h.b16 %v101
  %v445 = vunpack.c.l.b16 %v102
  %v446 = vunpack.c.l.b16 %v103
  %v447 = vunpack.c.h.b16 %v103
  %v448 = vunpack.c.l.b16 %v104
  %v449 = vunpack.c.l.b16 %v105
  %v450 = vunpack.c.h.b16 %v105
  %v451 = vunpack.c.l.b16 %v106
  %v452 = vunpack.c.l.b16 %v107
  %v453 = vunpack.c.h.b16 %v107
  %v454 = vunpack.c.l.b16 %v108
  %v455 = vunpack.c.l.b16 %v109
  %v456 = vunpack.c.h.b16 %v109
  %v457 = vunpack.c.l.b16 %v110
  %v458 = vunpack.c.l.b16 %v111
  %v459 = vunpack.c.h.b16 %v111
  %v460 = vunpack.c.l.b16 %v112
  %v461 = vunpack.c.l.b16 %v113
  %v462 = vunpack.c.h.b16 %v113
  %v463 = vunpack.c.l.b16 %v114
  %v464 = vunpack.c.l.b16 %v115
  %v465 = vunpack.c.h.b16 %v115
  %v466 = vunpack.c.l.b16 %v116
  %v467 = vunpack.c.l.b16 %v117
  %v468 = vunpack.c.h.b16 %v117
  %v469 = vunpack.c.l.b16 %v118
  %v470 = vunpack.c.l.b16 %v119
  %v471 = vunpack.c.h.b16 %v119
  %v472 = vunpack.c.l.b16 %v120
  %v473 = vunpack.c.l.b16 %v121
  %v474 = vunpack.c.h.b16 %v121
  %v475 = vunpack.c.l.b16 %v122
  %v476 = vunpack.c.l.b16 %v123
  %v477 = vunpack.c.h.b16 %v123
  %v478 = vunpack.c.l.b16 %v124
  %v479 = vunpack.c.l.b16 %v125
  %v480 = vunpack.c.h.b16 %v125
  %v481 = vunpack.c.l.b16 %v126
  %v482 = vunpack.c.l.b16 %v127
  %v483 = vunpack.c.h.b16 %v127
  %v484 = vunpack.c.l.b16 %v128
  %v485 = vunpack.c.l.b16 %v129
  %v486 = vunpack.c.h.b16 %v129
  %v487 = vunpack.c.l.b16 %v130
  %v488 = vunpack.c.l.b16 %v131
  %v489 = vunpack.c.h.b16 %v131
  %v490 = vunpack.c.l.b16 %v132
  %v491 = vunpack.c.l.b16 %v133
  %v492 = vunpack.c.h.b16 %v133
  %v493 = vunpack.c.l.b16 %v134
  %v494 = vunpack.c.l.b16 %v135
  %v495 = vunpack.c.h.b16 %v135
  %v496 = vunpack.c.l.b16 %v136
  %v497 = vunpack.c.l.b16 %v137
  %v498 = vunpack.c.h.b16 %v137
  %v499 = vunpack.c.l.b16 %v138
  %v500 = vunpack.c.l.b16 %v139
  %v501 = vunpack.c.h.b16 %v139
  %v502 = vunpack.c.l.b16 %v140
  %v503 = vunpack.c.l.b16 %v141
  %v504 = vunpack.c.h.b16 %v141
  %v505 = vunpack.c.l.b16 %v142
  %v506 = vpack.c.b16 %v317, %v314
  %v507 = vpack.c.b16 %v318, %v315
  %v508 = vpack.c.b16 %v319, %v316
  %v509 = vpack.c.b16 %v323, %v320
  %v510 = vpack.c.b16 %v324, %v321
  %v511 = vpack.c.b16 %v325, %v322
  %v512 = vpack.c.b16 %v329, %v326
  %v513 = vpack.c.b16 %v330, %v327
  %v514 = vpack.c.b16 %v331, %v328
  %v515 = vpack.c.b16 %v335, %v332
  %v516 = vpack.c.b16 %v336, %v333
  %v517 = vpack.c.b16 %v337, %v334
  %v518 = vpack.c.b16 %v341, %v338
  %v519 = vpack.c.b16 %v342, %v339
  %v520 = vpack.c.b16 %v343, %v340
  %v521 = vpack.c.b16 %v347, %v344
  %v522 = vpack.c.b16 %v348, %v345
  %v523 = vpack.c.b16 %v349, %v346
  %v524 = vpack.c.b16 %v353, %v350
  %v525 = vpack.c.b16 %v354, %v351
  %v526 = vpack.c.b16 %v355, %v352
  %v527 = vpack.c.b16 %v359, %v356
  %v528 = vpack.c.b16 %v360, %v357
  %v529 = vpack.c.b16 %v361, %v358
  %v530 = vpack.c.b16 %v365, %v362
  %v531 = vpack.c.b16 %v366, %v363
  %v532 = vpack.c.b16 %v367, %v364
  %v533 = vpack.c.b16 %v371, %v368
  %v534 = vpack.c.b16 %v372, %v369
  %v535 = vpack.c.b16 %v373, %v370
  %v536 = vpack.c.b16 %v377, %v374
  %v537 = vpack.c.b16 %v378, %v375
  %v538 = vpack.c.b16 %v379, %v376
  %v539 = vpack.c.b16 %v383, %v380
  %v540 = vpack.c.b16 %v384, %v381
  %v541 = vpack.c.b16 %v385, %v382
  %v542 = vpack.c.b16 %v389, %v386
  %v543 = vpack.c.b16 %v390, %v387
  %v544 = vpack.c.b16 %v391, %v388
  %v545 = vpack.c.b16 %v395, %v392
  %v546 = vpack.c.b16 %v396, %v393
  %v547 = vpack.c.b16 %v397, %v394
  %v548 = vpack.c.b16 %v401, %v398
  %v549 = vpack.c.b16 %v402, %v399
  %v550 = vpack.c.b16 %v403, %v400
  %v551 = vpack.c.b16 %v407, %v404
  %v552 = vpack.c.b16 %v408, %v405
  %v553 = vpack.c.b16 %v409, %v406
  %v554 = vpack.c.b16 %v413, %v410
  %v555 = vpack.c.b16 %v414, %v411
  %v556 = vpack.c.b16 %v415, %v412
  %v557 = vpack.c.b16 %v419, %v416
  %v558 = vpack.c.b16 %v420, %v417
  %v559 = vpack.c.b16 %v421, %v418
  %v560 = vpack.c.b16 %v425, %v422
  %v561 = vpack.c.b16 %v426, %v423
  %v562 = vpack.c.b16 %v427, %v424
  %v563 = vpack.c.b16 %v431, %v428
  %v564 = vpack.c.b16 %v432, %v429
  %v565 = vpack.c.b16 %v433, %v430
  %v566 = vpack.c.b16 %v437, %v434
  %v567 = vpack.c.b16 %v438, %v435
  %v568 = vpack.c.b16 %v439, %v436
  %v569 = vpack.c.b16 %v443, %v440
  %v570 = vpack.c.b16 %v444, %v441
  %v571 = vpack.c.b16 %v445, %v442
  %v572 = vpack.c.b16 %v449, %v446
  %v573 = vpack.c.b16 %v450, %v447
  %v574 = vpack.c.b16 %v451, %v448
  %v575 = vpack.c.b16 %v455, %v452
  %v576 = vpack.c.b16 %v456, %v453
  %v577 = vpack.c.b16 %v457, %v454
  %v578 = vpack.c.b16 %v461, %v458
  %v579 = vpack.c.b16 %v462, %v459
  %v580 = vpack.c.b16 %v463, %v460
  %v581 = vpack.c.b16 %v467, %v464
  %v582 = vpack.c.b16 %v468, %v465
  %v583 = vpack.c.b16 %v469, %v466
  %v584 = vpack.c.b16 %v473, %v470
  %v585 = vpack.c.b16 %v474, %v471
  %v586 = vpack.c.b16 %v475, %v472
  %v587 = vpack.c.b16 %v479, %v476
  %v588 = vpack.c.b16 %v480, %v477
  %v589 = vpack.c.b16 %v481, %v478
  %v590 = vpack.c.b16 %v485, %v482
  %v591 = vpack.c.b16 %v486, %v483
  %v592 = vpack.c.b16 %v487, %v484
  %v593 = vpack.c.b16 %v491, %v488
  %v594 = vpack.c.b16 %v492, %v489
  %v595 = vpack.c.b16 %v493, %v490
  %v596 = vpack.c.b16 %v497, %v494
  %v597 = vpack.c.b16 %v498, %v495
  %v598 = vpack.c.b16 %v499, %v496
  %v599 = vpack.c.b16 %v503, %v500
  %v600 = vpack.c.b16 %v504, %v501
  %v601 = vpack.c.b16 %v505, %v502
  %v702 = vunpack.c.l.b16 %v143
  %v703 = vunpack.c.l.b16 %v144
  %v704 = vunpack.c.l.b16 %v145
  %v705 = vunpack.c.l.b16 %v146
  %v706 = vunpack.c.l.b16 %v147
  %v707 = vunpack.c.l.b16 %v148
  %v708 = vunpack.c.l.b16 %v149
  %v709 = vunpack.c.l.b16 %v150
  %v710 = vunpack.c.l.b16 %v151
  %v711 = vunpack.c.l.b16 %v152
  %v712 = vunpack.c.l.b16 %v153
  %v713 = vunpack.c.l.b16 %v154
  %v714 = vunpack.c.l.b16 %v155
  %v715 = vunpack.c.l.b16 %v156
  %v716 = vunpack.c.l.b16 %v157
  %v717 = vunpack.c.l.b16 %v158
  %v718 = vunpack.c.l.b16 %v159
  %v719 = vunpack.c.l.b16 %v160
  %v720 = vunpack.c.l.b16 %v161
  %v721 = vunpack.c.l.b16 %v162
  %v722 = vunpack.c.l.b16 %v163
  %v723 = vunpack.c.l.b16 %v164
  %v724 = vunpack.c.l.b16 %v165
  %v725 = vunpack.c.l.b16 %v166
  %v726 = vunpack.c.l.b16 %v167
  %v727 = vunpack.c.l.b16 %v168
  %v728 = vunpack.c.l.b16 %v169
  %v729 = vunpack.c.l.b16 %v170
  %v730 = vunpack.c.l.b16 %v171
  %v731 = vunpack.c.l.b16 %v172
  %v732 = vunpack.c.l.b16 %v173
  %v733 = vunpack.c.l.b16 %v174
  %v734 = vunpack.c.l.b16 %v175
  %v735 = vunpack.c.l.b16 %v176
  %v736 = vunpack.c.l.b16 %v177
  %v737 = vunpack.c.l.b16 %v178
  %v738 = vpack.c.b16 %v703, %v702
  %v739 = vpack.c.b16 %v705, %v704
  %v740 = vpack.c.b16 %v707, %v706
  %v741 = vpack.c.b16 %v709, %v708
  %v742 = vpack.c.b16 %v711, %v710
  %v743 = vpack.c.b16 %v713, %v712
  %v744 = vpack.c.b16 %v715, %v714
  %v745 = vpack.c.b16 %v717, %v716
  %v746 = vpack.c.b16 %v719, %v718
  %v747 = vpack.c.b16 %v721, %v720
  %v748 = vpack.c.b16 %v723, %v722
  %v749 = vpack.c.b16 %v725, %v724
  %v750 = vpack.c.b16 %v727, %v726
  %v751 = vpack.c.b16 %v729, %v728
  %v752 = vpack.c.b16 %v731, %v730
  %v753 = vpack.c.b16 %v733, %v732
  %v754 = vpack.c.b16 %v735, %v734
  %v755 = vpack.c.b16 %v737, %v736
  %vm774 = vcmask 261120
  %v776 = vsel %vm774, %v508, 0
  %v779 = vsel %vm774, %v511, 0
  %v782 = vsel %vm774, %v514, 0
  %v785 = vsel %vm774, %v517, 0
  %v788 = vsel %vm774, %v520, 0
  %v791 = vsel %vm774, %v523, 0
  %v794 = vsel %vm774, %v526, 0
  %v797 = vsel %vm774, %v529, 0
  %v800 = vsel %vm774, %v532, 0
  %v803 = vsel %vm774, %v535, 0
  %v806 = vsel %vm774, %v538, 0
  %v809 = vsel %vm774, %v541, 0
  %v812 = vsel %vm774, %v544, 0
  %v815 = vsel %vm774, %v547, 0
  %v818 = vsel %vm774, %v550, 0
  %v821 = vsel %vm774, %v553, 0
  %v824 = vsel %vm774, %v556, 0
  %v827 = vsel %vm774, %v559, 0
  %v830 = vsel %vm774, %v562, 0
  %v833 = vsel %vm774, %v565, 0
  %v836 = vsel %vm774, %v568, 0
  %v839 = vsel %vm774, %v571, 0
  %v842 = vsel %vm774, %v574, 0
  %v845 = vsel %vm774, %v577, 0
  %v848 = vsel %vm774, %v580, 0
  %v851 = vsel %vm774, %v583, 0
  %v854 = vsel %vm774, %v586, 0
  %v857 = vsel %vm774, %v589, 0
  %v860 = vsel %vm774, %v592, 0
  %v863 = vsel %vm774, %v595, 0
  %v866 = vsel %vm774, %v598, 0
  %v869 = vsel %vm774, %v601, 0
  %871 = vmatprep.subr.bf16.mxu0 0
  %872 = vmatpush1.bf16.msra.mxu0 %v738
  %873 = vmatprep.subr.bf16.mxu0 0
  %874 = vmatpush1.bf16.msra.mxu0 %v739
  %875 = vmatprep.subr.bf16.mxu0 0
  %876 = vmatpush1.bf16.msra.mxu0 %v740
  %877 = vmatprep.subr.bf16.mxu0 0
  %878 = vmatpush1.bf16.msra.mxu0 %v741
  %879 = vmatprep.subr.bf16.mxu0 0
  %880 = vmatpush1.bf16.msra.mxu0 %v742
  %881 = vmatprep.subr.bf16.mxu0 0
  %882 = vmatpush1.bf16.msra.mxu0 %v743
  %883 = vmatprep.subr.bf16.mxu0 0
  %884 = vmatpush1.bf16.msra.mxu0 %v744
  %885 = vmatprep.subr.bf16.mxu0 0
  %886 = vmatpush1.bf16.msra.mxu0 %v745
  %887 = vmatprep.subr.bf16.mxu0 0
  %888 = vmatpush1.bf16.msra.mxu0 %v746
  %889 = vmatprep.subr.bf16.mxu0 0
  %890 = vmatpush1.bf16.msra.mxu0 %v747
  %891 = vmatprep.subr.bf16.mxu0 0
  %892 = vmatpush1.bf16.msra.mxu0 %v748
  %893 = vmatprep.subr.bf16.mxu0 0
  %894 = vmatpush1.bf16.msra.mxu0 %v749
  %895 = vmatprep.subr.bf16.mxu0 0
  %896 = vmatpush1.bf16.msra.mxu0 %v750
  %897 = vmatprep.subr.bf16.mxu0 0
  %898 = vmatpush1.bf16.msra.mxu0 %v751
  %899 = vmatprep.subr.bf16.mxu0 0
  %900 = vmatpush1.bf16.msra.mxu0 %v752
  %901 = vmatprep.subr.bf16.mxu0 0
  %902 = vmatpush1.bf16.msra.mxu0 %v753
  %903 = vmatprep.mubr.bf16.mxu0 %v507
  %904 = vmatmul.mubr.bf16.gmra.mrb[0].mxu0 %v506
  %v905 = vpop.f32.mrb[0].mxu0
  %v906 = vadd.f32 %v184, %v905
  %v907 = vpop.f32.mrb[0].mxu0
  %v908 = vpop.f32.mrb[0].mxu0
  %v909 = vadd.f32 %v184, %v908
  %v910 = vpop.f32.mrb[0].mxu0
  %911 = vmatprep.mubr.bf16.mxu0 %v510
  %912 = vmatmul.mubr.bf16.gmra.mrb[0].mxu0 %v509
  %v913 = vpop.f32.mrb[0].mxu0
  %v914 = vadd.f32 %v184, %v913
  %v915 = vpop.f32.mrb[0].mxu0
  %v916 = vpop.f32.mrb[0].mxu0
  %v917 = vadd.f32 %v184, %v916
  %v918 = vpop.f32.mrb[0].mxu0
  %919 = vmatprep.mubr.bf16.mxu0 %v513
  %920 = vmatmul.mubr.bf16.gmra.mrb[0].mxu0 %v512
  %v921 = vpop.f32.mrb[0].mxu0
  %v922 = vadd.f32 %v184, %v921
  %v923 = vpop.f32.mrb[0].mxu0
  %v924 = vpop.f32.mrb[0].mxu0
  %v925 = vadd.f32 %v184, %v924
  %v926 = vpop.f32.mrb[0].mxu0
  %927 = vmatprep.mubr.bf16.mxu0 %v516
  %928 = vmatmul.mubr.bf16.gmra.mrb[0].mxu0 %v515
  %v929 = vpop.f32.mrb[0].mxu0
  %v930 = vadd.f32 %v184, %v929
  %v931 = vpop.f32.mrb[0].mxu0
  %v932 = vpop.f32.mrb[0].mxu0
  %v933 = vadd.f32 %v184, %v932
  %v934 = vpop.f32.mrb[0].mxu0
  %935 = vmatprep.mubr.bf16.mxu0 %v519
  %936 = vmatmul.mubr.bf16.gmra.mrb[0].mxu0 %v518
  %v937 = vpop.f32.mrb[0].mxu0
  %v938 = vadd.f32 %v184, %v937
  %v939 = vpop.f32.mrb[0].mxu0
  %v940 = vpop.f32.mrb[0].mxu0
  %v941 = vadd.f32 %v184, %v940
  %v942 = vpop.f32.mrb[0].mxu0
  %943 = vmatprep.mubr.bf16.mxu0 %v522
  %944 = vmatmul.mubr.bf16.gmra.mrb[0].mxu0 %v521
  %v945 = vpop.f32.mrb[0].mxu0
  %v946 = vadd.f32 %v184, %v945
  %v947 = vpop.f32.mrb[0].mxu0
  %v948 = vpop.f32.mrb[0].mxu0
  %v949 = vadd.f32 %v184, %v948
  %v950 = vpop.f32.mrb[0].mxu0
  %951 = vmatprep.mubr.bf16.mxu0 %v525
  %952 = vmatmul.mubr.bf16.gmra.mrb[0].mxu0 %v524
  %v953 = vpop.f32.mrb[0].mxu0
  %v954 = vadd.f32 %v184, %v953
  %v955 = vpop.f32.mrb[0].mxu0
  %v956 = vpop.f32.mrb[0].mxu0
  %v957 = vadd.f32 %v184, %v956
  %v958 = vpop.f32.mrb[0].mxu0
  %959 = vmatprep.mubr.bf16.mxu0 %v528
  %960 = vmatmul.mubr.bf16.gmra.mrb[0].mxu0 %v527
  %v961 = vpop.f32.mrb[0].mxu0
  %v962 = vadd.f32 %v184, %v961
  %v963 = vpop.f32.mrb[0].mxu0
  %v964 = vpop.f32.mrb[0].mxu0
  %v965 = vadd.f32 %v184, %v964
  %v966 = vpop.f32.mrb[0].mxu0
  %967 = vmatprep.mubr.bf16.mxu0 %v531
  %968 = vmatmul.mubr.bf16.gmra.mrb[0].mxu0 %v530
  %v969 = vpop.f32.mrb[0].mxu0
  %v970 = vadd.f32 %v184, %v969
  %v971 = vpop.f32.mrb[0].mxu0
  %v972 = vpop.f32.mrb[0].mxu0
  %v973 = vadd.f32 %v184, %v972
  %v974 = vpop.f32.mrb[0].mxu0
  %975 = vmatprep.mubr.bf16.mxu0 %v534
  %976 = vmatmul.mubr.bf16.gmra.mrb[0].mxu0 %v533
  %v977 = vpop.f32.mrb[0].mxu0
  %v978 = vadd.f32 %v184, %v977
  %v979 = vpop.f32.mrb[0].mxu0
  %v980 = vpop.f32.mrb[0].mxu0
  %v981 = vadd.f32 %v184, %v980
  %v982 = vpop.f32.mrb[0].mxu0
  %983 = vmatprep.mubr.bf16.mxu0 %v537
  %984 = vmatmul.mubr.bf16.gmra.mrb[0].mxu0 %v536
  %v985 = vpop.f32.mrb[0].mxu0
  %v986 = vadd.f32 %v184, %v985
  %v987 = vpop.f32.mrb[0].mxu0
  %v988 = vpop.f32.mrb[0].mxu0
  %v989 = vadd.f32 %v184, %v988
  %v990 = vpop.f32.mrb[0].mxu0
  %991 = vmatprep.mubr.bf16.mxu0 %v540
  %992 = vmatmul.mubr.bf16.gmra.mrb[0].mxu0 %v539
  %v993 = vpop.f32.mrb[0].mxu0
  %v994 = vadd.f32 %v184, %v993
  %v995 = vpop.f32.mrb[0].mxu0
  %v996 = vpop.f32.mrb[0].mxu0
  %v997 = vadd.f32 %v184, %v996
  %v998 = vpop.f32.mrb[0].mxu0
  %999 = vmatprep.mubr.bf16.mxu0 %v543
  %1000 = vmatmul.mubr.bf16.gmra.mrb[0].mxu0 %v542
  %v1001 = vpop.f32.mrb[0].mxu0
  %v1002 = vadd.f32 %v184, %v1001
  %v1003 = vpop.f32.mrb[0].mxu0
  %v1004 = vpop.f32.mrb[0].mxu0
  %v1005 = vadd.f32 %v184, %v1004
  %v1006 = vpop.f32.mrb[0].mxu0
  %1007 = vmatprep.mubr.bf16.mxu0 %v546
  %1008 = vmatmul.mubr.bf16.gmra.mrb[0].mxu0 %v545
  %v1009 = vpop.f32.mrb[0].mxu0
  %v1010 = vadd.f32 %v184, %v1009
  %v1011 = vpop.f32.mrb[0].mxu0
  %v1012 = vpop.f32.mrb[0].mxu0
  %v1013 = vadd.f32 %v184, %v1012
  %v1014 = vpop.f32.mrb[0].mxu0
  %1015 = vmatprep.mubr.bf16.mxu0 %v549
  %1016 = vmatmul.mubr.bf16.gmra.mrb[0].mxu0 %v548
  %v1017 = vpop.f32.mrb[0].mxu0
  %v1018 = vadd.f32 %v184, %v1017
  %v1019 = vpop.f32.mrb[0].mxu0
  %v1020 = vpop.f32.mrb[0].mxu0
  %v1021 = vadd.f32 %v184, %v1020
  %v1022 = vpop.f32.mrb[0].mxu0
  %1023 = vmatprep.mubr.bf16.mxu0 %v552
  %1024 = vmatmul.mubr.bf16.gmra.mrb[0].mxu0 %v551
  %v1025 = vpop.f32.mrb[0].mxu0
  %v1026 = vadd.f32 %v184, %v1025
  %v1027 = vpop.f32.mrb[0].mxu0
  %v1028 = vpop.f32.mrb[0].mxu0
  %v1029 = vadd.f32 %v184, %v1028
  %v1030 = vpop.f32.mrb[0].mxu0
  %1031 = vmatprep.mubr.bf16.mxu0 %v555
  %1032 = vmatmul.mubr.bf16.gmra.mrb[0].mxu0 %v554
  %v1033 = vpop.f32.mrb[0].mxu0
  %v1034 = vadd.f32 %v184, %v1033
  %v1035 = vpop.f32.mrb[0].mxu0
  %v1036 = vpop.f32.mrb[0].mxu0
  %v1037 = vadd.f32 %v184, %v1036
  %v1038 = vpop.f32.mrb[0].mxu0
  %1039 = vmatprep.mubr.bf16.mxu0 %v558
  %1040 = vmatmul.mubr.bf16.gmra.mrb[0].mxu0 %v557
  %v1041 = vpop.f32.mrb[0].mxu0
  %v1042 = vadd.f32 %v184, %v1041
  %v1043 = vpop.f32.mrb[0].mxu0
  %v1044 = vpop.f32.mrb[0].mxu0
  %v1045 = vadd.f32 %v184, %v1044
  %v1046 = vpop.f32.mrb[0].mxu0
  %1047 = vmatprep.mubr.bf16.mxu0 %v561
  %1048 = vmatmul.mubr.bf16.gmra.mrb[0].mxu0 %v560
  %v1049 = vpop.f32.mrb[0].mxu0
  %v1050 = vadd.f32 %v184, %v1049
  %v1051 = vpop.f32.mrb[0].mxu0
  %v1052 = vpop.f32.mrb[0].mxu0
  %v1053 = vadd.f32 %v184, %v1052
  %v1054 = vpop.f32.mrb[0].mxu0
  %1055 = vmatprep.mubr.bf16.mxu0 %v564
  %1056 = vmatmul.mubr.bf16.gmra.mrb[0].mxu0 %v563
  %v1057 = vpop.f32.mrb[0].mxu0
  %v1058 = vadd.f32 %v184, %v1057
  %v1059 = vpop.f32.mrb[0].mxu0
  %v1060 = vpop.f32.mrb[0].mxu0
  %v1061 = vadd.f32 %v184, %v1060
  %v1062 = vpop.f32.mrb[0].mxu0
  %1063 = vmatprep.mubr.bf16.mxu0 %v567
  %1064 = vmatmul.mubr.bf16.gmra.mrb[0].mxu0 %v566
  %v1065 = vpop.f32.mrb[0].mxu0
  %v1066 = vadd.f32 %v184, %v1065
  %v1067 = vpop.f32.mrb[0].mxu0
  %v1068 = vpop.f32.mrb[0].mxu0
  %v1069 = vadd.f32 %v184, %v1068
  %v1070 = vpop.f32.mrb[0].mxu0
  %1071 = vmatprep.mubr.bf16.mxu0 %v570
  %1072 = vmatmul.mubr.bf16.gmra.mrb[0].mxu0 %v569
  %v1073 = vpop.f32.mrb[0].mxu0
  %v1074 = vadd.f32 %v184, %v1073
  %v1075 = vpop.f32.mrb[0].mxu0
  %v1076 = vpop.f32.mrb[0].mxu0
  %v1077 = vadd.f32 %v184, %v1076
  %v1078 = vpop.f32.mrb[0].mxu0
  %1079 = vmatprep.mubr.bf16.mxu0 %v573
  %1080 = vmatmul.mubr.bf16.gmra.mrb[0].mxu0 %v572
  %v1081 = vpop.f32.mrb[0].mxu0
  %v1082 = vadd.f32 %v184, %v1081
  %v1083 = vpop.f32.mrb[0].mxu0
  %v1084 = vpop.f32.mrb[0].mxu0
  %v1085 = vadd.f32 %v184, %v1084
  %v1086 = vpop.f32.mrb[0].mxu0
  %1087 = vmatprep.mubr.bf16.mxu0 %v576
  %1088 = vmatmul.mubr.bf16.gmra.mrb[0].mxu0 %v575
  %v1089 = vpop.f32.mrb[0].mxu0
  %v1090 = vadd.f32 %v184, %v1089
  %v1091 = vpop.f32.mrb[0].mxu0
  %v1092 = vpop.f32.mrb[0].mxu0
  %v1093 = vadd.f32 %v184, %v1092
  %v1094 = vpop.f32.mrb[0].mxu0
  %1095 = vmatprep.mubr.bf16.mxu0 %v579
  %1096 = vmatmul.mubr.bf16.gmra.mrb[0].mxu0 %v578
  %v1097 = vpop.f32.mrb[0].mxu0
  %v1098 = vadd.f32 %v184, %v1097
  %v1099 = vpop.f32.mrb[0].mxu0
  %v1100 = vpop.f32.mrb[0].mxu0
  %v1101 = vadd.f32 %v184, %v1100
  %v1102 = vpop.f32.mrb[0].mxu0
  %1103 = vmatprep.mubr.bf16.mxu0 %v582
  %1104 = vmatmul.mubr.bf16.gmra.mrb[0].mxu0 %v581
  %v1105 = vpop.f32.mrb[0].mxu0
  %v1106 = vadd.f32 %v184, %v1105
  %v1107 = vpop.f32.mrb[0].mxu0
  %v1108 = vpop.f32.mrb[0].mxu0
  %v1109 = vadd.f32 %v184, %v1108
  %v1110 = vpop.f32.mrb[0].mxu0
  %1111 = vmatprep.mubr.bf16.mxu0 %v585
  %1112 = vmatmul.mubr.bf16.gmra.mrb[0].mxu0 %v584
  %v1113 = vpop.f32.mrb[0].mxu0
  %v1114 = vadd.f32 %v184, %v1113
  %v1115 = vpop.f32.mrb[0].mxu0
  %v1116 = vpop.f32.mrb[0].mxu0
  %v1117 = vadd.f32 %v184, %v1116
  %v1118 = vpop.f32.mrb[0].mxu0
  %1119 = vmatprep.mubr.bf16.mxu0 %v588
  %1120 = vmatmul.mubr.bf16.gmra.mrb[0].mxu0 %v587
  %v1121 = vpop.f32.mrb[0].mxu0
  %v1122 = vadd.f32 %v184, %v1121
  %v1123 = vpop.f32.mrb[0].mxu0
  %v1124 = vpop.f32.mrb[0].mxu0
  %v1125 = vadd.f32 %v184, %v1124
  %v1126 = vpop.f32.mrb[0].mxu0
  %1127 = vmatprep.mubr.bf16.mxu0 %v591
  %1128 = vmatmul.mubr.bf16.gmra.mrb[0].mxu0 %v590
  %v1129 = vpop.f32.mrb[0].mxu0
  %v1130 = vadd.f32 %v184, %v1129
  %v1131 = vpop.f32.mrb[0].mxu0
  %v1132 = vpop.f32.mrb[0].mxu0
  %v1133 = vadd.f32 %v184, %v1132
  %v1134 = vpop.f32.mrb[0].mxu0
  %1135 = vmatprep.mubr.bf16.mxu0 %v594
  %1136 = vmatmul.mubr.bf16.gmra.mrb[0].mxu0 %v593
  %v1137 = vpop.f32.mrb[0].mxu0
  %v1138 = vadd.f32 %v184, %v1137
  %v1139 = vpop.f32.mrb[0].mxu0
  %v1140 = vpop.f32.mrb[0].mxu0
  %v1141 = vadd.f32 %v184, %v1140
  %v1142 = vpop.f32.mrb[0].mxu0
  %1143 = vmatprep.mubr.bf16.mxu0 %v597
  %1144 = vmatmul.mubr.bf16.gmra.mrb[0].mxu0 %v596
  %v1145 = vpop.f32.mrb[0].mxu0
  %v1146 = vadd.f32 %v184, %v1145
  %v1147 = vpop.f32.mrb[0].mxu0
  %v1148 = vpop.f32.mrb[0].mxu0
  %v1149 = vadd.f32 %v184, %v1148
  %v1150 = vpop.f32.mrb[0].mxu0
  %1151 = vmatprep.mubr.bf16.mxu0 %v600
  %1152 = vmatmul.mubr.bf16.gmra.mrb[0].mxu0 %v599
  %v1153 = vpop.f32.mrb[0].mxu0
  %v1154 = vadd.f32 %v184, %v1153
  %v1155 = vpop.f32.mrb[0].mxu0
  %v1156 = vpop.f32.mrb[0].mxu0
  %v1157 = vadd.f32 %v184, %v1156
  %v1158 = vpop.f32.mrb[0].mxu0
  %1159 = vdwg.mxu0
  %1160 = vmatprep.subr.bf16.mxu0 0
  %1161 = vmatpush1.bf16.msra.mxu0 %v754
  %1162 = vmatprep.subr.bf16.mxu0 0
  %1163 = vmatpush1.bf16.msra.mxu0 %v755
  %1164 = vmatprep.subr.bf16.mxu0 0
  %1165 = vmatpush1.bf16.msra.mxu0 0
  %1166 = vmatprep.subr.bf16.mxu0 0
  %1167 = vmatpush1.bf16.msra.mxu0 0
  %1168 = vmatprep.subr.bf16.mxu0 0
  %1169 = vmatpush1.bf16.msra.mxu0 0
  %1170 = vmatprep.subr.bf16.mxu0 0
  %1171 = vmatpush1.bf16.msra.mxu0 0
  %1172 = vmatprep.subr.bf16.mxu0 0
  %1173 = vmatpush1.bf16.msra.mxu0 0
  %1174 = vmatprep.subr.bf16.mxu0 0
  %1175 = vmatpush1.bf16.msra.mxu0 0
  %1176 = vmatprep.subr.bf16.mxu0 0
  %1177 = vmatpush1.bf16.msra.mxu0 0
  %1178 = vmatprep.subr.bf16.mxu0 0
  %1179 = vmatpush1.bf16.msra.mxu0 0
  %1180 = vmatprep.subr.bf16.mxu0 0
  %1181 = vmatpush1.bf16.msra.mxu0 0
  %1182 = vmatprep.subr.bf16.mxu0 0
  %1183 = vmatpush1.bf16.msra.mxu0 0
  %1184 = vmatprep.subr.bf16.mxu0 0
  %1185 = vmatpush1.bf16.msra.mxu0 0
  %1186 = vmatprep.subr.bf16.mxu0 0
  %1187 = vmatpush1.bf16.msra.mxu0 0
  %1188 = vmatprep.subr.bf16.mxu0 0
  %1189 = vmatpush1.bf16.msra.mxu0 0
  %1190 = vmatprep.subr.bf16.mxu0 0
  %1191 = vmatpush1.bf16.msra.mxu0 0
  %1192 = vmatprep.mubr.bf16.mxu0 0
  %1193 = vmatmul.mubr.bf16.gmra.mrb[0].mxu0 %v776
  %v1194 = vpop.f32.mrb[0].mxu0
  %v1195 = vadd.f32 %v906, %v1194
  %v1196 = vpop.f32.mrb[0].mxu0
  %v1197 = vpop.f32.mrb[0].mxu0
  %v1198 = vadd.f32 %v909, %v1197
  %v1199 = vpop.f32.mrb[0].mxu0
  %1200 = vmatprep.mubr.bf16.mxu0 0
  %1201 = vmatmul.mubr.bf16.gmra.mrb[0].mxu0 %v779
  %v1202 = vpop.f32.mrb[0].mxu0
  %v1203 = vadd.f32 %v914, %v1202
  %v1204 = vpop.f32.mrb[0].mxu0
  %v1205 = vpop.f32.mrb[0].mxu0
  %v1206 = vadd.f32 %v917, %v1205
  %v1207 = vpop.f32.mrb[0].mxu0
  %1208 = vmatprep.mubr.bf16.mxu0 0
  %1209 = vmatmul.mubr.bf16.gmra.mrb[0].mxu0 %v782
  %v1210 = vpop.f32.mrb[0].mxu0
  %v1211 = vadd.f32 %v922, %v1210
  %v1212 = vpop.f32.mrb[0].mxu0
  %v1213 = vpop.f32.mrb[0].mxu0
  %v1214 = vadd.f32 %v925, %v1213
  %v1215 = vpop.f32.mrb[0].mxu0
  %1216 = vmatprep.mubr.bf16.mxu0 0
  %1217 = vmatmul.mubr.bf16.gmra.mrb[0].mxu0 %v785
  %v1218 = vpop.f32.mrb[0].mxu0
  %v1219 = vadd.f32 %v930, %v1218
  %v1220 = vpop.f32.mrb[0].mxu0
  %v1221 = vpop.f32.mrb[0].mxu0
  %v1222 = vadd.f32 %v933, %v1221
  %v1223 = vpop.f32.mrb[0].mxu0
  %1224 = vmatprep.mubr.bf16.mxu0 0
  %1225 = vmatmul.mubr.bf16.gmra.mrb[0].mxu0 %v788
  %v1226 = vpop.f32.mrb[0].mxu0
  %v1227 = vadd.f32 %v938, %v1226
  %v1228 = vpop.f32.mrb[0].mxu0
  %v1229 = vpop.f32.mrb[0].mxu0
  %v1230 = vadd.f32 %v941, %v1229
  %v1231 = vpop.f32.mrb[0].mxu0
  %1232 = vmatprep.mubr.bf16.mxu0 0
  %1233 = vmatmul.mubr.bf16.gmra.mrb[0].mxu0 %v791
  %v1234 = vpop.f32.mrb[0].mxu0
  %v1235 = vadd.f32 %v946, %v1234
  %v1236 = vpop.f32.mrb[0].mxu0
  %v1237 = vpop.f32.mrb[0].mxu0
  %v1238 = vadd.f32 %v949, %v1237
  %v1239 = vpop.f32.mrb[0].mxu0
  %1240 = vmatprep.mubr.bf16.mxu0 0
  %1241 = vmatmul.mubr.bf16.gmra.mrb[0].mxu0 %v794
  %v1242 = vpop.f32.mrb[0].mxu0
  %v1243 = vadd.f32 %v954, %v1242
  %v1244 = vpop.f32.mrb[0].mxu0
  %v1245 = vpop.f32.mrb[0].mxu0
  %v1246 = vadd.f32 %v957, %v1245
  %v1247 = vpop.f32.mrb[0].mxu0
  %1248 = vmatprep.mubr.bf16.mxu0 0
  %1249 = vmatmul.mubr.bf16.gmra.mrb[0].mxu0 %v797
  %v1250 = vpop.f32.mrb[0].mxu0
  %v1251 = vadd.f32 %v962, %v1250
  %v1252 = vpop.f32.mrb[0].mxu0
  %v1253 = vpop.f32.mrb[0].mxu0
  %v1254 = vadd.f32 %v965, %v1253
  %v1255 = vpop.f32.mrb[0].mxu0
  %1256 = vmatprep.mubr.bf16.mxu0 0
  %1257 = vmatmul.mubr.bf16.gmra.mrb[0].mxu0 %v800
  %v1258 = vpop.f32.mrb[0].mxu0
  %v1259 = vadd.f32 %v970, %v1258
  %v1260 = vpop.f32.mrb[0].mxu0
  %v1261 = vpop.f32.mrb[0].mxu0
  %v1262 = vadd.f32 %v973, %v1261
  %v1263 = vpop.f32.mrb[0].mxu0
  %1264 = vmatprep.mubr.bf16.mxu0 0
  %1265 = vmatmul.mubr.bf16.gmra.mrb[0].mxu0 %v803
  %v1266 = vpop.f32.mrb[0].mxu0
  %v1267 = vadd.f32 %v978, %v1266
  %v1268 = vpop.f32.mrb[0].mxu0
  %v1269 = vpop.f32.mrb[0].mxu0
  %v1270 = vadd.f32 %v981, %v1269
  %v1271 = vpop.f32.mrb[0].mxu0
  %1272 = vmatprep.mubr.bf16.mxu0 0
  %1273 = vmatmul.mubr.bf16.gmra.mrb[0].mxu0 %v806
  %v1274 = vpop.f32.mrb[0].mxu0
  %v1275 = vadd.f32 %v986, %v1274
  %v1276 = vpop.f32.mrb[0].mxu0
  %v1277 = vpop.f32.mrb[0].mxu0
  %v1278 = vadd.f32 %v989, %v1277
  %v1279 = vpop.f32.mrb[0].mxu0
  %1280 = vmatprep.mubr.bf16.mxu0 0
  %1281 = vmatmul.mubr.bf16.gmra.mrb[0].mxu0 %v809
  %v1282 = vpop.f32.mrb[0].mxu0
  %v1283 = vadd.f32 %v994, %v1282
  %v1284 = vpop.f32.mrb[0].mxu0
  %v1285 = vpop.f32.mrb[0].mxu0
  %v1286 = vadd.f32 %v997, %v1285
  %v1287 = vpop.f32.mrb[0].mxu0
  %1288 = vmatprep.mubr.bf16.mxu0 0
  %1289 = vmatmul.mubr.bf16.gmra.mrb[0].mxu0 %v812
  %v1290 = vpop.f32.mrb[0].mxu0
  %v1291 = vadd.f32 %v1002, %v1290
  %v1292 = vpop.f32.mrb[0].mxu0
  %v1293 = vpop.f32.mrb[0].mxu0
  %v1294 = vadd.f32 %v1005, %v1293
  %v1295 = vpop.f32.mrb[0].mxu0
  %1296 = vmatprep.mubr.bf16.mxu0 0
  %1297 = vmatmul.mubr.bf16.gmra.mrb[0].mxu0 %v815
  %v1298 = vpop.f32.mrb[0].mxu0
  %v1299 = vadd.f32 %v1010, %v1298
  %v1300 = vpop.f32.mrb[0].mxu0
  %v1301 = vpop.f32.mrb[0].mxu0
  %v1302 = vadd.f32 %v1013, %v1301
  %v1303 = vpop.f32.mrb[0].mxu0
  %1304 = vmatprep.mubr.bf16.mxu0 0
  %1305 = vmatmul.mubr.bf16.gmra.mrb[0].mxu0 %v818
  %v1306 = vpop.f32.mrb[0].mxu0
  %v1307 = vadd.f32 %v1018, %v1306
  %v1308 = vpop.f32.mrb[0].mxu0
  %v1309 = vpop.f32.mrb[0].mxu0
  %v1310 = vadd.f32 %v1021, %v1309
  %v1311 = vpop.f32.mrb[0].mxu0
  %1312 = vmatprep.mubr.bf16.mxu0 0
  %1313 = vmatmul.mubr.bf16.gmra.mrb[0].mxu0 %v821
  %v1314 = vpop.f32.mrb[0].mxu0
  %v1315 = vadd.f32 %v1026, %v1314
  %v1316 = vpop.f32.mrb[0].mxu0
  %v1317 = vpop.f32.mrb[0].mxu0
  %v1318 = vadd.f32 %v1029, %v1317
  %v1319 = vpop.f32.mrb[0].mxu0
  %1320 = vmatprep.mubr.bf16.mxu0 0
  %1321 = vmatmul.mubr.bf16.gmra.mrb[0].mxu0 %v824
  %v1322 = vpop.f32.mrb[0].mxu0
  %v1323 = vadd.f32 %v1034, %v1322
  %v1324 = vpop.f32.mrb[0].mxu0
  %v1325 = vpop.f32.mrb[0].mxu0
  %v1326 = vadd.f32 %v1037, %v1325
  %v1327 = vpop.f32.mrb[0].mxu0
  %1328 = vmatprep.mubr.bf16.mxu0 0
  %1329 = vmatmul.mubr.bf16.gmra.mrb[0].mxu0 %v827
  %v1330 = vpop.f32.mrb[0].mxu0
  %v1331 = vadd.f32 %v1042, %v1330
  %v1332 = vpop.f32.mrb[0].mxu0
  %v1333 = vpop.f32.mrb[0].mxu0
  %v1334 = vadd.f32 %v1045, %v1333
  %v1335 = vpop.f32.mrb[0].mxu0
  %1336 = vmatprep.mubr.bf16.mxu0 0
  %1337 = vmatmul.mubr.bf16.gmra.mrb[0].mxu0 %v830
  %v1338 = vpop.f32.mrb[0].mxu0
  %v1339 = vadd.f32 %v1050, %v1338
  %v1340 = vpop.f32.mrb[0].mxu0
  %v1341 = vpop.f32.mrb[0].mxu0
  %v1342 = vadd.f32 %v1053, %v1341
  %v1343 = vpop.f32.mrb[0].mxu0
  %1344 = vmatprep.mubr.bf16.mxu0 0
  %1345 = vmatmul.mubr.bf16.gmra.mrb[0].mxu0 %v833
  %v1346 = vpop.f32.mrb[0].mxu0
  %v1347 = vadd.f32 %v1058, %v1346
  %v1348 = vpop.f32.mrb[0].mxu0
  %v1349 = vpop.f32.mrb[0].mxu0
  %v1350 = vadd.f32 %v1061, %v1349
  %v1351 = vpop.f32.mrb[0].mxu0
  %1352 = vmatprep.mubr.bf16.mxu0 0
  %1353 = vmatmul.mubr.bf16.gmra.mrb[0].mxu0 %v836
  %v1354 = vpop.f32.mrb[0].mxu0
  %v1355 = vadd.f32 %v1066, %v1354
  %v1356 = vpop.f32.mrb[0].mxu0
  %v1357 = vpop.f32.mrb[0].mxu0
  %v1358 = vadd.f32 %v1069, %v1357
  %v1359 = vpop.f32.mrb[0].mxu0
  %1360 = vmatprep.mubr.bf16.mxu0 0
  %1361 = vmatmul.mubr.bf16.gmra.mrb[0].mxu0 %v839
  %v1362 = vpop.f32.mrb[0].mxu0
  %v1363 = vadd.f32 %v1074, %v1362
  %v1364 = vpop.f32.mrb[0].mxu0
  %v1365 = vpop.f32.mrb[0].mxu0
  %v1366 = vadd.f32 %v1077, %v1365
  %v1367 = vpop.f32.mrb[0].mxu0
  %1368 = vmatprep.mubr.bf16.mxu0 0
  %1369 = vmatmul.mubr.bf16.gmra.mrb[0].mxu0 %v842
  %v1370 = vpop.f32.mrb[0].mxu0
  %v1371 = vadd.f32 %v1082, %v1370
  %v1372 = vpop.f32.mrb[0].mxu0
  %v1373 = vpop.f32.mrb[0].mxu0
  %v1374 = vadd.f32 %v1085, %v1373
  %v1375 = vpop.f32.mrb[0].mxu0
  %1376 = vmatprep.mubr.bf16.mxu0 0
  %1377 = vmatmul.mubr.bf16.gmra.mrb[0].mxu0 %v845
  %v1378 = vpop.f32.mrb[0].mxu0
  %v1379 = vadd.f32 %v1090, %v1378
  %v1380 = vpop.f32.mrb[0].mxu0
  %v1381 = vpop.f32.mrb[0].mxu0
  %v1382 = vadd.f32 %v1093, %v1381
  %v1383 = vpop.f32.mrb[0].mxu0
  %1384 = vmatprep.mubr.bf16.mxu0 0
  %1385 = vmatmul.mubr.bf16.gmra.mrb[0].mxu0 %v848
  %v1386 = vpop.f32.mrb[0].mxu0
  %v1387 = vadd.f32 %v1098, %v1386
  %v1388 = vpop.f32.mrb[0].mxu0
  %v1389 = vpop.f32.mrb[0].mxu0
  %v1390 = vadd.f32 %v1101, %v1389
  %v1391 = vpop.f32.mrb[0].mxu0
  %1392 = vmatprep.mubr.bf16.mxu0 0
  %1393 = vmatmul.mubr.bf16.gmra.mrb[0].mxu0 %v851
  %v1394 = vpop.f32.mrb[0].mxu0
  %v1395 = vadd.f32 %v1106, %v1394
  %v1396 = vpop.f32.mrb[0].mxu0
  %v1397 = vpop.f32.mrb[0].mxu0
  %v1398 = vadd.f32 %v1109, %v1397
  %v1399 = vpop.f32.mrb[0].mxu0
  %1400 = vmatprep.mubr.bf16.mxu0 0
  %1401 = vmatmul.mubr.bf16.gmra.mrb[0].mxu0 %v854
  %v1402 = vpop.f32.mrb[0].mxu0
  %v1403 = vadd.f32 %v1114, %v1402
  %v1404 = vpop.f32.mrb[0].mxu0
  %v1405 = vpop.f32.mrb[0].mxu0
  %v1406 = vadd.f32 %v1117, %v1405
  %v1407 = vpop.f32.mrb[0].mxu0
  %1408 = vmatprep.mubr.bf16.mxu0 0
  %1409 = vmatmul.mubr.bf16.gmra.mrb[0].mxu0 %v857
  %v1410 = vpop.f32.mrb[0].mxu0
  %v1411 = vadd.f32 %v1122, %v1410
  %v1412 = vpop.f32.mrb[0].mxu0
  %v1413 = vpop.f32.mrb[0].mxu0
  %v1414 = vadd.f32 %v1125, %v1413
  %v1415 = vpop.f32.mrb[0].mxu0
  %1416 = vmatprep.mubr.bf16.mxu0 0
  %1417 = vmatmul.mubr.bf16.gmra.mrb[0].mxu0 %v860
  %v1418 = vpop.f32.mrb[0].mxu0
  %v1419 = vadd.f32 %v1130, %v1418
  %v1420 = vpop.f32.mrb[0].mxu0
  %v1421 = vpop.f32.mrb[0].mxu0
  %v1422 = vadd.f32 %v1133, %v1421
  %v1423 = vpop.f32.mrb[0].mxu0
  %1424 = vmatprep.mubr.bf16.mxu0 0
  %1425 = vmatmul.mubr.bf16.gmra.mrb[0].mxu0 %v863
  %v1426 = vpop.f32.mrb[0].mxu0
  %v1427 = vadd.f32 %v1138, %v1426
  %v1428 = vpop.f32.mrb[0].mxu0
  %v1429 = vpop.f32.mrb[0].mxu0
  %v1430 = vadd.f32 %v1141, %v1429
  %v1431 = vpop.f32.mrb[0].mxu0
  %1432 = vmatprep.mubr.bf16.mxu0 0
  %1433 = vmatmul.mubr.bf16.gmra.mrb[0].mxu0 %v866
  %v1434 = vpop.f32.mrb[0].mxu0
  %v1435 = vadd.f32 %v1146, %v1434
  %v1436 = vpop.f32.mrb[0].mxu0
  %v1437 = vpop.f32.mrb[0].mxu0
  %v1438 = vadd.f32 %v1149, %v1437
  %v1439 = vpop.f32.mrb[0].mxu0
  %1440 = vmatprep.mubr.bf16.mxu0 0
  %1441 = vmatmul.mubr.bf16.gmra.mrb[0].mxu0 %v869
  %v1442 = vpop.f32.mrb[0].mxu0
  %v1443 = vadd.f32 %v1154, %v1442
  %v1444 = vpop.f32.mrb[0].mxu0
  %v1445 = vpop.f32.mrb[0].mxu0
  %v1446 = vadd.f32 %v1157, %v1445
  %v1447 = vpop.f32.mrb[0].mxu0
  %1448 = vdwg.mxu0
  %v1449 = vmax.f32 %v1195, 0.0
  %v1450 = vmax.f32 %v1198, 0.0
  %v1451 = vmax.f32 %v1203, 0.0
  %v1452 = vmax.f32 %v1206, 0.0
  %v1453 = vmax.f32 %v1211, 0.0
  %v1454 = vmax.f32 %v1214, 0.0
  %v1455 = vmax.f32 %v1219, 0.0
  %v1456 = vmax.f32 %v1222, 0.0
  %v1457 = vmax.f32 %v1227, 0.0
  %v1458 = vmax.f32 %v1230, 0.0
  %v1459 = vmax.f32 %v1235, 0.0
  %v1460 = vmax.f32 %v1238, 0.0
  %v1461 = vmax.f32 %v1243, 0.0
  %v1462 = vmax.f32 %v1246, 0.0
  %v1463 = vmax.f32 %v1251, 0.0
  %v1464 = vmax.f32 %v1254, 0.0
  %v1465 = vmax.f32 %v1259, 0.0
  %v1466 = vmax.f32 %v1262, 0.0
  %v1467 = vmax.f32 %v1267, 0.0
  %v1468 = vmax.f32 %v1270, 0.0
  %v1469 = vmax.f32 %v1275, 0.0
  %v1470 = vmax.f32 %v1278, 0.0
  %v1471 = vmax.f32 %v1283, 0.0
  %v1472 = vmax.f32 %v1286, 0.0
  %v1473 = vmax.f32 %v1291, 0.0
  %v1474 = vmax.f32 %v1294, 0.0
  %v1475 = vmax.f32 %v1299, 0.0
  %v1476 = vmax.f32 %v1302, 0.0
  %v1477 = vmax.f32 %v1307, 0.0
  %v1478 = vmax.f32 %v1310, 0.0
  %v1479 = vmax.f32 %v1315, 0.0
  %v1480 = vmax.f32 %v1318, 0.0
  %v1481 = vmax.f32 %v1323, 0.0
  %v1482 = vmax.f32 %v1326, 0.0
  %v1483 = vmax.f32 %v1331, 0.0
  %v1484 = vmax.f32 %v1334, 0.0
  %v1485 = vmax.f32 %v1339, 0.0
  %v1486 = vmax.f32 %v1342, 0.0
  %v1487 = vmax.f32 %v1347, 0.0
  %v1488 = vmax.f32 %v1350, 0.0
  %v1489 = vmax.f32 %v1355, 0.0
  %v1490 = vmax.f32 %v1358, 0.0
  %v1491 = vmax.f32 %v1363, 0.0
  %v1492 = vmax.f32 %v1366, 0.0
  %v1493 = vmax.f32 %v1371, 0.0
  %v1494 = vmax.f32 %v1374, 0.0
  %v1495 = vmax.f32 %v1379, 0.0
  %v1496 = vmax.f32 %v1382, 0.0
  %v1497 = vmax.f32 %v1387, 0.0
  %v1498 = vmax.f32 %v1390, 0.0
  %v1499 = vmax.f32 %v1395, 0.0
  %v1500 = vmax.f32 %v1398, 0.0
  %v1501 = vmax.f32 %v1403, 0.0
  %v1502 = vmax.f32 %v1406, 0.0
  %v1503 = vmax.f32 %v1411, 0.0
  %v1504 = vmax.f32 %v1414, 0.0
  %v1505 = vmax.f32 %v1419, 0.0
  %v1506 = vmax.f32 %v1422, 0.0
  %v1507 = vmax.f32 %v1427, 0.0
  %v1508 = vmax.f32 %v1430, 0.0
  %v1509 = vmax.f32 %v1435, 0.0
  %v1510 = vmax.f32 %v1438, 0.0
  %v1511 = vmax.f32 %v1443, 0.0
  %v1512 = vmax.f32 %v1446, 0.0
  %v1513 = vpack.c.bf16 %v1450, %v1449
  %v1514 = vpack.c.bf16 %v1452, %v1451
  %v1515 = vpack.c.bf16 %v1454, %v1453
  %v1516 = vpack.c.bf16 %v1456, %v1455
  %v1517 = vpack.c.bf16 %v1458, %v1457
  %v1518 = vpack.c.bf16 %v1460, %v1459
  %v1519 = vpack.c.bf16 %v1462, %v1461
  %v1520 = vpack.c.bf16 %v1464, %v1463
  %v1521 = vpack.c.bf16 %v1466, %v1465
  %v1522 = vpack.c.bf16 %v1468, %v1467
  %v1523 = vpack.c.bf16 %v1470, %v1469
  %v1524 = vpack.c.bf16 %v1472, %v1471
  %v1525 = vpack.c.bf16 %v1474, %v1473
  %v1526 = vpack.c.bf16 %v1476, %v1475
  %v1527 = vpack.c.bf16 %v1478, %v1477
  %v1528 = vpack.c.bf16 %v1480, %v1479
  %v1529 = vpack.c.bf16 %v1482, %v1481
  %v1530 = vpack.c.bf16 %v1484, %v1483
  %v1531 = vpack.c.bf16 %v1486, %v1485
  %v1532 = vpack.c.bf16 %v1488, %v1487
  %v1533 = vpack.c.bf16 %v1490, %v1489
  %v1534 = vpack.c.bf16 %v1492, %v1491
  %v1535 = vpack.c.bf16 %v1494, %v1493
  %v1536 = vpack.c.bf16 %v1496, %v1495
  %v1537 = vpack.c.bf16 %v1498, %v1497
  %v1538 = vpack.c.bf16 %v1500, %v1499
  %v1539 = vpack.c.bf16 %v1502, %v1501
  %v1540 = vpack.c.bf16 %v1504, %v1503
  %v1541 = vpack.c.bf16 %v1506, %v1505
  %v1542 = vpack.c.bf16 %v1508, %v1507
  %v1543 = vpack.c.bf16 %v1510, %v1509
  %v1544 = vpack.c.bf16 %v1512, %v1511
  %v1577 = vunpack.c.l.b16 %v1513
  %v1578 = vunpack.c.h.b16 %v1513
  %v1579 = vunpack.c.l.b16 %v1514
  %v1580 = vunpack.c.h.b16 %v1514
  %v1581 = vunpack.c.l.b16 %v1515
  %v1582 = vunpack.c.h.b16 %v1515
  %v1583 = vunpack.c.l.b16 %v1516
  %v1584 = vunpack.c.h.b16 %v1516
  %v1585 = vunpack.c.l.b16 %v1517
  %v1586 = vunpack.c.h.b16 %v1517
  %v1587 = vunpack.c.l.b16 %v1518
  %v1588 = vunpack.c.h.b16 %v1518
  %v1589 = vunpack.c.l.b16 %v1519
  %v1590 = vunpack.c.h.b16 %v1519
  %v1591 = vunpack.c.l.b16 %v1520
  %v1592 = vunpack.c.h.b16 %v1520
  %v1593 = vunpack.c.l.b16 %v1521
  %v1594 = vunpack.c.h.b16 %v1521
  %v1595 = vunpack.c.l.b16 %v1522
  %v1596 = vunpack.c.h.b16 %v1522
  %v1597 = vunpack.c.l.b16 %v1523
  %v1598 = vunpack.c.h.b16 %v1523
  %v1599 = vunpack.c.l.b16 %v1524
  %v1600 = vunpack.c.h.b16 %v1524
  %v1601 = vunpack.c.l.b16 %v1525
  %v1602 = vunpack.c.h.b16 %v1525
  %v1603 = vunpack.c.l.b16 %v1526
  %v1604 = vunpack.c.h.b16 %v1526
  %v1605 = vunpack.c.l.b16 %v1527
  %v1606 = vunpack.c.h.b16 %v1527
  %v1607 = vunpack.c.l.b16 %v1528
  %v1608 = vunpack.c.h.b16 %v1528
  %v1609 = vunpack.c.l.b16 %v1529
  %v1610 = vunpack.c.h.b16 %v1529
  %v1611 = vunpack.c.l.b16 %v1530
  %v1612 = vunpack.c.h.b16 %v1530
  %v1613 = vunpack.c.l.b16 %v1531
  %v1614 = vunpack.c.h.b16 %v1531
  %v1615 = vunpack.c.l.b16 %v1532
  %v1616 = vunpack.c.h.b16 %v1532
  %v1617 = vunpack.c.l.b16 %v1533
  %v1618 = vunpack.c.h.b16 %v1533
  %v1619 = vunpack.c.l.b16 %v1534
  %v1620 = vunpack.c.h.b16 %v1534
  %v1621 = vunpack.c.l.b16 %v1535
  %v1622 = vunpack.c.h.b16 %v1535
  %v1623 = vunpack.c.l.b16 %v1536
  %v1624 = vunpack.c.h.b16 %v1536
  %v1625 = vunpack.c.l.b16 %v1537
  %v1626 = vunpack.c.h.b16 %v1537
  %v1627 = vunpack.c.l.b16 %v1538
  %v1628 = vunpack.c.h.b16 %v1538
  %v1629 = vunpack.c.l.b16 %v1539
  %v1630 = vunpack.c.h.b16 %v1539
  %v1631 = vunpack.c.l.b16 %v1540
  %v1632 = vunpack.c.h.b16 %v1540
  %v1633 = vunpack.c.l.b16 %v1541
  %v1634 = vunpack.c.h.b16 %v1541
  %v1635 = vunpack.c.l.b16 %v1542
  %v1636 = vunpack.c.h.b16 %v1542
  %v1637 = vunpack.c.l.b16 %v1543
  %v1638 = vunpack.c.h.b16 %v1543
  %v1639 = vunpack.c.l.b16 %v1544
  %v1640 = vunpack.c.h.b16 %v1544
  %v1641 = vpack.c.b16 %v1577, %v1577
  %v1642 = vpack.c.b16 %v1578, %v1578
  %v1643 = vpack.c.b16 %v1579, %v1579
  %v1644 = vpack.c.b16 %v1580, %v1580
  %v1645 = vpack.c.b16 %v1581, %v1581
  %v1646 = vpack.c.b16 %v1582, %v1582
  %v1647 = vpack.c.b16 %v1583, %v1583
  %v1648 = vpack.c.b16 %v1584, %v1584
  %v1649 = vpack.c.b16 %v1585, %v1585
  %v1650 = vpack.c.b16 %v1586, %v1586
  %v1651 = vpack.c.b16 %v1587, %v1587
  %v1652 = vpack.c.b16 %v1588, %v1588
  %v1653 = vpack.c.b16 %v1589, %v1589
  %v1654 = vpack.c.b16 %v1590, %v1590
  %v1655 = vpack.c.b16 %v1591, %v1591
  %v1656 = vpack.c.b16 %v1592, %v1592
  %v1657 = vpack.c.b16 %v1593, %v1593
  %v1658 = vpack.c.b16 %v1594, %v1594
  %v1659 = vpack.c.b16 %v1595, %v1595
  %v1660 = vpack.c.b16 %v1596, %v1596
  %v1661 = vpack.c.b16 %v1597, %v1597
  %v1662 = vpack.c.b16 %v1598, %v1598
  %v1663 = vpack.c.b16 %v1599, %v1599
  %v1664 = vpack.c.b16 %v1600, %v1600
  %v1665 = vpack.c.b16 %v1601, %v1601
  %v1666 = vpack.c.b16 %v1602, %v1602
  %v1667 = vpack.c.b16 %v1603, %v1603
  %v1668 = vpack.c.b16 %v1604, %v1604
  %v1669 = vpack.c.b16 %v1605, %v1605
  %v1670 = vpack.c.b16 %v1606, %v1606
  %v1671 = vpack.c.b16 %v1607, %v1607
  %v1672 = vpack.c.b16 %v1608, %v1608
  %v1673 = vpack.c.b16 %v1609, %v1609
  %v1674 = vpack.c.b16 %v1610, %v1610
  %v1675 = vpack.c.b16 %v1611, %v1611
  %v1676 = vpack.c.b16 %v1612, %v1612
  %v1677 = vpack.c.b16 %v1613, %v1613
  %v1678 = vpack.c.b16 %v1614, %v1614
  %v1679 = vpack.c.b16 %v1615, %v1615
  %v1680 = vpack.c.b16 %v1616, %v1616
  %v1681 = vpack.c.b16 %v1617, %v1617
  %v1682 = vpack.c.b16 %v1618, %v1618
  %v1683 = vpack.c.b16 %v1619, %v1619
  %v1684 = vpack.c.b16 %v1620, %v1620
  %v1685 = vpack.c.b16 %v1621, %v1621
  %v1686 = vpack.c.b16 %v1622, %v1622
  %v1687 = vpack.c.b16 %v1623, %v1623
  %v1688 = vpack.c.b16 %v1624, %v1624
  %v1689 = vpack.c.b16 %v1625, %v1625
  %v1690 = vpack.c.b16 %v1626, %v1626
  %v1691 = vpack.c.b16 %v1627, %v1627
  %v1692 = vpack.c.b16 %v1628, %v1628
  %v1693 = vpack.c.b16 %v1629, %v1629
  %v1694 = vpack.c.b16 %v1630, %v1630
  %v1695 = vpack.c.b16 %v1631, %v1631
  %v1696 = vpack.c.b16 %v1632, %v1632
  %v1697 = vpack.c.b16 %v1633, %v1633
  %v1698 = vpack.c.b16 %v1634, %v1634
  %v1699 = vpack.c.b16 %v1635, %v1635
  %v1700 = vpack.c.b16 %v1636, %v1636
  %v1701 = vpack.c.b16 %v1637, %v1637
  %v1702 = vpack.c.b16 %v1638, %v1638
  %v1703 = vpack.c.b16 %v1639, %v1639
  %v1704 = vpack.c.b16 %v1640, %v1640
  %vm1769 = vcmask 519168
  %1770 = vst.msk [vmem:[%s3] sm:$0xf] %vm1769, %v1641
  %1771 = vst.msk [vmem:[%s3 + $0x4] sm:$0xf] %vm1769, %v1642
  %1772 = vst.msk [vmem:[%s3 + $0x8] sm:$0xf] %vm1769, %v1643
  %1773 = vst.msk [vmem:[%s3 + $0xc] sm:$0xf] %vm1769, %v1644
  %1774 = vst.msk [vmem:[%s3 + $0x10] sm:$0xf] %vm1769, %v1645
  %1775 = vst.msk [vmem:[%s3 + $0x14] sm:$0xf] %vm1769, %v1646
  %1776 = vst.msk [vmem:[%s3 + $0x18] sm:$0xf] %vm1769, %v1647
  %1777 = vst.msk [vmem:[%s3 + $0x1c] sm:$0xf] %vm1769, %v1648
  %1778 = vst.msk [vmem:[%s3 + $0x20] sm:$0xf] %vm1769, %v1649
  %1779 = vst.msk [vmem:[%s3 + $0x24] sm:$0xf] %vm1769, %v1650
  %1780 = vst.msk [vmem:[%s3 + $0x28] sm:$0xf] %vm1769, %v1651
  %1781 = vst.msk [vmem:[%s3 + $0x2c] sm:$0xf] %vm1769, %v1652
  %1782 = vst.msk [vmem:[%s3 + $0x30] sm:$0xf] %vm1769, %v1653
  %1783 = vst.msk [vmem:[%s3 + $0x34] sm:$0xf] %vm1769, %v1654
  %1784 = vst.msk [vmem:[%s3 + $0x38] sm:$0xf] %vm1769, %v1655
  %1785 = vst.msk [vmem:[%s3 + $0x3c] sm:$0xf] %vm1769, %v1656
  %1786 = vst.msk [vmem:[%s3 + $0x40] sm:$0xf] %vm1769, %v1657
  %1787 = vst.msk [vmem:[%s3 + $0x44] sm:$0xf] %vm1769, %v1658
  %1788 = vst.msk [vmem:[%s3 + $0x48] sm:$0xf] %vm1769, %v1659
  %1789 = vst.msk [vmem:[%s3 + $0x4c] sm:$0xf] %vm1769, %v1660
  %1790 = vst.msk [vmem:[%s3 + $0x50] sm:$0xf] %vm1769, %v1661
  %1791 = vst.msk [vmem:[%s3 + $0x54] sm:$0xf] %vm1769, %v1662
  %1792 = vst.msk [vmem:[%s3 + $0x58] sm:$0xf] %vm1769, %v1663
  %1793 = vst.msk [vmem:[%s3 + $0x5c] sm:$0xf] %vm1769, %v1664
  %1794 = vst.msk [vmem:[%s3 + $0x60] sm:$0xf] %vm1769, %v1665
  %1795 = vst.msk [vmem:[%s3 + $0x64] sm:$0xf] %vm1769, %v1666
  %1796 = vst.msk [vmem:[%s3 + $0x68] sm:$0xf] %vm1769, %v1667
  %1797 = vst.msk [vmem:[%s3 + $0x6c] sm:$0xf] %vm1769, %v1668
  %1798 = vst.msk [vmem:[%s3 + $0x70] sm:$0xf] %vm1769, %v1669
  %1799 = vst.msk [vmem:[%s3 + $0x74] sm:$0xf] %vm1769, %v1670
  %1800 = vst.msk [vmem:[%s3 + $0x78] sm:$0xf] %vm1769, %v1671
  %1801 = vst.msk [vmem:[%s3 + $0x7c] sm:$0xf] %vm1769, %v1672
  %1802 = vst.msk [vmem:[%s3 + $0x80] sm:$0xf] %vm1769, %v1673
  %1803 = vst.msk [vmem:[%s3 + $0x84] sm:$0xf] %vm1769, %v1674
  %1804 = vst.msk [vmem:[%s3 + $0x88] sm:$0xf] %vm1769, %v1675
  %1805 = vst.msk [vmem:[%s3 + $0x8c] sm:$0xf] %vm1769, %v1676
  %1806 = vst.msk [vmem:[%s3 + $0x90] sm:$0xf] %vm1769, %v1677
  %1807 = vst.msk [vmem:[%s3 + $0x94] sm:$0xf] %vm1769, %v1678
  %1808 = vst.msk [vmem:[%s3 + $0x98] sm:$0xf] %vm1769, %v1679
  %1809 = vst.msk [vmem:[%s3 + $0x9c] sm:$0xf] %vm1769, %v1680
  %1810 = vst.msk [vmem:[%s3 + $0xa0] sm:$0xf] %vm1769, %v1681
  %1811 = vst.msk [vmem:[%s3 + $0xa4] sm:$0xf] %vm1769, %v1682
  %1812 = vst.msk [vmem:[%s3 + $0xa8] sm:$0xf] %vm1769, %v1683
  %1813 = vst.msk [vmem:[%s3 + $0xac] sm:$0xf] %vm1769, %v1684
  %1814 = vst.msk [vmem:[%s3 + $0xb0] sm:$0xf] %vm1769, %v1685
  %1815 = vst.msk [vmem:[%s3 + $0xb4] sm:$0xf] %vm1769, %v1686
  %1816 = vst.msk [vmem:[%s3 + $0xb8] sm:$0xf] %vm1769, %v1687
  %1817 = vst.msk [vmem:[%s3 + $0xbc] sm:$0xf] %vm1769, %v1688
  %1818 = vst.msk [vmem:[%s3 + $0xc0] sm:$0xf] %vm1769, %v1689
  %1819 = vst.msk [vmem:[%s3 + $0xc4] sm:$0xf] %vm1769, %v1690
  %1820 = vst.msk [vmem:[%s3 + $0xc8] sm:$0xf] %vm1769, %v1691
  %1821 = vst.msk [vmem:[%s3 + $0xcc] sm:$0xf] %vm1769, %v1692
  %1822 = vst.msk [vmem:[%s3 + $0xd0] sm:$0xf] %vm1769, %v1693
  %1823 = vst.msk [vmem:[%s3 + $0xd4] sm:$0xf] %vm1769, %v1694
  %1824 = vst.msk [vmem:[%s3 + $0xd8] sm:$0xf] %vm1769, %v1695
  %1825 = vst.msk [vmem:[%s3 + $0xdc] sm:$0xf] %vm1769, %v1696
  %1826 = vst.msk [vmem:[%s3 + $0xe0] sm:$0xf] %vm1769, %v1697
  %1827 = vst.msk [vmem:[%s3 + $0xe4] sm:$0xf] %vm1769, %v1698
  %1828 = vst.msk [vmem:[%s3 + $0xe8] sm:$0xf] %vm1769, %v1699
  %1829 = vst.msk [vmem:[%s3 + $0xec] sm:$0xf] %vm1769, %v1700
  %1830 = vst.msk [vmem:[%s3 + $0xf0] sm:$0xf] %vm1769, %v1701
  %1831 = vst.msk [vmem:[%s3 + $0xf4] sm:$0xf] %vm1769, %v1702
  %1832 = vst.msk [vmem:[%s3 + $0xf8] sm:$0xf] %vm1769, %v1703
  %1833 = vst.msk [vmem:[%s3 + $0xfc] sm:$0xf] %vm1769, %v1704
  // Predicated region
  $region14: #{net_forward.11} parent=0 // pred_check
    _
  $region15: #{net_forward.11} parent=0 // pred_check_branch
    %1835 = sbr.rel (0) target = $region17
  $region16: #{net_forward.11} parent=0 // pred_region
    _
  $region17: #{net_forward.11} parent=0 // pred_fallthru
    _
  // Predicated region
  $region18: #{net_forward.11} parent=0 // pred_check
    _
  $region19: #{net_forward.11} parent=0 // pred_check_branch
    %1837 = sbr.rel (0) target = $region21
  $region20: #{net_forward.11} parent=0 // pred_region
    _
  $region21: #{net_forward.11} parent=0 // pred_fallthru
    _

// kernel: net_forward.12
$region0: #{net_forward.12}
  #allocation0 [shape = 'u32[]', space=smem, size = 0x4, offset = 0x4, fixed_abs, tag = 'smem constant byte address 0x4 - core index']
  #allocation1 [shape = 'u32[144,128]{1,0:T(1,128)}', space=vmem, size = 0x12000, scoped, tag = 'internal scratch']
  %s0 = inlined_call_operand.vmem [shape: bf16[128,64], index: 0, kind: input, shape index: {}]
  %s1 = inlined_call_operand.vmem [shape: bf16[128,64], index: 1, kind: input, shape index: {}]
  %s2 = inlined_call_operand.vmem [shape: bf16[128,64], index: 2, kind: input, shape index: {}]
  %s3 = inlined_call_operand.vmem [shape: bf16[128,64], index: 3, kind: input, shape index: {}]
  %s4 = inlined_call_operand.vmem [shape: bf16[128,64], index: 4, kind: output, shape index: {}]
  %s5 = sld [smem:[#allocation0]]
  $region26: #{net_forward.12} parent=0
    _
  %s7 = ssub.s32 1, %s5
  %s8 = scalar_select 0, %s7, %s5
  // Predicated region
  $region2: #{net_forward.12} parent=0 // pred_check
    _
  $region3: #{net_forward.12} parent=0 // pred_check_branch
    %10 = sbr.rel (0) target = $region5
  $region4: #{net_forward.12} parent=0 // pred_region
    _
  $region5: #{net_forward.12} parent=0 // pred_fallthru
    _
  // Predicated region
  $region6: #{net_forward.12} parent=0 // pred_check
    _
  $region7: #{net_forward.12} parent=0 // pred_check_branch
    %12 = sbr.rel (0) target = $region9
  $region8: #{net_forward.12} parent=0 // pred_region
    _
  $region9: #{net_forward.12} parent=0 // pred_fallthru
    _
  // Predicated region
  $region10: #{net_forward.12} parent=0 // pred_check
    _
  $region11: #{net_forward.12} parent=0 // pred_check_branch
    %14 = sbr.rel (0) target = $region13
  $region12: #{net_forward.12} parent=0 // pred_region
    _
  $region13: #{net_forward.12} parent=0 // pred_fallthru
    _
  // Predicated region
  $region14: #{net_forward.12} parent=0 // pred_check
    _
  $region15: #{net_forward.12} parent=0 // pred_check_branch
    %16 = sbr.rel (0) target = $region17
  $region16: #{net_forward.12} parent=0 // pred_region
    _
  $region17: #{net_forward.12} parent=0 // pred_fallthru
    _
  %v17 = vld [vmem:[%s0] sm:$0xf]
  %v18 = vld [vmem:[%s0 + $0x4] sm:$0xf]
  %v19 = vld [vmem:[%s0 + $0x8] sm:$0xf]
  %v20 = vld [vmem:[%s0 + $0xc] sm:$0xf]
  %v21 = vld [vmem:[%s0 + $0x10] sm:$0xf]
  %v22 = vld [vmem:[%s0 + $0x14] sm:$0xf]
  %v23 = vld [vmem:[%s0 + $0x18] sm:$0xf]
  %v24 = vld [vmem:[%s0 + $0x1c] sm:$0xf]
  %v25 = vld [vmem:[%s0 + $0x20] sm:$0xf]
  %v26 = vld [vmem:[%s0 + $0x24] sm:$0xf]
  %v27 = vld [vmem:[%s0 + $0x28] sm:$0xf]
  %v28 = vld [vmem:[%s0 + $0x2c] sm:$0xf]
  %v29 = vld [vmem:[%s0 + $0x30] sm:$0xf]
  %v30 = vld [vmem:[%s0 + $0x34] sm:$0xf]
  %v31 = vld [vmem:[%s0 + $0x38] sm:$0xf]
  %v32 = vld [vmem:[%s0 + $0x3c] sm:$0xf]
  %v33 = vld [vmem:[%s1] sm:$0xf]
  %v34 = vld [vmem:[%s1 + $0x4] sm:$0xf]
  %v35 = vld [vmem:[%s1 + $0x8] sm:$0xf]
  %v36 = vld [vmem:[%s1 + $0xc] sm:$0xf]
  %v37 = vld [vmem:[%s1 + $0x10] sm:$0xf]
  %v38 = vld [vmem:[%s1 + $0x14] sm:$0xf]
  %v39 = vld [vmem:[%s1 + $0x18] sm:$0xf]
  %v40 = vld [vmem:[%s1 + $0x1c] sm:$0xf]
  %v41 = vld [vmem:[%s1 + $0x20] sm:$0xf]
  %v42 = vld [vmem:[%s1 + $0x24] sm:$0xf]
  %v43 = vld [vmem:[%s1 + $0x28] sm:$0xf]
  %v44 = vld [vmem:[%s1 + $0x2c] sm:$0xf]
  %v45 = vld [vmem:[%s1 + $0x30] sm:$0xf]
  %v46 = vld [vmem:[%s1 + $0x34] sm:$0xf]
  %v47 = vld [vmem:[%s1 + $0x38] sm:$0xf]
  %v48 = vld [vmem:[%s1 + $0x3c] sm:$0xf]
  %v49 = vmax.bf16 %v17, %v33
  %v50 = vmax.bf16 %v18, %v34
  %v51 = vmax.bf16 %v19, %v35
  %v52 = vmax.bf16 %v20, %v36
  %v53 = vmax.bf16 %v21, %v37
  %v54 = vmax.bf16 %v22, %v38
  %v55 = vmax.bf16 %v23, %v39
  %v56 = vmax.bf16 %v24, %v40
  %v57 = vmax.bf16 %v25, %v41
  %v58 = vmax.bf16 %v26, %v42
  %v59 = vmax.bf16 %v27, %v43
  %v60 = vmax.bf16 %v28, %v44
  %v61 = vmax.bf16 %v29, %v45
  %v62 = vmax.bf16 %v30, %v46
  %v63 = vmax.bf16 %v31, %v47
  %v64 = vmax.bf16 %v32, %v48
  %v65 = vld [vmem:[%s2] sm:$0xf]
  %v66 = vld [vmem:[%s2 + $0x4] sm:$0xf]
  %v67 = vld [vmem:[%s2 + $0x8] sm:$0xf]
  %v68 = vld [vmem:[%s2 + $0xc] sm:$0xf]
  %v69 = vld [vmem:[%s2 + $0x10] sm:$0xf]
  %v70 = vld [vmem:[%s2 + $0x14] sm:$0xf]
  %v71 = vld [vmem:[%s2 + $0x18] sm:$0xf]
  %v72 = vld [vmem:[%s2 + $0x1c] sm:$0xf]
  %v73 = vld [vmem:[%s2 + $0x20] sm:$0xf]
  %v74 = vld [vmem:[%s2 + $0x24] sm:$0xf]
  %v75 = vld [vmem:[%s2 + $0x28] sm:$0xf]
  %v76 = vld [vmem:[%s2 + $0x2c] sm:$0xf]
  %v77 = vld [vmem:[%s2 + $0x30] sm:$0xf]
  %v78 = vld [vmem:[%s2 + $0x34] sm:$0xf]
  %v79 = vld [vmem:[%s2 + $0x38] sm:$0xf]
  %v80 = vld [vmem:[%s2 + $0x3c] sm:$0xf]
  %v81 = vld [vmem:[%s3] sm:$0xf]
  %v82 = vld [vmem:[%s3 + $0x4] sm:$0xf]
  %v83 = vld [vmem:[%s3 + $0x8] sm:$0xf]
  %v84 = vld [vmem:[%s3 + $0xc] sm:$0xf]
  %v85 = vld [vmem:[%s3 + $0x10] sm:$0xf]
  %v86 = vld [vmem:[%s3 + $0x14] sm:$0xf]
  %v87 = vld [vmem:[%s3 + $0x18] sm:$0xf]
  %v88 = vld [vmem:[%s3 + $0x1c] sm:$0xf]
  %v89 = vld [vmem:[%s3 + $0x20] sm:$0xf]
  %v90 = vld [vmem:[%s3 + $0x24] sm:$0xf]
  %v91 = vld [vmem:[%s3 + $0x28] sm:$0xf]
  %v92 = vld [vmem:[%s3 + $0x2c] sm:$0xf]
  %v93 = vld [vmem:[%s3 + $0x30] sm:$0xf]
  %v94 = vld [vmem:[%s3 + $0x34] sm:$0xf]
  %v95 = vld [vmem:[%s3 + $0x38] sm:$0xf]
  %v96 = vld [vmem:[%s3 + $0x3c] sm:$0xf]
  %v97 = vmax.bf16 %v65, %v81
  %v98 = vmax.bf16 %v66, %v82
  %v99 = vmax.bf16 %v67, %v83
  %v100 = vmax.bf16 %v68, %v84
  %v101 = vmax.bf16 %v69, %v85
  %v102 = vmax.bf16 %v70, %v86
  %v103 = vmax.bf16 %v71, %v87
  %v104 = vmax.bf16 %v72, %v88
  %v105 = vmax.bf16 %v73, %v89
  %v106 = vmax.bf16 %v74, %v90
  %v107 = vmax.bf16 %v75, %v91
  %v108 = vmax.bf16 %v76, %v92
  %v109 = vmax.bf16 %v77, %v93
  %v110 = vmax.bf16 %v78, %v94
  %v111 = vmax.bf16 %v79, %v95
  %v112 = vmax.bf16 %v80, %v96
  %v113 = vmax.bf16 %v49, %v97
  %v114 = vmax.bf16 %v50, %v98
  %v115 = vmax.bf16 %v51, %v99
  %v116 = vmax.bf16 %v52, %v100
  %v117 = vmax.bf16 %v53, %v101
  %v118 = vmax.bf16 %v54, %v102
  %v119 = vmax.bf16 %v55, %v103
  %v120 = vmax.bf16 %v56, %v104
  %v121 = vmax.bf16 %v57, %v105
  %v122 = vmax.bf16 %v58, %v106
  %v123 = vmax.bf16 %v59, %v107
  %v124 = vmax.bf16 %v60, %v108
  %v125 = vmax.bf16 %v61, %v109
  %v126 = vmax.bf16 %v62, %v110
  %v127 = vmax.bf16 %v63, %v111
  %v128 = vmax.bf16 %v64, %v112
  %vm129 = vcmask 519168
  %130 = vst.msk [vmem:[%s4] sm:$0xf] %vm129, %v113
  %131 = vst.msk [vmem:[%s4 + $0x4] sm:$0xf] %vm129, %v114
  %132 = vst.msk [vmem:[%s4 + $0x8] sm:$0xf] %vm129, %v115
  %133 = vst.msk [vmem:[%s4 + $0xc] sm:$0xf] %vm129, %v116
  %134 = vst.msk [vmem:[%s4 + $0x10] sm:$0xf] %vm129, %v117
  %135 = vst.msk [vmem:[%s4 + $0x14] sm:$0xf] %vm129, %v118
  %136 = vst.msk [vmem:[%s4 + $0x18] sm:$0xf] %vm129, %v119
  %137 = vst.msk [vmem:[%s4 + $0x1c] sm:$0xf] %vm129, %v120
  %138 = vst.msk [vmem:[%s4 + $0x20] sm:$0xf] %vm129, %v121
  %139 = vst.msk [vmem:[%s4 + $0x24] sm:$0xf] %vm129, %v122
  %140 = vst.msk [vmem:[%s4 + $0x28] sm:$0xf] %vm129, %v123
  %141 = vst.msk [vmem:[%s4 + $0x2c] sm:$0xf] %vm129, %v124
  %142 = vst.msk [vmem:[%s4 + $0x30] sm:$0xf] %vm129, %v125
  %143 = vst.msk [vmem:[%s4 + $0x34] sm:$0xf] %vm129, %v126
  %144 = vst.msk [vmem:[%s4 + $0x38] sm:$0xf] %vm129, %v127
  %145 = vst.msk [vmem:[%s4 + $0x3c] sm:$0xf] %vm129, %v128
  // Predicated region
  $region18: #{net_forward.12} parent=0 // pred_check
    _
  $region19: #{net_forward.12} parent=0 // pred_check_branch
    %147 = sbr.rel (0) target = $region21
  $region20: #{net_forward.12} parent=0 // pred_region
    _
  $region21: #{net_forward.12} parent=0 // pred_fallthru
    _
  // Predicated region
  $region22: #{net_forward.12} parent=0 // pred_check
    _
  $region23: #{net_forward.12} parent=0 // pred_check_branch
    %149 = sbr.rel (0) target = $region25
  $region24: #{net_forward.12} parent=0 // pred_region
    _
  $region25: #{net_forward.12} parent=0 // pred_fallthru
    _

// kernel: net_forward.14
$region0: #{net_forward.14}
  #allocation0 [shape = 'u32[]', space=smem, size = 0x4, offset = 0x4, fixed_abs, tag = 'smem constant byte address 0x4 - core index']
  #allocation1 [shape = 'u32[144,128]{1,0:T(1,128)}', space=vmem, size = 0x12000, scoped, tag = 'internal scratch']
  %s0 = inlined_call_operand.vmem [shape: bf16[32,128], index: 0, kind: input, shape index: {}]
  %s1 = inlined_call_operand.vmem [shape: bf16[32,128], index: 1, kind: input, shape index: {}]
  %s2 = inlined_call_operand.vmem [shape: bf16[32,128], index: 2, kind: input, shape index: {}]
  %s3 = inlined_call_operand.vmem [shape: bf16[32,128], index: 3, kind: input, shape index: {}]
  %s4 = inlined_call_operand.vmem [shape: bf16[32,128], index: 4, kind: output, shape index: {}]
  %s5 = sld [smem:[#allocation0]]
  $region26: #{net_forward.14} parent=0
    _
  %s7 = ssub.s32 1, %s5
  %s8 = scalar_select 0, %s7, %s5
  // Predicated region
  $region2: #{net_forward.14} parent=0 // pred_check
    _
  $region3: #{net_forward.14} parent=0 // pred_check_branch
    %10 = sbr.rel (0) target = $region5
  $region4: #{net_forward.14} parent=0 // pred_region
    _
  $region5: #{net_forward.14} parent=0 // pred_fallthru
    _
  // Predicated region
  $region6: #{net_forward.14} parent=0 // pred_check
    _
  $region7: #{net_forward.14} parent=0 // pred_check_branch
    %12 = sbr.rel (0) target = $region9
  $region8: #{net_forward.14} parent=0 // pred_region
    _
  $region9: #{net_forward.14} parent=0 // pred_fallthru
    _
  // Predicated region
  $region10: #{net_forward.14} parent=0 // pred_check
    _
  $region11: #{net_forward.14} parent=0 // pred_check_branch
    %14 = sbr.rel (0) target = $region13
  $region12: #{net_forward.14} parent=0 // pred_region
    _
  $region13: #{net_forward.14} parent=0 // pred_fallthru
    _
  // Predicated region
  $region14: #{net_forward.14} parent=0 // pred_check
    _
  $region15: #{net_forward.14} parent=0 // pred_check_branch
    %16 = sbr.rel (0) target = $region17
  $region16: #{net_forward.14} parent=0 // pred_region
    _
  $region17: #{net_forward.14} parent=0 // pred_fallthru
    _
  %v17 = vld [vmem:[%s0] sm:$0xf]
  %v18 = vld [vmem:[%s0 + $0x4] sm:$0xf]
  %v19 = vld [vmem:[%s0 + $0x8] sm:$0xf]
  %v20 = vld [vmem:[%s0 + $0xc] sm:$0xf]
  %v21 = vld [vmem:[%s1] sm:$0xf]
  %v22 = vld [vmem:[%s1 + $0x4] sm:$0xf]
  %v23 = vld [vmem:[%s1 + $0x8] sm:$0xf]
  %v24 = vld [vmem:[%s1 + $0xc] sm:$0xf]
  %v25 = vmax.bf16 %v17, %v21
  %v26 = vmax.bf16 %v18, %v22
  %v27 = vmax.bf16 %v19, %v23
  %v28 = vmax.bf16 %v20, %v24
  %v29 = vld [vmem:[%s2] sm:$0xf]
  %v30 = vld [vmem:[%s2 + $0x4] sm:$0xf]
  %v31 = vld [vmem:[%s2 + $0x8] sm:$0xf]
  %v32 = vld [vmem:[%s2 + $0xc] sm:$0xf]
  %v33 = vld [vmem:[%s3] sm:$0xf]
  %v34 = vld [vmem:[%s3 + $0x4] sm:$0xf]
  %v35 = vld [vmem:[%s3 + $0x8] sm:$0xf]
  %v36 = vld [vmem:[%s3 + $0xc] sm:$0xf]
  %v37 = vmax.bf16 %v29, %v33
  %v38 = vmax.bf16 %v30, %v34
  %v39 = vmax.bf16 %v31, %v35
  %v40 = vmax.bf16 %v32, %v36
  %v41 = vmax.bf16 %v25, %v37
  %v42 = vmax.bf16 %v26, %v38
  %v43 = vmax.bf16 %v27, %v39
  %v44 = vmax.bf16 %v28, %v40
  %45 = vst [vmem:[%s4] sm:$0xf] %v41
  %46 = vst [vmem:[%s4 + $0x4] sm:$0xf] %v42
  %47 = vst [vmem:[%s4 + $0x8] sm:$0xf] %v43
  %48 = vst [vmem:[%s4 + $0xc] sm:$0xf] %v44
  // Predicated region
  $region18: #{net_forward.14} parent=0 // pred_check
    _
  $region19: #{net_forward.14} parent=0 // pred_check_branch
    %50 = sbr.rel (0) target = $region21
  $region20: #{net_forward.14} parent=0 // pred_region
    _
  $region21: #{net_forward.14} parent=0 // pred_fallthru
    _
  // Predicated region
  $region22: #{net_forward.14} parent=0 // pred_check
    _
  $region23: #{net_forward.14} parent=0 // pred_check_branch
    %52 = sbr.rel (0) target = $region25
  $region24: #{net_forward.14} parent=0 // pred_region
    _
  $region25: #{net_forward.14} parent=0 // pred_fallthru
    _

// kernel: net_forward.13
$region0: #{net_forward.13}
  #allocation0 [shape = 'u32[]', space=smem, size = 0x4, offset = 0x4, fixed_abs, tag = 'smem constant byte address 0x4 - core index']
  #allocation1 [shape = 'u32[144,128]{1,0:T(1,128)}', space=vmem, size = 0x12000, scoped, tag = 'internal scratch']
  %s0 = inlined_call_operand.vmem [shape: bf16[128,576], index: 0, kind: input, shape index: {}]
  %s1 = inlined_call_operand.vmem [shape: bf16[576,128], index: 1, kind: input, shape index: {}]
  %s2 = inlined_call_operand.vmem [shape: f32[1,128], index: 2, kind: input, shape index: {}]
  %s3 = inlined_call_operand.vmem [shape: bf16[128,128], index: 3, kind: output, shape index: {}]
  %s4 = sld [smem:[#allocation0]]
  $region22: #{net_forward.13} parent=0
    _
  %s6 = ssub.s32 1, %s4
  %s7 = scalar_select 0, %s6, %s4
  // Predicated region
  $region2: #{net_forward.13} parent=0 // pred_check
    _
  $region3: #{net_forward.13} parent=0 // pred_check_branch
    %9 = sbr.rel (0) target = $region5
  $region4: #{net_forward.13} parent=0 // pred_region
    _
  $region5: #{net_forward.13} parent=0 // pred_fallthru
    _
  // Predicated region
  $region6: #{net_forward.13} parent=0 // pred_check
    _
  $region7: #{net_forward.13} parent=0 // pred_check_branch
    %11 = sbr.rel (0) target = $region9
  $region8: #{net_forward.13} parent=0 // pred_region
    _
  $region9: #{net_forward.13} parent=0 // pred_fallthru
    _
  // Predicated region
  $region10: #{net_forward.13} parent=0 // pred_check
    _
  $region11: #{net_forward.13} parent=0 // pred_check_branch
    %13 = sbr.rel (0) target = $region13
  $region12: #{net_forward.13} parent=0 // pred_region
    _
  $region13: #{net_forward.13} parent=0 // pred_fallthru
    _
  %v15 = vld [vmem:[%s0] sm:$0xff]
  %v16 = vld [vmem:[%s0 + $0x8] sm:$0xff]
  %v17 = vld [vmem:[%s0 + $0x10] sm:$0xf]
  %v18 = vld [vmem:[%s0 + $0x14] sm:$0xff]
  %v19 = vld [vmem:[%s0 + $0x1c] sm:$0xff]
  %v20 = vld [vmem:[%s0 + $0x24] sm:$0xf]
  %v21 = vld [vmem:[%s0 + $0x28] sm:$0xff]
  %v22 = vld [vmem:[%s0 + $0x30] sm:$0xff]
  %v23 = vld [vmem:[%s0 + $0x38] sm:$0xf]
  %v24 = vld [vmem:[%s0 + $0x3c] sm:$0xff]
  %v25 = vld [vmem:[%s0 + $0x44] sm:$0xff]
  %v26 = vld [vmem:[%s0 + $0x4c] sm:$0xf]
  %v27 = vld [vmem:[%s0 + $0x50] sm:$0xff]
  %v28 = vld [vmem:[%s0 + $0x58] sm:$0xff]
  %v29 = vld [vmem:[%s0 + $0x60] sm:$0xf]
  %v30 = vld [vmem:[%s0 + $0x64] sm:$0xff]
  %v31 = vld [vmem:[%s0 + $0x6c] sm:$0xff]
  %v32 = vld [vmem:[%s0 + $0x74] sm:$0xf]
  %v33 = vld [vmem:[%s0 + $0x78] sm:$0xff]
  %v34 = vld [vmem:[%s0 + $0x80] sm:$0xff]
  %v35 = vld [vmem:[%s0 + $0x88] sm:$0xf]
  %v36 = vld [vmem:[%s0 + $0x8c] sm:$0xff]
  %v37 = vld [vmem:[%s0 + $0x94] sm:$0xff]
  %v38 = vld [vmem:[%s0 + $0x9c] sm:$0xf]
  %v39 = vld [vmem:[%s0 + $0xa0] sm:$0xff]
  %v40 = vld [vmem:[%s0 + $0xa8] sm:$0xff]
  %v41 = vld [vmem:[%s0 + $0xb0] sm:$0xf]
  %v42 = vld [vmem:[%s0 + $0xb4] sm:$0xff]
  %v43 = vld [vmem:[%s0 + $0xbc] sm:$0xff]
  %v44 = vld [vmem:[%s0 + $0xc4] sm:$0xf]
  %v45 = vld [vmem:[%s0 + $0xc8] sm:$0xff]
  %v46 = vld [vmem:[%s0 + $0xd0] sm:$0xff]
  %v47 = vld [vmem:[%s0 + $0xd8] sm:$0xf]
  %v48 = vld [vmem:[%s0 + $0xdc] sm:$0xff]
  %v49 = vld [vmem:[%s0 + $0xe4] sm:$0xff]
  %v50 = vld [vmem:[%s0 + $0xec] sm:$0xf]
  %v51 = vld [vmem:[%s0 + $0xf0] sm:$0xff]
  %v52 = vld [vmem:[%s0 + $0xf8] sm:$0xff]
  %v53 = vld [vmem:[%s0 + $0x100] sm:$0xf]
  %v54 = vld [vmem:[%s0 + $0x104] sm:$0xff]
  %v55 = vld [vmem:[%s0 + $0x10c] sm:$0xff]
  %v56 = vld [vmem:[%s0 + $0x114] sm:$0xf]
  %v57 = vld [vmem:[%s0 + $0x118] sm:$0xff]
  %v58 = vld [vmem:[%s0 + $0x120] sm:$0xff]
  %v59 = vld [vmem:[%s0 + $0x128] sm:$0xf]
  %v60 = vld [vmem:[%s0 + $0x12c] sm:$0xff]
  %v61 = vld [vmem:[%s0 + $0x134] sm:$0xff]
  %v62 = vld [vmem:[%s0 + $0x13c] sm:$0xf]
  %v63 = vld [vmem:[%s1] sm:$0xf]
  %v64 = vld [vmem:[%s1 + $0x4] sm:$0xf]
  %v65 = vld [vmem:[%s1 + $0x8] sm:$0xf]
  %v66 = vld [vmem:[%s1 + $0xc] sm:$0xf]
  %v67 = vld [vmem:[%s1 + $0x10] sm:$0xf]
  %v68 = vld [vmem:[%s1 + $0x14] sm:$0xf]
  %v69 = vld [vmem:[%s1 + $0x18] sm:$0xf]
  %v70 = vld [vmem:[%s1 + $0x1c] sm:$0xf]
  %v71 = vld [vmem:[%s1 + $0x20] sm:$0xf]
  %v72 = vld [vmem:[%s1 + $0x24] sm:$0xf]
  %v73 = vld [vmem:[%s1 + $0x28] sm:$0xf]
  %v74 = vld [vmem:[%s1 + $0x2c] sm:$0xf]
  %v75 = vld [vmem:[%s1 + $0x30] sm:$0xf]
  %v76 = vld [vmem:[%s1 + $0x34] sm:$0xf]
  %v77 = vld [vmem:[%s1 + $0x38] sm:$0xf]
  %v78 = vld [vmem:[%s1 + $0x3c] sm:$0xf]
  %v79 = vld [vmem:[%s1 + $0x40] sm:$0xf]
  %v80 = vld [vmem:[%s1 + $0x44] sm:$0xf]
  %v81 = vld [vmem:[%s1 + $0x48] sm:$0xf]
  %v82 = vld [vmem:[%s1 + $0x4c] sm:$0xf]
  %v83 = vld [vmem:[%s1 + $0x50] sm:$0xf]
  %v84 = vld [vmem:[%s1 + $0x54] sm:$0xf]
  %v85 = vld [vmem:[%s1 + $0x58] sm:$0xf]
  %v86 = vld [vmem:[%s1 + $0x5c] sm:$0xf]
  %v87 = vld [vmem:[%s1 + $0x60] sm:$0xf]
  %v88 = vld [vmem:[%s1 + $0x64] sm:$0xf]
  %v89 = vld [vmem:[%s1 + $0x68] sm:$0xf]
  %v90 = vld [vmem:[%s1 + $0x6c] sm:$0xf]
  %v91 = vld [vmem:[%s1 + $0x70] sm:$0xf]
  %v92 = vld [vmem:[%s1 + $0x74] sm:$0xf]
  %v93 = vld [vmem:[%s1 + $0x78] sm:$0xf]
  %v94 = vld [vmem:[%s1 + $0x7c] sm:$0xf]
  %v95 = vld [vmem:[%s1 + $0x80] sm:$0xf]
  %v96 = vld [vmem:[%s1 + $0x84] sm:$0xf]
  %v97 = vld [vmem:[%s1 + $0x88] sm:$0xf]
  %v98 = vld [vmem:[%s1 + $0x8c] sm:$0xf]
  %v99 = vld [vmem:[%s1 + $0x90] sm:$0xf]
  %v100 = vld [vmem:[%s1 + $0x94] sm:$0xf]
  %v101 = vld [vmem:[%s1 + $0x98] sm:$0xf]
  %v102 = vld [vmem:[%s1 + $0x9c] sm:$0xf]
  %v103 = vld [vmem:[%s1 + $0xa0] sm:$0xf]
  %v104 = vld [vmem:[%s1 + $0xa4] sm:$0xf]
  %v105 = vld [vmem:[%s1 + $0xa8] sm:$0xf]
  %v106 = vld [vmem:[%s1 + $0xac] sm:$0xf]
  %v107 = vld [vmem:[%s1 + $0xb0] sm:$0xf]
  %v108 = vld [vmem:[%s1 + $0xb4] sm:$0xf]
  %v109 = vld [vmem:[%s1 + $0xb8] sm:$0xf]
  %v110 = vld [vmem:[%s1 + $0xbc] sm:$0xf]
  %v111 = vld [vmem:[%s1 + $0xc0] sm:$0xf]
  %v112 = vld [vmem:[%s1 + $0xc4] sm:$0xf]
  %v113 = vld [vmem:[%s1 + $0xc8] sm:$0xf]
  %v114 = vld [vmem:[%s1 + $0xcc] sm:$0xf]
  %v115 = vld [vmem:[%s1 + $0xd0] sm:$0xf]
  %v116 = vld [vmem:[%s1 + $0xd4] sm:$0xf]
  %v117 = vld [vmem:[%s1 + $0xd8] sm:$0xf]
  %v118 = vld [vmem:[%s1 + $0xdc] sm:$0xf]
  %v119 = vld [vmem:[%s1 + $0xe0] sm:$0xf]
  %v120 = vld [vmem:[%s1 + $0xe4] sm:$0xf]
  %v121 = vld [vmem:[%s1 + $0xe8] sm:$0xf]
  %v122 = vld [vmem:[%s1 + $0xec] sm:$0xf]
  %v123 = vld [vmem:[%s1 + $0xf0] sm:$0xf]
  %v124 = vld [vmem:[%s1 + $0xf4] sm:$0xf]
  %v125 = vld [vmem:[%s1 + $0xf8] sm:$0xf]
  %v126 = vld [vmem:[%s1 + $0xfc] sm:$0xf]
  %v127 = vld [vmem:[%s1 + $0x100] sm:$0xf]
  %v128 = vld [vmem:[%s1 + $0x104] sm:$0xf]
  %v129 = vld [vmem:[%s1 + $0x108] sm:$0xf]
  %v130 = vld [vmem:[%s1 + $0x10c] sm:$0xf]
  %v131 = vld [vmem:[%s1 + $0x110] sm:$0xf]
  %v132 = vld [vmem:[%s1 + $0x114] sm:$0xf]
  %v133 = vld [vmem:[%s1 + $0x118] sm:$0xf]
  %v134 = vld [vmem:[%s1 + $0x11c] sm:$0xf]
  %v135 = vld [vmem:[%s2] sm:$0x1]
  %v137 = vlaneseq
  %v138 = vshrl.u32 %v137, 7
  %v139 = vsub.s32 0, %v138
  %v140 = vrot.slane %v135, %v139
  %v190 = vunpack.c.l.b16 %v15
  %v191 = vunpack.c.h.b16 %v15
  %v192 = vunpack.c.l.b16 %v16
  %v193 = vunpack.c.h.b16 %v16
  %v194 = vunpack.c.l.b16 %v17
  %v195 = vunpack.c.l.b16 %v18
  %v196 = vunpack.c.h.b16 %v18
  %v197 = vunpack.c.l.b16 %v19
  %v198 = vunpack.c.h.b16 %v19
  %v199 = vunpack.c.l.b16 %v20
  %v200 = vunpack.c.l.b16 %v21
  %v201 = vunpack.c.h.b16 %v21
  %v202 = vunpack.c.l.b16 %v22
  %v203 = vunpack.c.h.b16 %v22
  %v204 = vunpack.c.l.b16 %v23
  %v205 = vunpack.c.l.b16 %v24
  %v206 = vunpack.c.h.b16 %v24
  %v207 = vunpack.c.l.b16 %v25
  %v208 = vunpack.c.h.b16 %v25
  %v209 = vunpack.c.l.b16 %v26
  %v210 = vunpack.c.l.b16 %v27
  %v211 = vunpack.c.h.b16 %v27
  %v212 = vunpack.c.l.b16 %v28
  %v213 = vunpack.c.h.b16 %v28
  %v214 = vunpack.c.l.b16 %v29
  %v215 = vunpack.c.l.b16 %v30
  %v216 = vunpack.c.h.b16 %v30
  %v217 = vunpack.c.l.b16 %v31
  %v218 = vunpack.c.h.b16 %v31
  %v219 = vunpack.c.l.b16 %v32
  %v220 = vunpack.c.l.b16 %v33
  %v221 = vunpack.c.h.b16 %v33
  %v222 = vunpack.c.l.b16 %v34
  %v223 = vunpack.c.h.b16 %v34
  %v224 = vunpack.c.l.b16 %v35
  %v225 = vunpack.c.l.b16 %v36
  %v226 = vunpack.c.h.b16 %v36
  %v227 = vunpack.c.l.b16 %v37
  %v228 = vunpack.c.h.b16 %v37
  %v229 = vunpack.c.l.b16 %v38
  %v230 = vunpack.c.l.b16 %v39
  %v231 = vunpack.c.h.b16 %v39
  %v232 = vunpack.c.l.b16 %v40
  %v233 = vunpack.c.h.b16 %v40
  %v234 = vunpack.c.l.b16 %v41
  %v235 = vunpack.c.l.b16 %v42
  %v236 = vunpack.c.h.b16 %v42
  %v237 = vunpack.c.l.b16 %v43
  %v238 = vunpack.c.h.b16 %v43
  %v239 = vunpack.c.l.b16 %v44
  %v240 = vunpack.c.l.b16 %v45
  %v241 = vunpack.c.h.b16 %v45
  %v242 = vunpack.c.l.b16 %v46
  %v243 = vunpack.c.h.b16 %v46
  %v244 = vunpack.c.l.b16 %v47
  %v245 = vunpack.c.l.b16 %v48
  %v246 = vunpack.c.h.b16 %v48
  %v247 = vunpack.c.l.b16 %v49
  %v248 = vunpack.c.h.b16 %v49
  %v249 = vunpack.c.l.b16 %v50
  %v250 = vunpack.c.l.b16 %v51
  %v251 = vunpack.c.h.b16 %v51
  %v252 = vunpack.c.l.b16 %v52
  %v253 = vunpack.c.h.b16 %v52
  %v254 = vunpack.c.l.b16 %v53
  %v255 = vunpack.c.l.b16 %v54
  %v256 = vunpack.c.h.b16 %v54
  %v257 = vunpack.c.l.b16 %v55
  %v258 = vunpack.c.h.b16 %v55
  %v259 = vunpack.c.l.b16 %v56
  %v260 = vunpack.c.l.b16 %v57
  %v261 = vunpack.c.h.b16 %v57
  %v262 = vunpack.c.l.b16 %v58
  %v263 = vunpack.c.h.b16 %v58
  %v264 = vunpack.c.l.b16 %v59
  %v265 = vunpack.c.l.b16 %v60
  %v266 = vunpack.c.h.b16 %v60
  %v267 = vunpack.c.l.b16 %v61
  %v268 = vunpack.c.h.b16 %v61
  %v269 = vunpack.c.l.b16 %v62
  %v270 = vpack.c.b16 %v195, %v190
  %v271 = vpack.c.b16 %v196, %v191
  %v272 = vpack.c.b16 %v197, %v192
  %v273 = vpack.c.b16 %v198, %v193
  %v274 = vpack.c.b16 %v199, %v194
  %v275 = vpack.c.b16 %v205, %v200
  %v276 = vpack.c.b16 %v206, %v201
  %v277 = vpack.c.b16 %v207, %v202
  %v278 = vpack.c.b16 %v208, %v203
  %v279 = vpack.c.b16 %v209, %v204
  %v280 = vpack.c.b16 %v215, %v210
  %v281 = vpack.c.b16 %v216, %v211
  %v282 = vpack.c.b16 %v217, %v212
  %v283 = vpack.c.b16 %v218, %v213
  %v284 = vpack.c.b16 %v219, %v214
  %v285 = vpack.c.b16 %v225, %v220
  %v286 = vpack.c.b16 %v226, %v221
  %v287 = vpack.c.b16 %v227, %v222
  %v288 = vpack.c.b16 %v228, %v223
  %v289 = vpack.c.b16 %v229, %v224
  %v290 = vpack.c.b16 %v235, %v230
  %v291 = vpack.c.b16 %v236, %v231
  %v292 = vpack.c.b16 %v237, %v232
  %v293 = vpack.c.b16 %v238, %v233
  %v294 = vpack.c.b16 %v239, %v234
  %v295 = vpack.c.b16 %v245, %v240
  %v296 = vpack.c.b16 %v246, %v241
  %v297 = vpack.c.b16 %v247, %v242
  %v298 = vpack.c.b16 %v248, %v243
  %v299 = vpack.c.b16 %v249, %v244
  %v300 = vpack.c.b16 %v255, %v250
  %v301 = vpack.c.b16 %v256, %v251
  %v302 = vpack.c.b16 %v257, %v252
  %v303 = vpack.c.b16 %v258, %v253
  %v304 = vpack.c.b16 %v259, %v254
  %v305 = vpack.c.b16 %v265, %v260
  %v306 = vpack.c.b16 %v266, %v261
  %v307 = vpack.c.b16 %v267, %v262
  %v308 = vpack.c.b16 %v268, %v263
  %v309 = vpack.c.b16 %v269, %v264
  %v414 = vunpack.c.l.b16 %v63
  %v415 = vunpack.c.l.b16 %v64
  %v416 = vunpack.c.l.b16 %v65
  %v417 = vunpack.c.l.b16 %v66
  %v418 = vunpack.c.l.b16 %v67
  %v419 = vunpack.c.l.b16 %v68
  %v420 = vunpack.c.l.b16 %v69
  %v421 = vunpack.c.l.b16 %v70
  %v422 = vunpack.c.l.b16 %v71
  %v423 = vunpack.c.l.b16 %v72
  %v424 = vunpack.c.l.b16 %v73
  %v425 = vunpack.c.l.b16 %v74
  %v426 = vunpack.c.l.b16 %v75
  %v427 = vunpack.c.l.b16 %v76
  %v428 = vunpack.c.l.b16 %v77
  %v429 = vunpack.c.l.b16 %v78
  %v430 = vunpack.c.l.b16 %v79
  %v431 = vunpack.c.l.b16 %v80
  %v432 = vunpack.c.l.b16 %v81
  %v433 = vunpack.c.l.b16 %v82
  %v434 = vunpack.c.l.b16 %v83
  %v435 = vunpack.c.l.b16 %v84
  %v436 = vunpack.c.l.b16 %v85
  %v437 = vunpack.c.l.b16 %v86
  %v438 = vunpack.c.l.b16 %v87
  %v439 = vunpack.c.l.b16 %v88
  %v440 = vunpack.c.l.b16 %v89
  %v441 = vunpack.c.l.b16 %v90
  %v442 = vunpack.c.l.b16 %v91
  %v443 = vunpack.c.l.b16 %v92
  %v444 = vunpack.c.l.b16 %v93
  %v445 = vunpack.c.l.b16 %v94
  %v446 = vunpack.c.l.b16 %v95
  %v447 = vunpack.c.l.b16 %v96
  %v448 = vunpack.c.l.b16 %v97
  %v449 = vunpack.c.l.b16 %v98
  %v450 = vunpack.c.l.b16 %v99
  %v451 = vunpack.c.l.b16 %v100
  %v452 = vunpack.c.l.b16 %v101
  %v453 = vunpack.c.l.b16 %v102
  %v454 = vunpack.c.l.b16 %v103
  %v455 = vunpack.c.l.b16 %v104
  %v456 = vunpack.c.l.b16 %v105
  %v457 = vunpack.c.l.b16 %v106
  %v458 = vunpack.c.l.b16 %v107
  %v459 = vunpack.c.l.b16 %v108
  %v460 = vunpack.c.l.b16 %v109
  %v461 = vunpack.c.l.b16 %v110
  %v462 = vunpack.c.l.b16 %v111
  %v463 = vunpack.c.l.b16 %v112
  %v464 = vunpack.c.l.b16 %v113
  %v465 = vunpack.c.l.b16 %v114
  %v466 = vunpack.c.l.b16 %v115
  %v467 = vunpack.c.l.b16 %v116
  %v468 = vunpack.c.l.b16 %v117
  %v469 = vunpack.c.l.b16 %v118
  %v470 = vunpack.c.l.b16 %v119
  %v471 = vunpack.c.l.b16 %v120
  %v472 = vunpack.c.l.b16 %v121
  %v473 = vunpack.c.l.b16 %v122
  %v474 = vunpack.c.l.b16 %v123
  %v475 = vunpack.c.l.b16 %v124
  %v476 = vunpack.c.l.b16 %v125
  %v477 = vunpack.c.l.b16 %v126
  %v478 = vunpack.c.l.b16 %v127
  %v479 = vunpack.c.l.b16 %v128
  %v480 = vunpack.c.l.b16 %v129
  %v481 = vunpack.c.l.b16 %v130
  %v482 = vunpack.c.l.b16 %v131
  %v483 = vunpack.c.l.b16 %v132
  %v484 = vunpack.c.l.b16 %v133
  %v485 = vunpack.c.l.b16 %v134
  %v486 = vpack.c.b16 %v415, %v414
  %v487 = vpack.c.b16 %v417, %v416
  %v488 = vpack.c.b16 %v419, %v418
  %v489 = vpack.c.b16 %v421, %v420
  %v490 = vpack.c.b16 %v423, %v422
  %v491 = vpack.c.b16 %v425, %v424
  %v492 = vpack.c.b16 %v427, %v426
  %v493 = vpack.c.b16 %v429, %v428
  %v494 = vpack.c.b16 %v431, %v430
  %v495 = vpack.c.b16 %v433, %v432
  %v496 = vpack.c.b16 %v435, %v434
  %v497 = vpack.c.b16 %v437, %v436
  %v498 = vpack.c.b16 %v439, %v438
  %v499 = vpack.c.b16 %v441, %v440
  %v500 = vpack.c.b16 %v443, %v442
  %v501 = vpack.c.b16 %v445, %v444
  %v502 = vpack.c.b16 %v447, %v446
  %v503 = vpack.c.b16 %v449, %v448
  %v504 = vpack.c.b16 %v451, %v450
  %v505 = vpack.c.b16 %v453, %v452
  %v506 = vpack.c.b16 %v455, %v454
  %v507 = vpack.c.b16 %v457, %v456
  %v508 = vpack.c.b16 %v459, %v458
  %v509 = vpack.c.b16 %v461, %v460
  %v510 = vpack.c.b16 %v463, %v462
  %v511 = vpack.c.b16 %v465, %v464
  %v512 = vpack.c.b16 %v467, %v466
  %v513 = vpack.c.b16 %v469, %v468
  %v514 = vpack.c.b16 %v471, %v470
  %v515 = vpack.c.b16 %v473, %v472
  %v516 = vpack.c.b16 %v475, %v474
  %v517 = vpack.c.b16 %v477, %v476
  %v518 = vpack.c.b16 %v479, %v478
  %v519 = vpack.c.b16 %v481, %v480
  %v520 = vpack.c.b16 %v483, %v482
  %v521 = vpack.c.b16 %v485, %v484
  %vm558 = vcmask 523264
  %v560 = vsel %vm558, %v274, 0
  %v563 = vsel %vm558, %v279, 0
  %v566 = vsel %vm558, %v284, 0
  %v569 = vsel %vm558, %v289, 0
  %v572 = vsel %vm558, %v294, 0
  %v575 = vsel %vm558, %v299, 0
  %v578 = vsel %vm558, %v304, 0
  %v581 = vsel %vm558, %v309, 0
  %583 = vmatprep.subr.bf16.mxu0 0
  %584 = vmatpush1.bf16.msra.mxu0 %v486
  %585 = vmatprep.subr.bf16.mxu0 0
  %586 = vmatpush1.bf16.msra.mxu0 %v487
  %587 = vmatprep.subr.bf16.mxu0 0
  %588 = vmatpush1.bf16.msra.mxu0 %v488
  %589 = vmatprep.subr.bf16.mxu0 0
  %590 = vmatpush1.bf16.msra.mxu0 %v489
  %591 = vmatprep.subr.bf16.mxu0 0
  %592 = vmatpush1.bf16.msra.mxu0 %v490
  %593 = vmatprep.subr.bf16.mxu0 0
  %594 = vmatpush1.bf16.msra.mxu0 %v491
  %595 = vmatprep.subr.bf16.mxu0 0
  %596 = vmatpush1.bf16.msra.mxu0 %v492
  %597 = vmatprep.subr.bf16.mxu0 0
  %598 = vmatpush1.bf16.msra.mxu0 %v493
  %599 = vmatprep.subr.bf16.mxu0 0
  %600 = vmatpush1.bf16.msra.mxu0 %v494
  %601 = vmatprep.subr.bf16.mxu0 0
  %602 = vmatpush1.bf16.msra.mxu0 %v495
  %603 = vmatprep.subr.bf16.mxu0 0
  %604 = vmatpush1.bf16.msra.mxu0 %v496
  %605 = vmatprep.subr.bf16.mxu0 0
  %606 = vmatpush1.bf16.msra.mxu0 %v497
  %607 = vmatprep.subr.bf16.mxu0 0
  %608 = vmatpush1.bf16.msra.mxu0 %v498
  %609 = vmatprep.subr.bf16.mxu0 0
  %610 = vmatpush1.bf16.msra.mxu0 %v499
  %611 = vmatprep.subr.bf16.mxu0 0
  %612 = vmatpush1.bf16.msra.mxu0 %v500
  %613 = vmatprep.subr.bf16.mxu0 0
  %614 = vmatpush1.bf16.msra.mxu0 %v501
  %615 = vmatprep.mubr.bf16.mxu0 %v271
  %616 = vmatmul.mubr.bf16.gmra.mrb[0].mxu0 %v270
  %v617 = vpop.f32.mrb[0].mxu0
  %v618 = vadd.f32 %v140, %v617
  %v619 = vpop.f32.mrb[0].mxu0
  %v620 = vpop.f32.mrb[0].mxu0
  %v621 = vadd.f32 %v140, %v620
  %v622 = vpop.f32.mrb[0].mxu0
  %623 = vmatprep.mubr.bf16.mxu0 %v276
  %624 = vmatmul.mubr.bf16.gmra.mrb[0].mxu0 %v275
  %v625 = vpop.f32.mrb[0].mxu0
  %v626 = vadd.f32 %v140, %v625
  %v627 = vpop.f32.mrb[0].mxu0
  %v628 = vpop.f32.mrb[0].mxu0
  %v629 = vadd.f32 %v140, %v628
  %v630 = vpop.f32.mrb[0].mxu0
  %631 = vmatprep.mubr.bf16.mxu0 %v281
  %632 = vmatmul.mubr.bf16.gmra.mrb[0].mxu0 %v280
  %v633 = vpop.f32.mrb[0].mxu0
  %v634 = vadd.f32 %v140, %v633
  %v635 = vpop.f32.mrb[0].mxu0
  %v636 = vpop.f32.mrb[0].mxu0
  %v637 = vadd.f32 %v140, %v636
  %v638 = vpop.f32.mrb[0].mxu0
  %639 = vmatprep.mubr.bf16.mxu0 %v286
  %640 = vmatmul.mubr.bf16.gmra.mrb[0].mxu0 %v285
  %v641 = vpop.f32.mrb[0].mxu0
  %v642 = vadd.f32 %v140, %v641
  %v643 = vpop.f32.mrb[0].mxu0
  %v644 = vpop.f32.mrb[0].mxu0
  %v645 = vadd.f32 %v140, %v644
  %v646 = vpop.f32.mrb[0].mxu0
  %647 = vmatprep.mubr.bf16.mxu0 %v291
  %648 = vmatmul.mubr.bf16.gmra.mrb[0].mxu0 %v290
  %v649 = vpop.f32.mrb[0].mxu0
  %v650 = vadd.f32 %v140, %v649
  %v651 = vpop.f32.mrb[0].mxu0
  %v652 = vpop.f32.mrb[0].mxu0
  %v653 = vadd.f32 %v140, %v652
  %v654 = vpop.f32.mrb[0].mxu0
  %655 = vmatprep.mubr.bf16.mxu0 %v296
  %656 = vmatmul.mubr.bf16.gmra.mrb[0].mxu0 %v295
  %v657 = vpop.f32.mrb[0].mxu0
  %v658 = vadd.f32 %v140, %v657
  %v659 = vpop.f32.mrb[0].mxu0
  %v660 = vpop.f32.mrb[0].mxu0
  %v661 = vadd.f32 %v140, %v660
  %v662 = vpop.f32.mrb[0].mxu0
  %663 = vmatprep.mubr.bf16.mxu0 %v301
  %664 = vmatmul.mubr.bf16.gmra.mrb[0].mxu0 %v300
  %v665 = vpop.f32.mrb[0].mxu0
  %v666 = vadd.f32 %v140, %v665
  %v667 = vpop.f32.mrb[0].mxu0
  %v668 = vpop.f32.mrb[0].mxu0
  %v669 = vadd.f32 %v140, %v668
  %v670 = vpop.f32.mrb[0].mxu0
  %671 = vmatprep.mubr.bf16.mxu0 %v306
  %672 = vmatmul.mubr.bf16.gmra.mrb[0].mxu0 %v305
  %v673 = vpop.f32.mrb[0].mxu0
  %v674 = vadd.f32 %v140, %v673
  %v675 = vpop.f32.mrb[0].mxu0
  %v676 = vpop.f32.mrb[0].mxu0
  %v677 = vadd.f32 %v140, %v676
  %v678 = vpop.f32.mrb[0].mxu0
  %679 = vdwg.mxu0
  %680 = vmatprep.subr.bf16.mxu0 0
  %681 = vmatpush1.bf16.msra.mxu0 %v502
  %682 = vmatprep.subr.bf16.mxu0 0
  %683 = vmatpush1.bf16.msra.mxu0 %v503
  %684 = vmatprep.subr.bf16.mxu0 0
  %685 = vmatpush1.bf16.msra.mxu0 %v504
  %686 = vmatprep.subr.bf16.mxu0 0
  %687 = vmatpush1.bf16.msra.mxu0 %v505
  %688 = vmatprep.subr.bf16.mxu0 0
  %689 = vmatpush1.bf16.msra.mxu0 %v506
  %690 = vmatprep.subr.bf16.mxu0 0
  %691 = vmatpush1.bf16.msra.mxu0 %v507
  %692 = vmatprep.subr.bf16.mxu0 0
  %693 = vmatpush1.bf16.msra.mxu0 %v508
  %694 = vmatprep.subr.bf16.mxu0 0
  %695 = vmatpush1.bf16.msra.mxu0 %v509
  %696 = vmatprep.subr.bf16.mxu0 0
  %697 = vmatpush1.bf16.msra.mxu0 %v510
  %698 = vmatprep.subr.bf16.mxu0 0
  %699 = vmatpush1.bf16.msra.mxu0 %v511
  %700 = vmatprep.subr.bf16.mxu0 0
  %701 = vmatpush1.bf16.msra.mxu0 %v512
  %702 = vmatprep.subr.bf16.mxu0 0
  %703 = vmatpush1.bf16.msra.mxu0 %v513
  %704 = vmatprep.subr.bf16.mxu0 0
  %705 = vmatpush1.bf16.msra.mxu0 %v514
  %706 = vmatprep.subr.bf16.mxu0 0
  %707 = vmatpush1.bf16.msra.mxu0 %v515
  %708 = vmatprep.subr.bf16.mxu0 0
  %709 = vmatpush1.bf16.msra.mxu0 %v516
  %710 = vmatprep.subr.bf16.mxu0 0
  %711 = vmatpush1.bf16.msra.mxu0 %v517
  %712 = vmatprep.mubr.bf16.mxu0 %v273
  %713 = vmatmul.mubr.bf16.gmra.mrb[0].mxu0 %v272
  %v714 = vpop.f32.mrb[0].mxu0
  %v715 = vadd.f32 %v618, %v714
  %v716 = vpop.f32.mrb[0].mxu0
  %v717 = vpop.f32.mrb[0].mxu0
  %v718 = vadd.f32 %v621, %v717
  %v719 = vpop.f32.mrb[0].mxu0
  %720 = vmatprep.mubr.bf16.mxu0 %v278
  %721 = vmatmul.mubr.bf16.gmra.mrb[0].mxu0 %v277
  %v722 = vpop.f32.mrb[0].mxu0
  %v723 = vadd.f32 %v626, %v722
  %v724 = vpop.f32.mrb[0].mxu0
  %v725 = vpop.f32.mrb[0].mxu0
  %v726 = vadd.f32 %v629, %v725
  %v727 = vpop.f32.mrb[0].mxu0
  %728 = vmatprep.mubr.bf16.mxu0 %v283
  %729 = vmatmul.mubr.bf16.gmra.mrb[0].mxu0 %v282
  %v730 = vpop.f32.mrb[0].mxu0
  %v731 = vadd.f32 %v634, %v730
  %v732 = vpop.f32.mrb[0].mxu0
  %v733 = vpop.f32.mrb[0].mxu0
  %v734 = vadd.f32 %v637, %v733
  %v735 = vpop.f32.mrb[0].mxu0
  %736 = vmatprep.mubr.bf16.mxu0 %v288
  %737 = vmatmul.mubr.bf16.gmra.mrb[0].mxu0 %v287
  %v738 = vpop.f32.mrb[0].mxu0
  %v739 = vadd.f32 %v642, %v738
  %v740 = vpop.f32.mrb[0].mxu0
  %v741 = vpop.f32.mrb[0].mxu0
  %v742 = vadd.f32 %v645, %v741
  %v743 = vpop.f32.mrb[0].mxu0
  %744 = vmatprep.mubr.bf16.mxu0 %v293
  %745 = vmatmul.mubr.bf16.gmra.mrb[0].mxu0 %v292
  %v746 = vpop.f32.mrb[0].mxu0
  %v747 = vadd.f32 %v650, %v746
  %v748 = vpop.f32.mrb[0].mxu0
  %v749 = vpop.f32.mrb[0].mxu0
  %v750 = vadd.f32 %v653, %v749
  %v751 = vpop.f32.mrb[0].mxu0
  %752 = vmatprep.mubr.bf16.mxu0 %v298
  %753 = vmatmul.mubr.bf16.gmra.mrb[0].mxu0 %v297
  %v754 = vpop.f32.mrb[0].mxu0
  %v755 = vadd.f32 %v658, %v754
  %v756 = vpop.f32.mrb[0].mxu0
  %v757 = vpop.f32.mrb[0].mxu0
  %v758 = vadd.f32 %v661, %v757
  %v759 = vpop.f32.mrb[0].mxu0
  %760 = vmatprep.mubr.bf16.mxu0 %v303
  %761 = vmatmul.mubr.bf16.gmra.mrb[0].mxu0 %v302
  %v762 = vpop.f32.mrb[0].mxu0
  %v763 = vadd.f32 %v666, %v762
  %v764 = vpop.f32.mrb[0].mxu0
  %v765 = vpop.f32.mrb[0].mxu0
  %v766 = vadd.f32 %v669, %v765
  %v767 = vpop.f32.mrb[0].mxu0
  %768 = vmatprep.mubr.bf16.mxu0 %v308
  %769 = vmatmul.mubr.bf16.gmra.mrb[0].mxu0 %v307
  %v770 = vpop.f32.mrb[0].mxu0
  %v771 = vadd.f32 %v674, %v770
  %v772 = vpop.f32.mrb[0].mxu0
  %v773 = vpop.f32.mrb[0].mxu0
  %v774 = vadd.f32 %v677, %v773
  %v775 = vpop.f32.mrb[0].mxu0
  %776 = vdwg.mxu0
  %777 = vmatprep.subr.bf16.mxu0 0
  %778 = vmatpush1.bf16.msra.mxu0 %v518
  %779 = vmatprep.subr.bf16.mxu0 0
  %780 = vmatpush1.bf16.msra.mxu0 %v519
  %781 = vmatprep.subr.bf16.mxu0 0
  %782 = vmatpush1.bf16.msra.mxu0 %v520
  %783 = vmatprep.subr.bf16.mxu0 0
  %784 = vmatpush1.bf16.msra.mxu0 %v521
  %785 = vmatprep.subr.bf16.mxu0 0
  %786 = vmatpush1.bf16.msra.mxu0 0
  %787 = vmatprep.subr.bf16.mxu0 0
  %788 = vmatpush1.bf16.msra.mxu0 0
  %789 = vmatprep.subr.bf16.mxu0 0
  %790 = vmatpush1.bf16.msra.mxu0 0
  %791 = vmatprep.subr.bf16.mxu0 0
  %792 = vmatpush1.bf16.msra.mxu0 0
  %793 = vmatprep.subr.bf16.mxu0 0
  %794 = vmatpush1.bf16.msra.mxu0 0
  %795 = vmatprep.subr.bf16.mxu0 0
  %796 = vmatpush1.bf16.msra.mxu0 0
  %797 = vmatprep.subr.bf16.mxu0 0
  %798 = vmatpush1.bf16.msra.mxu0 0
  %799 = vmatprep.subr.bf16.mxu0 0
  %800 = vmatpush1.bf16.msra.mxu0 0
  %801 = vmatprep.subr.bf16.mxu0 0
  %802 = vmatpush1.bf16.msra.mxu0 0
  %803 = vmatprep.subr.bf16.mxu0 0
  %804 = vmatpush1.bf16.msra.mxu0 0
  %805 = vmatprep.subr.bf16.mxu0 0
  %806 = vmatpush1.bf16.msra.mxu0 0
  %807 = vmatprep.subr.bf16.mxu0 0
  %808 = vmatpush1.bf16.msra.mxu0 0
  %809 = vmatprep.mubr.bf16.mxu0 0
  %810 = vmatmul.mubr.bf16.gmra.mrb[0].mxu0 %v560
  %v811 = vpop.f32.mrb[0].mxu0
  %v812 = vadd.f32 %v715, %v811
  %v813 = vpop.f32.mrb[0].mxu0
  %v814 = vpop.f32.mrb[0].mxu0
  %v815 = vadd.f32 %v718, %v814
  %v816 = vpop.f32.mrb[0].mxu0
  %817 = vmatprep.mubr.bf16.mxu0 0
  %818 = vmatmul.mubr.bf16.gmra.mrb[0].mxu0 %v563
  %v819 = vpop.f32.mrb[0].mxu0
  %v820 = vadd.f32 %v723, %v819
  %v821 = vpop.f32.mrb[0].mxu0
  %v822 = vpop.f32.mrb[0].mxu0
  %v823 = vadd.f32 %v726, %v822
  %v824 = vpop.f32.mrb[0].mxu0
  %825 = vmatprep.mubr.bf16.mxu0 0
  %826 = vmatmul.mubr.bf16.gmra.mrb[0].mxu0 %v566
  %v827 = vpop.f32.mrb[0].mxu0
  %v828 = vadd.f32 %v731, %v827
  %v829 = vpop.f32.mrb[0].mxu0
  %v830 = vpop.f32.mrb[0].mxu0
  %v831 = vadd.f32 %v734, %v830
  %v832 = vpop.f32.mrb[0].mxu0
  %833 = vmatprep.mubr.bf16.mxu0 0
  %834 = vmatmul.mubr.bf16.gmra.mrb[0].mxu0 %v569
  %v835 = vpop.f32.mrb[0].mxu0
  %v836 = vadd.f32 %v739, %v835
  %v837 = vpop.f32.mrb[0].mxu0
  %v838 = vpop.f32.mrb[0].mxu0
  %v839 = vadd.f32 %v742, %v838
  %v840 = vpop.f32.mrb[0].mxu0
  %841 = vmatprep.mubr.bf16.mxu0 0
  %842 = vmatmul.mubr.bf16.gmra.mrb[0].mxu0 %v572
  %v843 = vpop.f32.mrb[0].mxu0
  %v844 = vadd.f32 %v747, %v843
  %v845 = vpop.f32.mrb[0].mxu0
  %v846 = vpop.f32.mrb[0].mxu0
  %v847 = vadd.f32 %v750, %v846
  %v848 = vpop.f32.mrb[0].mxu0
  %849 = vmatprep.mubr.bf16.mxu0 0
  %850 = vmatmul.mubr.bf16.gmra.mrb[0].mxu0 %v575
  %v851 = vpop.f32.mrb[0].mxu0
  %v852 = vadd.f32 %v755, %v851
  %v853 = vpop.f32.mrb[0].mxu0
  %v854 = vpop.f32.mrb[0].mxu0
  %v855 = vadd.f32 %v758, %v854
  %v856 = vpop.f32.mrb[0].mxu0
  %857 = vmatprep.mubr.bf16.mxu0 0
  %858 = vmatmul.mubr.bf16.gmra.mrb[0].mxu0 %v578
  %v859 = vpop.f32.mrb[0].mxu0
  %v860 = vadd.f32 %v763, %v859
  %v861 = vpop.f32.mrb[0].mxu0
  %v862 = vpop.f32.mrb[0].mxu0
  %v863 = vadd.f32 %v766, %v862
  %v864 = vpop.f32.mrb[0].mxu0
  %865 = vmatprep.mubr.bf16.mxu0 0
  %866 = vmatmul.mubr.bf16.gmra.mrb[0].mxu0 %v581
  %v867 = vpop.f32.mrb[0].mxu0
  %v868 = vadd.f32 %v771, %v867
  %v869 = vpop.f32.mrb[0].mxu0
  %v870 = vpop.f32.mrb[0].mxu0
  %v871 = vadd.f32 %v774, %v870
  %v872 = vpop.f32.mrb[0].mxu0
  %873 = vdwg.mxu0
  %v874 = vmax.f32 %v812, 0.0
  %v875 = vmax.f32 %v815, 0.0
  %v876 = vmax.f32 %v820, 0.0
  %v877 = vmax.f32 %v823, 0.0
  %v878 = vmax.f32 %v828, 0.0
  %v879 = vmax.f32 %v831, 0.0
  %v880 = vmax.f32 %v836, 0.0
  %v881 = vmax.f32 %v839, 0.0
  %v882 = vmax.f32 %v844, 0.0
  %v883 = vmax.f32 %v847, 0.0
  %v884 = vmax.f32 %v852, 0.0
  %v885 = vmax.f32 %v855, 0.0
  %v886 = vmax.f32 %v860, 0.0
  %v887 = vmax.f32 %v863, 0.0
  %v888 = vmax.f32 %v868, 0.0
  %v889 = vmax.f32 %v871, 0.0
  %v890 = vpack.c.bf16 %v875, %v874
  %v891 = vpack.c.bf16 %v877, %v876
  %v892 = vpack.c.bf16 %v879, %v878
  %v893 = vpack.c.bf16 %v881, %v880
  %v894 = vpack.c.bf16 %v883, %v882
  %v895 = vpack.c.bf16 %v885, %v884
  %v896 = vpack.c.bf16 %v887, %v886
  %v897 = vpack.c.bf16 %v889, %v888
  %v906 = vunpack.c.l.b16 %v890
  %v907 = vunpack.c.h.b16 %v890
  %v908 = vunpack.c.l.b16 %v891
  %v909 = vunpack.c.h.b16 %v891
  %v910 = vunpack.c.l.b16 %v892
  %v911 = vunpack.c.h.b16 %v892
  %v912 = vunpack.c.l.b16 %v893
  %v913 = vunpack.c.h.b16 %v893
  %v914 = vunpack.c.l.b16 %v894
  %v915 = vunpack.c.h.b16 %v894
  %v916 = vunpack.c.l.b16 %v895
  %v917 = vunpack.c.h.b16 %v895
  %v918 = vunpack.c.l.b16 %v896
  %v919 = vunpack.c.h.b16 %v896
  %v920 = vunpack.c.l.b16 %v897
  %v921 = vunpack.c.h.b16 %v897
  %v922 = vpack.c.b16 %v906, %v906
  %v923 = vpack.c.b16 %v907, %v907
  %v924 = vpack.c.b16 %v908, %v908
  %v925 = vpack.c.b16 %v909, %v909
  %v926 = vpack.c.b16 %v910, %v910
  %v927 = vpack.c.b16 %v911, %v911
  %v928 = vpack.c.b16 %v912, %v912
  %v929 = vpack.c.b16 %v913, %v913
  %v930 = vpack.c.b16 %v914, %v914
  %v931 = vpack.c.b16 %v915, %v915
  %v932 = vpack.c.b16 %v916, %v916
  %v933 = vpack.c.b16 %v917, %v917
  %v934 = vpack.c.b16 %v918, %v918
  %v935 = vpack.c.b16 %v919, %v919
  %v936 = vpack.c.b16 %v920, %v920
  %v937 = vpack.c.b16 %v921, %v921
  %954 = vst [vmem:[%s3] sm:$0xf] %v922
  %955 = vst [vmem:[%s3 + $0x4] sm:$0xf] %v923
  %956 = vst [vmem:[%s3 + $0x8] sm:$0xf] %v924
  %957 = vst [vmem:[%s3 + $0xc] sm:$0xf] %v925
  %958 = vst [vmem:[%s3 + $0x10] sm:$0xf] %v926
  %959 = vst [vmem:[%s3 + $0x14] sm:$0xf] %v927
  %960 = vst [vmem:[%s3 + $0x18] sm:$0xf] %v928
  %961 = vst [vmem:[%s3 + $0x1c] sm:$0xf] %v929
  %962 = vst [vmem:[%s3 + $0x20] sm:$0xf] %v930
  %963 = vst [vmem:[%s3 + $0x24] sm:$0xf] %v931
  %964 = vst [vmem:[%s3 + $0x28] sm:$0xf] %v932
  %965 = vst [vmem:[%s3 + $0x2c] sm:$0xf] %v933
  %966 = vst [vmem:[%s3 + $0x30] sm:$0xf] %v934
  %967 = vst [vmem:[%s3 + $0x34] sm:$0xf] %v935
  %968 = vst [vmem:[%s3 + $0x38] sm:$0xf] %v936
  %969 = vst [vmem:[%s3 + $0x3c] sm:$0xf] %v937
  // Predicated region
  $region14: #{net_forward.13} parent=0 // pred_check
    _
  $region15: #{net_forward.13} parent=0 // pred_check_branch
    %971 = sbr.rel (0) target = $region17
  $region16: #{net_forward.13} parent=0 // pred_region
    _
  $region17: #{net_forward.13} parent=0 // pred_fallthru
    _
  // Predicated region
  $region18: #{net_forward.13} parent=0 // pred_check
    _
  $region19: #{net_forward.13} parent=0 // pred_check_branch
    %973 = sbr.rel (0) target = $region21
  $region20: #{net_forward.13} parent=0 // pred_region
    _
  $region21: #{net_forward.13} parent=0 // pred_fallthru
    _

// kernel: net_forward.15
$region0: #{net_forward.15}
  #allocation0 [shape = 'u32[]', space=smem, size = 0x4, offset = 0x4, fixed_abs, tag = 'smem constant byte address 0x4 - core index']
  #allocation1 [shape = 'u32[144,128]{1,0:T(1,128)}', space=vmem, size = 0x12000, scoped, tag = 'internal scratch']
  %s0 = inlined_call_operand.vmem [shape: bf16[32,1152], index: 0, kind: input, shape index: {}]
  %s1 = inlined_call_operand.vmem [shape: bf16[1152,256], index: 1, kind: input, shape index: {}]
  %s2 = inlined_call_operand.vmem [shape: f32[1,256], index: 2, kind: input, shape index: {}]
  %s3 = inlined_call_operand.vmem [shape: bf16[32,256], index: 3, kind: output, shape index: {}]
  %s4 = sld [smem:[#allocation0]]
  $region22: #{net_forward.15} parent=0
    _
  %s6 = ssub.s32 1, %s4
  %s7 = scalar_select 0, %s6, %s4
  // Predicated region
  $region2: #{net_forward.15} parent=0 // pred_check
    _
  $region3: #{net_forward.15} parent=0 // pred_check_branch
    %9 = sbr.rel (0) target = $region5
  $region4: #{net_forward.15} parent=0 // pred_region
    _
  $region5: #{net_forward.15} parent=0 // pred_fallthru
    _
  // Predicated region
  $region6: #{net_forward.15} parent=0 // pred_check
    _
  $region7: #{net_forward.15} parent=0 // pred_check_branch
    %11 = sbr.rel (0) target = $region9
  $region8: #{net_forward.15} parent=0 // pred_region
    _
  $region9: #{net_forward.15} parent=0 // pred_fallthru
    _
  // Predicated region
  $region10: #{net_forward.15} parent=0 // pred_check
    _
  $region11: #{net_forward.15} parent=0 // pred_check_branch
    %13 = sbr.rel (0) target = $region13
  $region12: #{net_forward.15} parent=0 // pred_region
    _
  $region13: #{net_forward.15} parent=0 // pred_fallthru
    _
  %v15 = vld [vmem:[%s0] sm:$0xff]
  %v16 = vld [vmem:[%s0 + $0x8] sm:$0xff]
  %v17 = vld [vmem:[%s0 + $0x10] sm:$0xff]
  %v18 = vld [vmem:[%s0 + $0x18] sm:$0xff]
  %v19 = vld [vmem:[%s0 + $0x20] sm:$0xf]
  %v20 = vld [vmem:[%s0 + $0x24] sm:$0xff]
  %v21 = vld [vmem:[%s0 + $0x2c] sm:$0xff]
  %v22 = vld [vmem:[%s0 + $0x34] sm:$0xff]
  %v23 = vld [vmem:[%s0 + $0x3c] sm:$0xff]
  %v24 = vld [vmem:[%s0 + $0x44] sm:$0xf]
  %v25 = vld [vmem:[%s0 + $0x48] sm:$0xff]
  %v26 = vld [vmem:[%s0 + $0x50] sm:$0xff]
  %v27 = vld [vmem:[%s0 + $0x58] sm:$0xff]
  %v28 = vld [vmem:[%s0 + $0x60] sm:$0xff]
  %v29 = vld [vmem:[%s0 + $0x68] sm:$0xf]
  %v30 = vld [vmem:[%s0 + $0x6c] sm:$0xff]
  %v31 = vld [vmem:[%s0 + $0x74] sm:$0xff]
  %v32 = vld [vmem:[%s0 + $0x7c] sm:$0xff]
  %v33 = vld [vmem:[%s0 + $0x84] sm:$0xff]
  %v34 = vld [vmem:[%s0 + $0x8c] sm:$0xf]
  %v35 = vld [vmem:[%s1] sm:$0xff]
  %v36 = vld [vmem:[%s1 + $0x8] sm:$0xff]
  %v37 = vld [vmem:[%s1 + $0x10] sm:$0xff]
  %v38 = vld [vmem:[%s1 + $0x18] sm:$0xff]
  %v39 = vld [vmem:[%s1 + $0x20] sm:$0xff]
  %v40 = vld [vmem:[%s1 + $0x28] sm:$0xff]
  %v41 = vld [vmem:[%s1 + $0x30] sm:$0xff]
  %v42 = vld [vmem:[%s1 + $0x38] sm:$0xff]
  %v43 = vld [vmem:[%s1 + $0x40] sm:$0xff]
  %v44 = vld [vmem:[%s1 + $0x48] sm:$0xff]
  %v45 = vld [vmem:[%s1 + $0x50] sm:$0xff]
  %v46 = vld [vmem:[%s1 + $0x58] sm:$0xff]
  %v47 = vld [vmem:[%s1 + $0x60] sm:$0xff]
  %v48 = vld [vmem:[%s1 + $0x68] sm:$0xff]
  %v49 = vld [vmem:[%s1 + $0x70] sm:$0xff]
  %v50 = vld [vmem:[%s1 + $0x78] sm:$0xff]
  %v51 = vld [vmem:[%s1 + $0x80] sm:$0xff]
  %v52 = vld [vmem:[%s1 + $0x88] sm:$0xff]
  %v53 = vld [vmem:[%s1 + $0x90] sm:$0xff]
  %v54 = vld [vmem:[%s1 + $0x98] sm:$0xff]
  %v55 = vld [vmem:[%s1 + $0xa0] sm:$0xff]
  %v56 = vld [vmem:[%s1 + $0xa8] sm:$0xff]
  %v57 = vld [vmem:[%s1 + $0xb0] sm:$0xff]
  %v58 = vld [vmem:[%s1 + $0xb8] sm:$0xff]
  %v59 = vld [vmem:[%s1 + $0xc0] sm:$0xff]
  %v60 = vld [vmem:[%s1 + $0xc8] sm:$0xff]
  %v61 = vld [vmem:[%s1 + $0xd0] sm:$0xff]
  %v62 = vld [vmem:[%s1 + $0xd8] sm:$0xff]
  %v63 = vld [vmem:[%s1 + $0xe0] sm:$0xff]
  %v64 = vld [vmem:[%s1 + $0xe8] sm:$0xff]
  %v65 = vld [vmem:[%s1 + $0xf0] sm:$0xff]
  %v66 = vld [vmem:[%s1 + $0xf8] sm:$0xff]
  %v67 = vld [vmem:[%s1 + $0x100] sm:$0xff]
  %v68 = vld [vmem:[%s1 + $0x108] sm:$0xff]
  %v69 = vld [vmem:[%s1 + $0x110] sm:$0xff]
  %v70 = vld [vmem:[%s1 + $0x118] sm:$0xff]
  %v71 = vld [vmem:[%s1 + $0x120] sm:$0xff]
  %v72 = vld [vmem:[%s1 + $0x128] sm:$0xff]
  %v73 = vld [vmem:[%s1 + $0x130] sm:$0xff]
  %v74 = vld [vmem:[%s1 + $0x138] sm:$0xff]
  %v75 = vld [vmem:[%s1 + $0x140] sm:$0xff]
  %v76 = vld [vmem:[%s1 + $0x148] sm:$0xff]
  %v77 = vld [vmem:[%s1 + $0x150] sm:$0xff]
  %v78 = vld [vmem:[%s1 + $0x158] sm:$0xff]
  %v79 = vld [vmem:[%s1 + $0x160] sm:$0xff]
  %v80 = vld [vmem:[%s1 + $0x168] sm:$0xff]
  %v81 = vld [vmem:[%s1 + $0x170] sm:$0xff]
  %v82 = vld [vmem:[%s1 + $0x178] sm:$0xff]
  %v83 = vld [vmem:[%s1 + $0x180] sm:$0xff]
  %v84 = vld [vmem:[%s1 + $0x188] sm:$0xff]
  %v85 = vld [vmem:[%s1 + $0x190] sm:$0xff]
  %v86 = vld [vmem:[%s1 + $0x198] sm:$0xff]
  %v87 = vld [vmem:[%s1 + $0x1a0] sm:$0xff]
  %v88 = vld [vmem:[%s1 + $0x1a8] sm:$0xff]
  %v89 = vld [vmem:[%s1 + $0x1b0] sm:$0xff]
  %v90 = vld [vmem:[%s1 + $0x1b8] sm:$0xff]
  %v91 = vld [vmem:[%s1 + $0x1c0] sm:$0xff]
  %v92 = vld [vmem:[%s1 + $0x1c8] sm:$0xff]
  %v93 = vld [vmem:[%s1 + $0x1d0] sm:$0xff]
  %v94 = vld [vmem:[%s1 + $0x1d8] sm:$0xff]
  %v95 = vld [vmem:[%s1 + $0x1e0] sm:$0xff]
  %v96 = vld [vmem:[%s1 + $0x1e8] sm:$0xff]
  %v97 = vld [vmem:[%s1 + $0x1f0] sm:$0xff]
  %v98 = vld [vmem:[%s1 + $0x1f8] sm:$0xff]
  %v99 = vld [vmem:[%s1 + $0x200] sm:$0xff]
  %v100 = vld [vmem:[%s1 + $0x208] sm:$0xff]
  %v101 = vld [vmem:[%s1 + $0x210] sm:$0xff]
  %v102 = vld [vmem:[%s1 + $0x218] sm:$0xff]
  %v103 = vld [vmem:[%s1 + $0x220] sm:$0xff]
  %v104 = vld [vmem:[%s1 + $0x228] sm:$0xff]
  %v105 = vld [vmem:[%s1 + $0x230] sm:$0xff]
  %v106 = vld [vmem:[%s1 + $0x238] sm:$0xff]
  %v107 = vld [vmem:[%s1 + $0x240] sm:$0xff]
  %v108 = vld [vmem:[%s1 + $0x248] sm:$0xff]
  %v109 = vld [vmem:[%s1 + $0x250] sm:$0xff]
  %v110 = vld [vmem:[%s1 + $0x258] sm:$0xff]
  %v111 = vld [vmem:[%s1 + $0x260] sm:$0xff]
  %v112 = vld [vmem:[%s1 + $0x268] sm:$0xff]
  %v113 = vld [vmem:[%s1 + $0x270] sm:$0xff]
  %v114 = vld [vmem:[%s1 + $0x278] sm:$0xff]
  %v115 = vld [vmem:[%s1 + $0x280] sm:$0xff]
  %v116 = vld [vmem:[%s1 + $0x288] sm:$0xff]
  %v117 = vld [vmem:[%s1 + $0x290] sm:$0xff]
  %v118 = vld [vmem:[%s1 + $0x298] sm:$0xff]
  %v119 = vld [vmem:[%s1 + $0x2a0] sm:$0xff]
  %v120 = vld [vmem:[%s1 + $0x2a8] sm:$0xff]
  %v121 = vld [vmem:[%s1 + $0x2b0] sm:$0xff]
  %v122 = vld [vmem:[%s1 + $0x2b8] sm:$0xff]
  %v123 = vld [vmem:[%s1 + $0x2c0] sm:$0xff]
  %v124 = vld [vmem:[%s1 + $0x2c8] sm:$0xff]
  %v125 = vld [vmem:[%s1 + $0x2d0] sm:$0xff]
  %v126 = vld [vmem:[%s1 + $0x2d8] sm:$0xff]
  %v127 = vld [vmem:[%s1 + $0x2e0] sm:$0xff]
  %v128 = vld [vmem:[%s1 + $0x2e8] sm:$0xff]
  %v129 = vld [vmem:[%s1 + $0x2f0] sm:$0xff]
  %v130 = vld [vmem:[%s1 + $0x2f8] sm:$0xff]
  %v131 = vld [vmem:[%s1 + $0x300] sm:$0xff]
  %v132 = vld [vmem:[%s1 + $0x308] sm:$0xff]
  %v133 = vld [vmem:[%s1 + $0x310] sm:$0xff]
  %v134 = vld [vmem:[%s1 + $0x318] sm:$0xff]
  %v135 = vld [vmem:[%s1 + $0x320] sm:$0xff]
  %v136 = vld [vmem:[%s1 + $0x328] sm:$0xff]
  %v137 = vld [vmem:[%s1 + $0x330] sm:$0xff]
  %v138 = vld [vmem:[%s1 + $0x338] sm:$0xff]
  %v139 = vld [vmem:[%s1 + $0x340] sm:$0xff]
  %v140 = vld [vmem:[%s1 + $0x348] sm:$0xff]
  %v141 = vld [vmem:[%s1 + $0x350] sm:$0xff]
  %v142 = vld [vmem:[%s1 + $0x358] sm:$0xff]
  %v143 = vld [vmem:[%s1 + $0x360] sm:$0xff]
  %v144 = vld [vmem:[%s1 + $0x368] sm:$0xff]
  %v145 = vld [vmem:[%s1 + $0x370] sm:$0xff]
  %v146 = vld [vmem:[%s1 + $0x378] sm:$0xff]
  %v147 = vld [vmem:[%s1 + $0x380] sm:$0xff]
  %v148 = vld [vmem:[%s1 + $0x388] sm:$0xff]
  %v149 = vld [vmem:[%s1 + $0x390] sm:$0xff]
  %v150 = vld [vmem:[%s1 + $0x398] sm:$0xff]
  %v151 = vld [vmem:[%s1 + $0x3a0] sm:$0xff]
  %v152 = vld [vmem:[%s1 + $0x3a8] sm:$0xff]
  %v153 = vld [vmem:[%s1 + $0x3b0] sm:$0xff]
  %v154 = vld [vmem:[%s1 + $0x3b8] sm:$0xff]
  %v155 = vld [vmem:[%s1 + $0x3c0] sm:$0xff]
  %v156 = vld [vmem:[%s1 + $0x3c8] sm:$0xff]
  %v157 = vld [vmem:[%s1 + $0x3d0] sm:$0xff]
  %v158 = vld [vmem:[%s1 + $0x3d8] sm:$0xff]
  %v159 = vld [vmem:[%s1 + $0x3e0] sm:$0xff]
  %v160 = vld [vmem:[%s1 + $0x3e8] sm:$0xff]
  %v161 = vld [vmem:[%s1 + $0x3f0] sm:$0xff]
  %v162 = vld [vmem:[%s1 + $0x3f8] sm:$0xff]
  %v163 = vld [vmem:[%s1 + $0x400] sm:$0xff]
  %v164 = vld [vmem:[%s1 + $0x408] sm:$0xff]
  %v165 = vld [vmem:[%s1 + $0x410] sm:$0xff]
  %v166 = vld [vmem:[%s1 + $0x418] sm:$0xff]
  %v167 = vld [vmem:[%s1 + $0x420] sm:$0xff]
  %v168 = vld [vmem:[%s1 + $0x428] sm:$0xff]
  %v169 = vld [vmem:[%s1 + $0x430] sm:$0xff]
  %v170 = vld [vmem:[%s1 + $0x438] sm:$0xff]
  %v171 = vld [vmem:[%s1 + $0x440] sm:$0xff]
  %v172 = vld [vmem:[%s1 + $0x448] sm:$0xff]
  %v173 = vld [vmem:[%s1 + $0x450] sm:$0xff]
  %v174 = vld [vmem:[%s1 + $0x458] sm:$0xff]
  %v175 = vld [vmem:[%s1 + $0x460] sm:$0xff]
  %v176 = vld [vmem:[%s1 + $0x468] sm:$0xff]
  %v177 = vld [vmem:[%s1 + $0x470] sm:$0xff]
  %v178 = vld [vmem:[%s1 + $0x478] sm:$0xff]
  %v179 = vld [vmem:[%s2] sm:$0x3]
  %v181 = vlaneseq
  %v182 = vshrl.u32 %v181, 7
  %v183 = vsub.s32 0, %v182
  %v184 = vrot.slane %v179, %v183
  %v185 = vlaneseq
  %v186 = vshrl.u32 %v185, 7
  %v187 = vsub.s32 1, %v186
  %v188 = vrot.slane %v179, %v187
  %v211 = vunpack.c.l.b16 %v15
  %v212 = vunpack.c.h.b16 %v15
  %v213 = vunpack.c.l.b16 %v16
  %v214 = vunpack.c.h.b16 %v16
  %v215 = vunpack.c.l.b16 %v17
  %v216 = vunpack.c.h.b16 %v17
  %v217 = vunpack.c.l.b16 %v18
  %v218 = vunpack.c.h.b16 %v18
  %v219 = vunpack.c.l.b16 %v19
  %v220 = vunpack.c.l.b16 %v20
  %v221 = vunpack.c.h.b16 %v20
  %v222 = vunpack.c.l.b16 %v21
  %v223 = vunpack.c.h.b16 %v21
  %v224 = vunpack.c.l.b16 %v22
  %v225 = vunpack.c.h.b16 %v22
  %v226 = vunpack.c.l.b16 %v23
  %v227 = vunpack.c.h.b16 %v23
  %v228 = vunpack.c.l.b16 %v24
  %v229 = vunpack.c.l.b16 %v25
  %v230 = vunpack.c.h.b16 %v25
  %v231 = vunpack.c.l.b16 %v26
  %v232 = vunpack.c.h.b16 %v26
  %v233 = vunpack.c.l.b16 %v27
  %v234 = vunpack.c.h.b16 %v27
  %v235 = vunpack.c.l.b16 %v28
  %v236 = vunpack.c.h.b16 %v28
  %v237 = vunpack.c.l.b16 %v29
  %v238 = vunpack.c.l.b16 %v30
  %v239 = vunpack.c.h.b16 %v30
  %v240 = vunpack.c.l.b16 %v31
  %v241 = vunpack.c.h.b16 %v31
  %v242 = vunpack.c.l.b16 %v32
  %v243 = vunpack.c.h.b16 %v32
  %v244 = vunpack.c.l.b16 %v33
  %v245 = vunpack.c.h.b16 %v33
  %v246 = vunpack.c.l.b16 %v34
  %v247 = vpack.c.b16 %v220, %v211
  %v248 = vpack.c.b16 %v221, %v212
  %v249 = vpack.c.b16 %v222, %v213
  %v250 = vpack.c.b16 %v223, %v214
  %v251 = vpack.c.b16 %v224, %v215
  %v252 = vpack.c.b16 %v225, %v216
  %v253 = vpack.c.b16 %v226, %v217
  %v254 = vpack.c.b16 %v227, %v218
  %v255 = vpack.c.b16 %v228, %v219
  %v256 = vpack.c.b16 %v238, %v229
  %v257 = vpack.c.b16 %v239, %v230
  %v258 = vpack.c.b16 %v240, %v231
  %v259 = vpack.c.b16 %v241, %v232
  %v260 = vpack.c.b16 %v242, %v233
  %v261 = vpack.c.b16 %v243, %v234
  %v262 = vpack.c.b16 %v244, %v235
  %v263 = vpack.c.b16 %v245, %v236
  %v264 = vpack.c.b16 %v246, %v237
  %v427 = vunpack.c.l.b16 %v35
  %v428 = vunpack.c.h.b16 %v35
  %v429 = vunpack.c.l.b16 %v36
  %v430 = vunpack.c.h.b16 %v36
  %v431 = vunpack.c.l.b16 %v37
  %v432 = vunpack.c.h.b16 %v37
  %v433 = vunpack.c.l.b16 %v38
  %v434 = vunpack.c.h.b16 %v38
  %v435 = vunpack.c.l.b16 %v39
  %v436 = vunpack.c.h.b16 %v39
  %v437 = vunpack.c.l.b16 %v40
  %v438 = vunpack.c.h.b16 %v40
  %v439 = vunpack.c.l.b16 %v41
  %v440 = vunpack.c.h.b16 %v41
  %v441 = vunpack.c.l.b16 %v42
  %v442 = vunpack.c.h.b16 %v42
  %v443 = vunpack.c.l.b16 %v43
  %v444 = vunpack.c.h.b16 %v43
  %v445 = vunpack.c.l.b16 %v44
  %v446 = vunpack.c.h.b16 %v44
  %v447 = vunpack.c.l.b16 %v45
  %v448 = vunpack.c.h.b16 %v45
  %v449 = vunpack.c.l.b16 %v46
  %v450 = vunpack.c.h.b16 %v46
  %v451 = vunpack.c.l.b16 %v47
  %v452 = vunpack.c.h.b16 %v47
  %v453 = vunpack.c.l.b16 %v48
  %v454 = vunpack.c.h.b16 %v48
  %v455 = vunpack.c.l.b16 %v49
  %v456 = vunpack.c.h.b16 %v49
  %v457 = vunpack.c.l.b16 %v50
  %v458 = vunpack.c.h.b16 %v50
  %v459 = vunpack.c.l.b16 %v51
  %v460 = vunpack.c.h.b16 %v51
  %v461 = vunpack.c.l.b16 %v52
  %v462 = vunpack.c.h.b16 %v52
  %v463 = vunpack.c.l.b16 %v53
  %v464 = vunpack.c.h.b16 %v53
  %v465 = vunpack.c.l.b16 %v54
  %v466 = vunpack.c.h.b16 %v54
  %v467 = vunpack.c.l.b16 %v55
  %v468 = vunpack.c.h.b16 %v55
  %v469 = vunpack.c.l.b16 %v56
  %v470 = vunpack.c.h.b16 %v56
  %v471 = vunpack.c.l.b16 %v57
  %v472 = vunpack.c.h.b16 %v57
  %v473 = vunpack.c.l.b16 %v58
  %v474 = vunpack.c.h.b16 %v58
  %v475 = vunpack.c.l.b16 %v59
  %v476 = vunpack.c.h.b16 %v59
  %v477 = vunpack.c.l.b16 %v60
  %v478 = vunpack.c.h.b16 %v60
  %v479 = vunpack.c.l.b16 %v61
  %v480 = vunpack.c.h.b16 %v61
  %v481 = vunpack.c.l.b16 %v62
  %v482 = vunpack.c.h.b16 %v62
  %v483 = vunpack.c.l.b16 %v63
  %v484 = vunpack.c.h.b16 %v63
  %v485 = vunpack.c.l.b16 %v64
  %v486 = vunpack.c.h.b16 %v64
  %v487 = vunpack.c.l.b16 %v65
  %v488 = vunpack.c.h.b16 %v65
  %v489 = vunpack.c.l.b16 %v66
  %v490 = vunpack.c.h.b16 %v66
  %v491 = vunpack.c.l.b16 %v67
  %v492 = vunpack.c.h.b16 %v67
  %v493 = vunpack.c.l.b16 %v68
  %v494 = vunpack.c.h.b16 %v68
  %v495 = vunpack.c.l.b16 %v69
  %v496 = vunpack.c.h.b16 %v69
  %v497 = vunpack.c.l.b16 %v70
  %v498 = vunpack.c.h.b16 %v70
  %v499 = vunpack.c.l.b16 %v71
  %v500 = vunpack.c.h.b16 %v71
  %v501 = vunpack.c.l.b16 %v72
  %v502 = vunpack.c.h.b16 %v72
  %v503 = vunpack.c.l.b16 %v73
  %v504 = vunpack.c.h.b16 %v73
  %v505 = vunpack.c.l.b16 %v74
  %v506 = vunpack.c.h.b16 %v74
  %v507 = vunpack.c.l.b16 %v75
  %v508 = vunpack.c.h.b16 %v75
  %v509 = vunpack.c.l.b16 %v76
  %v510 = vunpack.c.h.b16 %v76
  %v511 = vunpack.c.l.b16 %v77
  %v512 = vunpack.c.h.b16 %v77
  %v513 = vunpack.c.l.b16 %v78
  %v514 = vunpack.c.h.b16 %v78
  %v515 = vunpack.c.l.b16 %v79
  %v516 = vunpack.c.h.b16 %v79
  %v517 = vunpack.c.l.b16 %v80
  %v518 = vunpack.c.h.b16 %v80
  %v519 = vunpack.c.l.b16 %v81
  %v520 = vunpack.c.h.b16 %v81
  %v521 = vunpack.c.l.b16 %v82
  %v522 = vunpack.c.h.b16 %v82
  %v523 = vunpack.c.l.b16 %v83
  %v524 = vunpack.c.h.b16 %v83
  %v525 = vunpack.c.l.b16 %v84
  %v526 = vunpack.c.h.b16 %v84
  %v527 = vunpack.c.l.b16 %v85
  %v528 = vunpack.c.h.b16 %v85
  %v529 = vunpack.c.l.b16 %v86
  %v530 = vunpack.c.h.b16 %v86
  %v531 = vunpack.c.l.b16 %v87
  %v532 = vunpack.c.h.b16 %v87
  %v533 = vunpack.c.l.b16 %v88
  %v534 = vunpack.c.h.b16 %v88
  %v535 = vunpack.c.l.b16 %v89
  %v536 = vunpack.c.h.b16 %v89
  %v537 = vunpack.c.l.b16 %v90
  %v538 = vunpack.c.h.b16 %v90
  %v539 = vunpack.c.l.b16 %v91
  %v540 = vunpack.c.h.b16 %v91
  %v541 = vunpack.c.l.b16 %v92
  %v542 = vunpack.c.h.b16 %v92
  %v543 = vunpack.c.l.b16 %v93
  %v544 = vunpack.c.h.b16 %v93
  %v545 = vunpack.c.l.b16 %v94
  %v546 = vunpack.c.h.b16 %v94
  %v547 = vunpack.c.l.b16 %v95
  %v548 = vunpack.c.h.b16 %v95
  %v549 = vunpack.c.l.b16 %v96
  %v550 = vunpack.c.h.b16 %v96
  %v551 = vunpack.c.l.b16 %v97
  %v552 = vunpack.c.h.b16 %v97
  %v553 = vunpack.c.l.b16 %v98
  %v554 = vunpack.c.h.b16 %v98
  %v555 = vunpack.c.l.b16 %v99
  %v556 = vunpack.c.h.b16 %v99
  %v557 = vunpack.c.l.b16 %v100
  %v558 = vunpack.c.h.b16 %v100
  %v559 = vunpack.c.l.b16 %v101
  %v560 = vunpack.c.h.b16 %v101
  %v561 = vunpack.c.l.b16 %v102
  %v562 = vunpack.c.h.b16 %v102
  %v563 = vunpack.c.l.b16 %v103
  %v564 = vunpack.c.h.b16 %v103
  %v565 = vunpack.c.l.b16 %v104
  %v566 = vunpack.c.h.b16 %v104
  %v567 = vunpack.c.l.b16 %v105
  %v568 = vunpack.c.h.b16 %v105
  %v569 = vunpack.c.l.b16 %v106
  %v570 = vunpack.c.h.b16 %v106
  %v571 = vunpack.c.l.b16 %v107
  %v572 = vunpack.c.h.b16 %v107
  %v573 = vunpack.c.l.b16 %v108
  %v574 = vunpack.c.h.b16 %v108
  %v575 = vunpack.c.l.b16 %v109
  %v576 = vunpack.c.h.b16 %v109
  %v577 = vunpack.c.l.b16 %v110
  %v578 = vunpack.c.h.b16 %v110
  %v579 = vunpack.c.l.b16 %v111
  %v580 = vunpack.c.h.b16 %v111
  %v581 = vunpack.c.l.b16 %v112
  %v582 = vunpack.c.h.b16 %v112
  %v583 = vunpack.c.l.b16 %v113
  %v584 = vunpack.c.h.b16 %v113
  %v585 = vunpack.c.l.b16 %v114
  %v586 = vunpack.c.h.b16 %v114
  %v587 = vunpack.c.l.b16 %v115
  %v588 = vunpack.c.h.b16 %v115
  %v589 = vunpack.c.l.b16 %v116
  %v590 = vunpack.c.h.b16 %v116
  %v591 = vunpack.c.l.b16 %v117
  %v592 = vunpack.c.h.b16 %v117
  %v593 = vunpack.c.l.b16 %v118
  %v594 = vunpack.c.h.b16 %v118
  %v595 = vunpack.c.l.b16 %v119
  %v596 = vunpack.c.h.b16 %v119
  %v597 = vunpack.c.l.b16 %v120
  %v598 = vunpack.c.h.b16 %v120
  %v599 = vunpack.c.l.b16 %v121
  %v600 = vunpack.c.h.b16 %v121
  %v601 = vunpack.c.l.b16 %v122
  %v602 = vunpack.c.h.b16 %v122
  %v603 = vunpack.c.l.b16 %v123
  %v604 = vunpack.c.h.b16 %v123
  %v605 = vunpack.c.l.b16 %v124
  %v606 = vunpack.c.h.b16 %v124
  %v607 = vunpack.c.l.b16 %v125
  %v608 = vunpack.c.h.b16 %v125
  %v609 = vunpack.c.l.b16 %v126
  %v610 = vunpack.c.h.b16 %v126
  %v611 = vunpack.c.l.b16 %v127
  %v612 = vunpack.c.h.b16 %v127
  %v613 = vunpack.c.l.b16 %v128
  %v614 = vunpack.c.h.b16 %v128
  %v615 = vunpack.c.l.b16 %v129
  %v616 = vunpack.c.h.b16 %v129
  %v617 = vunpack.c.l.b16 %v130
  %v618 = vunpack.c.h.b16 %v130
  %v619 = vunpack.c.l.b16 %v131
  %v620 = vunpack.c.h.b16 %v131
  %v621 = vunpack.c.l.b16 %v132
  %v622 = vunpack.c.h.b16 %v132
  %v623 = vunpack.c.l.b16 %v133
  %v624 = vunpack.c.h.b16 %v133
  %v625 = vunpack.c.l.b16 %v134
  %v626 = vunpack.c.h.b16 %v134
  %v627 = vunpack.c.l.b16 %v135
  %v628 = vunpack.c.h.b16 %v135
  %v629 = vunpack.c.l.b16 %v136
  %v630 = vunpack.c.h.b16 %v136
  %v631 = vunpack.c.l.b16 %v137
  %v632 = vunpack.c.h.b16 %v137
  %v633 = vunpack.c.l.b16 %v138
  %v634 = vunpack.c.h.b16 %v138
  %v635 = vunpack.c.l.b16 %v139
  %v636 = vunpack.c.h.b16 %v139
  %v637 = vunpack.c.l.b16 %v140
  %v638 = vunpack.c.h.b16 %v140
  %v639 = vunpack.c.l.b16 %v141
  %v640 = vunpack.c.h.b16 %v141
  %v641 = vunpack.c.l.b16 %v142
  %v642 = vunpack.c.h.b16 %v142
  %v643 = vunpack.c.l.b16 %v143
  %v644 = vunpack.c.h.b16 %v143
  %v645 = vunpack.c.l.b16 %v144
  %v646 = vunpack.c.h.b16 %v144
  %v647 = vunpack.c.l.b16 %v145
  %v648 = vunpack.c.h.b16 %v145
  %v649 = vunpack.c.l.b16 %v146
  %v650 = vunpack.c.h.b16 %v146
  %v651 = vunpack.c.l.b16 %v147
  %v652 = vunpack.c.h.b16 %v147
  %v653 = vunpack.c.l.b16 %v148
  %v654 = vunpack.c.h.b16 %v148
  %v655 = vunpack.c.l.b16 %v149
  %v656 = vunpack.c.h.b16 %v149
  %v657 = vunpack.c.l.b16 %v150
  %v658 = vunpack.c.h.b16 %v150
  %v659 = vunpack.c.l.b16 %v151
  %v660 = vunpack.c.h.b16 %v151
  %v661 = vunpack.c.l.b16 %v152
  %v662 = vunpack.c.h.b16 %v152
  %v663 = vunpack.c.l.b16 %v153
  %v664 = vunpack.c.h.b16 %v153
  %v665 = vunpack.c.l.b16 %v154
  %v666 = vunpack.c.h.b16 %v154
  %v667 = vunpack.c.l.b16 %v155
  %v668 = vunpack.c.h.b16 %v155
  %v669 = vunpack.c.l.b16 %v156
  %v670 = vunpack.c.h.b16 %v156
  %v671 = vunpack.c.l.b16 %v157
  %v672 = vunpack.c.h.b16 %v157
  %v673 = vunpack.c.l.b16 %v158
  %v674 = vunpack.c.h.b16 %v158
  %v675 = vunpack.c.l.b16 %v159
  %v676 = vunpack.c.h.b16 %v159
  %v677 = vunpack.c.l.b16 %v160
  %v678 = vunpack.c.h.b16 %v160
  %v679 = vunpack.c.l.b16 %v161
  %v680 = vunpack.c.h.b16 %v161
  %v681 = vunpack.c.l.b16 %v162
  %v682 = vunpack.c.h.b16 %v162
  %v683 = vunpack.c.l.b16 %v163
  %v684 = vunpack.c.h.b16 %v163
  %v685 = vunpack.c.l.b16 %v164
  %v686 = vunpack.c.h.b16 %v164
  %v687 = vunpack.c.l.b16 %v165
  %v688 = vunpack.c.h.b16 %v165
  %v689 = vunpack.c.l.b16 %v166
  %v690 = vunpack.c.h.b16 %v166
  %v691 = vunpack.c.l.b16 %v167
  %v692 = vunpack.c.h.b16 %v167
  %v693 = vunpack.c.l.b16 %v168
  %v694 = vunpack.c.h.b16 %v168
  %v695 = vunpack.c.l.b16 %v169
  %v696 = vunpack.c.h.b16 %v169
  %v697 = vunpack.c.l.b16 %v170
  %v698 = vunpack.c.h.b16 %v170
  %v699 = vunpack.c.l.b16 %v171
  %v700 = vunpack.c.h.b16 %v171
  %v701 = vunpack.c.l.b16 %v172
  %v702 = vunpack.c.h.b16 %v172
  %v703 = vunpack.c.l.b16 %v173
  %v704 = vunpack.c.h.b16 %v173
  %v705 = vunpack.c.l.b16 %v174
  %v706 = vunpack.c.h.b16 %v174
  %v707 = vunpack.c.l.b16 %v175
  %v708 = vunpack.c.h.b16 %v175
  %v709 = vunpack.c.l.b16 %v176
  %v710 = vunpack.c.h.b16 %v176
  %v711 = vunpack.c.l.b16 %v177
  %v712 = vunpack.c.h.b16 %v177
  %v713 = vunpack.c.l.b16 %v178
  %v714 = vunpack.c.h.b16 %v178
  %v715 = vpack.c.b16 %v429, %v427
  %v716 = vpack.c.b16 %v430, %v428
  %v717 = vpack.c.b16 %v433, %v431
  %v718 = vpack.c.b16 %v434, %v432
  %v719 = vpack.c.b16 %v437, %v435
  %v720 = vpack.c.b16 %v438, %v436
  %v721 = vpack.c.b16 %v441, %v439
  %v722 = vpack.c.b16 %v442, %v440
  %v723 = vpack.c.b16 %v445, %v443
  %v724 = vpack.c.b16 %v446, %v444
  %v725 = vpack.c.b16 %v449, %v447
  %v726 = vpack.c.b16 %v450, %v448
  %v727 = vpack.c.b16 %v453, %v451
  %v728 = vpack.c.b16 %v454, %v452
  %v729 = vpack.c.b16 %v457, %v455
  %v730 = vpack.c.b16 %v458, %v456
  %v731 = vpack.c.b16 %v461, %v459
  %v732 = vpack.c.b16 %v462, %v460
  %v733 = vpack.c.b16 %v465, %v463
  %v734 = vpack.c.b16 %v466, %v464
  %v735 = vpack.c.b16 %v469, %v467
  %v736 = vpack.c.b16 %v470, %v468
  %v737 = vpack.c.b16 %v473, %v471
  %v738 = vpack.c.b16 %v474, %v472
  %v739 = vpack.c.b16 %v477, %v475
  %v740 = vpack.c.b16 %v478, %v476
  %v741 = vpack.c.b16 %v481, %v479
  %v742 = vpack.c.b16 %v482, %v480
  %v743 = vpack.c.b16 %v485, %v483
  %v744 = vpack.c.b16 %v486, %v484
  %v745 = vpack.c.b16 %v489, %v487
  %v746 = vpack.c.b16 %v490, %v488
  %v747 = vpack.c.b16 %v493, %v491
  %v748 = vpack.c.b16 %v494, %v492
  %v749 = vpack.c.b16 %v497, %v495
  %v750 = vpack.c.b16 %v498, %v496
  %v751 = vpack.c.b16 %v501, %v499
  %v752 = vpack.c.b16 %v502, %v500
  %v753 = vpack.c.b16 %v505, %v503
  %v754 = vpack.c.b16 %v506, %v504
  %v755 = vpack.c.b16 %v509, %v507
  %v756 = vpack.c.b16 %v510, %v508
  %v757 = vpack.c.b16 %v513, %v511
  %v758 = vpack.c.b16 %v514, %v512
  %v759 = vpack.c.b16 %v517, %v515
  %v760 = vpack.c.b16 %v518, %v516
  %v761 = vpack.c.b16 %v521, %v519
  %v762 = vpack.c.b16 %v522, %v520
  %v763 = vpack.c.b16 %v525, %v523
  %v764 = vpack.c.b16 %v526, %v524
  %v765 = vpack.c.b16 %v529, %v527
  %v766 = vpack.c.b16 %v530, %v528
  %v767 = vpack.c.b16 %v533, %v531
  %v768 = vpack.c.b16 %v534, %v532
  %v769 = vpack.c.b16 %v537, %v535
  %v770 = vpack.c.b16 %v538, %v536
  %v771 = vpack.c.b16 %v541, %v539
  %v772 = vpack.c.b16 %v542, %v540
  %v773 = vpack.c.b16 %v545, %v543
  %v774 = vpack.c.b16 %v546, %v544
  %v775 = vpack.c.b16 %v549, %v547
  %v776 = vpack.c.b16 %v550, %v548
  %v777 = vpack.c.b16 %v553, %v551
  %v778 = vpack.c.b16 %v554, %v552
  %v779 = vpack.c.b16 %v557, %v555
  %v780 = vpack.c.b16 %v558, %v556
  %v781 = vpack.c.b16 %v561, %v559
  %v782 = vpack.c.b16 %v562, %v560
  %v783 = vpack.c.b16 %v565, %v563
  %v784 = vpack.c.b16 %v566, %v564
  %v785 = vpack.c.b16 %v569, %v567
  %v786 = vpack.c.b16 %v570, %v568
  %v787 = vpack.c.b16 %v573, %v571
  %v788 = vpack.c.b16 %v574, %v572
  %v789 = vpack.c.b16 %v577, %v575
  %v790 = vpack.c.b16 %v578, %v576
  %v791 = vpack.c.b16 %v581, %v579
  %v792 = vpack.c.b16 %v582, %v580
  %v793 = vpack.c.b16 %v585, %v583
  %v794 = vpack.c.b16 %v586, %v584
  %v795 = vpack.c.b16 %v589, %v587
  %v796 = vpack.c.b16 %v590, %v588
  %v797 = vpack.c.b16 %v593, %v591
  %v798 = vpack.c.b16 %v594, %v592
  %v799 = vpack.c.b16 %v597, %v595
  %v800 = vpack.c.b16 %v598, %v596
  %v801 = vpack.c.b16 %v601, %v599
  %v802 = vpack.c.b16 %v602, %v600
  %v803 = vpack.c.b16 %v605, %v603
  %v804 = vpack.c.b16 %v606, %v604
  %v805 = vpack.c.b16 %v609, %v607
  %v806 = vpack.c.b16 %v610, %v608
  %v807 = vpack.c.b16 %v613, %v611
  %v808 = vpack.c.b16 %v614, %v612
  %v809 = vpack.c.b16 %v617, %v615
  %v810 = vpack.c.b16 %v618, %v616
  %v811 = vpack.c.b16 %v621, %v619
  %v812 = vpack.c.b16 %v622, %v620
  %v813 = vpack.c.b16 %v625, %v623
  %v814 = vpack.c.b16 %v626, %v624
  %v815 = vpack.c.b16 %v629, %v627
  %v816 = vpack.c.b16 %v630, %v628
  %v817 = vpack.c.b16 %v633, %v631
  %v818 = vpack.c.b16 %v634, %v632
  %v819 = vpack.c.b16 %v637, %v635
  %v820 = vpack.c.b16 %v638, %v636
  %v821 = vpack.c.b16 %v641, %v639
  %v822 = vpack.c.b16 %v642, %v640
  %v823 = vpack.c.b16 %v645, %v643
  %v824 = vpack.c.b16 %v646, %v644
  %v825 = vpack.c.b16 %v649, %v647
  %v826 = vpack.c.b16 %v650, %v648
  %v827 = vpack.c.b16 %v653, %v651
  %v828 = vpack.c.b16 %v654, %v652
  %v829 = vpack.c.b16 %v657, %v655
  %v830 = vpack.c.b16 %v658, %v656
  %v831 = vpack.c.b16 %v661, %v659
  %v832 = vpack.c.b16 %v662, %v660
  %v833 = vpack.c.b16 %v665, %v663
  %v834 = vpack.c.b16 %v666, %v664
  %v835 = vpack.c.b16 %v669, %v667
  %v836 = vpack.c.b16 %v670, %v668
  %v837 = vpack.c.b16 %v673, %v671
  %v838 = vpack.c.b16 %v674, %v672
  %v839 = vpack.c.b16 %v677, %v675
  %v840 = vpack.c.b16 %v678, %v676
  %v841 = vpack.c.b16 %v681, %v679
  %v842 = vpack.c.b16 %v682, %v680
  %v843 = vpack.c.b16 %v685, %v683
  %v844 = vpack.c.b16 %v686, %v684
  %v845 = vpack.c.b16 %v689, %v687
  %v846 = vpack.c.b16 %v690, %v688
  %v847 = vpack.c.b16 %v693, %v691
  %v848 = vpack.c.b16 %v694, %v692
  %v849 = vpack.c.b16 %v697, %v695
  %v850 = vpack.c.b16 %v698, %v696
  %v851 = vpack.c.b16 %v701, %v699
  %v852 = vpack.c.b16 %v702, %v700
  %v853 = vpack.c.b16 %v705, %v703
  %v854 = vpack.c.b16 %v706, %v704
  %v855 = vpack.c.b16 %v709, %v707
  %v856 = vpack.c.b16 %v710, %v708
  %v857 = vpack.c.b16 %v713, %v711
  %v858 = vpack.c.b16 %v714, %v712
  %1003 = vmatprep.subr.bf16.mxu0 %v716
  %1004 = vmatpush1.bf16.msra.mxu0 %v715
  %1005 = vmatprep.subr.bf16.mxu0 %v718
  %1006 = vmatpush1.bf16.msra.mxu0 %v717
  %1007 = vmatprep.subr.bf16.mxu0 %v720
  %1008 = vmatpush1.bf16.msra.mxu0 %v719
  %1009 = vmatprep.subr.bf16.mxu0 %v722
  %1010 = vmatpush1.bf16.msra.mxu0 %v721
  %1011 = vmatprep.subr.bf16.mxu0 %v724
  %1012 = vmatpush1.bf16.msra.mxu0 %v723
  %1013 = vmatprep.subr.bf16.mxu0 %v726
  %1014 = vmatpush1.bf16.msra.mxu0 %v725
  %1015 = vmatprep.subr.bf16.mxu0 %v728
  %1016 = vmatpush1.bf16.msra.mxu0 %v727
  %1017 = vmatprep.subr.bf16.mxu0 %v730
  %1018 = vmatpush1.bf16.msra.mxu0 %v729
  %1019 = vmatprep.subr.bf16.mxu0 %v732
  %1020 = vmatpush1.bf16.msra.mxu0 %v731
  %1021 = vmatprep.subr.bf16.mxu0 %v734
  %1022 = vmatpush1.bf16.msra.mxu0 %v733
  %1023 = vmatprep.subr.bf16.mxu0 %v736
  %1024 = vmatpush1.bf16.msra.mxu0 %v735
  %1025 = vmatprep.subr.bf16.mxu0 %v738
  %1026 = vmatpush1.bf16.msra.mxu0 %v737
  %1027 = vmatprep.subr.bf16.mxu0 %v740
  %1028 = vmatpush1.bf16.msra.mxu0 %v739
  %1029 = vmatprep.subr.bf16.mxu0 %v742
  %1030 = vmatpush1.bf16.msra.mxu0 %v741
  %1031 = vmatprep.subr.bf16.mxu0 %v744
  %1032 = vmatpush1.bf16.msra.mxu0 %v743
  %1033 = vmatprep.subr.bf16.mxu0 %v746
  %1034 = vmatpush1.bf16.msra.mxu0 %v745
  %1035 = vmatprep.mubr.bf16.mxu0 %v248
  %1036 = vmatmul.mubr.bf16.gmra.mrb[0].mxu0 %v247
  %v1037 = vpop.f32.mrb[0].mxu0
  %v1038 = vadd.f32 %v184, %v1037
  %v1039 = vpop.f32.mrb[0].mxu0
  %v1040 = vadd.f32 %v188, %v1039
  %v1041 = vpop.f32.mrb[0].mxu0
  %v1042 = vadd.f32 %v184, %v1041
  %v1043 = vpop.f32.mrb[0].mxu0
  %v1044 = vadd.f32 %v188, %v1043
  %1045 = vmatprep.mubr.bf16.mxu0 %v257
  %1046 = vmatmul.mubr.bf16.gmra.mrb[0].mxu0 %v256
  %v1047 = vpop.f32.mrb[0].mxu0
  %v1048 = vadd.f32 %v184, %v1047
  %v1049 = vpop.f32.mrb[0].mxu0
  %v1050 = vadd.f32 %v188, %v1049
  %v1051 = vpop.f32.mrb[0].mxu0
  %v1052 = vadd.f32 %v184, %v1051
  %v1053 = vpop.f32.mrb[0].mxu0
  %v1054 = vadd.f32 %v188, %v1053
  %1055 = vdwg.mxu0
  %1056 = vmatprep.subr.bf16.mxu0 %v748
  %1057 = vmatpush1.bf16.msra.mxu0 %v747
  %1058 = vmatprep.subr.bf16.mxu0 %v750
  %1059 = vmatpush1.bf16.msra.mxu0 %v749
  %1060 = vmatprep.subr.bf16.mxu0 %v752
  %1061 = vmatpush1.bf16.msra.mxu0 %v751
  %1062 = vmatprep.subr.bf16.mxu0 %v754
  %1063 = vmatpush1.bf16.msra.mxu0 %v753
  %1064 = vmatprep.subr.bf16.mxu0 %v756
  %1065 = vmatpush1.bf16.msra.mxu0 %v755
  %1066 = vmatprep.subr.bf16.mxu0 %v758
  %1067 = vmatpush1.bf16.msra.mxu0 %v757
  %1068 = vmatprep.subr.bf16.mxu0 %v760
  %1069 = vmatpush1.bf16.msra.mxu0 %v759
  %1070 = vmatprep.subr.bf16.mxu0 %v762
  %1071 = vmatpush1.bf16.msra.mxu0 %v761
  %1072 = vmatprep.subr.bf16.mxu0 %v764
  %1073 = vmatpush1.bf16.msra.mxu0 %v763
  %1074 = vmatprep.subr.bf16.mxu0 %v766
  %1075 = vmatpush1.bf16.msra.mxu0 %v765
  %1076 = vmatprep.subr.bf16.mxu0 %v768
  %1077 = vmatpush1.bf16.msra.mxu0 %v767
  %1078 = vmatprep.subr.bf16.mxu0 %v770
  %1079 = vmatpush1.bf16.msra.mxu0 %v769
  %1080 = vmatprep.subr.bf16.mxu0 %v772
  %1081 = vmatpush1.bf16.msra.mxu0 %v771
  %1082 = vmatprep.subr.bf16.mxu0 %v774
  %1083 = vmatpush1.bf16.msra.mxu0 %v773
  %1084 = vmatprep.subr.bf16.mxu0 %v776
  %1085 = vmatpush1.bf16.msra.mxu0 %v775
  %1086 = vmatprep.subr.bf16.mxu0 %v778
  %1087 = vmatpush1.bf16.msra.mxu0 %v777
  %1088 = vmatprep.mubr.bf16.mxu0 %v250
  %1089 = vmatmul.mubr.bf16.gmra.mrb[0].mxu0 %v249
  %v1090 = vpop.f32.mrb[0].mxu0
  %v1091 = vadd.f32 %v1038, %v1090
  %v1092 = vpop.f32.mrb[0].mxu0
  %v1093 = vadd.f32 %v1040, %v1092
  %v1094 = vpop.f32.mrb[0].mxu0
  %v1095 = vadd.f32 %v1042, %v1094
  %v1096 = vpop.f32.mrb[0].mxu0
  %v1097 = vadd.f32 %v1044, %v1096
  %1098 = vmatprep.mubr.bf16.mxu0 %v259
  %1099 = vmatmul.mubr.bf16.gmra.mrb[0].mxu0 %v258
  %v1100 = vpop.f32.mrb[0].mxu0
  %v1101 = vadd.f32 %v1048, %v1100
  %v1102 = vpop.f32.mrb[0].mxu0
  %v1103 = vadd.f32 %v1050, %v1102
  %v1104 = vpop.f32.mrb[0].mxu0
  %v1105 = vadd.f32 %v1052, %v1104
  %v1106 = vpop.f32.mrb[0].mxu0
  %v1107 = vadd.f32 %v1054, %v1106
  %1108 = vdwg.mxu0
  %1109 = vmatprep.subr.bf16.mxu0 %v780
  %1110 = vmatpush1.bf16.msra.mxu0 %v779
  %1111 = vmatprep.subr.bf16.mxu0 %v782
  %1112 = vmatpush1.bf16.msra.mxu0 %v781
  %1113 = vmatprep.subr.bf16.mxu0 %v784
  %1114 = vmatpush1.bf16.msra.mxu0 %v783
  %1115 = vmatprep.subr.bf16.mxu0 %v786
  %1116 = vmatpush1.bf16.msra.mxu0 %v785
  %1117 = vmatprep.subr.bf16.mxu0 %v788
  %1118 = vmatpush1.bf16.msra.mxu0 %v787
  %1119 = vmatprep.subr.bf16.mxu0 %v790
  %1120 = vmatpush1.bf16.msra.mxu0 %v789
  %1121 = vmatprep.subr.bf16.mxu0 %v792
  %1122 = vmatpush1.bf16.msra.mxu0 %v791
  %1123 = vmatprep.subr.bf16.mxu0 %v794
  %1124 = vmatpush1.bf16.msra.mxu0 %v793
  %1125 = vmatprep.subr.bf16.mxu0 %v796
  %1126 = vmatpush1.bf16.msra.mxu0 %v795
  %1127 = vmatprep.subr.bf16.mxu0 %v798
  %1128 = vmatpush1.bf16.msra.mxu0 %v797
  %1129 = vmatprep.subr.bf16.mxu0 %v800
  %1130 = vmatpush1.bf16.msra.mxu0 %v799
  %1131 = vmatprep.subr.bf16.mxu0 %v802
  %1132 = vmatpush1.bf16.msra.mxu0 %v801
  %1133 = vmatprep.subr.bf16.mxu0 %v804
  %1134 = vmatpush1.bf16.msra.mxu0 %v803
  %1135 = vmatprep.subr.bf16.mxu0 %v806
  %1136 = vmatpush1.bf16.msra.mxu0 %v805
  %1137 = vmatprep.subr.bf16.mxu0 %v808
  %1138 = vmatpush1.bf16.msra.mxu0 %v807
  %1139 = vmatprep.subr.bf16.mxu0 %v810
  %1140 = vmatpush1.bf16.msra.mxu0 %v809
  %1141 = vmatprep.mubr.bf16.mxu0 %v252
  %1142 = vmatmul.mubr.bf16.gmra.mrb[0].mxu0 %v251
  %v1143 = vpop.f32.mrb[0].mxu0
  %v1144 = vadd.f32 %v1091, %v1143
  %v1145 = vpop.f32.mrb[0].mxu0
  %v1146 = vadd.f32 %v1093, %v1145
  %v1147 = vpop.f32.mrb[0].mxu0
  %v1148 = vadd.f32 %v1095, %v1147
  %v1149 = vpop.f32.mrb[0].mxu0
  %v1150 = vadd.f32 %v1097, %v1149
  %1151 = vmatprep.mubr.bf16.mxu0 %v261
  %1152 = vmatmul.mubr.bf16.gmra.mrb[0].mxu0 %v260
  %v1153 = vpop.f32.mrb[0].mxu0
  %v1154 = vadd.f32 %v1101, %v1153
  %v1155 = vpop.f32.mrb[0].mxu0
  %v1156 = vadd.f32 %v1103, %v1155
  %v1157 = vpop.f32.mrb[0].mxu0
  %v1158 = vadd.f32 %v1105, %v1157
  %v1159 = vpop.f32.mrb[0].mxu0
  %v1160 = vadd.f32 %v1107, %v1159
  %1161 = vdwg.mxu0
  %1162 = vmatprep.subr.bf16.mxu0 %v812
  %1163 = vmatpush1.bf16.msra.mxu0 %v811
  %1164 = vmatprep.subr.bf16.mxu0 %v814
  %1165 = vmatpush1.bf16.msra.mxu0 %v813
  %1166 = vmatprep.subr.bf16.mxu0 %v816
  %1167 = vmatpush1.bf16.msra.mxu0 %v815
  %1168 = vmatprep.subr.bf16.mxu0 %v818
  %1169 = vmatpush1.bf16.msra.mxu0 %v817
  %1170 = vmatprep.subr.bf16.mxu0 %v820
  %1171 = vmatpush1.bf16.msra.mxu0 %v819
  %1172 = vmatprep.subr.bf16.mxu0 %v822
  %1173 = vmatpush1.bf16.msra.mxu0 %v821
  %1174 = vmatprep.subr.bf16.mxu0 %v824
  %1175 = vmatpush1.bf16.msra.mxu0 %v823
  %1176 = vmatprep.subr.bf16.mxu0 %v826
  %1177 = vmatpush1.bf16.msra.mxu0 %v825
  %1178 = vmatprep.subr.bf16.mxu0 %v828
  %1179 = vmatpush1.bf16.msra.mxu0 %v827
  %1180 = vmatprep.subr.bf16.mxu0 %v830
  %1181 = vmatpush1.bf16.msra.mxu0 %v829
  %1182 = vmatprep.subr.bf16.mxu0 %v832
  %1183 = vmatpush1.bf16.msra.mxu0 %v831
  %1184 = vmatprep.subr.bf16.mxu0 %v834
  %1185 = vmatpush1.bf16.msra.mxu0 %v833
  %1186 = vmatprep.subr.bf16.mxu0 %v836
  %1187 = vmatpush1.bf16.msra.mxu0 %v835
  %1188 = vmatprep.subr.bf16.mxu0 %v838
  %1189 = vmatpush1.bf16.msra.mxu0 %v837
  %1190 = vmatprep.subr.bf16.mxu0 %v840
  %1191 = vmatpush1.bf16.msra.mxu0 %v839
  %1192 = vmatprep.subr.bf16.mxu0 %v842
  %1193 = vmatpush1.bf16.msra.mxu0 %v841
  %1194 = vmatprep.mubr.bf16.mxu0 %v254
  %1195 = vmatmul.mubr.bf16.gmra.mrb[0].mxu0 %v253
  %v1196 = vpop.f32.mrb[0].mxu0
  %v1197 = vadd.f32 %v1144, %v1196
  %v1198 = vpop.f32.mrb[0].mxu0
  %v1199 = vadd.f32 %v1146, %v1198
  %v1200 = vpop.f32.mrb[0].mxu0
  %v1201 = vadd.f32 %v1148, %v1200
  %v1202 = vpop.f32.mrb[0].mxu0
  %v1203 = vadd.f32 %v1150, %v1202
  %1204 = vmatprep.mubr.bf16.mxu0 %v263
  %1205 = vmatmul.mubr.bf16.gmra.mrb[0].mxu0 %v262
  %v1206 = vpop.f32.mrb[0].mxu0
  %v1207 = vadd.f32 %v1154, %v1206
  %v1208 = vpop.f32.mrb[0].mxu0
  %v1209 = vadd.f32 %v1156, %v1208
  %v1210 = vpop.f32.mrb[0].mxu0
  %v1211 = vadd.f32 %v1158, %v1210
  %v1212 = vpop.f32.mrb[0].mxu0
  %v1213 = vadd.f32 %v1160, %v1212
  %1214 = vdwg.mxu0
  %1215 = vmatprep.subr.bf16.mxu0 %v844
  %1216 = vmatpush1.bf16.msra.mxu0 %v843
  %1217 = vmatprep.subr.bf16.mxu0 %v846
  %1218 = vmatpush1.bf16.msra.mxu0 %v845
  %1219 = vmatprep.subr.bf16.mxu0 %v848
  %1220 = vmatpush1.bf16.msra.mxu0 %v847
  %1221 = vmatprep.subr.bf16.mxu0 %v850
  %1222 = vmatpush1.bf16.msra.mxu0 %v849
  %1223 = vmatprep.subr.bf16.mxu0 %v852
  %1224 = vmatpush1.bf16.msra.mxu0 %v851
  %1225 = vmatprep.subr.bf16.mxu0 %v854
  %1226 = vmatpush1.bf16.msra.mxu0 %v853
  %1227 = vmatprep.subr.bf16.mxu0 %v856
  %1228 = vmatpush1.bf16.msra.mxu0 %v855
  %1229 = vmatprep.subr.bf16.mxu0 %v858
  %1230 = vmatpush1.bf16.msra.mxu0 %v857
  %1231 = vmatprep.subr.bf16.mxu0 0
  %1232 = vmatpush1.bf16.msra.mxu0 0
  %1233 = vmatprep.subr.bf16.mxu0 0
  %1234 = vmatpush1.bf16.msra.mxu0 0
  %1235 = vmatprep.subr.bf16.mxu0 0
  %1236 = vmatpush1.bf16.msra.mxu0 0
  %1237 = vmatprep.subr.bf16.mxu0 0
  %1238 = vmatpush1.bf16.msra.mxu0 0
  %1239 = vmatprep.subr.bf16.mxu0 0
  %1240 = vmatpush1.bf16.msra.mxu0 0
  %1241 = vmatprep.subr.bf16.mxu0 0
  %1242 = vmatpush1.bf16.msra.mxu0 0
  %1243 = vmatprep.subr.bf16.mxu0 0
  %1244 = vmatpush1.bf16.msra.mxu0 0
  %1245 = vmatprep.subr.bf16.mxu0 0
  %1246 = vmatpush1.bf16.msra.mxu0 0
  %1247 = vmatprep.mubr.bf16.mxu0 0
  %1248 = vmatmul.mubr.bf16.gmra.mrb[0].mxu0 %v255
  %v1249 = vpop.f32.mrb[0].mxu0
  %v1250 = vadd.f32 %v1197, %v1249
  %v1251 = vpop.f32.mrb[0].mxu0
  %v1252 = vadd.f32 %v1199, %v1251
  %v1253 = vpop.f32.mrb[0].mxu0
  %v1254 = vadd.f32 %v1201, %v1253
  %v1255 = vpop.f32.mrb[0].mxu0
  %v1256 = vadd.f32 %v1203, %v1255
  %1257 = vmatprep.mubr.bf16.mxu0 0
  %1258 = vmatmul.mubr.bf16.gmra.mrb[0].mxu0 %v264
  %v1259 = vpop.f32.mrb[0].mxu0
  %v1260 = vadd.f32 %v1207, %v1259
  %v1261 = vpop.f32.mrb[0].mxu0
  %v1262 = vadd.f32 %v1209, %v1261
  %v1263 = vpop.f32.mrb[0].mxu0
  %v1264 = vadd.f32 %v1211, %v1263
  %v1265 = vpop.f32.mrb[0].mxu0
  %v1266 = vadd.f32 %v1213, %v1265
  %1267 = vdwg.mxu0
  %v1268 = vmax.f32 %v1250, 0.0
  %v1269 = vmax.f32 %v1252, 0.0
  %v1270 = vmax.f32 %v1254, 0.0
  %v1271 = vmax.f32 %v1256, 0.0
  %v1272 = vmax.f32 %v1260, 0.0
  %v1273 = vmax.f32 %v1262, 0.0
  %v1274 = vmax.f32 %v1264, 0.0
  %v1275 = vmax.f32 %v1266, 0.0
  %v1276 = vpack.c.bf16 %v1270, %v1268
  %v1277 = vpack.c.bf16 %v1271, %v1269
  %v1278 = vpack.c.bf16 %v1274, %v1272
  %v1279 = vpack.c.bf16 %v1275, %v1273
  %v1284 = vunpack.c.l.b16 %v1276
  %v1285 = vunpack.c.l.b16 %v1277
  %v1286 = vunpack.c.h.b16 %v1276
  %v1287 = vunpack.c.h.b16 %v1277
  %v1288 = vunpack.c.l.b16 %v1278
  %v1289 = vunpack.c.l.b16 %v1279
  %v1290 = vunpack.c.h.b16 %v1278
  %v1291 = vunpack.c.h.b16 %v1279
  %v1292 = vpack.c.b16 %v1285, %v1284
  %v1293 = vpack.c.b16 %v1287, %v1286
  %v1294 = vpack.c.b16 %v1289, %v1288
  %v1295 = vpack.c.b16 %v1291, %v1290
  %1300 = vst [vmem:[%s3] sm:$0xff] %v1292
  %1301 = vst [vmem:[%s3 + $0x8] sm:$0xff] %v1293
  %1302 = vst [vmem:[%s3 + $0x10] sm:$0xff] %v1294
  %1303 = vst [vmem:[%s3 + $0x18] sm:$0xff] %v1295
  // Predicated region
  $region14: #{net_forward.15} parent=0 // pred_check
    _
  $region15: #{net_forward.15} parent=0 // pred_check_branch
    %1305 = sbr.rel (0) target = $region17
  $region16: #{net_forward.15} parent=0 // pred_region
    _
  $region17: #{net_forward.15} parent=0 // pred_fallthru
    _
  // Predicated region
  $region18: #{net_forward.15} parent=0 // pred_check
    _
  $region19: #{net_forward.15} parent=0 // pred_check_branch
    %1307 = sbr.rel (0) target = $region21
  $region20: #{net_forward.15} parent=0 // pred_region
    _
  $region21: #{net_forward.15} parent=0 // pred_fallthru
    _

// kernel: net_forward.16
$region0: #{net_forward.16}
  #allocation0 [shape = 'u32[]', space=smem, size = 0x4, offset = 0x4, fixed_abs, tag = 'smem constant byte address 0x4 - core index']
  #allocation1 [shape = 'u32[144,128]{1,0:T(1,128)}', space=vmem, size = 0x12000, scoped, tag = 'internal scratch']
  %s0 = inlined_call_operand.vmem [shape: bf16[8,256], index: 0, kind: input, shape index: {}]
  %s1 = inlined_call_operand.vmem [shape: bf16[8,256], index: 1, kind: input, shape index: {}]
  %s2 = inlined_call_operand.vmem [shape: bf16[8,256], index: 2, kind: input, shape index: {}]
  %s3 = inlined_call_operand.vmem [shape: bf16[8,256], index: 3, kind: input, shape index: {}]
  %s4 = inlined_call_operand.vmem [shape: bf16[8,256], index: 4, kind: output, shape index: {}]
  %s5 = sld [smem:[#allocation0]]
  $region26: #{net_forward.16} parent=0
    _
  %s7 = ssub.s32 1, %s5
  %s8 = scalar_select 0, %s7, %s5
  // Predicated region
  $region2: #{net_forward.16} parent=0 // pred_check
    _
  $region3: #{net_forward.16} parent=0 // pred_check_branch
    %10 = sbr.rel (0) target = $region5
  $region4: #{net_forward.16} parent=0 // pred_region
    _
  $region5: #{net_forward.16} parent=0 // pred_fallthru
    _
  // Predicated region
  $region6: #{net_forward.16} parent=0 // pred_check
    _
  $region7: #{net_forward.16} parent=0 // pred_check_branch
    %12 = sbr.rel (0) target = $region9
  $region8: #{net_forward.16} parent=0 // pred_region
    _
  $region9: #{net_forward.16} parent=0 // pred_fallthru
    _
  // Predicated region
  $region10: #{net_forward.16} parent=0 // pred_check
    _
  $region11: #{net_forward.16} parent=0 // pred_check_branch
    %14 = sbr.rel (0) target = $region13
  $region12: #{net_forward.16} parent=0 // pred_region
    _
  $region13: #{net_forward.16} parent=0 // pred_fallthru
    _
  // Predicated region
  $region14: #{net_forward.16} parent=0 // pred_check
    _
  $region15: #{net_forward.16} parent=0 // pred_check_branch
    %16 = sbr.rel (0) target = $region17
  $region16: #{net_forward.16} parent=0 // pred_region
    _
  $region17: #{net_forward.16} parent=0 // pred_fallthru
    _
  %v17 = vld [vmem:[%s0] sm:$0xff]
  %v18 = vld [vmem:[%s1] sm:$0xff]
  %v19 = vmax.bf16 %v17, %v18
  %v20 = vld [vmem:[%s2] sm:$0xff]
  %v21 = vld [vmem:[%s3] sm:$0xff]
  %v22 = vmax.bf16 %v20, %v21
  %v23 = vmax.bf16 %v19, %v22
  %24 = vst [vmem:[%s4] sm:$0xff] %v23
  // Predicated region
  $region18: #{net_forward.16} parent=0 // pred_check
    _
  $region19: #{net_forward.16} parent=0 // pred_check_branch
    %26 = sbr.rel (0) target = $region21
  $region20: #{net_forward.16} parent=0 // pred_region
    _
  $region21: #{net_forward.16} parent=0 // pred_fallthru
    _
  // Predicated region
  $region22: #{net_forward.16} parent=0 // pred_check
    _
  $region23: #{net_forward.16} parent=0 // pred_check_branch
    %28 = sbr.rel (0) target = $region25
  $region24: #{net_forward.16} parent=0 // pred_region
    _
  $region25: #{net_forward.16} parent=0 // pred_fallthru
    _

// kernel: net_forward.17
$region0: #{net_forward.17}
  #allocation0 [shape = 'u32[]', space=smem, size = 0x4, offset = 0x4, fixed_abs, tag = 'smem constant byte address 0x4 - core index']
  #allocation1 [shape = 'u32[144,128]{1,0:T(1,128)}', space=vmem, size = 0x12000, scoped, tag = 'internal scratch']
  %s0 = inlined_call_operand.vmem [shape: bf16[8,1024], index: 0, kind: input, shape index: {}]
  %s1 = inlined_call_operand.vmem [shape: bf16[1024,256], index: 1, kind: input, shape index: {}]
  %s2 = inlined_call_operand.vmem [shape: f32[1,256], index: 2, kind: input, shape index: {}]
  %s3 = inlined_call_operand.vmem [shape: bf16[256,64], index: 3, kind: input, shape index: {}]
  %s4 = inlined_call_operand.vmem [shape: f32[1,64], index: 4, kind: input, shape index: {}]
  %s5 = inlined_call_operand.vmem [shape: bf16[64,128], index: 5, kind: input, shape index: {}]
  %s6 = inlined_call_operand.vmem [shape: f32[1,128], index: 6, kind: input, shape index: {}]
  %s7 = inlined_call_operand.vmem [shape: f32[8,128], index: 7, kind: output, shape index: {}]
  %s8 = sld [smem:[#allocation0]]
  $region38: #{net_forward.17} parent=0
    _
  %s10 = ssub.s32 1, %s8
  %s11 = scalar_select 0, %s10, %s8
  // Predicated region
  $region2: #{net_forward.17} parent=0 // pred_check
    _
  $region3: #{net_forward.17} parent=0 // pred_check_branch
    %13 = sbr.rel (0) target = $region5
  $region4: #{net_forward.17} parent=0 // pred_region
    _
  $region5: #{net_forward.17} parent=0 // pred_fallthru
    _
  // Predicated region
  $region6: #{net_forward.17} parent=0 // pred_check
    _
  $region7: #{net_forward.17} parent=0 // pred_check_branch
    %15 = sbr.rel (0) target = $region9
  $region8: #{net_forward.17} parent=0 // pred_region
    _
  $region9: #{net_forward.17} parent=0 // pred_fallthru
    _
  // Predicated region
  $region10: #{net_forward.17} parent=0 // pred_check
    _
  $region11: #{net_forward.17} parent=0 // pred_check_branch
    %17 = sbr.rel (0) target = $region13
  $region12: #{net_forward.17} parent=0 // pred_region
    _
  $region13: #{net_forward.17} parent=0 // pred_fallthru
    _
  // Predicated region
  $region14: #{net_forward.17} parent=0 // pred_check
    _
  $region15: #{net_forward.17} parent=0 // pred_check_branch
    %19 = sbr.rel (0) target = $region17
  $region16: #{net_forward.17} parent=0 // pred_region
    _
  $region17: #{net_forward.17} parent=0 // pred_fallthru
    _
  // Predicated region
  $region18: #{net_forward.17} parent=0 // pred_check
    _
  $region19: #{net_forward.17} parent=0 // pred_check_branch
    %21 = sbr.rel (0) target = $region21
  $region20: #{net_forward.17} parent=0 // pred_region
    _
  $region21: #{net_forward.17} parent=0 // pred_fallthru
    _
  // Predicated region
  $region22: #{net_forward.17} parent=0 // pred_check
    _
  $region23: #{net_forward.17} parent=0 // pred_check_branch
    %23 = sbr.rel (0) target = $region25
  $region24: #{net_forward.17} parent=0 // pred_region
    _
  $region25: #{net_forward.17} parent=0 // pred_fallthru
    _
  // Predicated region
  $region26: #{net_forward.17} parent=0 // pred_check
    _
  $region27: #{net_forward.17} parent=0 // pred_check_branch
    %25 = sbr.rel (0) target = $region29
  $region28: #{net_forward.17} parent=0 // pred_region
    _
  $region29: #{net_forward.17} parent=0 // pred_fallthru
    _
  %v27 = vld [vmem:[%s0] sm:$0xff]
  %v28 = vld [vmem:[%s0 + $0x8] sm:$0xff]
  %v29 = vld [vmem:[%s0 + $0x10] sm:$0xff]
  %v30 = vld [vmem:[%s0 + $0x18] sm:$0xff]
  %v31 = vld [vmem:[%s1] sm:$0xff]
  %v32 = vld [vmem:[%s1 + $0x8] sm:$0xff]
  %v33 = vld [vmem:[%s1 + $0x10] sm:$0xff]
  %v34 = vld [vmem:[%s1 + $0x18] sm:$0xff]
  %v35 = vld [vmem:[%s1 + $0x20] sm:$0xff]
  %v36 = vld [vmem:[%s1 + $0x28] sm:$0xff]
  %v37 = vld [vmem:[%s1 + $0x30] sm:$0xff]
  %v38 = vld [vmem:[%s1 + $0x38] sm:$0xff]
  %v39 = vld [vmem:[%s1 + $0x40] sm:$0xff]
  %v40 = vld [vmem:[%s1 + $0x48] sm:$0xff]
  %v41 = vld [vmem:[%s1 + $0x50] sm:$0xff]
  %v42 = vld [vmem:[%s1 + $0x58] sm:$0xff]
  %v43 = vld [vmem:[%s1 + $0x60] sm:$0xff]
  %v44 = vld [vmem:[%s1 + $0x68] sm:$0xff]
  %v45 = vld [vmem:[%s1 + $0x70] sm:$0xff]
  %v46 = vld [vmem:[%s1 + $0x78] sm:$0xff]
  %v47 = vld [vmem:[%s1 + $0x80] sm:$0xff]
  %v48 = vld [vmem:[%s1 + $0x88] sm:$0xff]
  %v49 = vld [vmem:[%s1 + $0x90] sm:$0xff]
  %v50 = vld [vmem:[%s1 + $0x98] sm:$0xff]
  %v51 = vld [vmem:[%s1 + $0xa0] sm:$0xff]
  %v52 = vld [vmem:[%s1 + $0xa8] sm:$0xff]
  %v53 = vld [vmem:[%s1 + $0xb0] sm:$0xff]
  %v54 = vld [vmem:[%s1 + $0xb8] sm:$0xff]
  %v55 = vld [vmem:[%s1 + $0xc0] sm:$0xff]
  %v56 = vld [vmem:[%s1 + $0xc8] sm:$0xff]
  %v57 = vld [vmem:[%s1 + $0xd0] sm:$0xff]
  %v58 = vld [vmem:[%s1 + $0xd8] sm:$0xff]
  %v59 = vld [vmem:[%s1 + $0xe0] sm:$0xff]
  %v60 = vld [vmem:[%s1 + $0xe8] sm:$0xff]
  %v61 = vld [vmem:[%s1 + $0xf0] sm:$0xff]
  %v62 = vld [vmem:[%s1 + $0xf8] sm:$0xff]
  %v63 = vld [vmem:[%s1 + $0x100] sm:$0xff]
  %v64 = vld [vmem:[%s1 + $0x108] sm:$0xff]
  %v65 = vld [vmem:[%s1 + $0x110] sm:$0xff]
  %v66 = vld [vmem:[%s1 + $0x118] sm:$0xff]
  %v67 = vld [vmem:[%s1 + $0x120] sm:$0xff]
  %v68 = vld [vmem:[%s1 + $0x128] sm:$0xff]
  %v69 = vld [vmem:[%s1 + $0x130] sm:$0xff]
  %v70 = vld [vmem:[%s1 + $0x138] sm:$0xff]
  %v71 = vld [vmem:[%s1 + $0x140] sm:$0xff]
  %v72 = vld [vmem:[%s1 + $0x148] sm:$0xff]
  %v73 = vld [vmem:[%s1 + $0x150] sm:$0xff]
  %v74 = vld [vmem:[%s1 + $0x158] sm:$0xff]
  %v75 = vld [vmem:[%s1 + $0x160] sm:$0xff]
  %v76 = vld [vmem:[%s1 + $0x168] sm:$0xff]
  %v77 = vld [vmem:[%s1 + $0x170] sm:$0xff]
  %v78 = vld [vmem:[%s1 + $0x178] sm:$0xff]
  %v79 = vld [vmem:[%s1 + $0x180] sm:$0xff]
  %v80 = vld [vmem:[%s1 + $0x188] sm:$0xff]
  %v81 = vld [vmem:[%s1 + $0x190] sm:$0xff]
  %v82 = vld [vmem:[%s1 + $0x198] sm:$0xff]
  %v83 = vld [vmem:[%s1 + $0x1a0] sm:$0xff]
  %v84 = vld [vmem:[%s1 + $0x1a8] sm:$0xff]
  %v85 = vld [vmem:[%s1 + $0x1b0] sm:$0xff]
  %v86 = vld [vmem:[%s1 + $0x1b8] sm:$0xff]
  %v87 = vld [vmem:[%s1 + $0x1c0] sm:$0xff]
  %v88 = vld [vmem:[%s1 + $0x1c8] sm:$0xff]
  %v89 = vld [vmem:[%s1 + $0x1d0] sm:$0xff]
  %v90 = vld [vmem:[%s1 + $0x1d8] sm:$0xff]
  %v91 = vld [vmem:[%s1 + $0x1e0] sm:$0xff]
  %v92 = vld [vmem:[%s1 + $0x1e8] sm:$0xff]
  %v93 = vld [vmem:[%s1 + $0x1f0] sm:$0xff]
  %v94 = vld [vmem:[%s1 + $0x1f8] sm:$0xff]
  %v95 = vld [vmem:[%s1 + $0x200] sm:$0xff]
  %v96 = vld [vmem:[%s1 + $0x208] sm:$0xff]
  %v97 = vld [vmem:[%s1 + $0x210] sm:$0xff]
  %v98 = vld [vmem:[%s1 + $0x218] sm:$0xff]
  %v99 = vld [vmem:[%s1 + $0x220] sm:$0xff]
  %v100 = vld [vmem:[%s1 + $0x228] sm:$0xff]
  %v101 = vld [vmem:[%s1 + $0x230] sm:$0xff]
  %v102 = vld [vmem:[%s1 + $0x238] sm:$0xff]
  %v103 = vld [vmem:[%s1 + $0x240] sm:$0xff]
  %v104 = vld [vmem:[%s1 + $0x248] sm:$0xff]
  %v105 = vld [vmem:[%s1 + $0x250] sm:$0xff]
  %v106 = vld [vmem:[%s1 + $0x258] sm:$0xff]
  %v107 = vld [vmem:[%s1 + $0x260] sm:$0xff]
  %v108 = vld [vmem:[%s1 + $0x268] sm:$0xff]
  %v109 = vld [vmem:[%s1 + $0x270] sm:$0xff]
  %v110 = vld [vmem:[%s1 + $0x278] sm:$0xff]
  %v111 = vld [vmem:[%s1 + $0x280] sm:$0xff]
  %v112 = vld [vmem:[%s1 + $0x288] sm:$0xff]
  %v113 = vld [vmem:[%s1 + $0x290] sm:$0xff]
  %v114 = vld [vmem:[%s1 + $0x298] sm:$0xff]
  %v115 = vld [vmem:[%s1 + $0x2a0] sm:$0xff]
  %v116 = vld [vmem:[%s1 + $0x2a8] sm:$0xff]
  %v117 = vld [vmem:[%s1 + $0x2b0] sm:$0xff]
  %v118 = vld [vmem:[%s1 + $0x2b8] sm:$0xff]
  %v119 = vld [vmem:[%s1 + $0x2c0] sm:$0xff]
  %v120 = vld [vmem:[%s1 + $0x2c8] sm:$0xff]
  %v121 = vld [vmem:[%s1 + $0x2d0] sm:$0xff]
  %v122 = vld [vmem:[%s1 + $0x2d8] sm:$0xff]
  %v123 = vld [vmem:[%s1 + $0x2e0] sm:$0xff]
  %v124 = vld [vmem:[%s1 + $0x2e8] sm:$0xff]
  %v125 = vld [vmem:[%s1 + $0x2f0] sm:$0xff]
  %v126 = vld [vmem:[%s1 + $0x2f8] sm:$0xff]
  %v127 = vld [vmem:[%s1 + $0x300] sm:$0xff]
  %v128 = vld [vmem:[%s1 + $0x308] sm:$0xff]
  %v129 = vld [vmem:[%s1 + $0x310] sm:$0xff]
  %v130 = vld [vmem:[%s1 + $0x318] sm:$0xff]
  %v131 = vld [vmem:[%s1 + $0x320] sm:$0xff]
  %v132 = vld [vmem:[%s1 + $0x328] sm:$0xff]
  %v133 = vld [vmem:[%s1 + $0x330] sm:$0xff]
  %v134 = vld [vmem:[%s1 + $0x338] sm:$0xff]
  %v135 = vld [vmem:[%s1 + $0x340] sm:$0xff]
  %v136 = vld [vmem:[%s1 + $0x348] sm:$0xff]
  %v137 = vld [vmem:[%s1 + $0x350] sm:$0xff]
  %v138 = vld [vmem:[%s1 + $0x358] sm:$0xff]
  %v139 = vld [vmem:[%s1 + $0x360] sm:$0xff]
  %v140 = vld [vmem:[%s1 + $0x368] sm:$0xff]
  %v141 = vld [vmem:[%s1 + $0x370] sm:$0xff]
  %v142 = vld [vmem:[%s1 + $0x378] sm:$0xff]
  %v143 = vld [vmem:[%s1 + $0x380] sm:$0xff]
  %v144 = vld [vmem:[%s1 + $0x388] sm:$0xff]
  %v145 = vld [vmem:[%s1 + $0x390] sm:$0xff]
  %v146 = vld [vmem:[%s1 + $0x398] sm:$0xff]
  %v147 = vld [vmem:[%s1 + $0x3a0] sm:$0xff]
  %v148 = vld [vmem:[%s1 + $0x3a8] sm:$0xff]
  %v149 = vld [vmem:[%s1 + $0x3b0] sm:$0xff]
  %v150 = vld [vmem:[%s1 + $0x3b8] sm:$0xff]
  %v151 = vld [vmem:[%s1 + $0x3c0] sm:$0xff]
  %v152 = vld [vmem:[%s1 + $0x3c8] sm:$0xff]
  %v153 = vld [vmem:[%s1 + $0x3d0] sm:$0xff]
  %v154 = vld [vmem:[%s1 + $0x3d8] sm:$0xff]
  %v155 = vld [vmem:[%s1 + $0x3e0] sm:$0xff]
  %v156 = vld [vmem:[%s1 + $0x3e8] sm:$0xff]
  %v157 = vld [vmem:[%s1 + $0x3f0] sm:$0xff]
  %v158 = vld [vmem:[%s1 + $0x3f8] sm:$0xff]
  %v159 = vld [vmem:[%s2] sm:$0x3]
  %v161 = vlaneseq
  %v162 = vshrl.u32 %v161, 7
  %v163 = vsub.s32 0, %v162
  %v164 = vrot.slane %v159, %v163
  %v165 = vlaneseq
  %v166 = vshrl.u32 %v165, 7
  %v167 = vsub.s32 1, %v166
  %v168 = vrot.slane %v159, %v167
  %v175 = vunpack.c.l.b16 %v27
  %v176 = vunpack.c.h.b16 %v27
  %v177 = vunpack.c.l.b16 %v28
  %v178 = vunpack.c.h.b16 %v28
  %v179 = vunpack.c.l.b16 %v29
  %v180 = vunpack.c.h.b16 %v29
  %v181 = vunpack.c.l.b16 %v30
  %v182 = vunpack.c.h.b16 %v30
  %v183 = vpack.c.b16 %v175, %v175
  %v184 = vpack.c.b16 %v176, %v176
  %v185 = vpack.c.b16 %v177, %v177
  %v186 = vpack.c.b16 %v178, %v178
  %v187 = vpack.c.b16 %v179, %v179
  %v188 = vpack.c.b16 %v180, %v180
  %v189 = vpack.c.b16 %v181, %v181
  %v190 = vpack.c.b16 %v182, %v182
  %v327 = vunpack.c.l.b16 %v31
  %v328 = vunpack.c.h.b16 %v31
  %v329 = vunpack.c.l.b16 %v32
  %v330 = vunpack.c.h.b16 %v32
  %v331 = vunpack.c.l.b16 %v33
  %v332 = vunpack.c.h.b16 %v33
  %v333 = vunpack.c.l.b16 %v34
  %v334 = vunpack.c.h.b16 %v34
  %v335 = vunpack.c.l.b16 %v35
  %v336 = vunpack.c.h.b16 %v35
  %v337 = vunpack.c.l.b16 %v36
  %v338 = vunpack.c.h.b16 %v36
  %v339 = vunpack.c.l.b16 %v37
  %v340 = vunpack.c.h.b16 %v37
  %v341 = vunpack.c.l.b16 %v38
  %v342 = vunpack.c.h.b16 %v38
  %v343 = vunpack.c.l.b16 %v39
  %v344 = vunpack.c.h.b16 %v39
  %v345 = vunpack.c.l.b16 %v40
  %v346 = vunpack.c.h.b16 %v40
  %v347 = vunpack.c.l.b16 %v41
  %v348 = vunpack.c.h.b16 %v41
  %v349 = vunpack.c.l.b16 %v42
  %v350 = vunpack.c.h.b16 %v42
  %v351 = vunpack.c.l.b16 %v43
  %v352 = vunpack.c.h.b16 %v43
  %v353 = vunpack.c.l.b16 %v44
  %v354 = vunpack.c.h.b16 %v44
  %v355 = vunpack.c.l.b16 %v45
  %v356 = vunpack.c.h.b16 %v45
  %v357 = vunpack.c.l.b16 %v46
  %v358 = vunpack.c.h.b16 %v46
  %v359 = vunpack.c.l.b16 %v47
  %v360 = vunpack.c.h.b16 %v47
  %v361 = vunpack.c.l.b16 %v48
  %v362 = vunpack.c.h.b16 %v48
  %v363 = vunpack.c.l.b16 %v49
  %v364 = vunpack.c.h.b16 %v49
  %v365 = vunpack.c.l.b16 %v50
  %v366 = vunpack.c.h.b16 %v50
  %v367 = vunpack.c.l.b16 %v51
  %v368 = vunpack.c.h.b16 %v51
  %v369 = vunpack.c.l.b16 %v52
  %v370 = vunpack.c.h.b16 %v52
  %v371 = vunpack.c.l.b16 %v53
  %v372 = vunpack.c.h.b16 %v53
  %v373 = vunpack.c.l.b16 %v54
  %v374 = vunpack.c.h.b16 %v54
  %v375 = vunpack.c.l.b16 %v55
  %v376 = vunpack.c.h.b16 %v55
  %v377 = vunpack.c.l.b16 %v56
  %v378 = vunpack.c.h.b16 %v56
  %v379 = vunpack.c.l.b16 %v57
  %v380 = vunpack.c.h.b16 %v57
  %v381 = vunpack.c.l.b16 %v58
  %v382 = vunpack.c.h.b16 %v58
  %v383 = vunpack.c.l.b16 %v59
  %v384 = vunpack.c.h.b16 %v59
  %v385 = vunpack.c.l.b16 %v60
  %v386 = vunpack.c.h.b16 %v60
  %v387 = vunpack.c.l.b16 %v61
  %v388 = vunpack.c.h.b16 %v61
  %v389 = vunpack.c.l.b16 %v62
  %v390 = vunpack.c.h.b16 %v62
  %v391 = vunpack.c.l.b16 %v63
  %v392 = vunpack.c.h.b16 %v63
  %v393 = vunpack.c.l.b16 %v64
  %v394 = vunpack.c.h.b16 %v64
  %v395 = vunpack.c.l.b16 %v65
  %v396 = vunpack.c.h.b16 %v65
  %v397 = vunpack.c.l.b16 %v66
  %v398 = vunpack.c.h.b16 %v66
  %v399 = vunpack.c.l.b16 %v67
  %v400 = vunpack.c.h.b16 %v67
  %v401 = vunpack.c.l.b16 %v68
  %v402 = vunpack.c.h.b16 %v68
  %v403 = vunpack.c.l.b16 %v69
  %v404 = vunpack.c.h.b16 %v69
  %v405 = vunpack.c.l.b16 %v70
  %v406 = vunpack.c.h.b16 %v70
  %v407 = vunpack.c.l.b16 %v71
  %v408 = vunpack.c.h.b16 %v71
  %v409 = vunpack.c.l.b16 %v72
  %v410 = vunpack.c.h.b16 %v72
  %v411 = vunpack.c.l.b16 %v73
  %v412 = vunpack.c.h.b16 %v73
  %v413 = vunpack.c.l.b16 %v74
  %v414 = vunpack.c.h.b16 %v74
  %v415 = vunpack.c.l.b16 %v75
  %v416 = vunpack.c.h.b16 %v75
  %v417 = vunpack.c.l.b16 %v76
  %v418 = vunpack.c.h.b16 %v76
  %v419 = vunpack.c.l.b16 %v77
  %v420 = vunpack.c.h.b16 %v77
  %v421 = vunpack.c.l.b16 %v78
  %v422 = vunpack.c.h.b16 %v78
  %v423 = vunpack.c.l.b16 %v79
  %v424 = vunpack.c.h.b16 %v79
  %v425 = vunpack.c.l.b16 %v80
  %v426 = vunpack.c.h.b16 %v80
  %v427 = vunpack.c.l.b16 %v81
  %v428 = vunpack.c.h.b16 %v81
  %v429 = vunpack.c.l.b16 %v82
  %v430 = vunpack.c.h.b16 %v82
  %v431 = vunpack.c.l.b16 %v83
  %v432 = vunpack.c.h.b16 %v83
  %v433 = vunpack.c.l.b16 %v84
  %v434 = vunpack.c.h.b16 %v84
  %v435 = vunpack.c.l.b16 %v85
  %v436 = vunpack.c.h.b16 %v85
  %v437 = vunpack.c.l.b16 %v86
  %v438 = vunpack.c.h.b16 %v86
  %v439 = vunpack.c.l.b16 %v87
  %v440 = vunpack.c.h.b16 %v87
  %v441 = vunpack.c.l.b16 %v88
  %v442 = vunpack.c.h.b16 %v88
  %v443 = vunpack.c.l.b16 %v89
  %v444 = vunpack.c.h.b16 %v89
  %v445 = vunpack.c.l.b16 %v90
  %v446 = vunpack.c.h.b16 %v90
  %v447 = vunpack.c.l.b16 %v91
  %v448 = vunpack.c.h.b16 %v91
  %v449 = vunpack.c.l.b16 %v92
  %v450 = vunpack.c.h.b16 %v92
  %v451 = vunpack.c.l.b16 %v93
  %v452 = vunpack.c.h.b16 %v93
  %v453 = vunpack.c.l.b16 %v94
  %v454 = vunpack.c.h.b16 %v94
  %v455 = vunpack.c.l.b16 %v95
  %v456 = vunpack.c.h.b16 %v95
  %v457 = vunpack.c.l.b16 %v96
  %v458 = vunpack.c.h.b16 %v96
  %v459 = vunpack.c.l.b16 %v97
  %v460 = vunpack.c.h.b16 %v97
  %v461 = vunpack.c.l.b16 %v98
  %v462 = vunpack.c.h.b16 %v98
  %v463 = vunpack.c.l.b16 %v99
  %v464 = vunpack.c.h.b16 %v99
  %v465 = vunpack.c.l.b16 %v100
  %v466 = vunpack.c.h.b16 %v100
  %v467 = vunpack.c.l.b16 %v101
  %v468 = vunpack.c.h.b16 %v101
  %v469 = vunpack.c.l.b16 %v102
  %v470 = vunpack.c.h.b16 %v102
  %v471 = vunpack.c.l.b16 %v103
  %v472 = vunpack.c.h.b16 %v103
  %v473 = vunpack.c.l.b16 %v104
  %v474 = vunpack.c.h.b16 %v104
  %v475 = vunpack.c.l.b16 %v105
  %v476 = vunpack.c.h.b16 %v105
  %v477 = vunpack.c.l.b16 %v106
  %v478 = vunpack.c.h.b16 %v106
  %v479 = vunpack.c.l.b16 %v107
  %v480 = vunpack.c.h.b16 %v107
  %v481 = vunpack.c.l.b16 %v108
  %v482 = vunpack.c.h.b16 %v108
  %v483 = vunpack.c.l.b16 %v109
  %v484 = vunpack.c.h.b16 %v109
  %v485 = vunpack.c.l.b16 %v110
  %v486 = vunpack.c.h.b16 %v110
  %v487 = vunpack.c.l.b16 %v111
  %v488 = vunpack.c.h.b16 %v111
  %v489 = vunpack.c.l.b16 %v112
  %v490 = vunpack.c.h.b16 %v112
  %v491 = vunpack.c.l.b16 %v113
  %v492 = vunpack.c.h.b16 %v113
  %v493 = vunpack.c.l.b16 %v114
  %v494 = vunpack.c.h.b16 %v114
  %v495 = vunpack.c.l.b16 %v115
  %v496 = vunpack.c.h.b16 %v115
  %v497 = vunpack.c.l.b16 %v116
  %v498 = vunpack.c.h.b16 %v116
  %v499 = vunpack.c.l.b16 %v117
  %v500 = vunpack.c.h.b16 %v117
  %v501 = vunpack.c.l.b16 %v118
  %v502 = vunpack.c.h.b16 %v118
  %v503 = vunpack.c.l.b16 %v119
  %v504 = vunpack.c.h.b16 %v119
  %v505 = vunpack.c.l.b16 %v120
  %v506 = vunpack.c.h.b16 %v120
  %v507 = vunpack.c.l.b16 %v121
  %v508 = vunpack.c.h.b16 %v121
  %v509 = vunpack.c.l.b16 %v122
  %v510 = vunpack.c.h.b16 %v122
  %v511 = vunpack.c.l.b16 %v123
  %v512 = vunpack.c.h.b16 %v123
  %v513 = vunpack.c.l.b16 %v124
  %v514 = vunpack.c.h.b16 %v124
  %v515 = vunpack.c.l.b16 %v125
  %v516 = vunpack.c.h.b16 %v125
  %v517 = vunpack.c.l.b16 %v126
  %v518 = vunpack.c.h.b16 %v126
  %v519 = vunpack.c.l.b16 %v127
  %v520 = vunpack.c.h.b16 %v127
  %v521 = vunpack.c.l.b16 %v128
  %v522 = vunpack.c.h.b16 %v128
  %v523 = vunpack.c.l.b16 %v129
  %v524 = vunpack.c.h.b16 %v129
  %v525 = vunpack.c.l.b16 %v130
  %v526 = vunpack.c.h.b16 %v130
  %v527 = vunpack.c.l.b16 %v131
  %v528 = vunpack.c.h.b16 %v131
  %v529 = vunpack.c.l.b16 %v132
  %v530 = vunpack.c.h.b16 %v132
  %v531 = vunpack.c.l.b16 %v133
  %v532 = vunpack.c.h.b16 %v133
  %v533 = vunpack.c.l.b16 %v134
  %v534 = vunpack.c.h.b16 %v134
  %v535 = vunpack.c.l.b16 %v135
  %v536 = vunpack.c.h.b16 %v135
  %v537 = vunpack.c.l.b16 %v136
  %v538 = vunpack.c.h.b16 %v136
  %v539 = vunpack.c.l.b16 %v137
  %v540 = vunpack.c.h.b16 %v137
  %v541 = vunpack.c.l.b16 %v138
  %v542 = vunpack.c.h.b16 %v138
  %v543 = vunpack.c.l.b16 %v139
  %v544 = vunpack.c.h.b16 %v139
  %v545 = vunpack.c.l.b16 %v140
  %v546 = vunpack.c.h.b16 %v140
  %v547 = vunpack.c.l.b16 %v141
  %v548 = vunpack.c.h.b16 %v141
  %v549 = vunpack.c.l.b16 %v142
  %v550 = vunpack.c.h.b16 %v142
  %v551 = vunpack.c.l.b16 %v143
  %v552 = vunpack.c.h.b16 %v143
  %v553 = vunpack.c.l.b16 %v144
  %v554 = vunpack.c.h.b16 %v144
  %v555 = vunpack.c.l.b16 %v145
  %v556 = vunpack.c.h.b16 %v145
  %v557 = vunpack.c.l.b16 %v146
  %v558 = vunpack.c.h.b16 %v146
  %v559 = vunpack.c.l.b16 %v147
  %v560 = vunpack.c.h.b16 %v147
  %v561 = vunpack.c.l.b16 %v148
  %v562 = vunpack.c.h.b16 %v148
  %v563 = vunpack.c.l.b16 %v149
  %v564 = vunpack.c.h.b16 %v149
  %v565 = vunpack.c.l.b16 %v150
  %v566 = vunpack.c.h.b16 %v150
  %v567 = vunpack.c.l.b16 %v151
  %v568 = vunpack.c.h.b16 %v151
  %v569 = vunpack.c.l.b16 %v152
  %v570 = vunpack.c.h.b16 %v152
  %v571 = vunpack.c.l.b16 %v153
  %v572 = vunpack.c.h.b16 %v153
  %v573 = vunpack.c.l.b16 %v154
  %v574 = vunpack.c.h.b16 %v154
  %v575 = vunpack.c.l.b16 %v155
  %v576 = vunpack.c.h.b16 %v155
  %v577 = vunpack.c.l.b16 %v156
  %v578 = vunpack.c.h.b16 %v156
  %v579 = vunpack.c.l.b16 %v157
  %v580 = vunpack.c.h.b16 %v157
  %v581 = vunpack.c.l.b16 %v158
  %v582 = vunpack.c.h.b16 %v158
  %v583 = vpack.c.b16 %v329, %v327
  %v584 = vpack.c.b16 %v330, %v328
  %v585 = vpack.c.b16 %v333, %v331
  %v586 = vpack.c.b16 %v334, %v332
  %v587 = vpack.c.b16 %v337, %v335
  %v588 = vpack.c.b16 %v338, %v336
  %v589 = vpack.c.b16 %v341, %v339
  %v590 = vpack.c.b16 %v342, %v340
  %v591 = vpack.c.b16 %v345, %v343
  %v592 = vpack.c.b16 %v346, %v344
  %v593 = vpack.c.b16 %v349, %v347
  %v594 = vpack.c.b16 %v350, %v348
  %v595 = vpack.c.b16 %v353, %v351
  %v596 = vpack.c.b16 %v354, %v352
  %v597 = vpack.c.b16 %v357, %v355
  %v598 = vpack.c.b16 %v358, %v356
  %v599 = vpack.c.b16 %v361, %v359
  %v600 = vpack.c.b16 %v362, %v360
  %v601 = vpack.c.b16 %v365, %v363
  %v602 = vpack.c.b16 %v366, %v364
  %v603 = vpack.c.b16 %v369, %v367
  %v604 = vpack.c.b16 %v370, %v368
  %v605 = vpack.c.b16 %v373, %v371
  %v606 = vpack.c.b16 %v374, %v372
  %v607 = vpack.c.b16 %v377, %v375
  %v608 = vpack.c.b16 %v378, %v376
  %v609 = vpack.c.b16 %v381, %v379
  %v610 = vpack.c.b16 %v382, %v380
  %v611 = vpack.c.b16 %v385, %v383
  %v612 = vpack.c.b16 %v386, %v384
  %v613 = vpack.c.b16 %v389, %v387
  %v614 = vpack.c.b16 %v390, %v388
  %v615 = vpack.c.b16 %v393, %v391
  %v616 = vpack.c.b16 %v394, %v392
  %v617 = vpack.c.b16 %v397, %v395
  %v618 = vpack.c.b16 %v398, %v396
  %v619 = vpack.c.b16 %v401, %v399
  %v620 = vpack.c.b16 %v402, %v400
  %v621 = vpack.c.b16 %v405, %v403
  %v622 = vpack.c.b16 %v406, %v404
  %v623 = vpack.c.b16 %v409, %v407
  %v624 = vpack.c.b16 %v410, %v408
  %v625 = vpack.c.b16 %v413, %v411
  %v626 = vpack.c.b16 %v414, %v412
  %v627 = vpack.c.b16 %v417, %v415
  %v628 = vpack.c.b16 %v418, %v416
  %v629 = vpack.c.b16 %v421, %v419
  %v630 = vpack.c.b16 %v422, %v420
  %v631 = vpack.c.b16 %v425, %v423
  %v632 = vpack.c.b16 %v426, %v424
  %v633 = vpack.c.b16 %v429, %v427
  %v634 = vpack.c.b16 %v430, %v428
  %v635 = vpack.c.b16 %v433, %v431
  %v636 = vpack.c.b16 %v434, %v432
  %v637 = vpack.c.b16 %v437, %v435
  %v638 = vpack.c.b16 %v438, %v436
  %v639 = vpack.c.b16 %v441, %v439
  %v640 = vpack.c.b16 %v442, %v440
  %v641 = vpack.c.b16 %v445, %v443
  %v642 = vpack.c.b16 %v446, %v444
  %v643 = vpack.c.b16 %v449, %v447
  %v644 = vpack.c.b16 %v450, %v448
  %v645 = vpack.c.b16 %v453, %v451
  %v646 = vpack.c.b16 %v454, %v452
  %v647 = vpack.c.b16 %v457, %v455
  %v648 = vpack.c.b16 %v458, %v456
  %v649 = vpack.c.b16 %v461, %v459
  %v650 = vpack.c.b16 %v462, %v460
  %v651 = vpack.c.b16 %v465, %v463
  %v652 = vpack.c.b16 %v466, %v464
  %v653 = vpack.c.b16 %v469, %v467
  %v654 = vpack.c.b16 %v470, %v468
  %v655 = vpack.c.b16 %v473, %v471
  %v656 = vpack.c.b16 %v474, %v472
  %v657 = vpack.c.b16 %v477, %v475
  %v658 = vpack.c.b16 %v478, %v476
  %v659 = vpack.c.b16 %v481, %v479
  %v660 = vpack.c.b16 %v482, %v480
  %v661 = vpack.c.b16 %v485, %v483
  %v662 = vpack.c.b16 %v486, %v484
  %v663 = vpack.c.b16 %v489, %v487
  %v664 = vpack.c.b16 %v490, %v488
  %v665 = vpack.c.b16 %v493, %v491
  %v666 = vpack.c.b16 %v494, %v492
  %v667 = vpack.c.b16 %v497, %v495
  %v668 = vpack.c.b16 %v498, %v496
  %v669 = vpack.c.b16 %v501, %v499
  %v670 = vpack.c.b16 %v502, %v500
  %v671 = vpack.c.b16 %v505, %v503
  %v672 = vpack.c.b16 %v506, %v504
  %v673 = vpack.c.b16 %v509, %v507
  %v674 = vpack.c.b16 %v510, %v508
  %v675 = vpack.c.b16 %v513, %v511
  %v676 = vpack.c.b16 %v514, %v512
  %v677 = vpack.c.b16 %v517, %v515
  %v678 = vpack.c.b16 %v518, %v516
  %v679 = vpack.c.b16 %v521, %v519
  %v680 = vpack.c.b16 %v522, %v520
  %v681 = vpack.c.b16 %v525, %v523
  %v682 = vpack.c.b16 %v526, %v524
  %v683 = vpack.c.b16 %v529, %v527
  %v684 = vpack.c.b16 %v530, %v528
  %v685 = vpack.c.b16 %v533, %v531
  %v686 = vpack.c.b16 %v534, %v532
  %v687 = vpack.c.b16 %v537, %v535
  %v688 = vpack.c.b16 %v538, %v536
  %v689 = vpack.c.b16 %v541, %v539
  %v690 = vpack.c.b16 %v542, %v540
  %v691 = vpack.c.b16 %v545, %v543
  %v692 = vpack.c.b16 %v546, %v544
  %v693 = vpack.c.b16 %v549, %v547
  %v694 = vpack.c.b16 %v550, %v548
  %v695 = vpack.c.b16 %v553, %v551
  %v696 = vpack.c.b16 %v554, %v552
  %v697 = vpack.c.b16 %v557, %v555
  %v698 = vpack.c.b16 %v558, %v556
  %v699 = vpack.c.b16 %v561, %v559
  %v700 = vpack.c.b16 %v562, %v560
  %v701 = vpack.c.b16 %v565, %v563
  %v702 = vpack.c.b16 %v566, %v564
  %v703 = vpack.c.b16 %v569, %v567
  %v704 = vpack.c.b16 %v570, %v568
  %v705 = vpack.c.b16 %v573, %v571
  %v706 = vpack.c.b16 %v574, %v572
  %v707 = vpack.c.b16 %v577, %v575
  %v708 = vpack.c.b16 %v578, %v576
  %v709 = vpack.c.b16 %v581, %v579
  %v710 = vpack.c.b16 %v582, %v580
  %839 = vmatprep.subr.bf16.mxu0 %v584
  %840 = vmatpush1.bf16.msra.mxu0 %v583
  %841 = vmatprep.subr.bf16.mxu0 %v586
  %842 = vmatpush1.bf16.msra.mxu0 %v585
  %843 = vmatprep.subr.bf16.mxu0 %v588
  %844 = vmatpush1.bf16.msra.mxu0 %v587
  %845 = vmatprep.subr.bf16.mxu0 %v590
  %846 = vmatpush1.bf16.msra.mxu0 %v589
  %847 = vmatprep.subr.bf16.mxu0 %v592
  %848 = vmatpush1.bf16.msra.mxu0 %v591
  %849 = vmatprep.subr.bf16.mxu0 %v594
  %850 = vmatpush1.bf16.msra.mxu0 %v593
  %851 = vmatprep.subr.bf16.mxu0 %v596
  %852 = vmatpush1.bf16.msra.mxu0 %v595
  %853 = vmatprep.subr.bf16.mxu0 %v598
  %854 = vmatpush1.bf16.msra.mxu0 %v597
  %855 = vmatprep.subr.bf16.mxu0 %v600
  %856 = vmatpush1.bf16.msra.mxu0 %v599
  %857 = vmatprep.subr.bf16.mxu0 %v602
  %858 = vmatpush1.bf16.msra.mxu0 %v601
  %859 = vmatprep.subr.bf16.mxu0 %v604
  %860 = vmatpush1.bf16.msra.mxu0 %v603
  %861 = vmatprep.subr.bf16.mxu0 %v606
  %862 = vmatpush1.bf16.msra.mxu0 %v605
  %863 = vmatprep.subr.bf16.mxu0 %v608
  %864 = vmatpush1.bf16.msra.mxu0 %v607
  %865 = vmatprep.subr.bf16.mxu0 %v610
  %866 = vmatpush1.bf16.msra.mxu0 %v609
  %867 = vmatprep.subr.bf16.mxu0 %v612
  %868 = vmatpush1.bf16.msra.mxu0 %v611
  %869 = vmatprep.subr.bf16.mxu0 %v614
  %870 = vmatpush1.bf16.msra.mxu0 %v613
  %871 = vmatprep.mubr.bf16.mxu0 %v184
  %872 = vmatmul.mubr.bf16.gmra.mrb[0].mxu0 %v183
  %v873 = vpop.f32.mrb[0].mxu0
  %v874 = vadd.f32 %v164, %v873
  %v875 = vpop.f32.mrb[0].mxu0
  %v876 = vadd.f32 %v168, %v875
  %v877 = vpop.f32.mrb[0].mxu0
  %v878 = vpop.f32.mrb[0].mxu0
  %879 = vdwg.mxu0
  %880 = vmatprep.subr.bf16.mxu0 %v616
  %881 = vmatpush1.bf16.msra.mxu0 %v615
  %882 = vmatprep.subr.bf16.mxu0 %v618
  %883 = vmatpush1.bf16.msra.mxu0 %v617
  %884 = vmatprep.subr.bf16.mxu0 %v620
  %885 = vmatpush1.bf16.msra.mxu0 %v619
  %886 = vmatprep.subr.bf16.mxu0 %v622
  %887 = vmatpush1.bf16.msra.mxu0 %v621
  %888 = vmatprep.subr.bf16.mxu0 %v624
  %889 = vmatpush1.bf16.msra.mxu0 %v623
  %890 = vmatprep.subr.bf16.mxu0 %v626
  %891 = vmatpush1.bf16.msra.mxu0 %v625
  %892 = vmatprep.subr.bf16.mxu0 %v628
  %893 = vmatpush1.bf16.msra.mxu0 %v627
  %894 = vmatprep.subr.bf16.mxu0 %v630
  %895 = vmatpush1.bf16.msra.mxu0 %v629
  %896 = vmatprep.subr.bf16.mxu0 %v632
  %897 = vmatpush1.bf16.msra.mxu0 %v631
  %898 = vmatprep.subr.bf16.mxu0 %v634
  %899 = vmatpush1.bf16.msra.mxu0 %v633
  %900 = vmatprep.subr.bf16.mxu0 %v636
  %901 = vmatpush1.bf16.msra.mxu0 %v635
  %902 = vmatprep.subr.bf16.mxu0 %v638
  %903 = vmatpush1.bf16.msra.mxu0 %v637
  %904 = vmatprep.subr.bf16.mxu0 %v640
  %905 = vmatpush1.bf16.msra.mxu0 %v639
  %906 = vmatprep.subr.bf16.mxu0 %v642
  %907 = vmatpush1.bf16.msra.mxu0 %v641
  %908 = vmatprep.subr.bf16.mxu0 %v644
  %909 = vmatpush1.bf16.msra.mxu0 %v643
  %910 = vmatprep.subr.bf16.mxu0 %v646
  %911 = vmatpush1.bf16.msra.mxu0 %v645
  %912 = vmatprep.mubr.bf16.mxu0 %v186
  %913 = vmatmul.mubr.bf16.gmra.mrb[0].mxu0 %v185
  %v914 = vpop.f32.mrb[0].mxu0
  %v915 = vadd.f32 %v874, %v914
  %v916 = vpop.f32.mrb[0].mxu0
  %v917 = vadd.f32 %v876, %v916
  %v918 = vpop.f32.mrb[0].mxu0
  %v919 = vpop.f32.mrb[0].mxu0
  %920 = vdwg.mxu0
  %921 = vmatprep.subr.bf16.mxu0 %v648
  %922 = vmatpush1.bf16.msra.mxu0 %v647
  %923 = vmatprep.subr.bf16.mxu0 %v650
  %924 = vmatpush1.bf16.msra.mxu0 %v649
  %925 = vmatprep.subr.bf16.mxu0 %v652
  %926 = vmatpush1.bf16.msra.mxu0 %v651
  %927 = vmatprep.subr.bf16.mxu0 %v654
  %928 = vmatpush1.bf16.msra.mxu0 %v653
  %929 = vmatprep.subr.bf16.mxu0 %v656
  %930 = vmatpush1.bf16.msra.mxu0 %v655
  %931 = vmatprep.subr.bf16.mxu0 %v658
  %932 = vmatpush1.bf16.msra.mxu0 %v657
  %933 = vmatprep.subr.bf16.mxu0 %v660
  %934 = vmatpush1.bf16.msra.mxu0 %v659
  %935 = vmatprep.subr.bf16.mxu0 %v662
  %936 = vmatpush1.bf16.msra.mxu0 %v661
  %937 = vmatprep.subr.bf16.mxu0 %v664
  %938 = vmatpush1.bf16.msra.mxu0 %v663
  %939 = vmatprep.subr.bf16.mxu0 %v666
  %940 = vmatpush1.bf16.msra.mxu0 %v665
  %941 = vmatprep.subr.bf16.mxu0 %v668
  %942 = vmatpush1.bf16.msra.mxu0 %v667
  %943 = vmatprep.subr.bf16.mxu0 %v670
  %944 = vmatpush1.bf16.msra.mxu0 %v669
  %945 = vmatprep.subr.bf16.mxu0 %v672
  %946 = vmatpush1.bf16.msra.mxu0 %v671
  %947 = vmatprep.subr.bf16.mxu0 %v674
  %948 = vmatpush1.bf16.msra.mxu0 %v673
  %949 = vmatprep.subr.bf16.mxu0 %v676
  %950 = vmatpush1.bf16.msra.mxu0 %v675
  %951 = vmatprep.subr.bf16.mxu0 %v678
  %952 = vmatpush1.bf16.msra.mxu0 %v677
  %953 = vmatprep.mubr.bf16.mxu0 %v188
  %954 = vmatmul.mubr.bf16.gmra.mrb[0].mxu0 %v187
  %v955 = vpop.f32.mrb[0].mxu0
  %v956 = vadd.f32 %v915, %v955
  %v957 = vpop.f32.mrb[0].mxu0
  %v958 = vadd.f32 %v917, %v957
  %v959 = vpop.f32.mrb[0].mxu0
  %v960 = vpop.f32.mrb[0].mxu0
  %961 = vdwg.mxu0
  %962 = vmatprep.subr.bf16.mxu0 %v680
  %963 = vmatpush1.bf16.msra.mxu0 %v679
  %964 = vmatprep.subr.bf16.mxu0 %v682
  %965 = vmatpush1.bf16.msra.mxu0 %v681
  %966 = vmatprep.subr.bf16.mxu0 %v684
  %967 = vmatpush1.bf16.msra.mxu0 %v683
  %968 = vmatprep.subr.bf16.mxu0 %v686
  %969 = vmatpush1.bf16.msra.mxu0 %v685
  %970 = vmatprep.subr.bf16.mxu0 %v688
  %971 = vmatpush1.bf16.msra.mxu0 %v687
  %972 = vmatprep.subr.bf16.mxu0 %v690
  %973 = vmatpush1.bf16.msra.mxu0 %v689
  %974 = vmatprep.subr.bf16.mxu0 %v692
  %975 = vmatpush1.bf16.msra.mxu0 %v691
  %976 = vmatprep.subr.bf16.mxu0 %v694
  %977 = vmatpush1.bf16.msra.mxu0 %v693
  %978 = vmatprep.subr.bf16.mxu0 %v696
  %979 = vmatpush1.bf16.msra.mxu0 %v695
  %980 = vmatprep.subr.bf16.mxu0 %v698
  %981 = vmatpush1.bf16.msra.mxu0 %v697
  %982 = vmatprep.subr.bf16.mxu0 %v700
  %983 = vmatpush1.bf16.msra.mxu0 %v699
  %984 = vmatprep.subr.bf16.mxu0 %v702
  %985 = vmatpush1.bf16.msra.mxu0 %v701
  %986 = vmatprep.subr.bf16.mxu0 %v704
  %987 = vmatpush1.bf16.msra.mxu0 %v703
  %988 = vmatprep.subr.bf16.mxu0 %v706
  %989 = vmatpush1.bf16.msra.mxu0 %v705
  %990 = vmatprep.subr.bf16.mxu0 %v708
  %991 = vmatpush1.bf16.msra.mxu0 %v707
  %992 = vmatprep.subr.bf16.mxu0 %v710
  %993 = vmatpush1.bf16.msra.mxu0 %v709
  %994 = vmatprep.mubr.bf16.mxu0 %v190
  %995 = vmatmul.mubr.bf16.gmra.mrb[0].mxu0 %v189
  %v996 = vpop.f32.mrb[0].mxu0
  %v997 = vadd.f32 %v956, %v996
  %v998 = vpop.f32.mrb[0].mxu0
  %v999 = vadd.f32 %v958, %v998
  %v1000 = vpop.f32.mrb[0].mxu0
  %v1001 = vpop.f32.mrb[0].mxu0
  %1002 = vdwg.mxu0
  %v1003 = vmax.f32 %v997, 0.0
  %v1004 = vmax.f32 %v999, 0.0
  %v1005 = vpack.c.bf16 %v1003, %v1003
  %v1006 = vpack.c.bf16 %v1004, %v1004
  %v1007 = vld [vmem:[%s3] sm:$0xf]
  %v1008 = vld [vmem:[%s3 + $0x4] sm:$0xf]
  %v1009 = vld [vmem:[%s3 + $0x8] sm:$0xf]
  %v1010 = vld [vmem:[%s3 + $0xc] sm:$0xf]
  %v1011 = vld [vmem:[%s3 + $0x10] sm:$0xf]
  %v1012 = vld [vmem:[%s3 + $0x14] sm:$0xf]
  %v1013 = vld [vmem:[%s3 + $0x18] sm:$0xf]
  %v1014 = vld [vmem:[%s3 + $0x1c] sm:$0xf]
  %v1015 = vld [vmem:[%s3 + $0x20] sm:$0xf]
  %v1016 = vld [vmem:[%s3 + $0x24] sm:$0xf]
  %v1017 = vld [vmem:[%s3 + $0x28] sm:$0xf]
  %v1018 = vld [vmem:[%s3 + $0x2c] sm:$0xf]
  %v1019 = vld [vmem:[%s3 + $0x30] sm:$0xf]
  %v1020 = vld [vmem:[%s3 + $0x34] sm:$0xf]
  %v1021 = vld [vmem:[%s3 + $0x38] sm:$0xf]
  %v1022 = vld [vmem:[%s3 + $0x3c] sm:$0xf]
  %v1023 = vld [vmem:[%s3 + $0x40] sm:$0xf]
  %v1024 = vld [vmem:[%s3 + $0x44] sm:$0xf]
  %v1025 = vld [vmem:[%s3 + $0x48] sm:$0xf]
  %v1026 = vld [vmem:[%s3 + $0x4c] sm:$0xf]
  %v1027 = vld [vmem:[%s3 + $0x50] sm:$0xf]
  %v1028 = vld [vmem:[%s3 + $0x54] sm:$0xf]
  %v1029 = vld [vmem:[%s3 + $0x58] sm:$0xf]
  %v1030 = vld [vmem:[%s3 + $0x5c] sm:$0xf]
  %v1031 = vld [vmem:[%s3 + $0x60] sm:$0xf]
  %v1032 = vld [vmem:[%s3 + $0x64] sm:$0xf]
  %v1033 = vld [vmem:[%s3 + $0x68] sm:$0xf]
  %v1034 = vld [vmem:[%s3 + $0x6c] sm:$0xf]
  %v1035 = vld [vmem:[%s3 + $0x70] sm:$0xf]
  %v1036 = vld [vmem:[%s3 + $0x74] sm:$0xf]
  %v1037 = vld [vmem:[%s3 + $0x78] sm:$0xf]
  %v1038 = vld [vmem:[%s3 + $0x7c] sm:$0xf]
  %v1039 = vld [vmem:[%s4] sm:$0x1]
  %v1041 = vlaneseq
  %v1042 = vshrl.u32 %v1041, 7
  %v1043 = vsub.s32 0, %v1042
  %v1044 = vrot.slane %v1039, %v1043
  %v1078 = vunpack.c.l.b16 %v1007
  %v1079 = vunpack.c.l.b16 %v1008
  %v1080 = vunpack.c.l.b16 %v1009
  %v1081 = vunpack.c.l.b16 %v1010
  %v1082 = vunpack.c.l.b16 %v1011
  %v1083 = vunpack.c.l.b16 %v1012
  %v1084 = vunpack.c.l.b16 %v1013
  %v1085 = vunpack.c.l.b16 %v1014
  %v1086 = vunpack.c.l.b16 %v1015
  %v1087 = vunpack.c.l.b16 %v1016
  %v1088 = vunpack.c.l.b16 %v1017
  %v1089 = vunpack.c.l.b16 %v1018
  %v1090 = vunpack.c.l.b16 %v1019
  %v1091 = vunpack.c.l.b16 %v1020
  %v1092 = vunpack.c.l.b16 %v1021
  %v1093 = vunpack.c.l.b16 %v1022
  %v1094 = vunpack.c.l.b16 %v1023
  %v1095 = vunpack.c.l.b16 %v1024
  %v1096 = vunpack.c.l.b16 %v1025
  %v1097 = vunpack.c.l.b16 %v1026
  %v1098 = vunpack.c.l.b16 %v1027
  %v1099 = vunpack.c.l.b16 %v1028
  %v1100 = vunpack.c.l.b16 %v1029
  %v1101 = vunpack.c.l.b16 %v1030
  %v1102 = vunpack.c.l.b16 %v1031
  %v1103 = vunpack.c.l.b16 %v1032
  %v1104 = vunpack.c.l.b16 %v1033
  %v1105 = vunpack.c.l.b16 %v1034
  %v1106 = vunpack.c.l.b16 %v1035
  %v1107 = vunpack.c.l.b16 %v1036
  %v1108 = vunpack.c.l.b16 %v1037
  %v1109 = vunpack.c.l.b16 %v1038
  %v1110 = vpack.c.b16 %v1079, %v1078
  %v1111 = vpack.c.b16 %v1081, %v1080
  %v1112 = vpack.c.b16 %v1083, %v1082
  %v1113 = vpack.c.b16 %v1085, %v1084
  %v1114 = vpack.c.b16 %v1087, %v1086
  %v1115 = vpack.c.b16 %v1089, %v1088
  %v1116 = vpack.c.b16 %v1091, %v1090
  %v1117 = vpack.c.b16 %v1093, %v1092
  %v1118 = vpack.c.b16 %v1095, %v1094
  %v1119 = vpack.c.b16 %v1097, %v1096
  %v1120 = vpack.c.b16 %v1099, %v1098
  %v1121 = vpack.c.b16 %v1101, %v1100
  %v1122 = vpack.c.b16 %v1103, %v1102
  %v1123 = vpack.c.b16 %v1105, %v1104
  %v1124 = vpack.c.b16 %v1107, %v1106
  %v1125 = vpack.c.b16 %v1109, %v1108
  %1142 = vmatprep.subr.bf16.mxu0 0
  %1143 = vmatpush1.bf16.msra.mxu0 %v1110
  %1144 = vmatprep.subr.bf16.mxu0 0
  %1145 = vmatpush1.bf16.msra.mxu0 %v1111
  %1146 = vmatprep.subr.bf16.mxu0 0
  %1147 = vmatpush1.bf16.msra.mxu0 %v1112
  %1148 = vmatprep.subr.bf16.mxu0 0
  %1149 = vmatpush1.bf16.msra.mxu0 %v1113
  %1150 = vmatprep.subr.bf16.mxu0 0
  %1151 = vmatpush1.bf16.msra.mxu0 %v1114
  %1152 = vmatprep.subr.bf16.mxu0 0
  %1153 = vmatpush1.bf16.msra.mxu0 %v1115
  %1154 = vmatprep.subr.bf16.mxu0 0
  %1155 = vmatpush1.bf16.msra.mxu0 %v1116
  %1156 = vmatprep.subr.bf16.mxu0 0
  %1157 = vmatpush1.bf16.msra.mxu0 %v1117
  %1158 = vmatprep.subr.bf16.mxu0 0
  %1159 = vmatpush1.bf16.msra.mxu0 %v1118
  %1160 = vmatprep.subr.bf16.mxu0 0
  %1161 = vmatpush1.bf16.msra.mxu0 %v1119
  %1162 = vmatprep.subr.bf16.mxu0 0
  %1163 = vmatpush1.bf16.msra.mxu0 %v1120
  %1164 = vmatprep.subr.bf16.mxu0 0
  %1165 = vmatpush1.bf16.msra.mxu0 %v1121
  %1166 = vmatprep.subr.bf16.mxu0 0
  %1167 = vmatpush1.bf16.msra.mxu0 %v1122
  %1168 = vmatprep.subr.bf16.mxu0 0
  %1169 = vmatpush1.bf16.msra.mxu0 %v1123
  %1170 = vmatprep.subr.bf16.mxu0 0
  %1171 = vmatpush1.bf16.msra.mxu0 %v1124
  %1172 = vmatprep.subr.bf16.mxu0 0
  %1173 = vmatpush1.bf16.msra.mxu0 %v1125
  %1174 = vmatprep.mubr.bf16.mxu0 %v1006
  %1175 = vmatmul.mubr.bf16.gmra.mrb[0].mxu0 %v1005
  %v1176 = vpop.f32.mrb[0].mxu0
  %v1177 = vadd.f32 %v1044, %v1176
  %v1178 = vpop.f32.mrb[0].mxu0
  %v1179 = vpop.f32.mrb[0].mxu0
  %v1180 = vpop.f32.mrb[0].mxu0
  %1181 = vdwg.mxu0
  %v1182 = vmax.f32 %v1177, 0.0
  %v1183 = vpack.c.bf16 %v1182, %v1182
  %v1184 = vld [vmem:[%s5] sm:$0xf]
  %v1185 = vld [vmem:[%s5 + $0x4] sm:$0xf]
  %v1186 = vld [vmem:[%s5 + $0x8] sm:$0xf]
  %v1187 = vld [vmem:[%s5 + $0xc] sm:$0xf]
  %v1188 = vld [vmem:[%s5 + $0x10] sm:$0xf]
  %v1189 = vld [vmem:[%s5 + $0x14] sm:$0xf]
  %v1190 = vld [vmem:[%s5 + $0x18] sm:$0xf]
  %v1191 = vld [vmem:[%s5 + $0x1c] sm:$0xf]
  %v1192 = vld [vmem:[%s6] sm:$0x1]
  %v1194 = vlaneseq
  %v1195 = vshrl.u32 %v1194, 7
  %v1196 = vsub.s32 0, %v1195
  %v1197 = vrot.slane %v1192, %v1196
  %v1207 = vunpack.c.l.b16 %v1184
  %v1208 = vunpack.c.l.b16 %v1185
  %v1209 = vunpack.c.l.b16 %v1186
  %v1210 = vunpack.c.l.b16 %v1187
  %v1211 = vunpack.c.l.b16 %v1188
  %v1212 = vunpack.c.l.b16 %v1189
  %v1213 = vunpack.c.l.b16 %v1190
  %v1214 = vunpack.c.l.b16 %v1191
  %v1215 = vpack.c.b16 %v1208, %v1207
  %v1216 = vpack.c.b16 %v1210, %v1209
  %v1217 = vpack.c.b16 %v1212, %v1211
  %v1218 = vpack.c.b16 %v1214, %v1213
  %vm1223 = vcmask 523264
  %v1225 = vsel %vm1223, %v1183, 0
  %1227 = vmatprep.subr.bf16.mxu0 0
  %1228 = vmatpush1.bf16.msra.mxu0 %v1215
  %1229 = vmatprep.subr.bf16.mxu0 0
  %1230 = vmatpush1.bf16.msra.mxu0 %v1216
  %1231 = vmatprep.subr.bf16.mxu0 0
  %1232 = vmatpush1.bf16.msra.mxu0 %v1217
  %1233 = vmatprep.subr.bf16.mxu0 0
  %1234 = vmatpush1.bf16.msra.mxu0 %v1218
  %1235 = vmatprep.subr.bf16.mxu0 0
  %1236 = vmatpush1.bf16.msra.mxu0 0
  %1237 = vmatprep.subr.bf16.mxu0 0
  %1238 = vmatpush1.bf16.msra.mxu0 0
  %1239 = vmatprep.subr.bf16.mxu0 0
  %1240 = vmatpush1.bf16.msra.mxu0 0
  %1241 = vmatprep.subr.bf16.mxu0 0
  %1242 = vmatpush1.bf16.msra.mxu0 0
  %1243 = vmatprep.subr.bf16.mxu0 0
  %1244 = vmatpush1.bf16.msra.mxu0 0
  %1245 = vmatprep.subr.bf16.mxu0 0
  %1246 = vmatpush1.bf16.msra.mxu0 0
  %1247 = vmatprep.subr.bf16.mxu0 0
  %1248 = vmatpush1.bf16.msra.mxu0 0
  %1249 = vmatprep.subr.bf16.mxu0 0
  %1250 = vmatpush1.bf16.msra.mxu0 0
  %1251 = vmatprep.subr.bf16.mxu0 0
  %1252 = vmatpush1.bf16.msra.mxu0 0
  %1253 = vmatprep.subr.bf16.mxu0 0
  %1254 = vmatpush1.bf16.msra.mxu0 0
  %1255 = vmatprep.subr.bf16.mxu0 0
  %1256 = vmatpush1.bf16.msra.mxu0 0
  %1257 = vmatprep.subr.bf16.mxu0 0
  %1258 = vmatpush1.bf16.msra.mxu0 0
  %1259 = vmatprep.mubr.bf16.mxu0 0
  %1260 = vmatmul.mubr.bf16.gmra.mrb[0].mxu0 %v1225
  %v1261 = vpop.f32.mrb[0].mxu0
  %v1262 = vadd.f32 %v1197, %v1261
  %v1263 = vpop.f32.mrb[0].mxu0
  %v1264 = vpop.f32.mrb[0].mxu0
  %v1265 = vpop.f32.mrb[0].mxu0
  %1266 = vdwg.mxu0
  %1267 = vst [vmem:[%s7] sm:$0xff] %v1262
  // Predicated region
  $region30: #{net_forward.17} parent=0 // pred_check
    _
  $region31: #{net_forward.17} parent=0 // pred_check_branch
    %1269 = sbr.rel (0) target = $region33
  $region32: #{net_forward.17} parent=0 // pred_region
    _
  $region33: #{net_forward.17} parent=0 // pred_fallthru
    _
  // Predicated region
  $region34: #{net_forward.17} parent=0 // pred_check
    _
  $region35: #{net_forward.17} parent=0 // pred_check_branch
    %1271 = sbr.rel (0) target = $region37
  $region36: #{net_forward.17} parent=0 // pred_region
    _
  $region37: #{net_forward.17} parent=0 // pred_fallthru
    _

</llo_original>
